<compile_context>
chip_gen: v7x
topology: tpu7x:2x2x1
jax: 0.10.0
libtpu: 0.0.40
codegen_flags: <defaults>
</compile_context>

<pallas_src>
from functools import partial

import numpy as np
import jax
import jax.numpy as jnp
from jax import lax
from jax.experimental import pallas as pl
from jax.experimental.pallas import tpu as pltpu

EMB = 64            # embedding_size (fixed to 64 in the module)
LN_EPS = 1e-5       # torch.nn.LayerNorm default eps
NORM_EPS = 1e-12    # torch F.normalize default eps
NEG_BIG = -1e30     # finite "-inf" for masked logits


# ----------------------------------------------------------------------------
# small helpers
# ----------------------------------------------------------------------------
def _round_up(n, m):
    return ((n + m - 1) // m) * m


def _row_tiling(n, max_tile=512):
    tile = min(max_tile, _round_up(n, 16))
    return _round_up(n, tile), tile


def _col_tiling(n, max_tile=1024):
    tile = min(max_tile, _round_up(n, 128))
    return _round_up(n, tile), tile


def _l2n(x):
    """F.normalize(x, dim=-1): x / max(||x||, eps)."""
    ss = jnp.sum(x * x, axis=-1, keepdims=True)
    return x * lax.rsqrt(jnp.maximum(ss, NORM_EPS * NORM_EPS))


# ----------------------------------------------------------------------------
# Kernel 1: fused encoder+decoder HierachicalEncoder.forward_all
#           (row-tiled, parallel grid, features streamed once)
# ----------------------------------------------------------------------------
def _encoder_pair_kernel(cont_ref, text_ref, cf_ref, emb_ref, cold_ref, *args,
                         use_ln, use_wv, scale):
    out_ref = args[-1]
    enc_w = args[0:16]
    dec_w = args[16:32]

    cont = cont_ref[...]          # (T, c_dim) bf16
    text = text_ref[...]          # (T, t_dim) bf16
    cfin = cf_ref[...]            # (T, 64)    bf16
    cold = cold_ref[...]          # (T, 1)     f32  (1 = cold item)
    emb2 = emb_ref[...]           # (T, 128)   f32  (enc_emb | dec_emb)

    def mlp3(x, w1, b1, w2, b2, w3, b3):
        h = jnp.dot(x, w1[...], preferred_element_type=jnp.float32) + b1[...]
        h = jnp.maximum(h, 0.0).astype(jnp.bfloat16)
        h = jnp.dot(h, w2[...], preferred_element_type=jnp.float32) + b2[...]
        h = jnp.maximum(h, 0.0).astype(jnp.bfloat16)
        return jnp.dot(h, w3[...], preferred_element_type=jnp.float32) + b3[...]

    def one_encoder(w, emb):
        (cw1, cb1, cw2, cb2, cw3, cb3,
         tw1, tb1, tw2, tb2, tw3, tb3,
         cfw, cfb, wqkv, mw) = w

        c64 = mlp3(cont, cw1, cb1, cw2, cb2, cw3, cb3)             # (T, 64) f32
        t64 = mlp3(text, tw1, tb1, tw2, tb2, tw3, tb3)             # (T, 64) f32
        mm = mw[0, 0] * _l2n(c64) + mw[0, 1] * _l2n(t64)

        cf = jnp.dot(cfin, cfw[...],
                     preferred_element_type=jnp.float32) + cfb[...]
        cf = cold * mm + (1.0 - cold) * cf                         # cold replace

        feats = []
        for f in (mm, emb, cf):
            f = _l2n(f)                       # F.normalize(features, dim=-1)
            if use_ln:
                mu = jnp.mean(f, axis=-1, keepdims=True)
                var = jnp.mean((f - mu) ** 2, axis=-1, keepdims=True)
                f = (f - mu) * lax.rsqrt(var + LN_EPS)
            feats.append(f)

        # One (T,64)@(64, 192|128) dot per modal feature; q/k/v are lane slices.
        q, k, v = [], [], []
        for f in feats:
            qkv = jnp.dot(f.astype(jnp.bfloat16), wqkv[...],
                          preferred_element_type=jnp.float32)
            q.append(qkv[:, 0:EMB])
            k.append(qkv[:, EMB:2 * EMB])
            v.append(qkv[:, 2 * EMB:3 * EMB] if use_wv else f)

        acc = jnp.zeros_like(feats[0])
        for i in range(3):
            logit = [jnp.sum(q[i] * k[j], axis=-1, keepdims=True) * scale
                     for j in range(3)]
            mx = jnp.maximum(jnp.maximum(logit[0], logit[1]), logit[2])
            e = [jnp.exp(l - mx) for l in logit]
            den = e[0] + e[1] + e[2]
            acc = acc + (e[0] * v[0] + e[1] * v[1] + e[2] * v[2]) / den
        return acc * (1.0 / 3.0)

    y_enc = one_encoder(enc_w, emb2[:, 0:EMB])
    y_dec = one_encoder(dec_w, emb2[:, EMB:2 * EMB])
    # lane-dense 128-wide bf16 output: unmasked full-width stores
    out_ref[...] = jnp.concatenate([y_enc, y_dec], axis=-1).astype(out_ref.dtype)


def _encoder_weights(p, use_wv):
    def w16(x):
        return x.astype(jnp.bfloat16)

    def b32(x):
        return x.reshape(1, -1).astype(jnp.float32)

    mats = [p['wq'], p['wk'], p['wv']] if use_wv else [p['wq'], p['wk']]
    wqkv = jnp.concatenate(mats, axis=1).astype(jnp.bfloat16)      # (64, 192|128)
    ws = [w16(p['c_enc']['w1']), b32(p['c_enc']['b1']),
          w16(p['c_enc']['w2']), b32(p['c_enc']['b2']),
          w16(p['c_enc']['w3']), b32(p['c_enc']['b3']),
          w16(p['t_enc']['w1']), b32(p['t_enc']['b1']),
          w16(p['t_enc']['w2']), b32(p['t_enc']['b2']),
          w16(p['t_enc']['w3']), b32(p['t_enc']['b3']),
          w16(p['cf_w']), b32(p['cf_b']), wqkv]
    mw = jax.nn.softmax(p['modal_weight']).astype(jnp.float32).reshape(1, 2)
    return ws, mw


def fused_encoder_pair(enc_p, dec_p, content_n, text_n, cf_feature, cold_mask,
                       *, use_ln, use_wv, max_row_tile=512):
    """Both HierachicalEncoders' forward_all(): two (num_items, 64) outputs."""
    n_items = content_n.shape[0]
    n_pad, tile = _row_tiling(n_items, max_row_tile)

    def padr(x):
        return jnp.pad(x, ((0, n_pad - n_items), (0, 0)))

    cont = padr(content_n.astype(jnp.bfloat16))
    text = padr(text_n.astype(jnp.bfloat16))
    cf = padr(cf_feature.astype(jnp.bfloat16))
    emb2 = padr(jnp.concatenate([enc_p['item_emb'], dec_p['item_emb']],
                                axis=1).astype(jnp.float32))        # (N, 128)
    cold = padr(cold_mask.astype(jnp.float32).reshape(-1, 1))

    enc_ws, enc_mw = _encoder_weights(enc_p, use_wv)
    dec_ws, dec_mw = _encoder_weights(dec_p, use_wv)

    row_specs = [pl.BlockSpec((tile, a.shape[1]), lambda i: (i, 0))
                 for a in (cont, text, cf, emb2, cold)]
    vmem = pl.BlockSpec(memory_space=pltpu.MemorySpace.VMEM)   # whole array, 1 copy
    smem = pl.BlockSpec(memory_space=pltpu.MemorySpace.SMEM)
    w_specs = [vmem] * len(enc_ws) + [smem] + [vmem] * len(dec_ws) + [smem]

    out = pl.pallas_call(
        partial(_encoder_pair_kernel, use_ln=use_ln, use_wv=use_wv,
                scale=EMB ** (-0.5)),
        out_shape=jax.ShapeDtypeStruct((n_pad, 2 * EMB), jnp.bfloat16),
        grid=(n_pad // tile,),
        in_specs=row_specs + w_specs,
        out_specs=pl.BlockSpec((tile, 2 * EMB), lambda i: (i, 0)),
        compiler_params=pltpu.CompilerParams(
            dimension_semantics=("parallel",),
            vmem_limit_bytes=64 * 1024 * 1024),
    )(cont, text, cf, emb2, cold, *enc_ws, enc_mw, *dec_ws, dec_mw)
    return out[:n_items, 0:EMB], out[:n_items, EMB:2 * EMB]


# ----------------------------------------------------------------------------
# Kernel 2: fused retrieval logits + reconstruction loss
#           (parallel row tiles, online LSE over item tiles, int8 multi-hot)
# ----------------------------------------------------------------------------
def _recon_kernel(bundle_ref, items_ref, x_ref, out_ref,
                  m_sc, l_sc, slx_sc, sx_sc, *,
                  n_items, tile_n, n_col_tiles, has_pad):
    c = pl.program_id(1)

    @pl.when(c == 0)
    def _():
        m_sc[...] = jnp.full_like(m_sc, NEG_BIG)
        l_sc[...] = jnp.zeros_like(l_sc)
        slx_sc[...] = jnp.zeros_like(slx_sc)
        sx_sc[...] = jnp.zeros_like(sx_sc)

    logits = lax.dot_general(bundle_ref[...], items_ref[...],
                             (((1,), (1,)), ((), ())),
                             preferred_element_type=jnp.float32)   # (B, tile_n)
    x = x_ref[...].astype(jnp.float32)                             # int8 -> f32
    slx_sc[...] = slx_sc[...] + jnp.sum(logits * x, axis=-1, keepdims=True)
    sx_sc[...] = sx_sc[...] + jnp.sum(x, axis=-1, keepdims=True)

    def lse_update(lm):
        m_new = jnp.maximum(m_sc[...], jnp.max(lm, axis=-1, keepdims=True))
        l_sc[...] = jnp.exp(m_sc[...] - m_new) * l_sc[...] \
            + jnp.sum(jnp.exp(lm - m_new), axis=-1, keepdims=True)
        m_sc[...] = m_new

    if has_pad:
        @pl.when(c < n_col_tiles - 1)
        def _():                                   # unmasked fast path
            lse_update(logits)

        @pl.when(c == n_col_tiles - 1)
        def _():                                   # masked last column tile
            col = (n_col_tiles - 1) * tile_n + \
                lax.broadcasted_iota(jnp.int32, (1, tile_n), 1)
            lse_update(jnp.where(col < n_items, logits, NEG_BIG))
    else:
        lse_update(logits)

    @pl.when(c == n_col_tiles - 1)
    def _():
        lse = m_sc[...] + jnp.log(l_sc[...])
        sx = sx_sc[...]
        # TODO(synk): torch yields NaN for an all-empty bundle row; we clamp.
        out_ref[...] = (slx_sc[...] - lse * sx) / jnp.maximum(sx, 1.0)


def fused_recon_loss(bundle_feature, item_features, x):
    B, D = bundle_feature.shape
    N = item_features.shape[0]
    tile_b = min(256, _round_up(B, 32))
    b_pad = _round_up(B, tile_b)
    n_pad, tile_n = _col_tiling(N, max_tile=1024)
    n_col_tiles = n_pad // tile_n

    bf = jnp.pad(bundle_feature.astype(jnp.bfloat16), ((0, b_pad - B), (0, 0)))
    it = jnp.pad(item_features.astype(jnp.bfloat16), ((0, n_pad - N), (0, 0)))
    xp = jnp.pad(x.astype(jnp.int8), ((0, b_pad - B), (0, n_pad - N)))

    out = pl.pallas_call(
        partial(_recon_kernel, n_items=N, tile_n=tile_n,
                n_col_tiles=n_col_tiles, has_pad=(n_pad != N)),
        out_shape=jax.ShapeDtypeStruct((b_pad, 1), jnp.float32),
        grid=(b_pad // tile_b, n_col_tiles),
        in_specs=[pl.BlockSpec((tile_b, D), lambda r, c: (r, 0)),
                  pl.BlockSpec((tile_n, D), lambda r, c: (c, 0)),
                  pl.BlockSpec((tile_b, tile_n), lambda r, c: (r, c))],
        out_specs=pl.BlockSpec((tile_b, 1), lambda r, c: (r, 0)),
        scratch_shapes=[pltpu.VMEM((tile_b, 1), jnp.float32)] * 4,
        compiler_params=pltpu.CompilerParams(
            dimension_semantics=("parallel", "arbitrary"),
            vmem_limit_bytes=64 * 1024 * 1024),
    )(bf, it, xp)
    return -jnp.sum(out) / float(B)       # padded rows contribute exactly 0


# ----------------------------------------------------------------------------
# Kernel 3: tiled InfoNCE loss (parallel row tiles, online softmax over cols)
# ----------------------------------------------------------------------------
def _cl_kernel(a_ref, b_ref, out_ref, m_sc, l_sc, d_sc, *,
               n_valid, inv_temp, tile, n_col_tiles, has_pad):
    r = pl.program_id(0)
    c = pl.program_id(1)

    @pl.when(c == 0)
    def _():
        m_sc[...] = jnp.full_like(m_sc, NEG_BIG)
        l_sc[...] = jnp.zeros_like(l_sc)
        d_sc[...] = jnp.zeros_like(d_sc)

    logits = lax.dot_general(a_ref[...], b_ref[...],
                             (((1,), (1,)), ((), ())),
                             preferred_element_type=jnp.float32) * inv_temp

    @pl.when(r == c)                      # diagonal tiles only
    def _():
        li = lax.broadcasted_iota(jnp.int32, (tile, 1), 0)
        lj = lax.broadcasted_iota(jnp.int32, (1, tile), 1)
        d_sc[...] = d_sc[...] + jnp.sum(jnp.where(li == lj, logits, 0.0),
                                        axis=-1, keepdims=True)

    def lse_update(lm):
        m_new = jnp.maximum(m_sc[...], jnp.max(lm, axis=-1, keepdims=True))
        l_sc[...] = jnp.exp(m_sc[...] - m_new) * l_sc[...] \
            + jnp.sum(jnp.exp(lm - m_new), axis=-1, keepdims=True)
        m_sc[...] = m_new

    if has_pad:
        @pl.when(c < n_col_tiles - 1)
        def _():                                   # unmasked fast path
            lse_update(logits)

        @pl.when(c == n_col_tiles - 1)
        def _():                                   # masked last column tile
            col = (n_col_tiles - 1) * tile + \
                lax.broadcasted_iota(jnp.int32, (1, tile), 1)
            lse_update(jnp.where(col < n_valid, logits, NEG_BIG))
    else:
        lse_update(logits)

    @pl.when(c == n_col_tiles - 1)
    def _():
        row_g = r * tile + lax.broadcasted_iota(jnp.int32, (tile, 1), 0)
        row_ok = (row_g < n_valid).astype(jnp.float32)
        out_ref[...] = ((m_sc[...] + jnp.log(l_sc[...])) - d_sc[...]) * row_ok


def cl_loss(a, b, temp):
    """InfoNCE with labels = arange(N): mean_i(logsumexp_j(logits_ij) - logits_ii)."""
    a = _l2n(a.astype(jnp.float32))
    b = _l2n(b.astype(jnp.float32))
    N, D = a.shape
    tile = min(512, _round_up(N, 16))
    n_pad = _round_up(N, tile)
    nt = n_pad // tile
    ap = jnp.pad(a.astype(jnp.bfloat16), ((0, n_pad - N), (0, 0)))
    bp = jnp.pad(b.astype(jnp.bfloat16), ((0, n_pad - N), (0, 0)))

    out = pl.pallas_call(
        partial(_cl_kernel, n_valid=N, inv_temp=1.0 / float(temp), tile=tile,
                n_col_tiles=nt, has_pad=(n_pad != N)),
        out_shape=jax.ShapeDtypeStruct((n_pad, 1), jnp.float32),
        grid=(nt, nt),
        in_specs=[pl.BlockSpec((tile, D), lambda r, c: (r, 0)),
                  pl.BlockSpec((tile, D), lambda r, c: (c, 0))],
        out_specs=pl.BlockSpec((tile, 1), lambda r, c: (r, 0)),
        scratch_shapes=[pltpu.VMEM((tile, 1), jnp.float32)] * 3,
        compiler_params=pltpu.CompilerParams(
            dimension_semantics=("parallel", "arbitrary")),
    )(ap, bp)
    return jnp.sum(out) / float(N)        # padded rows contribute exactly 0


# ----------------------------------------------------------------------------
# Parameter construction (deterministic, matches torch init schemes)
# ----------------------------------------------------------------------------
def _xavier_normal(key, in_dim, out_dim):
    std = (2.0 / (in_dim + out_dim)) ** 0.5
    return std * jax.random.normal(key, (in_dim, out_dim), jnp.float32)


def _xavier_uniform(key, in_dim, out_dim):
    bound = (6.0 / (in_dim + out_dim)) ** 0.5
    return jax.random.uniform(key, (in_dim, out_dim), jnp.float32,
                              minval=-bound, maxval=bound)


def make_encoder_params(key, c_dim, t_dim, num_items):
    ks = jax.random.split(key, 12)
    return {
        'c_enc': {'w1': _xavier_normal(ks[0], c_dim, c_dim),
                  'b1': jnp.zeros((c_dim,), jnp.float32),
                  'w2': _xavier_normal(ks[1], c_dim, 256),
                  'b2': jnp.zeros((256,), jnp.float32),
                  'w3': _xavier_normal(ks[2], 256, EMB),
                  'b3': jnp.zeros((EMB,), jnp.float32)},
        't_enc': {'w1': _xavier_normal(ks[3], t_dim, t_dim),
                  'b1': jnp.zeros((t_dim,), jnp.float32),
                  'w2': _xavier_normal(ks[4], t_dim, 256),
                  'b2': jnp.zeros((256,), jnp.float32),
                  'w3': _xavier_normal(ks[5], 256, EMB),
                  'b3': jnp.zeros((EMB,), jnp.float32)},
        'item_emb': _xavier_uniform(ks[6], num_items, EMB),
        'cf_w': _xavier_normal(ks[7], EMB, EMB),
        'cf_b': jnp.zeros((EMB,), jnp.float32),
        'wq': _xavier_normal(ks[8], EMB, EMB),
        'wk': _xavier_normal(ks[9], EMB, EMB),
        'wv': _xavier_normal(ks[10], EMB, EMB),
        'modal_weight': jnp.array([0.5, 0.5], jnp.float32),
    }


# ----------------------------------------------------------------------------
# CLHE forward (plain-JAX glue around the Pallas kernels)
# ----------------------------------------------------------------------------
# TODO(synk): TransformerEncoder class is not defined in the provided source;
# masked mean pooling over tokens is used as a deterministic stand-in.
def bundle_encode(feat, mask):
    w = (~mask).astype(jnp.float32)                  # (bs, n_token)
    s = jnp.sum(feat.astype(jnp.float32) * w[..., None], axis=1)
    cnt = jnp.maximum(jnp.sum(w, axis=1, keepdims=True), 1.0)
    return s / cnt


def clhe_forward(enc_p, dec_p, data, batch, conf, items_in_batch):
    idx, full, seq_full, modify, seq_modify = batch
    del idx, modify
    num_items = conf['num_items']
    content_n, text_n, cf_feature, cold_mask = data
    use_ln = 'layernorm' in conf['attention']
    use_wv = 'w_v' in conf['attention']

    # One fused encoder+decoder pass; every view is a gather of it.
    enc_att, dec_att = fused_encoder_pair(
        enc_p, dec_p, content_n, text_n, cf_feature, cold_mask,
        use_ln=use_ln, use_wv=use_wv)                # (num_items, 64) bf16 each

    bs, n_token = seq_full.shape
    mask = seq_full == num_items
    seq0 = jnp.where(mask, 0, seq_full).reshape(-1)
    feat_bundle_view = jnp.take(enc_att, seq0, axis=0).reshape(bs, n_token, EMB)
    bundle_feature = bundle_encode(feat_bundle_view, mask)          # (bs, 64) f32

    # fused retrieval logits + reconstruction loss (online LSE over item tiles)
    loss = fused_recon_loss(bundle_feature, dec_att, full)

    item_loss = jnp.array(0.0, jnp.float32)
    if conf['cl_alpha'] > 0:
        # TODO(synk): only the 'NA' item augmentation path is implemented
        # (FD/FN/MD need dropout / gaussian noise + the cl_projector head).
        item_features = jnp.take(enc_att, items_in_batch, axis=0)
        item_loss = conf['cl_alpha'] * cl_loss(item_features, item_features,
                                               conf['cl_temp'])

    bundle_loss = jnp.array(0.0, jnp.float32)
    if conf['bundle_cl_alpha'] > 0:
        mask2 = seq_modify == num_items
        seq2 = jnp.where(mask2, 0, seq_modify).reshape(-1)
        fb2 = jnp.take(enc_att, seq2, axis=0).reshape(bs, n_token, EMB)
        bundle_feature2 = bundle_encode(fb2, mask)   # torch reuses seq_full mask
        bundle_loss = conf['bundle_cl_alpha'] * cl_loss(
            bundle_feature, bundle_feature2, conf['bundle_cl_temp'])

    return {'loss': loss + item_loss + bundle_loss,
            'item_loss': item_loss,
            'bundle_loss': bundle_loss}


# ----------------------------------------------------------------------------
# Main
# ----------------------------------------------------------------------------
if __name__ == "__main__":
    key = jax.random.PRNGKey(0)
    ks = jax.random.split(key, 8)

    num_users, num_bundles, num_items = 8, 6, 40
    c_dim, t_dim = 32, 48
    bs, n_token = 4, 8

    conf = {'num_users': num_users, 'num_bundles': num_bundles,
            'num_items': num_items, 'attention': ['layernorm', 'w_v'],
            'item_augment': 'NA', 'cl_temp': 0.2, 'cl_alpha': 1.0,
            'bundle_cl_temp': 0.2, 'bundle_cl_alpha': 1.0}

    # features (content / text are L2-normalized in __init__)
    content_feature = _l2n(jax.random.normal(ks[0], (num_items, c_dim),
                                             jnp.float32))
    text_feature = _l2n(jax.random.normal(ks[1], (num_items, t_dim),
                                          jnp.float32))
    cf_feature = jax.random.normal(ks[2], (num_items, EMB), jnp.float32)

    # ui_graph: last 4 items are "cold" (no user interactions)
    rng = np.random.default_rng(0)
    ui_graph = (rng.random((num_users, num_items)) < 0.3).astype(np.int32)
    ui_graph[:, num_items - 4:] = 0
    cold_mask_cf = jnp.asarray(ui_graph.sum(axis=0) == 0)

    enc_p = make_encoder_params(ks[3], c_dim, t_dim, num_items)
    dec_p = make_encoder_params(ks[4], c_dim, t_dim, num_items)

    # batch: seq_full (padded with num_items), full multi-hot, seq_modify
    seq_full_np = rng.integers(0, num_items, size=(bs, n_token)).astype(np.int32)
    seq_full_np[:, n_token - 2:] = num_items                   # padding tokens
    full_np = np.zeros((bs, num_items), np.float32)
    for b in range(bs):
        for t in seq_full_np[b]:
            if t < num_items:
                full_np[b, t] = 1.0
    seq_modify_np = seq_full_np.copy()
    seq_modify_np[:, 0] = num_items                            # masked item

    items_in_batch = np.nonzero(full_np.sum(axis=0))[0].astype(np.int32)

    batch = (jnp.arange(bs, dtype=jnp.int32),
             jnp.asarray(full_np),
             jnp.asarray(seq_full_np),
             None,
             jnp.asarray(seq_modify_np))
    data = (content_feature, text_feature, cf_feature, cold_mask_cf)

    fwd = jax.jit(lambda ep, dp, dat, b, items:
                  clhe_forward(ep, dp, dat, b, conf, items))
    out = fwd(enc_p, dec_p, data, batch, jnp.asarray(items_in_batch))
    out = jax.tree_util.tree_map(jax.block_until_ready, out)

    assert np.isfinite(float(out['loss']))
    print("KERNEL_OK")
</pallas_src>

<mosaic_0001>
module attributes {stable_mosaic.version = 11 : i64} {
  func.func @_cl_kernel(%arg0: i32, %arg1: i32, %arg2: memref<16x64xbf16, #tpu.memory_space<vmem>>, %arg3: memref<16x64xbf16, #tpu.memory_space<vmem>>, %arg4: memref<16x1xf32, #tpu.memory_space<vmem>>, %arg5: memref<16x1xf32, #tpu.memory_space<vmem>>, %arg6: memref<16x1xf32, #tpu.memory_space<vmem>>, %arg7: memref<16x1xf32, #tpu.memory_space<vmem>>) attributes {dimension_semantics = [#tpu.dimension_semantics<parallel>, #tpu.dimension_semantics<arbitrary>], iteration_bounds = array<i64: 1, 1>, scalar_prefetch = 0 : i64, scratch_operands = 3 : i64, tpu.core_type = #tpu.core_type<tc>, window_params = [{transform_indices = @transform_0, window_bounds = array<i64: 16, 64>}, {transform_indices = @transform_1, window_bounds = array<i64: 16, 64>}, {transform_indices = @transform_2, window_bounds = array<i64: 16, 1>}]} {
    %c0_i32 = arith.constant 0 : i32
    %0 = arith.cmpi eq, %arg1, %c0_i32 : i32
    %1 = arith.extui %0 : i1 to i32
    %c0_i32_0 = arith.constant 0 : i32
    %2 = arith.cmpi ne, %1, %c0_i32_0 : i32
    scf.if %2 {
      %cst_12 = arith.constant -1.000000e+30 : f32
      %20 = vector.broadcast %cst_12 : f32 to vector<16x1xf32>
      %c0_13 = arith.constant 0 : index
      %c0_14 = arith.constant 0 : index
      %21 = vector.load %arg5[%c0_13, %c0_14] : memref<16x1xf32, #tpu.memory_space<vmem>>, vector<16x1xf32>
      tpu.vector_store %arg5[%c0_13, %c0_14], %20 {strides = array<i32>} : memref<16x1xf32, #tpu.memory_space<vmem>>, vector<16x1xf32>,
      %cst_15 = arith.constant 0.000000e+00 : f32
      %22 = vector.broadcast %cst_15 : f32 to vector<16x1xf32>
      %c0_16 = arith.constant 0 : index
      %c0_17 = arith.constant 0 : index
      %23 = vector.load %arg6[%c0_16, %c0_17] : memref<16x1xf32, #tpu.memory_space<vmem>>, vector<16x1xf32>
      tpu.vector_store %arg6[%c0_16, %c0_17], %22 {strides = array<i32>} : memref<16x1xf32, #tpu.memory_space<vmem>>, vector<16x1xf32>,
      %cst_18 = arith.constant 0.000000e+00 : f32
      %24 = vector.broadcast %cst_18 : f32 to vector<16x1xf32>
      %c0_19 = arith.constant 0 : index
      %c0_20 = arith.constant 0 : index
      %25 = vector.load %arg7[%c0_19, %c0_20] : memref<16x1xf32, #tpu.memory_space<vmem>>, vector<16x1xf32>
      tpu.vector_store %arg7[%c0_19, %c0_20], %24 {strides = array<i32>} : memref<16x1xf32, #tpu.memory_space<vmem>>, vector<16x1xf32>,
    } else {
    }
    %c0 = arith.constant 0 : index
    %c0_1 = arith.constant 0 : index
    %3 = vector.load %arg2[%c0, %c0_1] : memref<16x64xbf16, #tpu.memory_space<vmem>>, vector<16x64xbf16>
    %c0_2 = arith.constant 0 : index
    %c0_3 = arith.constant 0 : index
    %4 = vector.load %arg3[%c0_2, %c0_3] : memref<16x64xbf16, #tpu.memory_space<vmem>>, vector<16x64xbf16>
    %cst = arith.constant dense<0.000000e+00> : vector<16x16xf32>
    %5 = tpu.matmul %3, %4, %cst {dimension_numbers = #tpu.dot_dimension_numbers<[1], [1], [0], [0], [0, 0, 1, 0], [], []>} : vector<16x64xbf16>, vector<16x64xbf16>, vector<16x16xf32> -> vector<16x16xf32>
    %cst_4 = arith.constant 5.000000e+00 : f32
    %6 = vector.broadcast %cst_4 : f32 to vector<16x16xf32>
    %7 = arith.mulf %5, %6 : vector<16x16xf32>
    %8 = arith.cmpi eq, %arg0, %arg1 : i32
    %9 = arith.extui %8 : i1 to i32
    %c0_i32_5 = arith.constant 0 : i32
    %10 = arith.cmpi ne, %9, %c0_i32_5 : i32
    scf.if %10 {
      %20 = tpu.iota {dimensions = array<i32: 0>} : vector<16x1xi32>
      %21 = tpu.iota {dimensions = array<i32: 1>} : vector<1x16xi32>
      %c0_12 = arith.constant 0 : index
      %c0_13 = arith.constant 0 : index
      %22 = vector.load %arg7[%c0_12, %c0_13] : memref<16x1xf32, #tpu.memory_space<vmem>>, vector<16x1xf32>
      %23 = vector.broadcast %20 : vector<16x1xi32> to vector<16x16xi32>
      %24 = vector.broadcast %21 : vector<1x16xi32> to vector<16x16xi32>
      %25 = arith.cmpi eq, %23, %24 : vector<16x16xi32>
      %cst_14 = arith.constant 0.000000e+00 : f32
      %26 = vector.broadcast %cst_14 : f32 to vector<16x16xf32>
      %27 = arith.select %25, %7, %26 : vector<16x16xi1>, vector<16x16xf32>
      %cst_15 = arith.constant dense<0.000000e+00> : vector<16xf32>
      %28 = vector.multi_reduction <add>, %27, %cst_15 [1] : vector<16x16xf32> to vector<16xf32>
      %29 = vector.shape_cast %28 : vector<16xf32> to vector<16x1xf32>
      %30 = arith.addf %22, %29 : vector<16x1xf32>
      %c0_16 = arith.constant 0 : index
      %c0_17 = arith.constant 0 : index
      %31 = vector.load %arg7[%c0_16, %c0_17] : memref<16x1xf32, #tpu.memory_space<vmem>>, vector<16x1xf32>
      tpu.vector_store %arg7[%c0_16, %c0_17], %30 {strides = array<i32>} : memref<16x1xf32, #tpu.memory_space<vmem>>, vector<16x1xf32>,
    } else {
    }
    %c0_i32_6 = arith.constant 0 : i32
    %11 = arith.cmpi slt, %arg1, %c0_i32_6 : i32
    %12 = arith.extui %11 : i1 to i32
    %c0_i32_7 = arith.constant 0 : i32
    %13 = arith.cmpi ne, %12, %c0_i32_7 : i32
    scf.if %13 {
      %c0_12 = arith.constant 0 : index
      %c0_13 = arith.constant 0 : index
      %20 = vector.load %arg5[%c0_12, %c0_13] : memref<16x1xf32, #tpu.memory_space<vmem>>, vector<16x1xf32>
      %cst_14 = arith.constant dense<0xFF800000> : vector<16xf32>
      %21 = vector.multi_reduction <maximumf>, %7, %cst_14 [1] : vector<16x16xf32> to vector<16xf32>
      %22 = vector.shape_cast %21 : vector<16xf32> to vector<16x1xf32>
      %23 = arith.maximumf %20, %22 : vector<16x1xf32>
      %c0_15 = arith.constant 0 : index
      %c0_16 = arith.constant 0 : index
      %24 = vector.load %arg5[%c0_15, %c0_16] : memref<16x1xf32, #tpu.memory_space<vmem>>, vector<16x1xf32>
      %25 = arith.subf %24, %23 : vector<16x1xf32>
      %26 = math.exp %25 : vector<16x1xf32>
      %c0_17 = arith.constant 0 : index
      %c0_18 = arith.constant 0 : index
      %27 = vector.load %arg6[%c0_17, %c0_18] : memref<16x1xf32, #tpu.memory_space<vmem>>, vector<16x1xf32>
      %28 = arith.mulf %26, %27 : vector<16x1xf32>
      %29 = vector.broadcast %23 : vector<16x1xf32> to vector<16x16xf32>
      %30 = arith.subf %7, %29 : vector<16x16xf32>
      %31 = math.exp %30 : vector<16x16xf32>
      %cst_19 = arith.constant dense<0.000000e+00> : vector<16xf32>
      %32 = vector.multi_reduction <add>, %31, %cst_19 [1] : vector<16x16xf32> to vector<16xf32>
      %33 = vector.shape_cast %32 : vector<16xf32> to vector<16x1xf32>
      %34 = arith.addf %28, %33 : vector<16x1xf32>
      %c0_20 = arith.constant 0 : index
      %c0_21 = arith.constant 0 : index
      %35 = vector.load %arg6[%c0_20, %c0_21] : memref<16x1xf32, #tpu.memory_space<vmem>>, vector<16x1xf32>
      tpu.vector_store %arg6[%c0_20, %c0_21], %34 {strides = array<i32>} : memref<16x1xf32, #tpu.memory_space<vmem>>, vector<16x1xf32>,
      %c0_22 = arith.constant 0 : index
      %c0_23 = arith.constant 0 : index
      %36 = vector.load %arg5[%c0_22, %c0_23] : memref<16x1xf32, #tpu.memory_space<vmem>>, vector<16x1xf32>
      tpu.vector_store %arg5[%c0_22, %c0_23], %23 {strides = array<i32>} : memref<16x1xf32, #tpu.memory_space<vmem>>, vector<16x1xf32>,
    } else {
    }
    %c0_i32_8 = arith.constant 0 : i32
    %14 = arith.cmpi eq, %arg1, %c0_i32_8 : i32
    %15 = arith.extui %14 : i1 to i32
    %c0_i32_9 = arith.constant 0 : i32
    %16 = arith.cmpi ne, %15, %c0_i32_9 : i32
    scf.if %16 {
      %20 = tpu.iota {dimensions = array<i32: 1>} : vector<1x16xi32>
      %c0_i32_12 = arith.constant 0 : i32
      %21 = vector.broadcast %c0_i32_12 : i32 to vector<1x16xi32>
      %22 = arith.addi %21, %20 : vector<1x16xi32>
      %c4_i32 = arith.constant 4 : i32
      %23 = vector.broadcast %c4_i32 : i32 to vector<1x16xi32>
      %24 = arith.cmpi slt, %22, %23 : vector<1x16xi32>
      %cst_13 = arith.constant -1.000000e+30 : f32
      %25 = vector.shape_cast %24 : vector<1x16xi1> to vector<1x16xi1>
      %26 = vector.broadcast %25 : vector<1x16xi1> to vector<16x16xi1>
      %27 = vector.broadcast %cst_13 : f32 to vector<16x16xf32>
      %28 = arith.select %26, %7, %27 : vector<16x16xi1>, vector<16x16xf32>
      %c0_14 = arith.constant 0 : index
      %c0_15 = arith.constant 0 : index
      %29 = vector.load %arg5[%c0_14, %c0_15] : memref<16x1xf32, #tpu.memory_space<vmem>>, vector<16x1xf32>
      %cst_16 = arith.constant dense<0xFF800000> : vector<16xf32>
      %30 = vector.multi_reduction <maximumf>, %28, %cst_16 [1] : vector<16x16xf32> to vector<16xf32>
      %31 = vector.shape_cast %30 : vector<16xf32> to vector<16x1xf32>
      %32 = arith.maximumf %29, %31 : vector<16x1xf32>
      %c0_17 = arith.constant 0 : index
      %c0_18 = arith.constant 0 : index
      %33 = vector.load %arg5[%c0_17, %c0_18] : memref<16x1xf32, #tpu.memory_space<vmem>>, vector<16x1xf32>
      %34 = arith.subf %33, %32 : vector<16x1xf32>
      %35 = math.exp %34 : vector<16x1xf32>
      %c0_19 = arith.constant 0 : index
      %c0_20 = arith.constant 0 : index
      %36 = vector.load %arg6[%c0_19, %c0_20] : memref<16x1xf32, #tpu.memory_space<vmem>>, vector<16x1xf32>
      %37 = arith.mulf %35, %36 : vector<16x1xf32>
      %38 = vector.broadcast %32 : vector<16x1xf32> to vector<16x16xf32>
      %39 = arith.subf %28, %38 : vector<16x16xf32>
      %40 = math.exp %39 : vector<16x16xf32>
      %cst_21 = arith.constant dense<0.000000e+00> : vector<16xf32>
      %41 = vector.multi_reduction <add>, %40, %cst_21 [1] : vector<16x16xf32> to vector<16xf32>
      %42 = vector.shape_cast %41 : vector<16xf32> to vector<16x1xf32>
      %43 = arith.addf %37, %42 : vector<16x1xf32>
      %c0_22 = arith.constant 0 : index
      %c0_23 = arith.constant 0 : index
      %44 = vector.load %arg6[%c0_22, %c0_23] : memref<16x1xf32, #tpu.memory_space<vmem>>, vector<16x1xf32>
      tpu.vector_store %arg6[%c0_22, %c0_23], %43 {strides = array<i32>} : memref<16x1xf32, #tpu.memory_space<vmem>>, vector<16x1xf32>,
      %c0_24 = arith.constant 0 : index
      %c0_25 = arith.constant 0 : index
      %45 = vector.load %arg5[%c0_24, %c0_25] : memref<16x1xf32, #tpu.memory_space<vmem>>, vector<16x1xf32>
      tpu.vector_store %arg5[%c0_24, %c0_25], %32 {strides = array<i32>} : memref<16x1xf32, #tpu.memory_space<vmem>>, vector<16x1xf32>,
    } else {
    }
    %c0_i32_10 = arith.constant 0 : i32
    %17 = arith.cmpi eq, %arg1, %c0_i32_10 : i32
    %18 = arith.extui %17 : i1 to i32
    %c0_i32_11 = arith.constant 0 : i32
    %19 = arith.cmpi ne, %18, %c0_i32_11 : i32
    scf.if %19 {
      %c16_i32 = arith.constant 16 : i32
      %20 = arith.muli %arg0, %c16_i32 : i32
      %21 = tpu.iota {dimensions = array<i32: 0>} : vector<16x1xi32>
      %22 = vector.broadcast %20 : i32 to vector<16x1xi32>
      %23 = arith.addi %22, %21 : vector<16x1xi32>
      %c4_i32 = arith.constant 4 : i32
      %24 = vector.broadcast %c4_i32 : i32 to vector<16x1xi32>
      %25 = arith.cmpi slt, %23, %24 : vector<16x1xi32>
      %26 = arith.extui %25 : vector<16x1xi1> to vector<16x1xi32>
      %27 = arith.sitofp %26 : vector<16x1xi32> to vector<16x1xf32>
      %c0_12 = arith.constant 0 : index
      %c0_13 = arith.constant 0 : index
      %28 = vector.load %arg5[%c0_12, %c0_13] : memref<16x1xf32, #tpu.memory_space<vmem>>, vector<16x1xf32>
      %c0_14 = arith.constant 0 : index
      %c0_15 = arith.constant 0 : index
      %29 = vector.load %arg6[%c0_14, %c0_15] : memref<16x1xf32, #tpu.memory_space<vmem>>, vector<16x1xf32>
      %30 = math.log %29 : vector<16x1xf32>
      %31 = arith.addf %28, %30 : vector<16x1xf32>
      %c0_16 = arith.constant 0 : index
      %c0_17 = arith.constant 0 : index
      %32 = vector.load %arg7[%c0_16, %c0_17] : memref<16x1xf32, #tpu.memory_space<vmem>>, vector<16x1xf32>
      %33 = arith.subf %31, %32 : vector<16x1xf32>
      %34 = arith.mulf %33, %27 : vector<16x1xf32>
      %c0_18 = arith.constant 0 : index
      %c0_19 = arith.constant 0 : index
      %35 = vector.load %arg4[%c0_18, %c0_19] : memref<16x1xf32, #tpu.memory_space<vmem>>, vector<16x1xf32>
      tpu.vector_store %arg4[%c0_18, %c0_19], %34 {strides = array<i32>} : memref<16x1xf32, #tpu.memory_space<vmem>>, vector<16x1xf32>,
    } else {
    }
    return
  }
  func.func @transform_0(%arg0: i32, %arg1: i32) -> (i32, i32) {
    %c0_i32 = arith.constant 0 : i32
    %c0_i32_0 = arith.constant 0 : i32
    return %arg0, %c0_i32 : i32, i32
  }
  func.func @transform_1(%arg0: i32, %arg1: i32) -> (i32, i32) {
    %c0_i32 = arith.constant 0 : i32
    %c0_i32_0 = arith.constant 0 : i32
    return %arg1, %c0_i32 : i32, i32
  }
  func.func @transform_2(%arg0: i32, %arg1: i32) -> (i32, i32) {
    %c0_i32 = arith.constant 0 : i32
    %c0_i32_0 = arith.constant 0 : i32
    return %arg0, %c0_i32 : i32, i32
  }
}

module attributes {stable_mosaic.version = 11 : i64} {
  func.func @_encoder_pair_kernel(%arg0: i32, %arg1: memref<48x32xbf16, #tpu.memory_space<vmem>>, %arg2: memref<48x48xbf16, #tpu.memory_space<vmem>>, %arg3: memref<48x64xbf16, #tpu.memory_space<vmem>>, %arg4: memref<48x128xf32, #tpu.memory_space<vmem>>, %arg5: memref<48x1xf32, #tpu.memory_space<vmem>>, %arg6: memref<32x32xbf16, #tpu.memory_space<vmem>>, %arg7: memref<1x32xf32, #tpu.memory_space<vmem>>, %arg8: memref<32x256xbf16, #tpu.memory_space<vmem>>, %arg9: memref<1x256xf32, #tpu.memory_space<vmem>>, %arg10: memref<256x64xbf16, #tpu.memory_space<vmem>>, %arg11: memref<1x64xf32, #tpu.memory_space<vmem>>, %arg12: memref<48x48xbf16, #tpu.memory_space<vmem>>, %arg13: memref<1x48xf32, #tpu.memory_space<vmem>>, %arg14: memref<48x256xbf16, #tpu.memory_space<vmem>>, %arg15: memref<1x256xf32, #tpu.memory_space<vmem>>, %arg16: memref<256x64xbf16, #tpu.memory_space<vmem>>, %arg17: memref<1x64xf32, #tpu.memory_space<vmem>>, %arg18: memref<64x64xbf16, #tpu.memory_space<vmem>>, %arg19: memref<1x64xf32, #tpu.memory_space<vmem>>, %arg20: memref<64x192xbf16, #tpu.memory_space<vmem>>, %arg21: memref<1x2xf32, #tpu.memory_space<smem>>, %arg22: memref<32x32xbf16, #tpu.memory_space<vmem>>, %arg23: memref<1x32xf32, #tpu.memory_space<vmem>>, %arg24: memref<32x256xbf16, #tpu.memory_space<vmem>>, %arg25: memref<1x256xf32, #tpu.memory_space<vmem>>, %arg26: memref<256x64xbf16, #tpu.memory_space<vmem>>, %arg27: memref<1x64xf32, #tpu.memory_space<vmem>>, %arg28: memref<48x48xbf16, #tpu.memory_space<vmem>>, %arg29: memref<1x48xf32, #tpu.memory_space<vmem>>, %arg30: memref<48x256xbf16, #tpu.memory_space<vmem>>, %arg31: memref<1x256xf32, #tpu.memory_space<vmem>>, %arg32: memref<256x64xbf16, #tpu.memory_space<vmem>>, %arg33: memref<1x64xf32, #tpu.memory_space<vmem>>, %arg34: memref<64x64xbf16, #tpu.memory_space<vmem>>, %arg35: memref<1x64xf32, #tpu.memory_space<vmem>>, %arg36: memref<64x192xbf16, #tpu.memory_space<vmem>>, %arg37: memref<1x2xf32, #tpu.memory_space<smem>>, %arg38: memref<48x128xbf16, #tpu.memory_space<vmem>>) attributes {dimension_semantics = [#tpu.dimension_semantics<parallel>], iteration_bounds = array<i64: 1>, scalar_prefetch = 0 : i64, scratch_operands = 0 : i64, tpu.core_type = #tpu.core_type<tc>, window_params = [{transform_indices = @transform_0, window_bounds = array<i64: 48, 32>}, {transform_indices = @transform_1, window_bounds = array<i64: 48, 48>}, {transform_indices = @transform_2, window_bounds = array<i64: 48, 64>}, {transform_indices = @transform_3, window_bounds = array<i64: 48, 128>}, {transform_indices = @transform_4, window_bounds = array<i64: 48, 1>}, {pipeline_mode = #tpu.pipeline_mode<synchronous>, transform_indices = @transform_5, window_bounds = array<i64: 32, 32>}, {pipeline_mode = #tpu.pipeline_mode<synchronous>, transform_indices = @transform_6, window_bounds = array<i64: 1, 32>}, {pipeline_mode = #tpu.pipeline_mode<synchronous>, transform_indices = @transform_7, window_bounds = array<i64: 32, 256>}, {pipeline_mode = #tpu.pipeline_mode<synchronous>, transform_indices = @transform_8, window_bounds = array<i64: 1, 256>}, {pipeline_mode = #tpu.pipeline_mode<synchronous>, transform_indices = @transform_9, window_bounds = array<i64: 256, 64>}, {pipeline_mode = #tpu.pipeline_mode<synchronous>, transform_indices = @transform_10, window_bounds = array<i64: 1, 64>}, {pipeline_mode = #tpu.pipeline_mode<synchronous>, transform_indices = @transform_11, window_bounds = array<i64: 48, 48>}, {pipeline_mode = #tpu.pipeline_mode<synchronous>, transform_indices = @transform_12, window_bounds = array<i64: 1, 48>}, {pipeline_mode = #tpu.pipeline_mode<synchronous>, transform_indices = @transform_13, window_bounds = array<i64: 48, 256>}, {pipeline_mode = #tpu.pipeline_mode<synchronous>, transform_indices = @transform_14, window_bounds = array<i64: 1, 256>}, {pipeline_mode = #tpu.pipeline_mode<synchronous>, transform_indices = @transform_15, window_bounds = array<i64: 256, 64>}, {pipeline_mode = #tpu.pipeline_mode<synchronous>, transform_indices = @transform_16, window_bounds = array<i64: 1, 64>}, {pipeline_mode = #tpu.pipeline_mode<synchronous>, transform_indices = @transform_17, window_bounds = array<i64: 64, 64>}, {pipeline_mode = #tpu.pipeline_mode<synchronous>, transform_indices = @transform_18, window_bounds = array<i64: 1, 64>}, {pipeline_mode = #tpu.pipeline_mode<synchronous>, transform_indices = @transform_19, window_bounds = array<i64: 64, 192>}, {transform_indices = @transform_20, window_bounds = array<i64: 1, 2>}, {pipeline_mode = #tpu.pipeline_mode<synchronous>, transform_indices = @transform_21, window_bounds = array<i64: 32, 32>}, {pipeline_mode = #tpu.pipeline_mode<synchronous>, transform_indices = @transform_22, window_bounds = array<i64: 1, 32>}, {pipeline_mode = #tpu.pipeline_mode<synchronous>, transform_indices = @transform_23, window_bounds = array<i64: 32, 256>}, {pipeline_mode = #tpu.pipeline_mode<synchronous>, transform_indices = @transform_24, window_bounds = array<i64: 1, 256>}, {pipeline_mode = #tpu.pipeline_mode<synchronous>, transform_indices = @transform_25, window_bounds = array<i64: 256, 64>}, {pipeline_mode = #tpu.pipeline_mode<synchronous>, transform_indices = @transform_26, window_bounds = array<i64: 1, 64>}, {pipeline_mode = #tpu.pipeline_mode<synchronous>, transform_indices = @transform_27, window_bounds = array<i64: 48, 48>}, {pipeline_mode = #tpu.pipeline_mode<synchronous>, transform_indices = @transform_28, window_bounds = array<i64: 1, 48>}, {pipeline_mode = #tpu.pipeline_mode<synchronous>, transform_indices = @transform_29, window_bounds = array<i64: 48, 256>}, {pipeline_mode = #tpu.pipeline_mode<synchronous>, transform_indices = @transform_30, window_bounds = array<i64: 1, 256>}, {pipeline_mode = #tpu.pipeline_mode<synchronous>, transform_indices = @transform_31, window_bounds = array<i64: 256, 64>}, {pipeline_mode = #tpu.pipeline_mode<synchronous>, transform_indices = @transform_32, window_bounds = array<i64: 1, 64>}, {pipeline_mode = #tpu.pipeline_mode<synchronous>, transform_indices = @transform_33, window_bounds = array<i64: 64, 64>}, {pipeline_mode = #tpu.pipeline_mode<synchronous>, transform_indices = @transform_34, window_bounds = array<i64: 1, 64>}, {pipeline_mode = #tpu.pipeline_mode<synchronous>, transform_indices = @transform_35, window_bounds = array<i64: 64, 192>}, {transform_indices = @transform_36, window_bounds = array<i64: 1, 2>}, {transform_indices = @transform_37, window_bounds = array<i64: 48, 128>}]} {
    %c0 = arith.constant 0 : index
    %c0_0 = arith.constant 0 : index
    %0 = vector.load %arg1[%c0, %c0_0] : memref<48x32xbf16, #tpu.memory_space<vmem>>, vector<48x32xbf16>
    %c0_1 = arith.constant 0 : index
    %c0_2 = arith.constant 0 : index
    %1 = vector.load %arg2[%c0_1, %c0_2] : memref<48x48xbf16, #tpu.memory_space<vmem>>, vector<48x48xbf16>
    %c0_3 = arith.constant 0 : index
    %c0_4 = arith.constant 0 : index
    %2 = vector.load %arg3[%c0_3, %c0_4] : memref<48x64xbf16, #tpu.memory_space<vmem>>, vector<48x64xbf16>
    %c0_5 = arith.constant 0 : index
    %c0_6 = arith.constant 0 : index
    %3 = vector.load %arg5[%c0_5, %c0_6] : memref<48x1xf32, #tpu.memory_space<vmem>>, vector<48x1xf32>
    %c0_7 = arith.constant 0 : index
    %c0_8 = arith.constant 0 : index
    %4 = vector.load %arg4[%c0_7, %c0_8] : memref<48x128xf32, #tpu.memory_space<vmem>>, vector<48x128xf32>
    %5 = vector.extract_strided_slice %4 {offsets = [0, 0], sizes = [48, 64], strides = [1, 1]} : vector<48x128xf32> to vector<48x64xf32>
    %c0_9 = arith.constant 0 : index
    %c0_10 = arith.constant 0 : index
    %6 = vector.load %arg6[%c0_9, %c0_10] : memref<32x32xbf16, #tpu.memory_space<vmem>>, vector<32x32xbf16>
    %cst = arith.constant dense<0.000000e+00> : vector<48x32xf32>
    %7 = tpu.matmul %0, %6, %cst {dimension_numbers = #tpu.dot_dimension_numbers<[1], [0], [0], [1], [0, 0, 1, 1], [], []>} : vector<48x32xbf16>, vector<32x32xbf16>, vector<48x32xf32> -> vector<48x32xf32>
    %c0_11 = arith.constant 0 : index
    %c0_12 = arith.constant 0 : index
    %8 = vector.load %arg7[%c0_11, %c0_12] : memref<1x32xf32, #tpu.memory_space<vmem>>, vector<1x32xf32>
    %9 = vector.broadcast %8 : vector<1x32xf32> to vector<48x32xf32>
    %10 = arith.addf %7, %9 : vector<48x32xf32>
    %cst_13 = arith.constant 0.000000e+00 : f32
    %11 = vector.broadcast %cst_13 : f32 to vector<48x32xf32>
    %12 = arith.maximumf %10, %11 : vector<48x32xf32>
    %13 = arith.truncf %12 : vector<48x32xf32> to vector<48x32xbf16>
    %c0_14 = arith.constant 0 : index
    %c0_15 = arith.constant 0 : index
    %14 = vector.load %arg8[%c0_14, %c0_15] : memref<32x256xbf16, #tpu.memory_space<vmem>>, vector<32x256xbf16>
    %cst_16 = arith.constant dense<0.000000e+00> : vector<48x256xf32>
    %15 = tpu.matmul %13, %14, %cst_16 {dimension_numbers = #tpu.dot_dimension_numbers<[1], [0], [0], [1], [0, 0, 1, 1], [], []>} : vector<48x32xbf16>, vector<32x256xbf16>, vector<48x256xf32> -> vector<48x256xf32>
    %c0_17 = arith.constant 0 : index
    %c0_18 = arith.constant 0 : index
    %16 = vector.load %arg9[%c0_17, %c0_18] : memref<1x256xf32, #tpu.memory_space<vmem>>, vector<1x256xf32>
    %17 = vector.broadcast %16 : vector<1x256xf32> to vector<48x256xf32>
    %18 = arith.addf %15, %17 : vector<48x256xf32>
    %cst_19 = arith.constant 0.000000e+00 : f32
    %19 = vector.broadcast %cst_19 : f32 to vector<48x256xf32>
    %20 = arith.maximumf %18, %19 : vector<48x256xf32>
    %21 = arith.truncf %20 : vector<48x256xf32> to vector<48x256xbf16>
    %c0_20 = arith.constant 0 : index
    %c0_21 = arith.constant 0 : index
    %22 = vector.load %arg10[%c0_20, %c0_21] : memref<256x64xbf16, #tpu.memory_space<vmem>>, vector<256x64xbf16>
    %cst_22 = arith.constant dense<0.000000e+00> : vector<48x64xf32>
    %23 = tpu.matmul %21, %22, %cst_22 {dimension_numbers = #tpu.dot_dimension_numbers<[1], [0], [0], [1], [0, 0, 1, 1], [], []>} : vector<48x256xbf16>, vector<256x64xbf16>, vector<48x64xf32> -> vector<48x64xf32>
    %c0_23 = arith.constant 0 : index
    %c0_24 = arith.constant 0 : index
    %24 = vector.load %arg11[%c0_23, %c0_24] : memref<1x64xf32, #tpu.memory_space<vmem>>, vector<1x64xf32>
    %25 = vector.broadcast %24 : vector<1x64xf32> to vector<48x64xf32>
    %26 = arith.addf %23, %25 : vector<48x64xf32>
    %c0_25 = arith.constant 0 : index
    %c0_26 = arith.constant 0 : index
    %27 = vector.load %arg12[%c0_25, %c0_26] : memref<48x48xbf16, #tpu.memory_space<vmem>>, vector<48x48xbf16>
    %cst_27 = arith.constant dense<0.000000e+00> : vector<48x48xf32>
    %28 = tpu.matmul %1, %27, %cst_27 {dimension_numbers = #tpu.dot_dimension_numbers<[1], [0], [0], [1], [0, 0, 1, 1], [], []>} : vector<48x48xbf16>, vector<48x48xbf16>, vector<48x48xf32> -> vector<48x48xf32>
    %c0_28 = arith.constant 0 : index
    %c0_29 = arith.constant 0 : index
    %29 = vector.load %arg13[%c0_28, %c0_29] : memref<1x48xf32, #tpu.memory_space<vmem>>, vector<1x48xf32>
    %30 = vector.broadcast %29 : vector<1x48xf32> to vector<48x48xf32>
    %31 = arith.addf %28, %30 : vector<48x48xf32>
    %cst_30 = arith.constant 0.000000e+00 : f32
    %32 = vector.broadcast %cst_30 : f32 to vector<48x48xf32>
    %33 = arith.maximumf %31, %32 : vector<48x48xf32>
    %34 = arith.truncf %33 : vector<48x48xf32> to vector<48x48xbf16>
    %c0_31 = arith.constant 0 : index
    %c0_32 = arith.constant 0 : index
    %35 = vector.load %arg14[%c0_31, %c0_32] : memref<48x256xbf16, #tpu.memory_space<vmem>>, vector<48x256xbf16>
    %cst_33 = arith.constant dense<0.000000e+00> : vector<48x256xf32>
    %36 = tpu.matmul %34, %35, %cst_33 {dimension_numbers = #tpu.dot_dimension_numbers<[1], [0], [0], [1], [0, 0, 1, 1], [], []>} : vector<48x48xbf16>, vector<48x256xbf16>, vector<48x256xf32> -> vector<48x256xf32>
    %c0_34 = arith.constant 0 : index
    %c0_35 = arith.constant 0 : index
    %37 = vector.load %arg15[%c0_34, %c0_35] : memref<1x256xf32, #tpu.memory_space<vmem>>, vector<1x256xf32>
    %38 = vector.broadcast %37 : vector<1x256xf32> to vector<48x256xf32>
    %39 = arith.addf %36, %38 : vector<48x256xf32>
    %cst_36 = arith.constant 0.000000e+00 : f32
    %40 = vector.broadcast %cst_36 : f32 to vector<48x256xf32>
    %41 = arith.maximumf %39, %40 : vector<48x256xf32>
    %42 = arith.truncf %41 : vector<48x256xf32> to vector<48x256xbf16>
    %c0_37 = arith.constant 0 : index
    %c0_38 = arith.constant 0 : index
    %43 = vector.load %arg16[%c0_37, %c0_38] : memref<256x64xbf16, #tpu.memory_space<vmem>>, vector<256x64xbf16>
    %cst_39 = arith.constant dense<0.000000e+00> : vector<48x64xf32>
    %44 = tpu.matmul %42, %43, %cst_39 {dimension_numbers = #tpu.dot_dimension_numbers<[1], [0], [0], [1], [0, 0, 1, 1], [], []>} : vector<48x256xbf16>, vector<256x64xbf16>, vector<48x64xf32> -> vector<48x64xf32>
    %c0_40 = arith.constant 0 : index
    %c0_41 = arith.constant 0 : index
    %45 = vector.load %arg17[%c0_40, %c0_41] : memref<1x64xf32, #tpu.memory_space<vmem>>, vector<1x64xf32>
    %46 = vector.broadcast %45 : vector<1x64xf32> to vector<48x64xf32>
    %47 = arith.addf %44, %46 : vector<48x64xf32>
    %c0_42 = arith.constant 0 : index
    %c0_43 = arith.constant 0 : index
    %48 = memref.load %arg21[%c0_42, %c0_43] : memref<1x2xf32, #tpu.memory_space<smem>>
    %49 = arith.mulf %26, %26 : vector<48x64xf32>
    %cst_44 = arith.constant dense<0.000000e+00> : vector<48xf32>
    %50 = vector.multi_reduction <add>, %49, %cst_44 [1] : vector<48x64xf32> to vector<48xf32>
    %51 = vector.shape_cast %50 : vector<48xf32> to vector<48x1xf32>
    %cst_45 = arith.constant 1.000000e-24 : f32
    %52 = vector.broadcast %cst_45 : f32 to vector<48x1xf32>
    %53 = arith.maximumf %51, %52 : vector<48x1xf32>
    %54 = math.rsqrt %53 : vector<48x1xf32>
    %55 = vector.broadcast %54 : vector<48x1xf32> to vector<48x64xf32>
    %56 = arith.mulf %26, %55 : vector<48x64xf32>
    %57 = vector.broadcast %48 : f32 to vector<48x64xf32>
    %58 = arith.mulf %57, %56 : vector<48x64xf32>
    %c0_46 = arith.constant 0 : index
    %c1 = arith.constant 1 : index
    %59 = memref.load %arg21[%c0_46, %c1] : memref<1x2xf32, #tpu.memory_space<smem>>
    %60 = arith.mulf %47, %47 : vector<48x64xf32>
    %cst_47 = arith.constant dense<0.000000e+00> : vector<48xf32>
    %61 = vector.multi_reduction <add>, %60, %cst_47 [1] : vector<48x64xf32> to vector<48xf32>
    %62 = vector.shape_cast %61 : vector<48xf32> to vector<48x1xf32>
    %cst_48 = arith.constant 1.000000e-24 : f32
    %63 = vector.broadcast %cst_48 : f32 to vector<48x1xf32>
    %64 = arith.maximumf %62, %63 : vector<48x1xf32>
    %65 = math.rsqrt %64 : vector<48x1xf32>
    %66 = vector.broadcast %65 : vector<48x1xf32> to vector<48x64xf32>
    %67 = arith.mulf %47, %66 : vector<48x64xf32>
    %68 = vector.broadcast %59 : f32 to vector<48x64xf32>
    %69 = arith.mulf %68, %67 : vector<48x64xf32>
    %70 = arith.addf %58, %69 : vector<48x64xf32>
    %c0_49 = arith.constant 0 : index
    %c0_50 = arith.constant 0 : index
    %71 = vector.load %arg18[%c0_49, %c0_50] : memref<64x64xbf16, #tpu.memory_space<vmem>>, vector<64x64xbf16>
    %cst_51 = arith.constant dense<0.000000e+00> : vector<48x64xf32>
    %72 = tpu.matmul %2, %71, %cst_51 {dimension_numbers = #tpu.dot_dimension_numbers<[1], [0], [0], [1], [0, 0, 1, 1], [], []>} : vector<48x64xbf16>, vector<64x64xbf16>, vector<48x64xf32> -> vector<48x64xf32>
    %c0_52 = arith.constant 0 : index
    %c0_53 = arith.constant 0 : index
    %73 = vector.load %arg19[%c0_52, %c0_53] : memref<1x64xf32, #tpu.memory_space<vmem>>, vector<1x64xf32>
    %74 = vector.broadcast %73 : vector<1x64xf32> to vector<48x64xf32>
    %75 = arith.addf %72, %74 : vector<48x64xf32>
    %76 = vector.broadcast %3 : vector<48x1xf32> to vector<48x64xf32>
    %77 = arith.mulf %76, %70 : vector<48x64xf32>
    %cst_54 = arith.constant 1.000000e+00 : f32
    %78 = vector.broadcast %cst_54 : f32 to vector<48x1xf32>
    %79 = arith.subf %78, %3 : vector<48x1xf32>
    %80 = vector.broadcast %79 : vector<48x1xf32> to vector<48x64xf32>
    %81 = arith.mulf %80, %75 : vector<48x64xf32>
    %82 = arith.addf %77, %81 : vector<48x64xf32>
    %83 = arith.mulf %70, %70 : vector<48x64xf32>
    %cst_55 = arith.constant dense<0.000000e+00> : vector<48xf32>
    %84 = vector.multi_reduction <add>, %83, %cst_55 [1] : vector<48x64xf32> to vector<48xf32>
    %85 = vector.shape_cast %84 : vector<48xf32> to vector<48x1xf32>
    %cst_56 = arith.constant 1.000000e-24 : f32
    %86 = vector.broadcast %cst_56 : f32 to vector<48x1xf32>
    %87 = arith.maximumf %85, %86 : vector<48x1xf32>
    %88 = math.rsqrt %87 : vector<48x1xf32>
    %89 = vector.broadcast %88 : vector<48x1xf32> to vector<48x64xf32>
    %90 = arith.mulf %70, %89 : vector<48x64xf32>
    %cst_57 = arith.constant dense<0.000000e+00> : vector<48xf32>
    %91 = vector.multi_reduction <add>, %90, %cst_57 [1] : vector<48x64xf32> to vector<48xf32>
    %92 = vector.shape_cast %91 : vector<48xf32> to vector<48x1xf32>
    %cst_58 = arith.constant 6.400000e+01 : f32
    %93 = vector.broadcast %cst_58 : f32 to vector<48x1xf32>
    %94 = arith.divf %92, %93 : vector<48x1xf32>
    %95 = vector.broadcast %94 : vector<48x1xf32> to vector<48x64xf32>
    %96 = arith.subf %90, %95 : vector<48x64xf32>
    %97 = arith.mulf %96, %96 : vector<48x64xf32>
    %cst_59 = arith.constant dense<0.000000e+00> : vector<48xf32>
    %98 = vector.multi_reduction <add>, %97, %cst_59 [1] : vector<48x64xf32> to vector<48xf32>
    %99 = vector.shape_cast %98 : vector<48xf32> to vector<48x1xf32>
    %cst_60 = arith.constant 6.400000e+01 : f32
    %100 = vector.broadcast %cst_60 : f32 to vector<48x1xf32>
    %101 = arith.divf %99, %100 : vector<48x1xf32>
    %102 = vector.broadcast %94 : vector<48x1xf32> to vector<48x64xf32>
    %103 = arith.subf %90, %102 : vector<48x64xf32>
    %cst_61 = arith.constant 9.99999974E-6 : f32
    %104 = vector.broadcast %cst_61 : f32 to vector<48x1xf32>
    %105 = arith.addf %101, %104 : vector<48x1xf32>
    %106 = math.rsqrt %105 : vector<48x1xf32>
    %107 = vector.broadcast %106 : vector<48x1xf32> to vector<48x64xf32>
    %108 = arith.mulf %103, %107 : vector<48x64xf32>
    %109 = arith.mulf %5, %5 : vector<48x64xf32>
    %cst_62 = arith.constant dense<0.000000e+00> : vector<48xf32>
    %110 = vector.multi_reduction <add>, %109, %cst_62 [1] : vector<48x64xf32> to vector<48xf32>
    %111 = vector.shape_cast %110 : vector<48xf32> to vector<48x1xf32>
    %cst_63 = arith.constant 1.000000e-24 : f32
    %112 = vector.broadcast %cst_63 : f32 to vector<48x1xf32>
    %113 = arith.maximumf %111, %112 : vector<48x1xf32>
    %114 = math.rsqrt %113 : vector<48x1xf32>
    %115 = vector.broadcast %114 : vector<48x1xf32> to vector<48x64xf32>
    %116 = arith.mulf %5, %115 : vector<48x64xf32>
    %cst_64 = arith.constant dense<0.000000e+00> : vector<48xf32>
    %117 = vector.multi_reduction <add>, %116, %cst_64 [1] : vector<48x64xf32> to vector<48xf32>
    %118 = vector.shape_cast %117 : vector<48xf32> to vector<48x1xf32>
    %cst_65 = arith.constant 6.400000e+01 : f32
    %119 = vector.broadcast %cst_65 : f32 to vector<48x1xf32>
    %120 = arith.divf %118, %119 : vector<48x1xf32>
    %121 = vector.broadcast %120 : vector<48x1xf32> to vector<48x64xf32>
    %122 = arith.subf %116, %121 : vector<48x64xf32>
    %123 = arith.mulf %122, %122 : vector<48x64xf32>
    %cst_66 = arith.constant dense<0.000000e+00> : vector<48xf32>
    %124 = vector.multi_reduction <add>, %123, %cst_66 [1] : vector<48x64xf32> to vector<48xf32>
    %125 = vector.shape_cast %124 : vector<48xf32> to vector<48x1xf32>
    %cst_67 = arith.constant 6.400000e+01 : f32
    %126 = vector.broadcast %cst_67 : f32 to vector<48x1xf32>
    %127 = arith.divf %125, %126 : vector<48x1xf32>
    %128 = vector.broadcast %120 : vector<48x1xf32> to vector<48x64xf32>
    %129 = arith.subf %116, %128 : vector<48x64xf32>
    %cst_68 = arith.constant 9.99999974E-6 : f32
    %130 = vector.broadcast %cst_68 : f32 to vector<48x1xf32>
    %131 = arith.addf %127, %130 : vector<48x1xf32>
    %132 = math.rsqrt %131 : vector<48x1xf32>
    %133 = vector.broadcast %132 : vector<48x1xf32> to vector<48x64xf32>
    %134 = arith.mulf %129, %133 : vector<48x64xf32>
    %135 = arith.mulf %82, %82 : vector<48x64xf32>
    %cst_69 = arith.constant dense<0.000000e+00> : vector<48xf32>
    %136 = vector.multi_reduction <add>, %135, %cst_69 [1] : vector<48x64xf32> to vector<48xf32>
    %137 = vector.shape_cast %136 : vector<48xf32> to vector<48x1xf32>
    %cst_70 = arith.constant 1.000000e-24 : f32
    %138 = vector.broadcast %cst_70 : f32 to vector<48x1xf32>
    %139 = arith.maximumf %137, %138 : vector<48x1xf32>
    %140 = math.rsqrt %139 : vector<48x1xf32>
    %141 = vector.broadcast %140 : vector<48x1xf32> to vector<48x64xf32>
    %142 = arith.mulf %82, %141 : vector<48x64xf32>
    %cst_71 = arith.constant dense<0.000000e+00> : vector<48xf32>
    %143 = vector.multi_reduction <add>, %142, %cst_71 [1] : vector<48x64xf32> to vector<48xf32>
    %144 = vector.shape_cast %143 : vector<48xf32> to vector<48x1xf32>
    %cst_72 = arith.constant 6.400000e+01 : f32
    %145 = vector.broadcast %cst_72 : f32 to vector<48x1xf32>
    %146 = arith.divf %144, %145 : vector<48x1xf32>
    %147 = vector.broadcast %146 : vector<48x1xf32> to vector<48x64xf32>
    %148 = arith.subf %142, %147 : vector<48x64xf32>
    %149 = arith.mulf %148, %148 : vector<48x64xf32>
    %cst_73 = arith.constant dense<0.000000e+00> : vector<48xf32>
    %150 = vector.multi_reduction <add>, %149, %cst_73 [1] : vector<48x64xf32> to vector<48xf32>
    %151 = vector.shape_cast %150 : vector<48xf32> to vector<48x1xf32>
    %cst_74 = arith.constant 6.400000e+01 : f32
    %152 = vector.broadcast %cst_74 : f32 to vector<48x1xf32>
    %153 = arith.divf %151, %152 : vector<48x1xf32>
    %154 = vector.broadcast %146 : vector<48x1xf32> to vector<48x64xf32>
    %155 = arith.subf %142, %154 : vector<48x64xf32>
    %cst_75 = arith.constant 9.99999974E-6 : f32
    %156 = vector.broadcast %cst_75 : f32 to vector<48x1xf32>
    %157 = arith.addf %153, %156 : vector<48x1xf32>
    %158 = math.rsqrt %157 : vector<48x1xf32>
    %159 = vector.broadcast %158 : vector<48x1xf32> to vector<48x64xf32>
    %160 = arith.mulf %155, %159 : vector<48x64xf32>
    %161 = arith.truncf %108 : vector<48x64xf32> to vector<48x64xbf16>
    %c0_76 = arith.constant 0 : index
    %c0_77 = arith.constant 0 : index
    %162 = vector.load %arg20[%c0_76, %c0_77] : memref<64x192xbf16, #tpu.memory_space<vmem>>, vector<64x192xbf16>
    %cst_78 = arith.constant dense<0.000000e+00> : vector<48x192xf32>
    %163 = tpu.matmul %161, %162, %cst_78 {dimension_numbers = #tpu.dot_dimension_numbers<[1], [0], [0], [1], [0, 0, 1, 1], [], []>} : vector<48x64xbf16>, vector<64x192xbf16>, vector<48x192xf32> -> vector<48x192xf32>
    %164 = vector.extract_strided_slice %163 {offsets = [0, 0], sizes = [48, 64], strides = [1, 1]} : vector<48x192xf32> to vector<48x64xf32>
    %165 = vector.extract_strided_slice %163 {offsets = [0, 64], sizes = [48, 64], strides = [1, 1]} : vector<48x192xf32> to vector<48x64xf32>
    %166 = vector.extract_strided_slice %163 {offsets = [0, 128], sizes = [48, 64], strides = [1, 1]} : vector<48x192xf32> to vector<48x64xf32>
    %167 = arith.truncf %134 : vector<48x64xf32> to vector<48x64xbf16>
    %c0_79 = arith.constant 0 : index
    %c0_80 = arith.constant 0 : index
    %168 = vector.load %arg20[%c0_79, %c0_80] : memref<64x192xbf16, #tpu.memory_space<vmem>>, vector<64x192xbf16>
    %cst_81 = arith.constant dense<0.000000e+00> : vector<48x192xf32>
    %169 = tpu.matmul %167, %168, %cst_81 {dimension_numbers = #tpu.dot_dimension_numbers<[1], [0], [0], [1], [0, 0, 1, 1], [], []>} : vector<48x64xbf16>, vector<64x192xbf16>, vector<48x192xf32> -> vector<48x192xf32>
    %170 = vector.extract_strided_slice %169 {offsets = [0, 0], sizes = [48, 64], strides = [1, 1]} : vector<48x192xf32> to vector<48x64xf32>
    %171 = vector.extract_strided_slice %169 {offsets = [0, 64], sizes = [48, 64], strides = [1, 1]} : vector<48x192xf32> to vector<48x64xf32>
    %172 = vector.extract_strided_slice %169 {offsets = [0, 128], sizes = [48, 64], strides = [1, 1]} : vector<48x192xf32> to vector<48x64xf32>
    %173 = arith.truncf %160 : vector<48x64xf32> to vector<48x64xbf16>
    %c0_82 = arith.constant 0 : index
    %c0_83 = arith.constant 0 : index
    %174 = vector.load %arg20[%c0_82, %c0_83] : memref<64x192xbf16, #tpu.memory_space<vmem>>, vector<64x192xbf16>
    %cst_84 = arith.constant dense<0.000000e+00> : vector<48x192xf32>
    %175 = tpu.matmul %173, %174, %cst_84 {dimension_numbers = #tpu.dot_dimension_numbers<[1], [0], [0], [1], [0, 0, 1, 1], [], []>} : vector<48x64xbf16>, vector<64x192xbf16>, vector<48x192xf32> -> vector<48x192xf32>
    %176 = vector.extract_strided_slice %175 {offsets = [0, 0], sizes = [48, 64], strides = [1, 1]} : vector<48x192xf32> to vector<48x64xf32>
    %177 = vector.extract_strided_slice %175 {offsets = [0, 64], sizes = [48, 64], strides = [1, 1]} : vector<48x192xf32> to vector<48x64xf32>
    %178 = vector.extract_strided_slice %175 {offsets = [0, 128], sizes = [48, 64], strides = [1, 1]} : vector<48x192xf32> to vector<48x64xf32>
    %cst_85 = arith.constant 0.000000e+00 : f32
    %179 = vector.broadcast %cst_85 : f32 to vector<48x64xf32>
    %180 = arith.mulf %164, %165 : vector<48x64xf32>
    %cst_86 = arith.constant dense<0.000000e+00> : vector<48xf32>
    %181 = vector.multi_reduction <add>, %180, %cst_86 [1] : vector<48x64xf32> to vector<48xf32>
    %182 = vector.shape_cast %181 : vector<48xf32> to vector<48x1xf32>
    %cst_87 = arith.constant 1.250000e-01 : f32
    %183 = vector.broadcast %cst_87 : f32 to vector<48x1xf32>
    %184 = arith.mulf %182, %183 : vector<48x1xf32>
    %185 = arith.mulf %164, %171 : vector<48x64xf32>
    %cst_88 = arith.constant dense<0.000000e+00> : vector<48xf32>
    %186 = vector.multi_reduction <add>, %185, %cst_88 [1] : vector<48x64xf32> to vector<48xf32>
    %187 = vector.shape_cast %186 : vector<48xf32> to vector<48x1xf32>
    %cst_89 = arith.constant 1.250000e-01 : f32
    %188 = vector.broadcast %cst_89 : f32 to vector<48x1xf32>
    %189 = arith.mulf %187, %188 : vector<48x1xf32>
    %190 = arith.mulf %164, %177 : vector<48x64xf32>
    %cst_90 = arith.constant dense<0.000000e+00> : vector<48xf32>
    %191 = vector.multi_reduction <add>, %190, %cst_90 [1] : vector<48x64xf32> to vector<48xf32>
    %192 = vector.shape_cast %191 : vector<48xf32> to vector<48x1xf32>
    %cst_91 = arith.constant 1.250000e-01 : f32
    %193 = vector.broadcast %cst_91 : f32 to vector<48x1xf32>
    %194 = arith.mulf %192, %193 : vector<48x1xf32>
    %195 = arith.maximumf %184, %189 : vector<48x1xf32>
    %196 = arith.maximumf %195, %194 : vector<48x1xf32>
    %197 = arith.subf %184, %196 : vector<48x1xf32>
    %198 = math.exp %197 : vector<48x1xf32>
    %199 = arith.subf %189, %196 : vector<48x1xf32>
    %200 = math.exp %199 : vector<48x1xf32>
    %201 = arith.subf %194, %196 : vector<48x1xf32>
    %202 = math.exp %201 : vector<48x1xf32>
    %203 = arith.addf %198, %200 : vector<48x1xf32>
    %204 = arith.addf %203, %202 : vector<48x1xf32>
    %205 = vector.broadcast %198 : vector<48x1xf32> to vector<48x64xf32>
    %206 = arith.mulf %205, %166 : vector<48x64xf32>
    %207 = vector.broadcast %200 : vector<48x1xf32> to vector<48x64xf32>
    %208 = arith.mulf %207, %172 : vector<48x64xf32>
    %209 = arith.addf %206, %208 : vector<48x64xf32>
    %210 = vector.broadcast %202 : vector<48x1xf32> to vector<48x64xf32>
    %211 = arith.mulf %210, %178 : vector<48x64xf32>
    %212 = arith.addf %209, %211 : vector<48x64xf32>
    %213 = vector.broadcast %204 : vector<48x1xf32> to vector<48x64xf32>
    %214 = arith.divf %212, %213 : vector<48x64xf32>
    %215 = arith.addf %179, %214 : vector<48x64xf32>
    %216 = arith.mulf %170, %165 : vector<48x64xf32>
    %cst_92 = arith.constant dense<0.000000e+00> : vector<48xf32>
    %217 = vector.multi_reduction <add>, %216, %cst_92 [1] : vector<48x64xf32> to vector<48xf32>
    %218 = vector.shape_cast %217 : vector<48xf32> to vector<48x1xf32>
    %cst_93 = arith.constant 1.250000e-01 : f32
    %219 = vector.broadcast %cst_93 : f32 to vector<48x1xf32>
    %220 = arith.mulf %218, %219 : vector<48x1xf32>
    %221 = arith.mulf %170, %171 : vector<48x64xf32>
    %cst_94 = arith.constant dense<0.000000e+00> : vector<48xf32>
    %222 = vector.multi_reduction <add>, %221, %cst_94 [1] : vector<48x64xf32> to vector<48xf32>
    %223 = vector.shape_cast %222 : vector<48xf32> to vector<48x1xf32>
    %cst_95 = arith.constant 1.250000e-01 : f32
    %224 = vector.broadcast %cst_95 : f32 to vector<48x1xf32>
    %225 = arith.mulf %223, %224 : vector<48x1xf32>
    %226 = arith.mulf %170, %177 : vector<48x64xf32>
    %cst_96 = arith.constant dense<0.000000e+00> : vector<48xf32>
    %227 = vector.multi_reduction <add>, %226, %cst_96 [1] : vector<48x64xf32> to vector<48xf32>
    %228 = vector.shape_cast %227 : vector<48xf32> to vector<48x1xf32>
    %cst_97 = arith.constant 1.250000e-01 : f32
    %229 = vector.broadcast %cst_97 : f32 to vector<48x1xf32>
    %230 = arith.mulf %228, %229 : vector<48x1xf32>
    %231 = arith.maximumf %220, %225 : vector<48x1xf32>
    %232 = arith.maximumf %231, %230 : vector<48x1xf32>
    %233 = arith.subf %220, %232 : vector<48x1xf32>
    %234 = math.exp %233 : vector<48x1xf32>
    %235 = arith.subf %225, %232 : vector<48x1xf32>
    %236 = math.exp %235 : vector<48x1xf32>
    %237 = arith.subf %230, %232 : vector<48x1xf32>
    %238 = math.exp %237 : vector<48x1xf32>
    %239 = arith.addf %234, %236 : vector<48x1xf32>
    %240 = arith.addf %239, %238 : vector<48x1xf32>
    %241 = vector.broadcast %234 : vector<48x1xf32> to vector<48x64xf32>
    %242 = arith.mulf %241, %166 : vector<48x64xf32>
    %243 = vector.broadcast %236 : vector<48x1xf32> to vector<48x64xf32>
    %244 = arith.mulf %243, %172 : vector<48x64xf32>
    %245 = arith.addf %242, %244 : vector<48x64xf32>
    %246 = vector.broadcast %238 : vector<48x1xf32> to vector<48x64xf32>
    %247 = arith.mulf %246, %178 : vector<48x64xf32>
    %248 = arith.addf %245, %247 : vector<48x64xf32>
    %249 = vector.broadcast %240 : vector<48x1xf32> to vector<48x64xf32>
    %250 = arith.divf %248, %249 : vector<48x64xf32>
    %251 = arith.addf %215, %250 : vector<48x64xf32>
    %252 = arith.mulf %176, %165 : vector<48x64xf32>
    %cst_98 = arith.constant dense<0.000000e+00> : vector<48xf32>
    %253 = vector.multi_reduction <add>, %252, %cst_98 [1] : vector<48x64xf32> to vector<48xf32>
    %254 = vector.shape_cast %253 : vector<48xf32> to vector<48x1xf32>
    %cst_99 = arith.constant 1.250000e-01 : f32
    %255 = vector.broadcast %cst_99 : f32 to vector<48x1xf32>
    %256 = arith.mulf %254, %255 : vector<48x1xf32>
    %257 = arith.mulf %176, %171 : vector<48x64xf32>
    %cst_100 = arith.constant dense<0.000000e+00> : vector<48xf32>
    %258 = vector.multi_reduction <add>, %257, %cst_100 [1] : vector<48x64xf32> to vector<48xf32>
    %259 = vector.shape_cast %258 : vector<48xf32> to vector<48x1xf32>
    %cst_101 = arith.constant 1.250000e-01 : f32
    %260 = vector.broadcast %cst_101 : f32 to vector<48x1xf32>
    %261 = arith.mulf %259, %260 : vector<48x1xf32>
    %262 = arith.mulf %176, %177 : vector<48x64xf32>
    %cst_102 = arith.constant dense<0.000000e+00> : vector<48xf32>
    %263 = vector.multi_reduction <add>, %262, %cst_102 [1] : vector<48x64xf32> to vector<48xf32>
    %264 = vector.shape_cast %263 : vector<48xf32> to vector<48x1xf32>
    %cst_103 = arith.constant 1.250000e-01 : f32
    %265 = vector.broadcast %cst_103 : f32 to vector<48x1xf32>
    %266 = arith.mulf %264, %265 : vector<48x1xf32>
    %267 = arith.maximumf %256, %261 : vector<48x1xf32>
    %268 = arith.maximumf %267, %266 : vector<48x1xf32>
    %269 = arith.subf %256, %268 : vector<48x1xf32>
    %270 = math.exp %269 : vector<48x1xf32>
    %271 = arith.subf %261, %268 : vector<48x1xf32>
    %272 = math.exp %271 : vector<48x1xf32>
    %273 = arith.subf %266, %268 : vector<48x1xf32>
    %274 = math.exp %273 : vector<48x1xf32>
    %275 = arith.addf %270, %272 : vector<48x1xf32>
    %276 = arith.addf %275, %274 : vector<48x1xf32>
    %277 = vector.broadcast %270 : vector<48x1xf32> to vector<48x64xf32>
    %278 = arith.mulf %277, %166 : vector<48x64xf32>
    %279 = vector.broadcast %272 : vector<48x1xf32> to vector<48x64xf32>
    %280 = arith.mulf %279, %172 : vector<48x64xf32>
    %281 = arith.addf %278, %280 : vector<48x64xf32>
    %282 = vector.broadcast %274 : vector<48x1xf32> to vector<48x64xf32>
    %283 = arith.mulf %282, %178 : vector<48x64xf32>
    %284 = arith.addf %281, %283 : vector<48x64xf32>
    %285 = vector.broadcast %276 : vector<48x1xf32> to vector<48x64xf32>
    %286 = arith.divf %284, %285 : vector<48x64xf32>
    %287 = arith.addf %251, %286 : vector<48x64xf32>
    %cst_104 = arith.constant 0.333333343 : f32
    %288 = vector.broadcast %cst_104 : f32 to vector<48x64xf32>
    %289 = arith.mulf %287, %288 : vector<48x64xf32>
    %290 = vector.extract_strided_slice %4 {offsets = [0, 64], sizes = [48, 64], strides = [1, 1]} : vector<48x128xf32> to vector<48x64xf32>
    %c0_105 = arith.constant 0 : index
    %c0_106 = arith.constant 0 : index
    %291 = vector.load %arg22[%c0_105, %c0_106] : memref<32x32xbf16, #tpu.memory_space<vmem>>, vector<32x32xbf16>
    %cst_107 = arith.constant dense<0.000000e+00> : vector<48x32xf32>
    %292 = tpu.matmul %0, %291, %cst_107 {dimension_numbers = #tpu.dot_dimension_numbers<[1], [0], [0], [1], [0, 0, 1, 1], [], []>} : vector<48x32xbf16>, vector<32x32xbf16>, vector<48x32xf32> -> vector<48x32xf32>
    %c0_108 = arith.constant 0 : index
    %c0_109 = arith.constant 0 : index
    %293 = vector.load %arg23[%c0_108, %c0_109] : memref<1x32xf32, #tpu.memory_space<vmem>>, vector<1x32xf32>
    %294 = vector.broadcast %293 : vector<1x32xf32> to vector<48x32xf32>
    %295 = arith.addf %292, %294 : vector<48x32xf32>
    %cst_110 = arith.constant 0.000000e+00 : f32
    %296 = vector.broadcast %cst_110 : f32 to vector<48x32xf32>
    %297 = arith.maximumf %295, %296 : vector<48x32xf32>
    %298 = arith.truncf %297 : vector<48x32xf32> to vector<48x32xbf16>
    %c0_111 = arith.constant 0 : index
    %c0_112 = arith.constant 0 : index
    %299 = vector.load %arg24[%c0_111, %c0_112] : memref<32x256xbf16, #tpu.memory_space<vmem>>, vector<32x256xbf16>
    %cst_113 = arith.constant dense<0.000000e+00> : vector<48x256xf32>
    %300 = tpu.matmul %298, %299, %cst_113 {dimension_numbers = #tpu.dot_dimension_numbers<[1], [0], [0], [1], [0, 0, 1, 1], [], []>} : vector<48x32xbf16>, vector<32x256xbf16>, vector<48x256xf32> -> vector<48x256xf32>
    %c0_114 = arith.constant 0 : index
    %c0_115 = arith.constant 0 : index
    %301 = vector.load %arg25[%c0_114, %c0_115] : memref<1x256xf32, #tpu.memory_space<vmem>>, vector<1x256xf32>
    %302 = vector.broadcast %301 : vector<1x256xf32> to vector<48x256xf32>
    %303 = arith.addf %300, %302 : vector<48x256xf32>
    %cst_116 = arith.constant 0.000000e+00 : f32
    %304 = vector.broadcast %cst_116 : f32 to vector<48x256xf32>
    %305 = arith.maximumf %303, %304 : vector<48x256xf32>
    %306 = arith.truncf %305 : vector<48x256xf32> to vector<48x256xbf16>
    %c0_117 = arith.constant 0 : index
    %c0_118 = arith.constant 0 : index
    %307 = vector.load %arg26[%c0_117, %c0_118] : memref<256x64xbf16, #tpu.memory_space<vmem>>, vector<256x64xbf16>
    %cst_119 = arith.constant dense<0.000000e+00> : vector<48x64xf32>
    %308 = tpu.matmul %306, %307, %cst_119 {dimension_numbers = #tpu.dot_dimension_numbers<[1], [0], [0], [1], [0, 0, 1, 1], [], []>} : vector<48x256xbf16>, vector<256x64xbf16>, vector<48x64xf32> -> vector<48x64xf32>
    %c0_120 = arith.constant 0 : index
    %c0_121 = arith.constant 0 : index
    %309 = vector.load %arg27[%c0_120, %c0_121] : memref<1x64xf32, #tpu.memory_space<vmem>>, vector<1x64xf32>
    %310 = vector.broadcast %309 : vector<1x64xf32> to vector<48x64xf32>
    %311 = arith.addf %308, %310 : vector<48x64xf32>
    %c0_122 = arith.constant 0 : index
    %c0_123 = arith.constant 0 : index
    %312 = vector.load %arg28[%c0_122, %c0_123] : memref<48x48xbf16, #tpu.memory_space<vmem>>, vector<48x48xbf16>
    %cst_124 = arith.constant dense<0.000000e+00> : vector<48x48xf32>
    %313 = tpu.matmul %1, %312, %cst_124 {dimension_numbers = #tpu.dot_dimension_numbers<[1], [0], [0], [1], [0, 0, 1, 1], [], []>} : vector<48x48xbf16>, vector<48x48xbf16>, vector<48x48xf32> -> vector<48x48xf32>
    %c0_125 = arith.constant 0 : index
    %c0_126 = arith.constant 0 : index
    %314 = vector.load %arg29[%c0_125, %c0_126] : memref<1x48xf32, #tpu.memory_space<vmem>>, vector<1x48xf32>
    %315 = vector.broadcast %314 : vector<1x48xf32> to vector<48x48xf32>
    %316 = arith.addf %313, %315 : vector<48x48xf32>
    %cst_127 = arith.constant 0.000000e+00 : f32
    %317 = vector.broadcast %cst_127 : f32 to vector<48x48xf32>
    %318 = arith.maximumf %316, %317 : vector<48x48xf32>
    %319 = arith.truncf %318 : vector<48x48xf32> to vector<48x48xbf16>
    %c0_128 = arith.constant 0 : index
    %c0_129 = arith.constant 0 : index
    %320 = vector.load %arg30[%c0_128, %c0_129] : memref<48x256xbf16, #tpu.memory_space<vmem>>, vector<48x256xbf16>
    %cst_130 = arith.constant dense<0.000000e+00> : vector<48x256xf32>
    %321 = tpu.matmul %319, %320, %cst_130 {dimension_numbers = #tpu.dot_dimension_numbers<[1], [0], [0], [1], [0, 0, 1, 1], [], []>} : vector<48x48xbf16>, vector<48x256xbf16>, vector<48x256xf32> -> vector<48x256xf32>
    %c0_131 = arith.constant 0 : index
    %c0_132 = arith.constant 0 : index
    %322 = vector.load %arg31[%c0_131, %c0_132] : memref<1x256xf32, #tpu.memory_space<vmem>>, vector<1x256xf32>
    %323 = vector.broadcast %322 : vector<1x256xf32> to vector<48x256xf32>
    %324 = arith.addf %321, %323 : vector<48x256xf32>
    %cst_133 = arith.constant 0.000000e+00 : f32
    %325 = vector.broadcast %cst_133 : f32 to vector<48x256xf32>
    %326 = arith.maximumf %324, %325 : vector<48x256xf32>
    %327 = arith.truncf %326 : vector<48x256xf32> to vector<48x256xbf16>
    %c0_134 = arith.constant 0 : index
    %c0_135 = arith.constant 0 : index
    %328 = vector.load %arg32[%c0_134, %c0_135] : memref<256x64xbf16, #tpu.memory_space<vmem>>, vector<256x64xbf16>
    %cst_136 = arith.constant dense<0.000000e+00> : vector<48x64xf32>
    %329 = tpu.matmul %327, %328, %cst_136 {dimension_numbers = #tpu.dot_dimension_numbers<[1], [0], [0], [1], [0, 0, 1, 1], [], []>} : vector<48x256xbf16>, vector<256x64xbf16>, vector<48x64xf32> -> vector<48x64xf32>
    %c0_137 = arith.constant 0 : index
    %c0_138 = arith.constant 0 : index
    %330 = vector.load %arg33[%c0_137, %c0_138] : memref<1x64xf32, #tpu.memory_space<vmem>>, vector<1x64xf32>
    %331 = vector.broadcast %330 : vector<1x64xf32> to vector<48x64xf32>
    %332 = arith.addf %329, %331 : vector<48x64xf32>
    %c0_139 = arith.constant 0 : index
    %c0_140 = arith.constant 0 : index
    %333 = memref.load %arg37[%c0_139, %c0_140] : memref<1x2xf32, #tpu.memory_space<smem>>
    %334 = arith.mulf %311, %311 : vector<48x64xf32>
    %cst_141 = arith.constant dense<0.000000e+00> : vector<48xf32>
    %335 = vector.multi_reduction <add>, %334, %cst_141 [1] : vector<48x64xf32> to vector<48xf32>
    %336 = vector.shape_cast %335 : vector<48xf32> to vector<48x1xf32>
    %cst_142 = arith.constant 1.000000e-24 : f32
    %337 = vector.broadcast %cst_142 : f32 to vector<48x1xf32>
    %338 = arith.maximumf %336, %337 : vector<48x1xf32>
    %339 = math.rsqrt %338 : vector<48x1xf32>
    %340 = vector.broadcast %339 : vector<48x1xf32> to vector<48x64xf32>
    %341 = arith.mulf %311, %340 : vector<48x64xf32>
    %342 = vector.broadcast %333 : f32 to vector<48x64xf32>
    %343 = arith.mulf %342, %341 : vector<48x64xf32>
    %c0_143 = arith.constant 0 : index
    %c1_144 = arith.constant 1 : index
    %344 = memref.load %arg37[%c0_143, %c1_144] : memref<1x2xf32, #tpu.memory_space<smem>>
    %345 = arith.mulf %332, %332 : vector<48x64xf32>
    %cst_145 = arith.constant dense<0.000000e+00> : vector<48xf32>
    %346 = vector.multi_reduction <add>, %345, %cst_145 [1] : vector<48x64xf32> to vector<48xf32>
    %347 = vector.shape_cast %346 : vector<48xf32> to vector<48x1xf32>
    %cst_146 = arith.constant 1.000000e-24 : f32
    %348 = vector.broadcast %cst_146 : f32 to vector<48x1xf32>
    %349 = arith.maximumf %347, %348 : vector<48x1xf32>
    %350 = math.rsqrt %349 : vector<48x1xf32>
    %351 = vector.broadcast %350 : vector<48x1xf32> to vector<48x64xf32>
    %352 = arith.mulf %332, %351 : vector<48x64xf32>
    %353 = vector.broadcast %344 : f32 to vector<48x64xf32>
    %354 = arith.mulf %353, %352 : vector<48x64xf32>
    %355 = arith.addf %343, %354 : vector<48x64xf32>
    %c0_147 = arith.constant 0 : index
    %c0_148 = arith.constant 0 : index
    %356 = vector.load %arg34[%c0_147, %c0_148] : memref<64x64xbf16, #tpu.memory_space<vmem>>, vector<64x64xbf16>
    %cst_149 = arith.constant dense<0.000000e+00> : vector<48x64xf32>
    %357 = tpu.matmul %2, %356, %cst_149 {dimension_numbers = #tpu.dot_dimension_numbers<[1], [0], [0], [1], [0, 0, 1, 1], [], []>} : vector<48x64xbf16>, vector<64x64xbf16>, vector<48x64xf32> -> vector<48x64xf32>
    %c0_150 = arith.constant 0 : index
    %c0_151 = arith.constant 0 : index
    %358 = vector.load %arg35[%c0_150, %c0_151] : memref<1x64xf32, #tpu.memory_space<vmem>>, vector<1x64xf32>
    %359 = vector.broadcast %358 : vector<1x64xf32> to vector<48x64xf32>
    %360 = arith.addf %357, %359 : vector<48x64xf32>
    %361 = vector.broadcast %3 : vector<48x1xf32> to vector<48x64xf32>
    %362 = arith.mulf %361, %355 : vector<48x64xf32>
    %cst_152 = arith.constant 1.000000e+00 : f32
    %363 = vector.broadcast %cst_152 : f32 to vector<48x1xf32>
    %364 = arith.subf %363, %3 : vector<48x1xf32>
    %365 = vector.broadcast %364 : vector<48x1xf32> to vector<48x64xf32>
    %366 = arith.mulf %365, %360 : vector<48x64xf32>
    %367 = arith.addf %362, %366 : vector<48x64xf32>
    %368 = arith.mulf %355, %355 : vector<48x64xf32>
    %cst_153 = arith.constant dense<0.000000e+00> : vector<48xf32>
    %369 = vector.multi_reduction <add>, %368, %cst_153 [1] : vector<48x64xf32> to vector<48xf32>
    %370 = vector.shape_cast %369 : vector<48xf32> to vector<48x1xf32>
    %cst_154 = arith.constant 1.000000e-24 : f32
    %371 = vector.broadcast %cst_154 : f32 to vector<48x1xf32>
    %372 = arith.maximumf %370, %371 : vector<48x1xf32>
    %373 = math.rsqrt %372 : vector<48x1xf32>
    %374 = vector.broadcast %373 : vector<48x1xf32> to vector<48x64xf32>
    %375 = arith.mulf %355, %374 : vector<48x64xf32>
    %cst_155 = arith.constant dense<0.000000e+00> : vector<48xf32>
    %376 = vector.multi_reduction <add>, %375, %cst_155 [1] : vector<48x64xf32> to vector<48xf32>
    %377 = vector.shape_cast %376 : vector<48xf32> to vector<48x1xf32>
    %cst_156 = arith.constant 6.400000e+01 : f32
    %378 = vector.broadcast %cst_156 : f32 to vector<48x1xf32>
    %379 = arith.divf %377, %378 : vector<48x1xf32>
    %380 = vector.broadcast %379 : vector<48x1xf32> to vector<48x64xf32>
    %381 = arith.subf %375, %380 : vector<48x64xf32>
    %382 = arith.mulf %381, %381 : vector<48x64xf32>
    %cst_157 = arith.constant dense<0.000000e+00> : vector<48xf32>
    %383 = vector.multi_reduction <add>, %382, %cst_157 [1] : vector<48x64xf32> to vector<48xf32>
    %384 = vector.shape_cast %383 : vector<48xf32> to vector<48x1xf32>
    %cst_158 = arith.constant 6.400000e+01 : f32
    %385 = vector.broadcast %cst_158 : f32 to vector<48x1xf32>
    %386 = arith.divf %384, %385 : vector<48x1xf32>
    %387 = vector.broadcast %379 : vector<48x1xf32> to vector<48x64xf32>
    %388 = arith.subf %375, %387 : vector<48x64xf32>
    %cst_159 = arith.constant 9.99999974E-6 : f32
    %389 = vector.broadcast %cst_159 : f32 to vector<48x1xf32>
    %390 = arith.addf %386, %389 : vector<48x1xf32>
    %391 = math.rsqrt %390 : vector<48x1xf32>
    %392 = vector.broadcast %391 : vector<48x1xf32> to vector<48x64xf32>
    %393 = arith.mulf %388, %392 : vector<48x64xf32>
    %394 = arith.mulf %290, %290 : vector<48x64xf32>
    %cst_160 = arith.constant dense<0.000000e+00> : vector<48xf32>
    %395 = vector.multi_reduction <add>, %394, %cst_160 [1] : vector<48x64xf32> to vector<48xf32>
    %396 = vector.shape_cast %395 : vector<48xf32> to vector<48x1xf32>
    %cst_161 = arith.constant 1.000000e-24 : f32
    %397 = vector.broadcast %cst_161 : f32 to vector<48x1xf32>
    %398 = arith.maximumf %396, %397 : vector<48x1xf32>
    %399 = math.rsqrt %398 : vector<48x1xf32>
    %400 = vector.broadcast %399 : vector<48x1xf32> to vector<48x64xf32>
    %401 = arith.mulf %290, %400 : vector<48x64xf32>
    %cst_162 = arith.constant dense<0.000000e+00> : vector<48xf32>
    %402 = vector.multi_reduction <add>, %401, %cst_162 [1] : vector<48x64xf32> to vector<48xf32>
    %403 = vector.shape_cast %402 : vector<48xf32> to vector<48x1xf32>
    %cst_163 = arith.constant 6.400000e+01 : f32
    %404 = vector.broadcast %cst_163 : f32 to vector<48x1xf32>
    %405 = arith.divf %403, %404 : vector<48x1xf32>
    %406 = vector.broadcast %405 : vector<48x1xf32> to vector<48x64xf32>
    %407 = arith.subf %401, %406 : vector<48x64xf32>
    %408 = arith.mulf %407, %407 : vector<48x64xf32>
    %cst_164 = arith.constant dense<0.000000e+00> : vector<48xf32>
    %409 = vector.multi_reduction <add>, %408, %cst_164 [1] : vector<48x64xf32> to vector<48xf32>
    %410 = vector.shape_cast %409 : vector<48xf32> to vector<48x1xf32>
    %cst_165 = arith.constant 6.400000e+01 : f32
    %411 = vector.broadcast %cst_165 : f32 to vector<48x1xf32>
    %412 = arith.divf %410, %411 : vector<48x1xf32>
    %413 = vector.broadcast %405 : vector<48x1xf32> to vector<48x64xf32>
    %414 = arith.subf %401, %413 : vector<48x64xf32>
    %cst_166 = arith.constant 9.99999974E-6 : f32
    %415 = vector.broadcast %cst_166 : f32 to vector<48x1xf32>
    %416 = arith.addf %412, %415 : vector<48x1xf32>
    %417 = math.rsqrt %416 : vector<48x1xf32>
    %418 = vector.broadcast %417 : vector<48x1xf32> to vector<48x64xf32>
    %419 = arith.mulf %414, %418 : vector<48x64xf32>
    %420 = arith.mulf %367, %367 : vector<48x64xf32>
    %cst_167 = arith.constant dense<0.000000e+00> : vector<48xf32>
    %421 = vector.multi_reduction <add>, %420, %cst_167 [1] : vector<48x64xf32> to vector<48xf32>
    %422 = vector.shape_cast %421 : vector<48xf32> to vector<48x1xf32>
    %cst_168 = arith.constant 1.000000e-24 : f32
    %423 = vector.broadcast %cst_168 : f32 to vector<48x1xf32>
    %424 = arith.maximumf %422, %423 : vector<48x1xf32>
    %425 = math.rsqrt %424 : vector<48x1xf32>
    %426 = vector.broadcast %425 : vector<48x1xf32> to vector<48x64xf32>
    %427 = arith.mulf %367, %426 : vector<48x64xf32>
    %cst_169 = arith.constant dense<0.000000e+00> : vector<48xf32>
    %428 = vector.multi_reduction <add>, %427, %cst_169 [1] : vector<48x64xf32> to vector<48xf32>
    %429 = vector.shape_cast %428 : vector<48xf32> to vector<48x1xf32>
    %cst_170 = arith.constant 6.400000e+01 : f32
    %430 = vector.broadcast %cst_170 : f32 to vector<48x1xf32>
    %431 = arith.divf %429, %430 : vector<48x1xf32>
    %432 = vector.broadcast %431 : vector<48x1xf32> to vector<48x64xf32>
    %433 = arith.subf %427, %432 : vector<48x64xf32>
    %434 = arith.mulf %433, %433 : vector<48x64xf32>
    %cst_171 = arith.constant dense<0.000000e+00> : vector<48xf32>
    %435 = vector.multi_reduction <add>, %434, %cst_171 [1] : vector<48x64xf32> to vector<48xf32>
    %436 = vector.shape_cast %435 : vector<48xf32> to vector<48x1xf32>
    %cst_172 = arith.constant 6.400000e+01 : f32
    %437 = vector.broadcast %cst_172 : f32 to vector<48x1xf32>
    %438 = arith.divf %436, %437 : vector<48x1xf32>
    %439 = vector.broadcast %431 : vector<48x1xf32> to vector<48x64xf32>
    %440 = arith.subf %427, %439 : vector<48x64xf32>
    %cst_173 = arith.constant 9.99999974E-6 : f32
    %441 = vector.broadcast %cst_173 : f32 to vector<48x1xf32>
    %442 = arith.addf %438, %441 : vector<48x1xf32>
    %443 = math.rsqrt %442 : vector<48x1xf32>
    %444 = vector.broadcast %443 : vector<48x1xf32> to vector<48x64xf32>
    %445 = arith.mulf %440, %444 : vector<48x64xf32>
    %446 = arith.truncf %393 : vector<48x64xf32> to vector<48x64xbf16>
    %c0_174 = arith.constant 0 : index
    %c0_175 = arith.constant 0 : index
    %447 = vector.load %arg36[%c0_174, %c0_175] : memref<64x192xbf16, #tpu.memory_space<vmem>>, vector<64x192xbf16>
    %cst_176 = arith.constant dense<0.000000e+00> : vector<48x192xf32>
    %448 = tpu.matmul %446, %447, %cst_176 {dimension_numbers = #tpu.dot_dimension_numbers<[1], [0], [0], [1], [0, 0, 1, 1], [], []>} : vector<48x64xbf16>, vector<64x192xbf16>, vector<48x192xf32> -> vector<48x192xf32>
    %449 = vector.extract_strided_slice %448 {offsets = [0, 0], sizes = [48, 64], strides = [1, 1]} : vector<48x192xf32> to vector<48x64xf32>
    %450 = vector.extract_strided_slice %448 {offsets = [0, 64], sizes = [48, 64], strides = [1, 1]} : vector<48x192xf32> to vector<48x64xf32>
    %451 = vector.extract_strided_slice %448 {offsets = [0, 128], sizes = [48, 64], strides = [1, 1]} : vector<48x192xf32> to vector<48x64xf32>
    %452 = arith.truncf %419 : vector<48x64xf32> to vector<48x64xbf16>
    %c0_177 = arith.constant 0 : index
    %c0_178 = arith.constant 0 : index
    %453 = vector.load %arg36[%c0_177, %c0_178] : memref<64x192xbf16, #tpu.memory_space<vmem>>, vector<64x192xbf16>
    %cst_179 = arith.constant dense<0.000000e+00> : vector<48x192xf32>
    %454 = tpu.matmul %452, %453, %cst_179 {dimension_numbers = #tpu.dot_dimension_numbers<[1], [0], [0], [1], [0, 0, 1, 1], [], []>} : vector<48x64xbf16>, vector<64x192xbf16>, vector<48x192xf32> -> vector<48x192xf32>
    %455 = vector.extract_strided_slice %454 {offsets = [0, 0], sizes = [48, 64], strides = [1, 1]} : vector<48x192xf32> to vector<48x64xf32>
    %456 = vector.extract_strided_slice %454 {offsets = [0, 64], sizes = [48, 64], strides = [1, 1]} : vector<48x192xf32> to vector<48x64xf32>
    %457 = vector.extract_strided_slice %454 {offsets = [0, 128], sizes = [48, 64], strides = [1, 1]} : vector<48x192xf32> to vector<48x64xf32>
    %458 = arith.truncf %445 : vector<48x64xf32> to vector<48x64xbf16>
    %c0_180 = arith.constant 0 : index
    %c0_181 = arith.constant 0 : index
    %459 = vector.load %arg36[%c0_180, %c0_181] : memref<64x192xbf16, #tpu.memory_space<vmem>>, vector<64x192xbf16>
    %cst_182 = arith.constant dense<0.000000e+00> : vector<48x192xf32>
    %460 = tpu.matmul %458, %459, %cst_182 {dimension_numbers = #tpu.dot_dimension_numbers<[1], [0], [0], [1], [0, 0, 1, 1], [], []>} : vector<48x64xbf16>, vector<64x192xbf16>, vector<48x192xf32> -> vector<48x192xf32>
    %461 = vector.extract_strided_slice %460 {offsets = [0, 0], sizes = [48, 64], strides = [1, 1]} : vector<48x192xf32> to vector<48x64xf32>
    %462 = vector.extract_strided_slice %460 {offsets = [0, 64], sizes = [48, 64], strides = [1, 1]} : vector<48x192xf32> to vector<48x64xf32>
    %463 = vector.extract_strided_slice %460 {offsets = [0, 128], sizes = [48, 64], strides = [1, 1]} : vector<48x192xf32> to vector<48x64xf32>
    %cst_183 = arith.constant 0.000000e+00 : f32
    %464 = vector.broadcast %cst_183 : f32 to vector<48x64xf32>
    %465 = arith.mulf %449, %450 : vector<48x64xf32>
    %cst_184 = arith.constant dense<0.000000e+00> : vector<48xf32>
    %466 = vector.multi_reduction <add>, %465, %cst_184 [1] : vector<48x64xf32> to vector<48xf32>
    %467 = vector.shape_cast %466 : vector<48xf32> to vector<48x1xf32>
    %cst_185 = arith.constant 1.250000e-01 : f32
    %468 = vector.broadcast %cst_185 : f32 to vector<48x1xf32>
    %469 = arith.mulf %467, %468 : vector<48x1xf32>
    %470 = arith.mulf %449, %456 : vector<48x64xf32>
    %cst_186 = arith.constant dense<0.000000e+00> : vector<48xf32>
    %471 = vector.multi_reduction <add>, %470, %cst_186 [1] : vector<48x64xf32> to vector<48xf32>
    %472 = vector.shape_cast %471 : vector<48xf32> to vector<48x1xf32>
    %cst_187 = arith.constant 1.250000e-01 : f32
    %473 = vector.broadcast %cst_187 : f32 to vector<48x1xf32>
    %474 = arith.mulf %472, %473 : vector<48x1xf32>
    %475 = arith.mulf %449, %462 : vector<48x64xf32>
    %cst_188 = arith.constant dense<0.000000e+00> : vector<48xf32>
    %476 = vector.multi_reduction <add>, %475, %cst_188 [1] : vector<48x64xf32> to vector<48xf32>
    %477 = vector.shape_cast %476 : vector<48xf32> to vector<48x1xf32>
    %cst_189 = arith.constant 1.250000e-01 : f32
    %478 = vector.broadcast %cst_189 : f32 to vector<48x1xf32>
    %479 = arith.mulf %477, %478 : vector<48x1xf32>
    %480 = arith.maximumf %469, %474 : vector<48x1xf32>
    %481 = arith.maximumf %480, %479 : vector<48x1xf32>
    %482 = arith.subf %469, %481 : vector<48x1xf32>
    %483 = math.exp %482 : vector<48x1xf32>
    %484 = arith.subf %474, %481 : vector<48x1xf32>
    %485 = math.exp %484 : vector<48x1xf32>
    %486 = arith.subf %479, %481 : vector<48x1xf32>
    %487 = math.exp %486 : vector<48x1xf32>
    %488 = arith.addf %483, %485 : vector<48x1xf32>
    %489 = arith.addf %488, %487 : vector<48x1xf32>
    %490 = vector.broadcast %483 : vector<48x1xf32> to vector<48x64xf32>
    %491 = arith.mulf %490, %451 : vector<48x64xf32>
    %492 = vector.broadcast %485 : vector<48x1xf32> to vector<48x64xf32>
    %493 = arith.mulf %492, %457 : vector<48x64xf32>
    %494 = arith.addf %491, %493 : vector<48x64xf32>
    %495 = vector.broadcast %487 : vector<48x1xf32> to vector<48x64xf32>
    %496 = arith.mulf %495, %463 : vector<48x64xf32>
    %497 = arith.addf %494, %496 : vector<48x64xf32>
    %498 = vector.broadcast %489 : vector<48x1xf32> to vector<48x64xf32>
    %499 = arith.divf %497, %498 : vector<48x64xf32>
    %500 = arith.addf %464, %499 : vector<48x64xf32>
    %501 = arith.mulf %455, %450 : vector<48x64xf32>
    %cst_190 = arith.constant dense<0.000000e+00> : vector<48xf32>
    %502 = vector.multi_reduction <add>, %501, %cst_190 [1] : vector<48x64xf32> to vector<48xf32>
    %503 = vector.shape_cast %502 : vector<48xf32> to vector<48x1xf32>
    %cst_191 = arith.constant 1.250000e-01 : f32
    %504 = vector.broadcast %cst_191 : f32 to vector<48x1xf32>
    %505 = arith.mulf %503, %504 : vector<48x1xf32>
    %506 = arith.mulf %455, %456 : vector<48x64xf32>
    %cst_192 = arith.constant dense<0.000000e+00> : vector<48xf32>
    %507 = vector.multi_reduction <add>, %506, %cst_192 [1] : vector<48x64xf32> to vector<48xf32>
    %508 = vector.shape_cast %507 : vector<48xf32> to vector<48x1xf32>
    %cst_193 = arith.constant 1.250000e-01 : f32
    %509 = vector.broadcast %cst_193 : f32 to vector<48x1xf32>
    %510 = arith.mulf %508, %509 : vector<48x1xf32>
    %511 = arith.mulf %455, %462 : vector<48x64xf32>
    %cst_194 = arith.constant dense<0.000000e+00> : vector<48xf32>
    %512 = vector.multi_reduction <add>, %511, %cst_194 [1] : vector<48x64xf32> to vector<48xf32>
    %513 = vector.shape_cast %512 : vector<48xf32> to vector<48x1xf32>
    %cst_195 = arith.constant 1.250000e-01 : f32
    %514 = vector.broadcast %cst_195 : f32 to vector<48x1xf32>
    %515 = arith.mulf %513, %514 : vector<48x1xf32>
    %516 = arith.maximumf %505, %510 : vector<48x1xf32>
    %517 = arith.maximumf %516, %515 : vector<48x1xf32>
    %518 = arith.subf %505, %517 : vector<48x1xf32>
    %519 = math.exp %518 : vector<48x1xf32>
    %520 = arith.subf %510, %517 : vector<48x1xf32>
    %521 = math.exp %520 : vector<48x1xf32>
    %522 = arith.subf %515, %517 : vector<48x1xf32>
    %523 = math.exp %522 : vector<48x1xf32>
    %524 = arith.addf %519, %521 : vector<48x1xf32>
    %525 = arith.addf %524, %523 : vector<48x1xf32>
    %526 = vector.broadcast %519 : vector<48x1xf32> to vector<48x64xf32>
    %527 = arith.mulf %526, %451 : vector<48x64xf32>
    %528 = vector.broadcast %521 : vector<48x1xf32> to vector<48x64xf32>
    %529 = arith.mulf %528, %457 : vector<48x64xf32>
    %530 = arith.addf %527, %529 : vector<48x64xf32>
    %531 = vector.broadcast %523 : vector<48x1xf32> to vector<48x64xf32>
    %532 = arith.mulf %531, %463 : vector<48x64xf32>
    %533 = arith.addf %530, %532 : vector<48x64xf32>
    %534 = vector.broadcast %525 : vector<48x1xf32> to vector<48x64xf32>
    %535 = arith.divf %533, %534 : vector<48x64xf32>
    %536 = arith.addf %500, %535 : vector<48x64xf32>
    %537 = arith.mulf %461, %450 : vector<48x64xf32>
    %cst_196 = arith.constant dense<0.000000e+00> : vector<48xf32>
    %538 = vector.multi_reduction <add>, %537, %cst_196 [1] : vector<48x64xf32> to vector<48xf32>
    %539 = vector.shape_cast %538 : vector<48xf32> to vector<48x1xf32>
    %cst_197 = arith.constant 1.250000e-01 : f32
    %540 = vector.broadcast %cst_197 : f32 to vector<48x1xf32>
    %541 = arith.mulf %539, %540 : vector<48x1xf32>
    %542 = arith.mulf %461, %456 : vector<48x64xf32>
    %cst_198 = arith.constant dense<0.000000e+00> : vector<48xf32>
    %543 = vector.multi_reduction <add>, %542, %cst_198 [1] : vector<48x64xf32> to vector<48xf32>
    %544 = vector.shape_cast %543 : vector<48xf32> to vector<48x1xf32>
    %cst_199 = arith.constant 1.250000e-01 : f32
    %545 = vector.broadcast %cst_199 : f32 to vector<48x1xf32>
    %546 = arith.mulf %544, %545 : vector<48x1xf32>
    %547 = arith.mulf %461, %462 : vector<48x64xf32>
    %cst_200 = arith.constant dense<0.000000e+00> : vector<48xf32>
    %548 = vector.multi_reduction <add>, %547, %cst_200 [1] : vector<48x64xf32> to vector<48xf32>
    %549 = vector.shape_cast %548 : vector<48xf32> to vector<48x1xf32>
    %cst_201 = arith.constant 1.250000e-01 : f32
    %550 = vector.broadcast %cst_201 : f32 to vector<48x1xf32>
    %551 = arith.mulf %549, %550 : vector<48x1xf32>
    %552 = arith.maximumf %541, %546 : vector<48x1xf32>
    %553 = arith.maximumf %552, %551 : vector<48x1xf32>
    %554 = arith.subf %541, %553 : vector<48x1xf32>
    %555 = math.exp %554 : vector<48x1xf32>
    %556 = arith.subf %546, %553 : vector<48x1xf32>
    %557 = math.exp %556 : vector<48x1xf32>
    %558 = arith.subf %551, %553 : vector<48x1xf32>
    %559 = math.exp %558 : vector<48x1xf32>
    %560 = arith.addf %555, %557 : vector<48x1xf32>
    %561 = arith.addf %560, %559 : vector<48x1xf32>
    %562 = vector.broadcast %555 : vector<48x1xf32> to vector<48x64xf32>
    %563 = arith.mulf %562, %451 : vector<48x64xf32>
    %564 = vector.broadcast %557 : vector<48x1xf32> to vector<48x64xf32>
    %565 = arith.mulf %564, %457 : vector<48x64xf32>
    %566 = arith.addf %563, %565 : vector<48x64xf32>
    %567 = vector.broadcast %559 : vector<48x1xf32> to vector<48x64xf32>
    %568 = arith.mulf %567, %463 : vector<48x64xf32>
    %569 = arith.addf %566, %568 : vector<48x64xf32>
    %570 = vector.broadcast %561 : vector<48x1xf32> to vector<48x64xf32>
    %571 = arith.divf %569, %570 : vector<48x64xf32>
    %572 = arith.addf %536, %571 : vector<48x64xf32>
    %cst_202 = arith.constant 0.333333343 : f32
    %573 = vector.broadcast %cst_202 : f32 to vector<48x64xf32>
    %574 = arith.mulf %572, %573 : vector<48x64xf32>
    %575 = tpu.concatenate %289, %574 in 1 : vector<48x64xf32>, vector<48x64xf32> -> vector<48x128xf32>
    %576 = arith.truncf %575 : vector<48x128xf32> to vector<48x128xbf16>
    %c0_203 = arith.constant 0 : index
    %c0_204 = arith.constant 0 : index
    %577 = vector.load %arg38[%c0_203, %c0_204] : memref<48x128xbf16, #tpu.memory_space<vmem>>, vector<48x128xbf16>
    tpu.vector_store %arg38[%c0_203, %c0_204], %576 {strides = array<i32>} : memref<48x128xbf16, #tpu.memory_space<vmem>>, vector<48x128xbf16>,
    return
  }
  func.func @transform_0(%arg0: i32) -> (i32, i32) {
    %c0_i32 = arith.constant 0 : i32
    %c0_i32_0 = arith.constant 0 : i32
    return %arg0, %c0_i32 : i32, i32
  }
  func.func @transform_1(%arg0: i32) -> (i32, i32) {
    %c0_i32 = arith.constant 0 : i32
    %c0_i32_0 = arith.constant 0 : i32
    return %arg0, %c0_i32 : i32, i32
  }
  func.func @transform_2(%arg0: i32) -> (i32, i32) {
    %c0_i32 = arith.constant 0 : i32
    %c0_i32_0 = arith.constant 0 : i32
    return %arg0, %c0_i32 : i32, i32
  }
  func.func @transform_3(%arg0: i32) -> (i32, i32) {
    %c0_i32 = arith.constant 0 : i32
    %c0_i32_0 = arith.constant 0 : i32
    return %arg0, %c0_i32 : i32, i32
  }
  func.func @transform_4(%arg0: i32) -> (i32, i32) {
    %c0_i32 = arith.constant 0 : i32
    %c0_i32_0 = arith.constant 0 : i32
    return %arg0, %c0_i32 : i32, i32
  }
  func.func @transform_5(%arg0: i32) -> (i32, i32) {
    %c0_i32 = arith.constant 0 : i32
    %c0_i32_0 = arith.constant 0 : i32
    %c0_i32_1 = arith.constant 0 : i32
    return %c0_i32, %c0_i32_0 : i32, i32
  }
  func.func @transform_6(%arg0: i32) -> (i32, i32) {
    %c0_i32 = arith.constant 0 : i32
    %c0_i32_0 = arith.constant 0 : i32
    %c0_i32_1 = arith.constant 0 : i32
    return %c0_i32, %c0_i32_0 : i32, i32
  }
  func.func @transform_7(%arg0: i32) -> (i32, i32) {
    %c0_i32 = arith.constant 0 : i32
    %c0_i32_0 = arith.constant 0 : i32
    %c0_i32_1 = arith.constant 0 : i32
    return %c0_i32, %c0_i32_0 : i32, i32
  }
  func.func @transform_8(%arg0: i32) -> (i32, i32) {
    %c0_i32 = arith.constant 0 : i32
    %c0_i32_0 = arith.constant 0 : i32
    %c0_i32_1 = arith.constant 0 : i32
    return %c0_i32, %c0_i32_0 : i32, i32
  }
  func.func @transform_9(%arg0: i32) -> (i32, i32) {
    %c0_i32 = arith.constant 0 : i32
    %c0_i32_0 = arith.constant 0 : i32
    %c0_i32_1 = arith.constant 0 : i32
    return %c0_i32, %c0_i32_0 : i32, i32
  }
  func.func @transform_10(%arg0: i32) -> (i32, i32) {
    %c0_i32 = arith.constant 0 : i32
    %c0_i32_0 = arith.constant 0 : i32
    %c0_i32_1 = arith.constant 0 : i32
    return %c0_i32, %c0_i32_0 : i32, i32
  }
  func.func @transform_11(%arg0: i32) -> (i32, i32) {
    %c0_i32 = arith.constant 0 : i32
    %c0_i32_0 = arith.constant 0 : i32
    %c0_i32_1 = arith.constant 0 : i32
    return %c0_i32, %c0_i32_0 : i32, i32
  }
  func.func @transform_12(%arg0: i32) -> (i32, i32) {
    %c0_i32 = arith.constant 0 : i32
    %c0_i32_0 = arith.constant 0 : i32
    %c0_i32_1 = arith.constant 0 : i32
    return %c0_i32, %c0_i32_0 : i32, i32
  }
  func.func @transform_13(%arg0: i32) -> (i32, i32) {
    %c0_i32 = arith.constant 0 : i32
    %c0_i32_0 = arith.constant 0 : i32
    %c0_i32_1 = arith.constant 0 : i32
    return %c0_i32, %c0_i32_0 : i32, i32
  }
  func.func @transform_14(%arg0: i32) -> (i32, i32) {
    %c0_i32 = arith.constant 0 : i32
    %c0_i32_0 = arith.constant 0 : i32
    %c0_i32_1 = arith.constant 0 : i32
    return %c0_i32, %c0_i32_0 : i32, i32
  }
  func.func @transform_15(%arg0: i32) -> (i32, i32) {
    %c0_i32 = arith.constant 0 : i32
    %c0_i32_0 = arith.constant 0 : i32
    %c0_i32_1 = arith.constant 0 : i32
    return %c0_i32, %c0_i32_0 : i32, i32
  }
  func.func @transform_16(%arg0: i32) -> (i32, i32) {
    %c0_i32 = arith.constant 0 : i32
    %c0_i32_0 = arith.constant 0 : i32
    %c0_i32_1 = arith.constant 0 : i32
    return %c0_i32, %c0_i32_0 : i32, i32
  }
  func.func @transform_17(%arg0: i32) -> (i32, i32) {
    %c0_i32 = arith.constant 0 : i32
    %c0_i32_0 = arith.constant 0 : i32
    %c0_i32_1 = arith.constant 0 : i32
    return %c0_i32, %c0_i32_0 : i32, i32
  }
  func.func @transform_18(%arg0: i32) -> (i32, i32) {
    %c0_i32 = arith.constant 0 : i32
    %c0_i32_0 = arith.constant 0 : i32
    %c0_i32_1 = arith.constant 0 : i32
    return %c0_i32, %c0_i32_0 : i32, i32
  }
  func.func @transform_19(%arg0: i32) -> (i32, i32) {
    %c0_i32 = arith.constant 0 : i32
    %c0_i32_0 = arith.constant 0 : i32
    %c0_i32_1 = arith.constant 0 : i32
    return %c0_i32, %c0_i32_0 : i32, i32
  }
  func.func @transform_20(%arg0: i32) -> (i32, i32) {
    %c0_i32 = arith.constant 0 : i32
    %c0_i32_0 = arith.constant 0 : i32
    %c0_i32_1 = arith.constant 0 : i32
    return %c0_i32, %c0_i32_0 : i32, i32
  }
  func.func @transform_21(%arg0: i32) -> (i32, i32) {
    %c0_i32 = arith.constant 0 : i32
    %c0_i32_0 = arith.constant 0 : i32
    %c0_i32_1 = arith.constant 0 : i32
    return %c0_i32, %c0_i32_0 : i32, i32
  }
  func.func @transform_22(%arg0: i32) -> (i32, i32) {
    %c0_i32 = arith.constant 0 : i32
    %c0_i32_0 = arith.constant 0 : i32
    %c0_i32_1 = arith.constant 0 : i32
    return %c0_i32, %c0_i32_0 : i32, i32
  }
  func.func @transform_23(%arg0: i32) -> (i32, i32) {
    %c0_i32 = arith.constant 0 : i32
    %c0_i32_0 = arith.constant 0 : i32
    %c0_i32_1 = arith.constant 0 : i32
    return %c0_i32, %c0_i32_0 : i32, i32
  }
  func.func @transform_24(%arg0: i32) -> (i32, i32) {
    %c0_i32 = arith.constant 0 : i32
    %c0_i32_0 = arith.constant 0 : i32
    %c0_i32_1 = arith.constant 0 : i32
    return %c0_i32, %c0_i32_0 : i32, i32
  }
  func.func @transform_25(%arg0: i32) -> (i32, i32) {
    %c0_i32 = arith.constant 0 : i32
    %c0_i32_0 = arith.constant 0 : i32
    %c0_i32_1 = arith.constant 0 : i32
    return %c0_i32, %c0_i32_0 : i32, i32
  }
  func.func @transform_26(%arg0: i32) -> (i32, i32) {
    %c0_i32 = arith.constant 0 : i32
    %c0_i32_0 = arith.constant 0 : i32
    %c0_i32_1 = arith.constant 0 : i32
    return %c0_i32, %c0_i32_0 : i32, i32
  }
  func.func @transform_27(%arg0: i32) -> (i32, i32) {
    %c0_i32 = arith.constant 0 : i32
    %c0_i32_0 = arith.constant 0 : i32
    %c0_i32_1 = arith.constant 0 : i32
    return %c0_i32, %c0_i32_0 : i32, i32
  }
  func.func @transform_28(%arg0: i32) -> (i32, i32) {
    %c0_i32 = arith.constant 0 : i32
    %c0_i32_0 = arith.constant 0 : i32
    %c0_i32_1 = arith.constant 0 : i32
    return %c0_i32, %c0_i32_0 : i32, i32
  }
  func.func @transform_29(%arg0: i32) -> (i32, i32) {
    %c0_i32 = arith.constant 0 : i32
    %c0_i32_0 = arith.constant 0 : i32
    %c0_i32_1 = arith.constant 0 : i32
    return %c0_i32, %c0_i32_0 : i32, i32
  }
  func.func @transform_30(%arg0: i32) -> (i32, i32) {
    %c0_i32 = arith.constant 0 : i32
    %c0_i32_0 = arith.constant 0 : i32
    %c0_i32_1 = arith.constant 0 : i32
    return %c0_i32, %c0_i32_0 : i32, i32
  }
  func.func @transform_31(%arg0: i32) -> (i32, i32) {
    %c0_i32 = arith.constant 0 : i32
    %c0_i32_0 = arith.constant 0 : i32
    %c0_i32_1 = arith.constant 0 : i32
    return %c0_i32, %c0_i32_0 : i32, i32
  }
  func.func @transform_32(%arg0: i32) -> (i32, i32) {
    %c0_i32 = arith.constant 0 : i32
    %c0_i32_0 = arith.constant 0 : i32
    %c0_i32_1 = arith.constant 0 : i32
    return %c0_i32, %c0_i32_0 : i32, i32
  }
  func.func @transform_33(%arg0: i32) -> (i32, i32) {
    %c0_i32 = arith.constant 0 : i32
    %c0_i32_0 = arith.constant 0 : i32
    %c0_i32_1 = arith.constant 0 : i32
    return %c0_i32, %c0_i32_0 : i32, i32
  }
  func.func @transform_34(%arg0: i32) -> (i32, i32) {
    %c0_i32 = arith.constant 0 : i32
    %c0_i32_0 = arith.constant 0 : i32
    %c0_i32_1 = arith.constant 0 : i32
    return %c0_i32, %c0_i32_0 : i32, i32
  }
  func.func @transform_35(%arg0: i32) -> (i32, i32) {
    %c0_i32 = arith.constant 0 : i32
    %c0_i32_0 = arith.constant 0 : i32
    %c0_i32_1 = arith.constant 0 : i32
    return %c0_i32, %c0_i32_0 : i32, i32
  }
  func.func @transform_36(%arg0: i32) -> (i32, i32) {
    %c0_i32 = arith.constant 0 : i32
    %c0_i32_0 = arith.constant 0 : i32
    %c0_i32_1 = arith.constant 0 : i32
    return %c0_i32, %c0_i32_0 : i32, i32
  }
  func.func @transform_37(%arg0: i32) -> (i32, i32) {
    %c0_i32 = arith.constant 0 : i32
    %c0_i32_0 = arith.constant 0 : i32
    return %arg0, %c0_i32 : i32, i32
  }
}

module attributes {stable_mosaic.version = 11 : i64} {
  func.func @_recon_kernel(%arg0: i32, %arg1: i32, %arg2: memref<32x64xbf16, #tpu.memory_space<vmem>>, %arg3: memref<128x64xbf16, #tpu.memory_space<vmem>>, %arg4: memref<32x128xi8, #tpu.memory_space<vmem>>, %arg5: memref<32x1xf32, #tpu.memory_space<vmem>>, %arg6: memref<32x1xf32, #tpu.memory_space<vmem>>, %arg7: memref<32x1xf32, #tpu.memory_space<vmem>>, %arg8: memref<32x1xf32, #tpu.memory_space<vmem>>, %arg9: memref<32x1xf32, #tpu.memory_space<vmem>>) attributes {dimension_semantics = [#tpu.dimension_semantics<parallel>, #tpu.dimension_semantics<arbitrary>], iteration_bounds = array<i64: 1, 1>, scalar_prefetch = 0 : i64, scratch_operands = 4 : i64, tpu.core_type = #tpu.core_type<tc>, window_params = [{transform_indices = @transform_0, window_bounds = array<i64: 32, 64>}, {transform_indices = @transform_1, window_bounds = array<i64: 128, 64>}, {transform_indices = @transform_2, window_bounds = array<i64: 32, 128>}, {transform_indices = @transform_3, window_bounds = array<i64: 32, 1>}]} {
    %c0_i32 = arith.constant 0 : i32
    %0 = arith.cmpi eq, %arg1, %c0_i32 : i32
    %1 = arith.extui %0 : i1 to i32
    %c0_i32_0 = arith.constant 0 : i32
    %2 = arith.cmpi ne, %1, %c0_i32_0 : i32
    scf.if %2 {
      %cst_22 = arith.constant -1.000000e+30 : f32
      %28 = vector.broadcast %cst_22 : f32 to vector<32x1xf32>
      %c0_23 = arith.constant 0 : index
      %c0_24 = arith.constant 0 : index
      %29 = vector.load %arg6[%c0_23, %c0_24] : memref<32x1xf32, #tpu.memory_space<vmem>>, vector<32x1xf32>
      tpu.vector_store %arg6[%c0_23, %c0_24], %28 {strides = array<i32>} : memref<32x1xf32, #tpu.memory_space<vmem>>, vector<32x1xf32>,
      %cst_25 = arith.constant 0.000000e+00 : f32
      %30 = vector.broadcast %cst_25 : f32 to vector<32x1xf32>
      %c0_26 = arith.constant 0 : index
      %c0_27 = arith.constant 0 : index
      %31 = vector.load %arg7[%c0_26, %c0_27] : memref<32x1xf32, #tpu.memory_space<vmem>>, vector<32x1xf32>
      tpu.vector_store %arg7[%c0_26, %c0_27], %30 {strides = array<i32>} : memref<32x1xf32, #tpu.memory_space<vmem>>, vector<32x1xf32>,
      %cst_28 = arith.constant 0.000000e+00 : f32
      %32 = vector.broadcast %cst_28 : f32 to vector<32x1xf32>
      %c0_29 = arith.constant 0 : index
      %c0_30 = arith.constant 0 : index
      %33 = vector.load %arg8[%c0_29, %c0_30] : memref<32x1xf32, #tpu.memory_space<vmem>>, vector<32x1xf32>
      tpu.vector_store %arg8[%c0_29, %c0_30], %32 {strides = array<i32>} : memref<32x1xf32, #tpu.memory_space<vmem>>, vector<32x1xf32>,
      %cst_31 = arith.constant 0.000000e+00 : f32
      %34 = vector.broadcast %cst_31 : f32 to vector<32x1xf32>
      %c0_32 = arith.constant 0 : index
      %c0_33 = arith.constant 0 : index
      %35 = vector.load %arg9[%c0_32, %c0_33] : memref<32x1xf32, #tpu.memory_space<vmem>>, vector<32x1xf32>
      tpu.vector_store %arg9[%c0_32, %c0_33], %34 {strides = array<i32>} : memref<32x1xf32, #tpu.memory_space<vmem>>, vector<32x1xf32>,
    } else {
    }
    %c0 = arith.constant 0 : index
    %c0_1 = arith.constant 0 : index
    %3 = vector.load %arg2[%c0, %c0_1] : memref<32x64xbf16, #tpu.memory_space<vmem>>, vector<32x64xbf16>
    %c0_2 = arith.constant 0 : index
    %c0_3 = arith.constant 0 : index
    %4 = vector.load %arg3[%c0_2, %c0_3] : memref<128x64xbf16, #tpu.memory_space<vmem>>, vector<128x64xbf16>
    %cst = arith.constant dense<0.000000e+00> : vector<32x128xf32>
    %5 = tpu.matmul %3, %4, %cst {dimension_numbers = #tpu.dot_dimension_numbers<[1], [1], [0], [0], [0, 0, 1, 0], [], []>} : vector<32x64xbf16>, vector<128x64xbf16>, vector<32x128xf32> -> vector<32x128xf32>
    %c0_4 = arith.constant 0 : index
    %c0_5 = arith.constant 0 : index
    %6 = vector.load %arg4[%c0_4, %c0_5] : memref<32x128xi8, #tpu.memory_space<vmem>>, vector<32x128xi8>
    %7 = arith.sitofp %6 : vector<32x128xi8> to vector<32x128xf32>
    %c0_6 = arith.constant 0 : index
    %c0_7 = arith.constant 0 : index
    %8 = vector.load %arg8[%c0_6, %c0_7] : memref<32x1xf32, #tpu.memory_space<vmem>>, vector<32x1xf32>
    %9 = arith.mulf %5, %7 : vector<32x128xf32>
    %cst_8 = arith.constant dense<0.000000e+00> : vector<32xf32>
    %10 = vector.multi_reduction <add>, %9, %cst_8 [1] : vector<32x128xf32> to vector<32xf32>
    %11 = vector.shape_cast %10 : vector<32xf32> to vector<32x1xf32>
    %12 = arith.addf %8, %11 : vector<32x1xf32>
    %c0_9 = arith.constant 0 : index
    %c0_10 = arith.constant 0 : index
    %13 = vector.load %arg8[%c0_9, %c0_10] : memref<32x1xf32, #tpu.memory_space<vmem>>, vector<32x1xf32>
    tpu.vector_store %arg8[%c0_9, %c0_10], %12 {strides = array<i32>} : memref<32x1xf32, #tpu.memory_space<vmem>>, vector<32x1xf32>,
    %c0_11 = arith.constant 0 : index
    %c0_12 = arith.constant 0 : index
    %14 = vector.load %arg9[%c0_11, %c0_12] : memref<32x1xf32, #tpu.memory_space<vmem>>, vector<32x1xf32>
    %cst_13 = arith.constant dense<0.000000e+00> : vector<32xf32>
    %15 = vector.multi_reduction <add>, %7, %cst_13 [1] : vector<32x128xf32> to vector<32xf32>
    %16 = vector.shape_cast %15 : vector<32xf32> to vector<32x1xf32>
    %17 = arith.addf %14, %16 : vector<32x1xf32>
    %c0_14 = arith.constant 0 : index
    %c0_15 = arith.constant 0 : index
    %18 = vector.load %arg9[%c0_14, %c0_15] : memref<32x1xf32, #tpu.memory_space<vmem>>, vector<32x1xf32>
    tpu.vector_store %arg9[%c0_14, %c0_15], %17 {strides = array<i32>} : memref<32x1xf32, #tpu.memory_space<vmem>>, vector<32x1xf32>,
    %c0_i32_16 = arith.constant 0 : i32
    %19 = arith.cmpi slt, %arg1, %c0_i32_16 : i32
    %20 = arith.extui %19 : i1 to i32
    %c0_i32_17 = arith.constant 0 : i32
    %21 = arith.cmpi ne, %20, %c0_i32_17 : i32
    scf.if %21 {
      %c0_22 = arith.constant 0 : index
      %c0_23 = arith.constant 0 : index
      %28 = vector.load %arg6[%c0_22, %c0_23] : memref<32x1xf32, #tpu.memory_space<vmem>>, vector<32x1xf32>
      %cst_24 = arith.constant dense<0xFF800000> : vector<32xf32>
      %29 = vector.multi_reduction <maximumf>, %5, %cst_24 [1] : vector<32x128xf32> to vector<32xf32>
      %30 = vector.shape_cast %29 : vector<32xf32> to vector<32x1xf32>
      %31 = arith.maximumf %28, %30 : vector<32x1xf32>
      %c0_25 = arith.constant 0 : index
      %c0_26 = arith.constant 0 : index
      %32 = vector.load %arg6[%c0_25, %c0_26] : memref<32x1xf32, #tpu.memory_space<vmem>>, vector<32x1xf32>
      %33 = arith.subf %32, %31 : vector<32x1xf32>
      %34 = math.exp %33 : vector<32x1xf32>
      %c0_27 = arith.constant 0 : index
      %c0_28 = arith.constant 0 : index
      %35 = vector.load %arg7[%c0_27, %c0_28] : memref<32x1xf32, #tpu.memory_space<vmem>>, vector<32x1xf32>
      %36 = arith.mulf %34, %35 : vector<32x1xf32>
      %37 = vector.broadcast %31 : vector<32x1xf32> to vector<32x128xf32>
      %38 = arith.subf %5, %37 : vector<32x128xf32>
      %39 = math.exp %38 : vector<32x128xf32>
      %cst_29 = arith.constant dense<0.000000e+00> : vector<32xf32>
      %40 = vector.multi_reduction <add>, %39, %cst_29 [1] : vector<32x128xf32> to vector<32xf32>
      %41 = vector.shape_cast %40 : vector<32xf32> to vector<32x1xf32>
      %42 = arith.addf %36, %41 : vector<32x1xf32>
      %c0_30 = arith.constant 0 : index
      %c0_31 = arith.constant 0 : index
      %43 = vector.load %arg7[%c0_30, %c0_31] : memref<32x1xf32, #tpu.memory_space<vmem>>, vector<32x1xf32>
      tpu.vector_store %arg7[%c0_30, %c0_31], %42 {strides = array<i32>} : memref<32x1xf32, #tpu.memory_space<vmem>>, vector<32x1xf32>,
      %c0_32 = arith.constant 0 : index
      %c0_33 = arith.constant 0 : index
      %44 = vector.load %arg6[%c0_32, %c0_33] : memref<32x1xf32, #tpu.memory_space<vmem>>, vector<32x1xf32>
      tpu.vector_store %arg6[%c0_32, %c0_33], %31 {strides = array<i32>} : memref<32x1xf32, #tpu.memory_space<vmem>>, vector<32x1xf32>,
    } else {
    }
    %c0_i32_18 = arith.constant 0 : i32
    %22 = arith.cmpi eq, %arg1, %c0_i32_18 : i32
    %23 = arith.extui %22 : i1 to i32
    %c0_i32_19 = arith.constant 0 : i32
    %24 = arith.cmpi ne, %23, %c0_i32_19 : i32
    scf.if %24 {
      %28 = tpu.iota {dimensions = array<i32: 1>} : vector<1x128xi32>
      %c0_i32_22 = arith.constant 0 : i32
      %29 = vector.broadcast %c0_i32_22 : i32 to vector<1x128xi32>
      %30 = arith.addi %29, %28 : vector<1x128xi32>
      %c40_i32 = arith.constant 40 : i32
      %31 = vector.broadcast %c40_i32 : i32 to vector<1x128xi32>
      %32 = arith.cmpi slt, %30, %31 : vector<1x128xi32>
      %cst_23 = arith.constant -1.000000e+30 : f32
      %33 = vector.shape_cast %32 : vector<1x128xi1> to vector<1x128xi1>
      %34 = vector.broadcast %33 : vector<1x128xi1> to vector<32x128xi1>
      %35 = vector.broadcast %cst_23 : f32 to vector<32x128xf32>
      %36 = arith.select %34, %5, %35 : vector<32x128xi1>, vector<32x128xf32>
      %c0_24 = arith.constant 0 : index
      %c0_25 = arith.constant 0 : index
      %37 = vector.load %arg6[%c0_24, %c0_25] : memref<32x1xf32, #tpu.memory_space<vmem>>, vector<32x1xf32>
      %cst_26 = arith.constant dense<0xFF800000> : vector<32xf32>
      %38 = vector.multi_reduction <maximumf>, %36, %cst_26 [1] : vector<32x128xf32> to vector<32xf32>
      %39 = vector.shape_cast %38 : vector<32xf32> to vector<32x1xf32>
      %40 = arith.maximumf %37, %39 : vector<32x1xf32>
      %c0_27 = arith.constant 0 : index
      %c0_28 = arith.constant 0 : index
      %41 = vector.load %arg6[%c0_27, %c0_28] : memref<32x1xf32, #tpu.memory_space<vmem>>, vector<32x1xf32>
      %42 = arith.subf %41, %40 : vector<32x1xf32>
      %43 = math.exp %42 : vector<32x1xf32>
      %c0_29 = arith.constant 0 : index
      %c0_30 = arith.constant 0 : index
      %44 = vector.load %arg7[%c0_29, %c0_30] : memref<32x1xf32, #tpu.memory_space<vmem>>, vector<32x1xf32>
      %45 = arith.mulf %43, %44 : vector<32x1xf32>
      %46 = vector.broadcast %40 : vector<32x1xf32> to vector<32x128xf32>
      %47 = arith.subf %36, %46 : vector<32x128xf32>
      %48 = math.exp %47 : vector<32x128xf32>
      %cst_31 = arith.constant dense<0.000000e+00> : vector<32xf32>
      %49 = vector.multi_reduction <add>, %48, %cst_31 [1] : vector<32x128xf32> to vector<32xf32>
      %50 = vector.shape_cast %49 : vector<32xf32> to vector<32x1xf32>
      %51 = arith.addf %45, %50 : vector<32x1xf32>
      %c0_32 = arith.constant 0 : index
      %c0_33 = arith.constant 0 : index
      %52 = vector.load %arg7[%c0_32, %c0_33] : memref<32x1xf32, #tpu.memory_space<vmem>>, vector<32x1xf32>
      tpu.vector_store %arg7[%c0_32, %c0_33], %51 {strides = array<i32>} : memref<32x1xf32, #tpu.memory_space<vmem>>, vector<32x1xf32>,
      %c0_34 = arith.constant 0 : index
      %c0_35 = arith.constant 0 : index
      %53 = vector.load %arg6[%c0_34, %c0_35] : memref<32x1xf32, #tpu.memory_space<vmem>>, vector<32x1xf32>
      tpu.vector_store %arg6[%c0_34, %c0_35], %40 {strides = array<i32>} : memref<32x1xf32, #tpu.memory_space<vmem>>, vector<32x1xf32>,
    } else {
    }
    %c0_i32_20 = arith.constant 0 : i32
    %25 = arith.cmpi eq, %arg1, %c0_i32_20 : i32
    %26 = arith.extui %25 : i1 to i32
    %c0_i32_21 = arith.constant 0 : i32
    %27 = arith.cmpi ne, %26, %c0_i32_21 : i32
    scf.if %27 {
      %c0_22 = arith.constant 0 : index
      %c0_23 = arith.constant 0 : index
      %28 = vector.load %arg6[%c0_22, %c0_23] : memref<32x1xf32, #tpu.memory_space<vmem>>, vector<32x1xf32>
      %c0_24 = arith.constant 0 : index
      %c0_25 = arith.constant 0 : index
      %29 = vector.load %arg7[%c0_24, %c0_25] : memref<32x1xf32, #tpu.memory_space<vmem>>, vector<32x1xf32>
      %30 = math.log %29 : vector<32x1xf32>
      %31 = arith.addf %28, %30 : vector<32x1xf32>
      %c0_26 = arith.constant 0 : index
      %c0_27 = arith.constant 0 : index
      %32 = vector.load %arg9[%c0_26, %c0_27] : memref<32x1xf32, #tpu.memory_space<vmem>>, vector<32x1xf32>
      %c0_28 = arith.constant 0 : index
      %c0_29 = arith.constant 0 : index
      %33 = vector.load %arg8[%c0_28, %c0_29] : memref<32x1xf32, #tpu.memory_space<vmem>>, vector<32x1xf32>
      %34 = arith.mulf %31, %32 : vector<32x1xf32>
      %35 = arith.subf %33, %34 : vector<32x1xf32>
      %cst_30 = arith.constant 1.000000e+00 : f32
      %36 = vector.broadcast %cst_30 : f32 to vector<32x1xf32>
      %37 = arith.maximumf %32, %36 : vector<32x1xf32>
      %38 = arith.divf %35, %37 : vector<32x1xf32>
      %c0_31 = arith.constant 0 : index
      %c0_32 = arith.constant 0 : index
      %39 = vector.load %arg5[%c0_31, %c0_32] : memref<32x1xf32, #tpu.memory_space<vmem>>, vector<32x1xf32>
      tpu.vector_store %arg5[%c0_31, %c0_32], %38 {strides = array<i32>} : memref<32x1xf32, #tpu.memory_space<vmem>>, vector<32x1xf32>,
    } else {
    }
    return
  }
  func.func @transform_0(%arg0: i32, %arg1: i32) -> (i32, i32) {
    %c0_i32 = arith.constant 0 : i32
    %c0_i32_0 = arith.constant 0 : i32
    return %arg0, %c0_i32 : i32, i32
  }
  func.func @transform_1(%arg0: i32, %arg1: i32) -> (i32, i32) {
    %c0_i32 = arith.constant 0 : i32
    %c0_i32_0 = arith.constant 0 : i32
    return %arg1, %c0_i32 : i32, i32
  }
  func.func @transform_2(%arg0: i32, %arg1: i32) -> (i32, i32) {
    %c0_i32 = arith.constant 0 : i32
    return %arg0, %arg1 : i32, i32
  }
  func.func @transform_3(%arg0: i32, %arg1: i32) -> (i32, i32) {
    %c0_i32 = arith.constant 0 : i32
    %c0_i32_0 = arith.constant 0 : i32
    return %arg0, %c0_i32 : i32, i32
  }
}

module attributes {stable_mosaic.version = 11 : i64} {
  func.func @_cl_kernel(%arg0: i32, %arg1: i32, %arg2: memref<32x64xbf16, #tpu.memory_space<vmem>>, %arg3: memref<32x64xbf16, #tpu.memory_space<vmem>>, %arg4: memref<32x1xf32, #tpu.memory_space<vmem>>, %arg5: memref<32x1xf32, #tpu.memory_space<vmem>>, %arg6: memref<32x1xf32, #tpu.memory_space<vmem>>, %arg7: memref<32x1xf32, #tpu.memory_space<vmem>>) attributes {dimension_semantics = [#tpu.dimension_semantics<parallel>, #tpu.dimension_semantics<arbitrary>], iteration_bounds = array<i64: 1, 1>, scalar_prefetch = 0 : i64, scratch_operands = 3 : i64, tpu.core_type = #tpu.core_type<tc>, window_params = [{transform_indices = @transform_0, window_bounds = array<i64: 32, 64>}, {transform_indices = @transform_1, window_bounds = array<i64: 32, 64>}, {transform_indices = @transform_2, window_bounds = array<i64: 32, 1>}]} {
    %c0_i32 = arith.constant 0 : i32
    %0 = arith.cmpi eq, %arg1, %c0_i32 : i32
    %1 = arith.extui %0 : i1 to i32
    %c0_i32_0 = arith.constant 0 : i32
    %2 = arith.cmpi ne, %1, %c0_i32_0 : i32
    scf.if %2 {
      %cst_12 = arith.constant -1.000000e+30 : f32
      %20 = vector.broadcast %cst_12 : f32 to vector<32x1xf32>
      %c0_13 = arith.constant 0 : index
      %c0_14 = arith.constant 0 : index
      %21 = vector.load %arg5[%c0_13, %c0_14] : memref<32x1xf32, #tpu.memory_space<vmem>>, vector<32x1xf32>
      tpu.vector_store %arg5[%c0_13, %c0_14], %20 {strides = array<i32>} : memref<32x1xf32, #tpu.memory_space<vmem>>, vector<32x1xf32>,
      %cst_15 = arith.constant 0.000000e+00 : f32
      %22 = vector.broadcast %cst_15 : f32 to vector<32x1xf32>
      %c0_16 = arith.constant 0 : index
      %c0_17 = arith.constant 0 : index
      %23 = vector.load %arg6[%c0_16, %c0_17] : memref<32x1xf32, #tpu.memory_space<vmem>>, vector<32x1xf32>
      tpu.vector_store %arg6[%c0_16, %c0_17], %22 {strides = array<i32>} : memref<32x1xf32, #tpu.memory_space<vmem>>, vector<32x1xf32>,
      %cst_18 = arith.constant 0.000000e+00 : f32
      %24 = vector.broadcast %cst_18 : f32 to vector<32x1xf32>
      %c0_19 = arith.constant 0 : index
      %c0_20 = arith.constant 0 : index
      %25 = vector.load %arg7[%c0_19, %c0_20] : memref<32x1xf32, #tpu.memory_space<vmem>>, vector<32x1xf32>
      tpu.vector_store %arg7[%c0_19, %c0_20], %24 {strides = array<i32>} : memref<32x1xf32, #tpu.memory_space<vmem>>, vector<32x1xf32>,
    } else {
    }
    %c0 = arith.constant 0 : index
    %c0_1 = arith.constant 0 : index
    %3 = vector.load %arg2[%c0, %c0_1] : memref<32x64xbf16, #tpu.memory_space<vmem>>, vector<32x64xbf16>
    %c0_2 = arith.constant 0 : index
    %c0_3 = arith.constant 0 : index
    %4 = vector.load %arg3[%c0_2, %c0_3] : memref<32x64xbf16, #tpu.memory_space<vmem>>, vector<32x64xbf16>
    %cst = arith.constant dense<0.000000e+00> : vector<32x32xf32>
    %5 = tpu.matmul %3, %4, %cst {dimension_numbers = #tpu.dot_dimension_numbers<[1], [1], [0], [0], [0, 0, 1, 0], [], []>} : vector<32x64xbf16>, vector<32x64xbf16>, vector<32x32xf32> -> vector<32x32xf32>
    %cst_4 = arith.constant 5.000000e+00 : f32
    %6 = vector.broadcast %cst_4 : f32 to vector<32x32xf32>
    %7 = arith.mulf %5, %6 : vector<32x32xf32>
    %8 = arith.cmpi eq, %arg0, %arg1 : i32
    %9 = arith.extui %8 : i1 to i32
    %c0_i32_5 = arith.constant 0 : i32
    %10 = arith.cmpi ne, %9, %c0_i32_5 : i32
    scf.if %10 {
      %20 = tpu.iota {dimensions = array<i32: 0>} : vector<32x1xi32>
      %21 = tpu.iota {dimensions = array<i32: 1>} : vector<1x32xi32>
      %c0_12 = arith.constant 0 : index
      %c0_13 = arith.constant 0 : index
      %22 = vector.load %arg7[%c0_12, %c0_13] : memref<32x1xf32, #tpu.memory_space<vmem>>, vector<32x1xf32>
      %23 = vector.broadcast %20 : vector<32x1xi32> to vector<32x32xi32>
      %24 = vector.broadcast %21 : vector<1x32xi32> to vector<32x32xi32>
      %25 = arith.cmpi eq, %23, %24 : vector<32x32xi32>
      %cst_14 = arith.constant 0.000000e+00 : f32
      %26 = vector.broadcast %cst_14 : f32 to vector<32x32xf32>
      %27 = arith.select %25, %7, %26 : vector<32x32xi1>, vector<32x32xf32>
      %cst_15 = arith.constant dense<0.000000e+00> : vector<32xf32>
      %28 = vector.multi_reduction <add>, %27, %cst_15 [1] : vector<32x32xf32> to vector<32xf32>
      %29 = vector.shape_cast %28 : vector<32xf32> to vector<32x1xf32>
      %30 = arith.addf %22, %29 : vector<32x1xf32>
      %c0_16 = arith.constant 0 : index
      %c0_17 = arith.constant 0 : index
      %31 = vector.load %arg7[%c0_16, %c0_17] : memref<32x1xf32, #tpu.memory_space<vmem>>, vector<32x1xf32>
      tpu.vector_store %arg7[%c0_16, %c0_17], %30 {strides = array<i32>} : memref<32x1xf32, #tpu.memory_space<vmem>>, vector<32x1xf32>,
    } else {
    }
    %c0_i32_6 = arith.constant 0 : i32
    %11 = arith.cmpi slt, %arg1, %c0_i32_6 : i32
    %12 = arith.extui %11 : i1 to i32
    %c0_i32_7 = arith.constant 0 : i32
    %13 = arith.cmpi ne, %12, %c0_i32_7 : i32
    scf.if %13 {
      %c0_12 = arith.constant 0 : index
      %c0_13 = arith.constant 0 : index
      %20 = vector.load %arg5[%c0_12, %c0_13] : memref<32x1xf32, #tpu.memory_space<vmem>>, vector<32x1xf32>
      %cst_14 = arith.constant dense<0xFF800000> : vector<32xf32>
      %21 = vector.multi_reduction <maximumf>, %7, %cst_14 [1] : vector<32x32xf32> to vector<32xf32>
      %22 = vector.shape_cast %21 : vector<32xf32> to vector<32x1xf32>
      %23 = arith.maximumf %20, %22 : vector<32x1xf32>
      %c0_15 = arith.constant 0 : index
      %c0_16 = arith.constant 0 : index
      %24 = vector.load %arg5[%c0_15, %c0_16] : memref<32x1xf32, #tpu.memory_space<vmem>>, vector<32x1xf32>
      %25 = arith.subf %24, %23 : vector<32x1xf32>
      %26 = math.exp %25 : vector<32x1xf32>
      %c0_17 = arith.constant 0 : index
      %c0_18 = arith.constant 0 : index
      %27 = vector.load %arg6[%c0_17, %c0_18] : memref<32x1xf32, #tpu.memory_space<vmem>>, vector<32x1xf32>
      %28 = arith.mulf %26, %27 : vector<32x1xf32>
      %29 = vector.broadcast %23 : vector<32x1xf32> to vector<32x32xf32>
      %30 = arith.subf %7, %29 : vector<32x32xf32>
      %31 = math.exp %30 : vector<32x32xf32>
      %cst_19 = arith.constant dense<0.000000e+00> : vector<32xf32>
      %32 = vector.multi_reduction <add>, %31, %cst_19 [1] : vector<32x32xf32> to vector<32xf32>
      %33 = vector.shape_cast %32 : vector<32xf32> to vector<32x1xf32>
      %34 = arith.addf %28, %33 : vector<32x1xf32>
      %c0_20 = arith.constant 0 : index
      %c0_21 = arith.constant 0 : index
      %35 = vector.load %arg6[%c0_20, %c0_21] : memref<32x1xf32, #tpu.memory_space<vmem>>, vector<32x1xf32>
      tpu.vector_store %arg6[%c0_20, %c0_21], %34 {strides = array<i32>} : memref<32x1xf32, #tpu.memory_space<vmem>>, vector<32x1xf32>,
      %c0_22 = arith.constant 0 : index
      %c0_23 = arith.constant 0 : index
      %36 = vector.load %arg5[%c0_22, %c0_23] : memref<32x1xf32, #tpu.memory_space<vmem>>, vector<32x1xf32>
      tpu.vector_store %arg5[%c0_22, %c0_23], %23 {strides = array<i32>} : memref<32x1xf32, #tpu.memory_space<vmem>>, vector<32x1xf32>,
    } else {
    }
    %c0_i32_8 = arith.constant 0 : i32
    %14 = arith.cmpi eq, %arg1, %c0_i32_8 : i32
    %15 = arith.extui %14 : i1 to i32
    %c0_i32_9 = arith.constant 0 : i32
    %16 = arith.cmpi ne, %15, %c0_i32_9 : i32
    scf.if %16 {
      %20 = tpu.iota {dimensions = array<i32: 1>} : vector<1x32xi32>
      %c0_i32_12 = arith.constant 0 : i32
      %21 = vector.broadcast %c0_i32_12 : i32 to vector<1x32xi32>
      %22 = arith.addi %21, %20 : vector<1x32xi32>
      %c18_i32 = arith.constant 18 : i32
      %23 = vector.broadcast %c18_i32 : i32 to vector<1x32xi32>
      %24 = arith.cmpi slt, %22, %23 : vector<1x32xi32>
      %cst_13 = arith.constant -1.000000e+30 : f32
      %25 = vector.shape_cast %24 : vector<1x32xi1> to vector<1x32xi1>
      %26 = vector.broadcast %25 : vector<1x32xi1> to vector<32x32xi1>
      %27 = vector.broadcast %cst_13 : f32 to vector<32x32xf32>
      %28 = arith.select %26, %7, %27 : vector<32x32xi1>, vector<32x32xf32>
      %c0_14 = arith.constant 0 : index
      %c0_15 = arith.constant 0 : index
      %29 = vector.load %arg5[%c0_14, %c0_15] : memref<32x1xf32, #tpu.memory_space<vmem>>, vector<32x1xf32>
      %cst_16 = arith.constant dense<0xFF800000> : vector<32xf32>
      %30 = vector.multi_reduction <maximumf>, %28, %cst_16 [1] : vector<32x32xf32> to vector<32xf32>
      %31 = vector.shape_cast %30 : vector<32xf32> to vector<32x1xf32>
      %32 = arith.maximumf %29, %31 : vector<32x1xf32>
      %c0_17 = arith.constant 0 : index
      %c0_18 = arith.constant 0 : index
      %33 = vector.load %arg5[%c0_17, %c0_18] : memref<32x1xf32, #tpu.memory_space<vmem>>, vector<32x1xf32>
      %34 = arith.subf %33, %32 : vector<32x1xf32>
      %35 = math.exp %34 : vector<32x1xf32>
      %c0_19 = arith.constant 0 : index
      %c0_20 = arith.constant 0 : index
      %36 = vector.load %arg6[%c0_19, %c0_20] : memref<32x1xf32, #tpu.memory_space<vmem>>, vector<32x1xf32>
      %37 = arith.mulf %35, %36 : vector<32x1xf32>
      %38 = vector.broadcast %32 : vector<32x1xf32> to vector<32x32xf32>
      %39 = arith.subf %28, %38 : vector<32x32xf32>
      %40 = math.exp %39 : vector<32x32xf32>
      %cst_21 = arith.constant dense<0.000000e+00> : vector<32xf32>
      %41 = vector.multi_reduction <add>, %40, %cst_21 [1] : vector<32x32xf32> to vector<32xf32>
      %42 = vector.shape_cast %41 : vector<32xf32> to vector<32x1xf32>
      %43 = arith.addf %37, %42 : vector<32x1xf32>
      %c0_22 = arith.constant 0 : index
      %c0_23 = arith.constant 0 : index
      %44 = vector.load %arg6[%c0_22, %c0_23] : memref<32x1xf32, #tpu.memory_space<vmem>>, vector<32x1xf32>
      tpu.vector_store %arg6[%c0_22, %c0_23], %43 {strides = array<i32>} : memref<32x1xf32, #tpu.memory_space<vmem>>, vector<32x1xf32>,
      %c0_24 = arith.constant 0 : index
      %c0_25 = arith.constant 0 : index
      %45 = vector.load %arg5[%c0_24, %c0_25] : memref<32x1xf32, #tpu.memory_space<vmem>>, vector<32x1xf32>
      tpu.vector_store %arg5[%c0_24, %c0_25], %32 {strides = array<i32>} : memref<32x1xf32, #tpu.memory_space<vmem>>, vector<32x1xf32>,
    } else {
    }
    %c0_i32_10 = arith.constant 0 : i32
    %17 = arith.cmpi eq, %arg1, %c0_i32_10 : i32
    %18 = arith.extui %17 : i1 to i32
    %c0_i32_11 = arith.constant 0 : i32
    %19 = arith.cmpi ne, %18, %c0_i32_11 : i32
    scf.if %19 {
      %c32_i32 = arith.constant 32 : i32
      %20 = arith.muli %arg0, %c32_i32 : i32
      %21 = tpu.iota {dimensions = array<i32: 0>} : vector<32x1xi32>
      %22 = vector.broadcast %20 : i32 to vector<32x1xi32>
      %23 = arith.addi %22, %21 : vector<32x1xi32>
      %c18_i32 = arith.constant 18 : i32
      %24 = vector.broadcast %c18_i32 : i32 to vector<32x1xi32>
      %25 = arith.cmpi slt, %23, %24 : vector<32x1xi32>
      %26 = arith.extui %25 : vector<32x1xi1> to vector<32x1xi32>
      %27 = arith.sitofp %26 : vector<32x1xi32> to vector<32x1xf32>
      %c0_12 = arith.constant 0 : index
      %c0_13 = arith.constant 0 : index
      %28 = vector.load %arg5[%c0_12, %c0_13] : memref<32x1xf32, #tpu.memory_space<vmem>>, vector<32x1xf32>
      %c0_14 = arith.constant 0 : index
      %c0_15 = arith.constant 0 : index
      %29 = vector.load %arg6[%c0_14, %c0_15] : memref<32x1xf32, #tpu.memory_space<vmem>>, vector<32x1xf32>
      %30 = math.log %29 : vector<32x1xf32>
      %31 = arith.addf %28, %30 : vector<32x1xf32>
      %c0_16 = arith.constant 0 : index
      %c0_17 = arith.constant 0 : index
      %32 = vector.load %arg7[%c0_16, %c0_17] : memref<32x1xf32, #tpu.memory_space<vmem>>, vector<32x1xf32>
      %33 = arith.subf %31, %32 : vector<32x1xf32>
      %34 = arith.mulf %33, %27 : vector<32x1xf32>
      %c0_18 = arith.constant 0 : index
      %c0_19 = arith.constant 0 : index
      %35 = vector.load %arg4[%c0_18, %c0_19] : memref<32x1xf32, #tpu.memory_space<vmem>>, vector<32x1xf32>
      tpu.vector_store %arg4[%c0_18, %c0_19], %34 {strides = array<i32>} : memref<32x1xf32, #tpu.memory_space<vmem>>, vector<32x1xf32>,
    } else {
    }
    return
  }
  func.func @transform_0(%arg0: i32, %arg1: i32) -> (i32, i32) {
    %c0_i32 = arith.constant 0 : i32
    %c0_i32_0 = arith.constant 0 : i32
    return %arg0, %c0_i32 : i32, i32
  }
  func.func @transform_1(%arg0: i32, %arg1: i32) -> (i32, i32) {
    %c0_i32 = arith.constant 0 : i32
    %c0_i32_0 = arith.constant 0 : i32
    return %arg1, %c0_i32 : i32, i32
  }
  func.func @transform_2(%arg0: i32, %arg1: i32) -> (i32, i32) {
    %c0_i32 = arith.constant 0 : i32
    %c0_i32_0 = arith.constant 0 : i32
    return %arg0, %c0_i32 : i32, i32
  }
}

</mosaic_0001>

<llo_original>
// kernel: _lambda_.5
$region0: #{_lambda_.5}
  #allocation0 [shape = 'u32[]', space=smem, size = 0x4, offset = 0x4, fixed_abs, tag = 'smem constant byte address 0x4 - core index']
  #allocation1 [shape = 'u32[144,128]{1,0:T(1,128)}', space=vmem, size = 0x12000, scoped, tag = 'internal scratch']
  #allocation2 [shape = 'f32[32,1]{1,0:T(8,128)}', space=vmem, size = 0x4000, scoped, tag = 'scratch operand']
  #allocation3 [shape = 'f32[32,1]{1,0:T(8,128)}', space=vmem, size = 0x4000, scoped, tag = 'scratch operand']
  #allocation4 [shape = 'f32[32,1]{1,0:T(8,128)}', space=vmem, size = 0x4000, scoped, tag = 'scratch operand']
  #allocation5 [shape = 'f32[32,1]{1,0:T(8,128)}', space=vmem, size = 0x4000, scoped, tag = 'scratch operand']
  %s0 = inlined_call_operand.hbm [shape: bf16[32,64], index: 0, kind: input, shape index: {}]
  %s1 = inlined_call_operand.hbm [shape: bf16[128,64], index: 1, kind: input, shape index: {}]
  %s2 = inlined_call_operand.hbm [shape: s8[32,128], index: 2, kind: input, shape index: {}]
  %s3 = inlined_call_operand.hbm [shape: f32[32,1], index: 3, kind: output, shape index: {}]
  %s4 = sld [smem:[#allocation0]]
  $region46: #{_lambda_.5} parent=0
    _
  %s6 = ssub.s32 1, %s4
  %s7 = scalar_select 0, %s6, %s4
  $region1: #{_lambda_.5} parent=0
    #allocation6 [shape = 'u8[8192]{0}', space=vmem, size = 0x2000, scoped, tag = 'input window, operand 0, single buffered']
    #allocation7 [shape = 's32[1]{0}', space=sflag, size = 0x4, scoped, tag = 'scoped memory for _lambda_.5']
    #allocation8 [shape = 's32[1]{0}', space=sflag, size = 0x4, scoped, tag = 'scoped memory for _lambda_.5']
    #allocation9 [shape = 'u8[32768]{0}', space=vmem, size = 0x8000, scoped, tag = 'input window, operand 1, single buffered']
    #allocation10 [shape = 's32[1]{0}', space=sflag, size = 0x4, scoped, tag = 'scoped memory for _lambda_.5']
    #allocation11 [shape = 'u8[4096]{0}', space=vmem, size = 0x1000, scoped, tag = 'input window, operand 2, single buffered']
    #allocation12 [shape = 'u8[16384]{0}', space=vmem, size = 0x4000, scoped, tag = 'output window, operand 0, single buffered']
    %8 = vsyncpa [#allocation7], 0
    %9 = vsyncpa [#allocation10], 0
    %10 = vsyncpa [#allocation8], 0
    // Predicated region
    $region2: #{_lambda_.5} parent=1 // pred_check
      _
    $region3: #{_lambda_.5} parent=1 // pred_check_branch
      %12 = sbr.rel (0) target = $region5
    $region4: #{_lambda_.5} parent=1 // pred_region
      %s14 = ssub.s32 256, 256
      %15 = vsyncadd [#allocation7], %s14
      %s16 = sshll.u32 [#allocation6], 4
      %s17 = int_to_ptr.vmem [resolvable:$true] %s16
      %22 = dma.hbm_to_vmem [thread:$0]  %s0, 256, %s17, [#allocation7], 64, 64, 4
    $region5: #{_lambda_.5} parent=1 // pred_fallthru
      _
    // Predicated region
    $region6: #{_lambda_.5} parent=1 // pred_check
      _
    $region7: #{_lambda_.5} parent=1 // pred_check_branch
      %24 = sbr.rel (0) target = $region9
    $region8: #{_lambda_.5} parent=1 // pred_region
      %s26 = ssub.s32 1024, 1024
      %27 = vsyncadd [#allocation10], %s26
      %s28 = sshll.u32 [#allocation9], 4
      %s29 = int_to_ptr.vmem [resolvable:$true] %s28
      %34 = dma.hbm_to_vmem [thread:$0]  %s1, 1024, %s29, [#allocation10], 64, 64, 4
    $region9: #{_lambda_.5} parent=1 // pred_fallthru
      _
    // Predicated region
    $region10: #{_lambda_.5} parent=1 // pred_check
      _
    $region11: #{_lambda_.5} parent=1 // pred_check_branch
      %36 = sbr.rel (0) target = $region13
    $region12: #{_lambda_.5} parent=1 // pred_region
      %s38 = ssub.s32 128, 128
      %39 = vsyncadd [#allocation10], %s38
      %s41 = sshll.u32 [#allocation11], 4
      %s42 = int_to_ptr.vmem [resolvable:$true] %s41
      %44 = dma.hbm_to_vmem [thread:$0]  %s2, 128, %s42, [#allocation10]
    $region13: #{_lambda_.5} parent=1 // pred_fallthru
      _
    // Predicated region
    $region14: #{_lambda_.5} parent=1 // pred_check
      _
    $region15: #{_lambda_.5} parent=1 // pred_check_branch
      %46 = sbr.rel (0) target = $region17
    $region16: #{_lambda_.5} parent=1 // pred_region
      %47 = dma.done [#allocation7], 256
    $region17: #{_lambda_.5} parent=1 // pred_fallthru
      _
    // Predicated region
    $region18: #{_lambda_.5} parent=1 // pred_check
      _
    $region19: #{_lambda_.5} parent=1 // pred_check_branch
      %49 = sbr.rel (0) target = $region21
    $region20: #{_lambda_.5} parent=1 // pred_region
      %50 = dma.done [#allocation10], 1024
    $region21: #{_lambda_.5} parent=1 // pred_fallthru
      _
    // Predicated region
    $region22: #{_lambda_.5} parent=1 // pred_check
      _
    $region23: #{_lambda_.5} parent=1 // pred_check_branch
      %52 = sbr.rel (0) target = $region25
    $region24: #{_lambda_.5} parent=1 // pred_region
      %53 = dma.done [#allocation10], 128
    $region25: #{_lambda_.5} parent=1 // pred_fallthru
      _
    %p55 = scmp.eq.s32.totalorder 0, 0
    // Predicated region
    $region26: #{_lambda_.5} parent=1 // pred_check
      %p56 = pneg %p55
    $region27: #{_lambda_.5} parent=1 // pred_check_branch
      %58 = sbr.rel (%p56) target = $region29
    $region28: #{_lambda_.5} parent=1 // pred_region
      %vm59 = vcmask 7168
      %60 = vst.msk [vmem:[#allocation2] sm:$0xff] %vm59, -1e+30
      %61 = vst.msk [vmem:[#allocation2 + $0x8] sm:$0xff] %vm59, -1e+30
      %62 = vst.msk [vmem:[#allocation2 + $0x10] sm:$0xff] %vm59, -1e+30
      %63 = vst.msk [vmem:[#allocation2 + $0x18] sm:$0xff] %vm59, -1e+30
      %64 = vst.msk [vmem:[#allocation3] sm:$0xff] %vm59, 0.0
      %65 = vst.msk [vmem:[#allocation3 + $0x8] sm:$0xff] %vm59, 0.0
      %66 = vst.msk [vmem:[#allocation3 + $0x10] sm:$0xff] %vm59, 0.0
      %67 = vst.msk [vmem:[#allocation3 + $0x18] sm:$0xff] %vm59, 0.0
      %68 = vst.msk [vmem:[#allocation4] sm:$0xff] %vm59, 0.0
      %69 = vst.msk [vmem:[#allocation4 + $0x8] sm:$0xff] %vm59, 0.0
      %70 = vst.msk [vmem:[#allocation4 + $0x10] sm:$0xff] %vm59, 0.0
      %71 = vst.msk [vmem:[#allocation4 + $0x18] sm:$0xff] %vm59, 0.0
      %72 = vst.msk [vmem:[#allocation5] sm:$0xff] %vm59, 0.0
      %73 = vst.msk [vmem:[#allocation5 + $0x8] sm:$0xff] %vm59, 0.0
      %74 = vst.msk [vmem:[#allocation5 + $0x10] sm:$0xff] %vm59, 0.0
      %75 = vst.msk [vmem:[#allocation5 + $0x18] sm:$0xff] %vm59, 0.0
    $region29: #{_lambda_.5} parent=1 // pred_fallthru
      _
    %v76 = vld [vmem:[#allocation6] sm:$0xf]
    %v77 = vld [vmem:[#allocation6 + $0x4] sm:$0xf]
    %v78 = vld [vmem:[#allocation6 + $0x8] sm:$0xf]
    %v79 = vld [vmem:[#allocation6 + $0xc] sm:$0xf]
    %v80 = vld [vmem:[#allocation9] sm:$0xf]
    %v81 = vld [vmem:[#allocation9 + $0x4] sm:$0xf]
    %v82 = vld [vmem:[#allocation9 + $0x8] sm:$0xf]
    %v83 = vld [vmem:[#allocation9 + $0xc] sm:$0xf]
    %v84 = vld [vmem:[#allocation9 + $0x10] sm:$0xf]
    %v85 = vld [vmem:[#allocation9 + $0x14] sm:$0xf]
    %v86 = vld [vmem:[#allocation9 + $0x18] sm:$0xf]
    %v87 = vld [vmem:[#allocation9 + $0x1c] sm:$0xf]
    %v88 = vld [vmem:[#allocation9 + $0x20] sm:$0xf]
    %v89 = vld [vmem:[#allocation9 + $0x24] sm:$0xf]
    %v90 = vld [vmem:[#allocation9 + $0x28] sm:$0xf]
    %v91 = vld [vmem:[#allocation9 + $0x2c] sm:$0xf]
    %v92 = vld [vmem:[#allocation9 + $0x30] sm:$0xf]
    %v93 = vld [vmem:[#allocation9 + $0x34] sm:$0xf]
    %v94 = vld [vmem:[#allocation9 + $0x38] sm:$0xf]
    %v95 = vld [vmem:[#allocation9 + $0x3c] sm:$0xf]
    %v100 = vunpack.c.l.b16 %v76
    %v101 = vunpack.c.l.b16 %v77
    %v102 = vunpack.c.l.b16 %v78
    %v103 = vunpack.c.l.b16 %v79
    %v104 = vpack.c.b16 %v101, %v100
    %v105 = vpack.c.b16 %v103, %v102
    %v122 = vunpack.c.l.b16 %v80
    %v123 = vunpack.c.l.b16 %v81
    %v124 = vunpack.c.l.b16 %v82
    %v125 = vunpack.c.l.b16 %v83
    %v126 = vunpack.c.l.b16 %v84
    %v127 = vunpack.c.l.b16 %v85
    %v128 = vunpack.c.l.b16 %v86
    %v129 = vunpack.c.l.b16 %v87
    %v130 = vunpack.c.l.b16 %v88
    %v131 = vunpack.c.l.b16 %v89
    %v132 = vunpack.c.l.b16 %v90
    %v133 = vunpack.c.l.b16 %v91
    %v134 = vunpack.c.l.b16 %v92
    %v135 = vunpack.c.l.b16 %v93
    %v136 = vunpack.c.l.b16 %v94
    %v137 = vunpack.c.l.b16 %v95
    %v138 = vpack.c.b16 %v123, %v122
    %v139 = vpack.c.b16 %v125, %v124
    %v140 = vpack.c.b16 %v127, %v126
    %v141 = vpack.c.b16 %v129, %v128
    %v142 = vpack.c.b16 %v131, %v130
    %v143 = vpack.c.b16 %v133, %v132
    %v144 = vpack.c.b16 %v135, %v134
    %v145 = vpack.c.b16 %v137, %v136
    %vm146 = vcmask 523264
    %v148 = vsel %vm146, %v104, 0
    %v151 = vsel %vm146, %v105, 0
    %v154 = vsel %vm146, %v138, 0
    %v157 = vsel %vm146, %v139, 0
    %v160 = vsel %vm146, %v140, 0
    %v163 = vsel %vm146, %v141, 0
    %v166 = vsel %vm146, %v142, 0
    %v169 = vsel %vm146, %v143, 0
    %v172 = vsel %vm146, %v144, 0
    %v175 = vsel %vm146, %v145, 0
    %177 = vmatprep.subr.bf16.mxu0 0
    %178 = vmatpush1.bf16.xpose.msra.mxu0 %v154
    %179 = vmatprep.subr.bf16.mxu0 0
    %180 = vmatpush1.bf16.xpose.msra.mxu0 %v157
    %181 = vmatprep.subr.bf16.mxu0 0
    %182 = vmatpush1.bf16.xpose.msra.mxu0 %v160
    %183 = vmatprep.subr.bf16.mxu0 0
    %184 = vmatpush1.bf16.xpose.msra.mxu0 %v163
    %185 = vmatprep.subr.bf16.mxu0 0
    %186 = vmatpush1.bf16.xpose.msra.mxu0 %v166
    %187 = vmatprep.subr.bf16.mxu0 0
    %188 = vmatpush1.bf16.xpose.msra.mxu0 %v169
    %189 = vmatprep.subr.bf16.mxu0 0
    %190 = vmatpush1.bf16.xpose.msra.mxu0 %v172
    %191 = vmatprep.subr.bf16.mxu0 0
    %192 = vmatpush1.bf16.xpose.msra.mxu0 %v175
    %193 = vmatprep.subr.bf16.mxu0 0
    %194 = vmatpush1.bf16.xpose.msra.mxu0 0
    %195 = vmatprep.subr.bf16.mxu0 0
    %196 = vmatpush1.bf16.xpose.msra.mxu0 0
    %197 = vmatprep.subr.bf16.mxu0 0
    %198 = vmatpush1.bf16.xpose.msra.mxu0 0
    %199 = vmatprep.subr.bf16.mxu0 0
    %200 = vmatpush1.bf16.xpose.msra.mxu0 0
    %201 = vmatprep.subr.bf16.mxu0 0
    %202 = vmatpush1.bf16.xpose.msra.mxu0 0
    %203 = vmatprep.subr.bf16.mxu0 0
    %204 = vmatpush1.bf16.xpose.msra.mxu0 0
    %205 = vmatprep.subr.bf16.mxu0 0
    %206 = vmatpush1.bf16.xpose.msra.mxu0 0
    %207 = vmatprep.subr.bf16.mxu0 0
    %208 = vmatpush1.bf16.xpose.msra.mxu0 0
    %209 = vmatprep.mubr.bf16.mxu0 0
    %210 = vmatmul.mubr.bf16.gmra.mrb[0].mxu0 %v148
    %v211 = vpop.f32.mrb[0].mxu0
    %v212 = vadd.f32 0.0, %v211
    %v213 = vpop.f32.mrb[0].mxu0
    %v214 = vpop.f32.mrb[0].mxu0
    %v215 = vadd.f32 0.0, %v214
    %v216 = vpop.f32.mrb[0].mxu0
    %217 = vmatprep.mubr.bf16.mxu0 0
    %218 = vmatmul.mubr.bf16.gmra.mrb[0].mxu0 %v151
    %v219 = vpop.f32.mrb[0].mxu0
    %v220 = vadd.f32 0.0, %v219
    %v221 = vpop.f32.mrb[0].mxu0
    %v222 = vpop.f32.mrb[0].mxu0
    %v223 = vadd.f32 0.0, %v222
    %v224 = vpop.f32.mrb[0].mxu0
    %225 = vdwg.mxu0
    %v226 = vld [vmem:[#allocation11] sm:$0xff]
    %v227 = vunpack.c.0.s8 %v226
    %v228 = vunpack.c.1.s8 %v226
    %v229 = vunpack.c.2.s8 %v226
    %v230 = vunpack.c.3.s8 %v226
    %v231 = vcvt.s32.f32 %v227
    %v232 = vcvt.s32.f32 %v228
    %v233 = vcvt.s32.f32 %v229
    %v234 = vcvt.s32.f32 %v230
    %v235 = vld [vmem:[#allocation4] sm:$0xff]
    %v236 = vld [vmem:[#allocation4 + $0x8] sm:$0xff]
    %v237 = vld [vmem:[#allocation4 + $0x10] sm:$0xff]
    %v238 = vld [vmem:[#allocation4 + $0x18] sm:$0xff]
    %v239 = vmul.f32 %v212, %v231
    %v240 = vmul.f32 %v215, %v232
    %v241 = vmul.f32 %v220, %v233
    %v242 = vmul.f32 %v223, %v234
    %243 = vadd.xlane.f32.xlu0 %v239
    %v244 = vpop.xlane.xlu0 %243
    %245 = vadd.xlane.f32.xlu0 %v240
    %v246 = vpop.xlane.xlu0 %245
    %247 = vadd.xlane.f32.xlu0 %v241
    %v248 = vpop.xlane.xlu0 %247
    %249 = vadd.xlane.f32.xlu0 %v242
    %v250 = vpop.xlane.xlu0 %249
    %v251 = vadd.f32 %v235, %v244
    %v252 = vadd.f32 %v236, %v246
    %v253 = vadd.f32 %v237, %v248
    %v254 = vadd.f32 %v238, %v250
    %vm255 = vcmask 7168
    %256 = vst.msk [vmem:[#allocation4] sm:$0xff] %vm255, %v251
    %257 = vst.msk [vmem:[#allocation4 + $0x8] sm:$0xff] %vm255, %v252
    %258 = vst.msk [vmem:[#allocation4 + $0x10] sm:$0xff] %vm255, %v253
    %259 = vst.msk [vmem:[#allocation4 + $0x18] sm:$0xff] %vm255, %v254
    %v260 = vld [vmem:[#allocation5] sm:$0xff]
    %v261 = vld [vmem:[#allocation5 + $0x8] sm:$0xff]
    %v262 = vld [vmem:[#allocation5 + $0x10] sm:$0xff]
    %v263 = vld [vmem:[#allocation5 + $0x18] sm:$0xff]
    %264 = vadd.xlane.f32.xlu0 %v231
    %v265 = vpop.xlane.xlu0 %264
    %266 = vadd.xlane.f32.xlu0 %v232
    %v267 = vpop.xlane.xlu0 %266
    %268 = vadd.xlane.f32.xlu0 %v233
    %v269 = vpop.xlane.xlu0 %268
    %270 = vadd.xlane.f32.xlu0 %v234
    %v271 = vpop.xlane.xlu0 %270
    %v272 = vadd.f32 %v260, %v265
    %v273 = vadd.f32 %v261, %v267
    %v274 = vadd.f32 %v262, %v269
    %v275 = vadd.f32 %v263, %v271
    %276 = vst.msk [vmem:[#allocation5] sm:$0xff] %vm255, %v272
    %277 = vst.msk [vmem:[#allocation5 + $0x8] sm:$0xff] %vm255, %v273
    %278 = vst.msk [vmem:[#allocation5 + $0x10] sm:$0xff] %vm255, %v274
    %279 = vst.msk [vmem:[#allocation5 + $0x18] sm:$0xff] %vm255, %v275
    %p280 = scmp.lt.s32.totalorder 0, 0
    // Predicated region
    $region30: #{_lambda_.5} parent=1 // pred_check
      %p281 = pneg %p280
    $region31: #{_lambda_.5} parent=1 // pred_check_branch
      %283 = sbr.rel (%p281) target = $region33
    $region32: #{_lambda_.5} parent=1 // pred_region
      %v284 = vld [vmem:[#allocation2] sm:$0xff]
      %v285 = vld [vmem:[#allocation2 + $0x8] sm:$0xff]
      %v286 = vld [vmem:[#allocation2 + $0x10] sm:$0xff]
      %v287 = vld [vmem:[#allocation2 + $0x18] sm:$0xff]
      %288 = vmax.xlane.f32.xlu0 %v212
      %v289 = vpop.xlane.xlu0 %288
      %290 = vmax.xlane.f32.xlu0 %v215
      %v291 = vpop.xlane.xlu0 %290
      %292 = vmax.xlane.f32.xlu0 %v220
      %v293 = vpop.xlane.xlu0 %292
      %294 = vmax.xlane.f32.xlu0 %v223
      %v295 = vpop.xlane.xlu0 %294
      %v296 = vmax.f32 %v284, %v289
      %v297 = vmax.f32 %v285, %v291
      %v298 = vmax.f32 %v286, %v293
      %v299 = vmax.f32 %v287, %v295
      %v300 = vsub.f32 %v284, %v296
      %v301 = vsub.f32 %v285, %v297
      %v302 = vsub.f32 %v286, %v298
      %v303 = vsub.f32 %v287, %v299
      %v304 = vmul.f32 %v300, 1.442695
      %v305 = vpow.pop %v304
      %v306 = vmul.f32 %v301, 1.442695
      %v307 = vpow.pop %v306
      %v308 = vmul.f32 %v302, 1.442695
      %v309 = vpow.pop %v308
      %v310 = vmul.f32 %v303, 1.442695
      %v311 = vpow.pop %v310
      %v312 = vld [vmem:[#allocation3] sm:$0xff]
      %v313 = vld [vmem:[#allocation3 + $0x8] sm:$0xff]
      %v314 = vld [vmem:[#allocation3 + $0x10] sm:$0xff]
      %v315 = vld [vmem:[#allocation3 + $0x18] sm:$0xff]
      %v316 = vmul.f32 %v305, %v312
      %v317 = vmul.f32 %v307, %v313
      %v318 = vmul.f32 %v309, %v314
      %v319 = vmul.f32 %v311, %v315
      %321 = vset.pattern.permute.xlu0 0
      %322 = vperm.xlu0 %321, %v296
      %v323 = vpop.permute.xlu0 %322
      %326 = vset.pattern.permute.xlu0 0
      %327 = vperm.xlu0 %326, %v297
      %v328 = vpop.permute.xlu0 %327
      %331 = vset.pattern.permute.xlu0 0
      %332 = vperm.xlu0 %331, %v298
      %v333 = vpop.permute.xlu0 %332
      %336 = vset.pattern.permute.xlu0 0
      %337 = vperm.xlu0 %336, %v299
      %v338 = vpop.permute.xlu0 %337
      %v340 = vsub.f32 %v212, %v323
      %v341 = vsub.f32 %v215, %v328
      %v342 = vsub.f32 %v220, %v333
      %v343 = vsub.f32 %v223, %v338
      %v344 = vmul.f32 %v340, 1.442695
      %v345 = vpow.pop %v344
      %v346 = vmul.f32 %v341, 1.442695
      %v347 = vpow.pop %v346
      %v348 = vmul.f32 %v342, 1.442695
      %v349 = vpow.pop %v348
      %v350 = vmul.f32 %v343, 1.442695
      %v351 = vpow.pop %v350
      %352 = vadd.xlane.f32.xlu0 %v345
      %v353 = vpop.xlane.xlu0 %352
      %354 = vadd.xlane.f32.xlu0 %v347
      %v355 = vpop.xlane.xlu0 %354
      %356 = vadd.xlane.f32.xlu0 %v349
      %v357 = vpop.xlane.xlu0 %356
      %358 = vadd.xlane.f32.xlu0 %v351
      %v359 = vpop.xlane.xlu0 %358
      %v360 = vadd.f32 %v316, %v353
      %v361 = vadd.f32 %v317, %v355
      %v362 = vadd.f32 %v318, %v357
      %v363 = vadd.f32 %v319, %v359
      %364 = vst.msk [vmem:[#allocation3] sm:$0xff] %vm255, %v360
      %365 = vst.msk [vmem:[#allocation3 + $0x8] sm:$0xff] %vm255, %v361
      %366 = vst.msk [vmem:[#allocation3 + $0x10] sm:$0xff] %vm255, %v362
      %367 = vst.msk [vmem:[#allocation3 + $0x18] sm:$0xff] %vm255, %v363
      %368 = vst.msk [vmem:[#allocation2] sm:$0xff] %vm255, %v296
      %369 = vst.msk [vmem:[#allocation2 + $0x8] sm:$0xff] %vm255, %v297
      %370 = vst.msk [vmem:[#allocation2 + $0x10] sm:$0xff] %vm255, %v298
      %371 = vst.msk [vmem:[#allocation2 + $0x18] sm:$0xff] %vm255, %v299
    $region33: #{_lambda_.5} parent=1 // pred_fallthru
      _
    // Predicated region
    $region34: #{_lambda_.5} parent=1 // pred_check
      %p372 = pneg %p55
    $region35: #{_lambda_.5} parent=1 // pred_check_branch
      %374 = sbr.rel (%p372) target = $region37
    $region36: #{_lambda_.5} parent=1 // pred_region
      %v375 = vlaneseq
      %v376 = vand.u32 %v375, 127
      %vm377 = vcmp.lt.s32.totalorder %v376, 40
      %v378 = vsel %vm377, 1, 0
      %vm379 = vcmp.eq.s32.totalorder %v378, 1
      %v380 = vsel %vm379, %v212, -1e+30
      %v381 = vsel %vm379, %v215, -1e+30
      %v382 = vsel %vm379, %v220, -1e+30
      %v383 = vsel %vm379, %v223, -1e+30
      %v384 = vld [vmem:[#allocation2] sm:$0xff]
      %v385 = vld [vmem:[#allocation2 + $0x8] sm:$0xff]
      %v386 = vld [vmem:[#allocation2 + $0x10] sm:$0xff]
      %v387 = vld [vmem:[#allocation2 + $0x18] sm:$0xff]
      %388 = vmax.xlane.f32.xlu0 %v380
      %v389 = vpop.xlane.xlu0 %388
      %390 = vmax.xlane.f32.xlu0 %v381
      %v391 = vpop.xlane.xlu0 %390
      %392 = vmax.xlane.f32.xlu0 %v382
      %v393 = vpop.xlane.xlu0 %392
      %394 = vmax.xlane.f32.xlu0 %v383
      %v395 = vpop.xlane.xlu0 %394
      %v396 = vmax.f32 %v384, %v389
      %v397 = vmax.f32 %v385, %v391
      %v398 = vmax.f32 %v386, %v393
      %v399 = vmax.f32 %v387, %v395
      %v400 = vsub.f32 %v384, %v396
      %v401 = vsub.f32 %v385, %v397
      %v402 = vsub.f32 %v386, %v398
      %v403 = vsub.f32 %v387, %v399
      %v404 = vmul.f32 %v400, 1.442695
      %v405 = vpow.pop %v404
      %v406 = vmul.f32 %v401, 1.442695
      %v407 = vpow.pop %v406
      %v408 = vmul.f32 %v402, 1.442695
      %v409 = vpow.pop %v408
      %v410 = vmul.f32 %v403, 1.442695
      %v411 = vpow.pop %v410
      %v412 = vld [vmem:[#allocation3] sm:$0xff]
      %v413 = vld [vmem:[#allocation3 + $0x8] sm:$0xff]
      %v414 = vld [vmem:[#allocation3 + $0x10] sm:$0xff]
      %v415 = vld [vmem:[#allocation3 + $0x18] sm:$0xff]
      %v416 = vmul.f32 %v405, %v412
      %v417 = vmul.f32 %v407, %v413
      %v418 = vmul.f32 %v409, %v414
      %v419 = vmul.f32 %v411, %v415
      %421 = vset.pattern.permute.xlu0 0
      %422 = vperm.xlu0 %421, %v396
      %v423 = vpop.permute.xlu0 %422
      %426 = vset.pattern.permute.xlu0 0
      %427 = vperm.xlu0 %426, %v397
      %v428 = vpop.permute.xlu0 %427
      %431 = vset.pattern.permute.xlu0 0
      %432 = vperm.xlu0 %431, %v398
      %v433 = vpop.permute.xlu0 %432
      %436 = vset.pattern.permute.xlu0 0
      %437 = vperm.xlu0 %436, %v399
      %v438 = vpop.permute.xlu0 %437
      %v440 = vsub.f32 %v380, %v423
      %v441 = vsub.f32 %v381, %v428
      %v442 = vsub.f32 %v382, %v433
      %v443 = vsub.f32 %v383, %v438
      %v444 = vmul.f32 %v440, 1.442695
      %v445 = vpow.pop %v444
      %v446 = vmul.f32 %v441, 1.442695
      %v447 = vpow.pop %v446
      %v448 = vmul.f32 %v442, 1.442695
      %v449 = vpow.pop %v448
      %v450 = vmul.f32 %v443, 1.442695
      %v451 = vpow.pop %v450
      %452 = vadd.xlane.f32.xlu0 %v445
      %v453 = vpop.xlane.xlu0 %452
      %454 = vadd.xlane.f32.xlu0 %v447
      %v455 = vpop.xlane.xlu0 %454
      %456 = vadd.xlane.f32.xlu0 %v449
      %v457 = vpop.xlane.xlu0 %456
      %458 = vadd.xlane.f32.xlu0 %v451
      %v459 = vpop.xlane.xlu0 %458
      %v460 = vadd.f32 %v416, %v453
      %v461 = vadd.f32 %v417, %v455
      %v462 = vadd.f32 %v418, %v457
      %v463 = vadd.f32 %v419, %v459
      %464 = vst.msk [vmem:[#allocation3] sm:$0xff] %vm255, %v460
      %465 = vst.msk [vmem:[#allocation3 + $0x8] sm:$0xff] %vm255, %v461
      %466 = vst.msk [vmem:[#allocation3 + $0x10] sm:$0xff] %vm255, %v462
      %467 = vst.msk [vmem:[#allocation3 + $0x18] sm:$0xff] %vm255, %v463
      %468 = vst.msk [vmem:[#allocation2] sm:$0xff] %vm255, %v396
      %469 = vst.msk [vmem:[#allocation2 + $0x8] sm:$0xff] %vm255, %v397
      %470 = vst.msk [vmem:[#allocation2 + $0x10] sm:$0xff] %vm255, %v398
      %471 = vst.msk [vmem:[#allocation2 + $0x18] sm:$0xff] %vm255, %v399
      %v472 = vld [vmem:[#allocation2] sm:$0xff]
      %v473 = vld [vmem:[#allocation2 + $0x8] sm:$0xff]
      %v474 = vld [vmem:[#allocation2 + $0x10] sm:$0xff]
      %v475 = vld [vmem:[#allocation2 + $0x18] sm:$0xff]
      %v476 = vld [vmem:[#allocation3] sm:$0xff]
      %v477 = vld [vmem:[#allocation3 + $0x8] sm:$0xff]
      %v478 = vld [vmem:[#allocation3 + $0x10] sm:$0xff]
      %v479 = vld [vmem:[#allocation3 + $0x18] sm:$0xff]
      %v480 = vlog2.pop %v476
      %v481 = vmul.f32 %v480, 0.6931472
      %v482 = vlog2.pop %v477
      %v483 = vmul.f32 %v482, 0.6931472
      %v484 = vlog2.pop %v478
      %v485 = vmul.f32 %v484, 0.6931472
      %v486 = vlog2.pop %v479
      %v487 = vmul.f32 %v486, 0.6931472
      %v488 = vadd.f32 %v472, %v481
      %v489 = vadd.f32 %v473, %v483
      %v490 = vadd.f32 %v474, %v485
      %v491 = vadd.f32 %v475, %v487
      %v492 = vld [vmem:[#allocation5] sm:$0xff]
      %v493 = vld [vmem:[#allocation5 + $0x8] sm:$0xff]
      %v494 = vld [vmem:[#allocation5 + $0x10] sm:$0xff]
      %v495 = vld [vmem:[#allocation5 + $0x18] sm:$0xff]
      %v496 = vld [vmem:[#allocation4] sm:$0xff]
      %v497 = vld [vmem:[#allocation4 + $0x8] sm:$0xff]
      %v498 = vld [vmem:[#allocation4 + $0x10] sm:$0xff]
      %v499 = vld [vmem:[#allocation4 + $0x18] sm:$0xff]
      %v500 = vmul.f32 %v488, %v492
      %v501 = vmul.f32 %v489, %v493
      %v502 = vmul.f32 %v490, %v494
      %v503 = vmul.f32 %v491, %v495
      %v504 = vsub.f32 %v496, %v500
      %v505 = vsub.f32 %v497, %v501
      %v506 = vsub.f32 %v498, %v502
      %v507 = vsub.f32 %v499, %v503
      %v508 = vmax.f32 %v492, 1.0
      %v509 = vmax.f32 %v493, 1.0
      %v510 = vmax.f32 %v494, 1.0
      %v511 = vmax.f32 %v495, 1.0
      %v512 = vrcp.pop %v508
      %v513 = vmul.f32 %v504, %v512
      %v514 = vrcp.pop %v509
      %v515 = vmul.f32 %v505, %v514
      %v516 = vrcp.pop %v510
      %v517 = vmul.f32 %v506, %v516
      %v518 = vrcp.pop %v511
      %v519 = vmul.f32 %v507, %v518
      %520 = vst.msk [vmem:[#allocation12] sm:$0xff] %vm255, %v513
      %521 = vst.msk [vmem:[#allocation12 + $0x8] sm:$0xff] %vm255, %v515
      %522 = vst.msk [vmem:[#allocation12 + $0x10] sm:$0xff] %vm255, %v517
      %523 = vst.msk [vmem:[#allocation12 + $0x18] sm:$0xff] %vm255, %v519
    $region37: #{_lambda_.5} parent=1 // pred_fallthru
      _
    // Predicated region
    $region38: #{_lambda_.5} parent=1 // pred_check
      _
    $region39: #{_lambda_.5} parent=1 // pred_check_branch
      %525 = sbr.rel (0) target = $region41
    $region40: #{_lambda_.5} parent=1 // pred_region
      %s527 = ssub.s32 512, 512
      %528 = vsyncadd [#allocation8], %s527
      %s529 = sshll.u32 [#allocation12], 4
      %s530 = int_to_ptr.vmem [resolvable:$true] %s529
      %535 = dma.vmem_to_hbm [thread:$0]  %s530, 512, %s3, [#allocation8], 128, 128, 8
    $region41: #{_lambda_.5} parent=1 // pred_fallthru
      _
    // Predicated region
    $region42: #{_lambda_.5} parent=1 // pred_check
      _
    $region43: #{_lambda_.5} parent=1 // pred_check_branch
      %537 = sbr.rel (0) target = $region45
    $region44: #{_lambda_.5} parent=1 // pred_region
      %538 = dma.done [#allocation8], 512
    $region45: #{_lambda_.5} parent=1 // pred_fallthru
      _
    %539 = vsyncpa [#allocation7], 1
    %540 = vsyncpa [#allocation10], 1
    %541 = vsyncpa [#allocation8], 1

// kernel: _lambda_.7
$region0: #{_lambda_.7}
  #allocation0 [shape = 'u32[]', space=smem, size = 0x4, offset = 0x4, fixed_abs, tag = 'smem constant byte address 0x4 - core index']
  #allocation1 [shape = 'u32[144,128]{1,0:T(1,128)}', space=vmem, size = 0x12000, scoped, tag = 'internal scratch']
  #allocation2 [shape = 'f32[16,1]{1,0:T(8,128)}', space=vmem, size = 0x2000, scoped, tag = 'scratch operand']
  #allocation3 [shape = 'f32[16,1]{1,0:T(8,128)}', space=vmem, size = 0x2000, scoped, tag = 'scratch operand']
  #allocation4 [shape = 'f32[16,1]{1,0:T(8,128)}', space=vmem, size = 0x2000, scoped, tag = 'scratch operand']
  %s0 = inlined_call_operand.vmem [shape: bf16[16,64], index: 0, kind: input, shape index: {}]
  %s1 = inlined_call_operand.vmem [shape: bf16[16,64], index: 1, kind: input, shape index: {}]
  %s2 = inlined_call_operand.vmem [shape: f32[16,1], index: 2, kind: output, shape index: {}]
  %s3 = sld [smem:[#allocation0]]
  $region34: #{_lambda_.7} parent=0
    _
  %s5 = ssub.s32 1, %s3
  %s6 = scalar_select 0, %s5, %s3
  // Predicated region
  $region2: #{_lambda_.7} parent=0 // pred_check
    _
  $region3: #{_lambda_.7} parent=0 // pred_check_branch
    %8 = sbr.rel (0) target = $region5
  $region4: #{_lambda_.7} parent=0 // pred_region
    _
  $region5: #{_lambda_.7} parent=0 // pred_fallthru
    _
  // Predicated region
  $region6: #{_lambda_.7} parent=0 // pred_check
    _
  $region7: #{_lambda_.7} parent=0 // pred_check_branch
    %10 = sbr.rel (0) target = $region9
  $region8: #{_lambda_.7} parent=0 // pred_region
    _
  $region9: #{_lambda_.7} parent=0 // pred_fallthru
    _
  %p12 = scmp.eq.s32.totalorder 0, 0
  // Predicated region
  $region10: #{_lambda_.7} parent=0 // pred_check
    %p13 = pneg %p12
  $region11: #{_lambda_.7} parent=0 // pred_check_branch
    %15 = sbr.rel (%p13) target = $region13
  $region12: #{_lambda_.7} parent=0 // pred_region
    %vm16 = vcmask 7168
    %17 = vst.msk [vmem:[#allocation2] sm:$0xff] %vm16, -1e+30
    %18 = vst.msk [vmem:[#allocation2 + $0x8] sm:$0xff] %vm16, -1e+30
    %19 = vst.msk [vmem:[#allocation3] sm:$0xff] %vm16, 0.0
    %20 = vst.msk [vmem:[#allocation3 + $0x8] sm:$0xff] %vm16, 0.0
    %21 = vst.msk [vmem:[#allocation4] sm:$0xff] %vm16, 0.0
    %22 = vst.msk [vmem:[#allocation4 + $0x8] sm:$0xff] %vm16, 0.0
  $region13: #{_lambda_.7} parent=0 // pred_fallthru
    _
  %v23 = vld [vmem:[%s0] sm:$0xf]
  %v24 = vld [vmem:[%s0 + $0x4] sm:$0xf]
  %v25 = vld [vmem:[%s1] sm:$0xf]
  %v26 = vld [vmem:[%s1 + $0x4] sm:$0xf]
  %v29 = vunpack.c.l.b16 %v23
  %v30 = vunpack.c.l.b16 %v24
  %v31 = vpack.c.b16 %v30, %v29
  %v34 = vunpack.c.l.b16 %v25
  %v35 = vunpack.c.l.b16 %v26
  %v36 = vpack.c.b16 %v35, %v34
  %vm37 = vcmask 523264
  %v39 = vsel %vm37, %v31, 0
  %v42 = vsel %vm37, %v36, 0
  %44 = vmatprep.subr.bf16.mxu0 0
  %45 = vmatpush1.bf16.xpose.msra.mxu0 %v42
  %46 = vmatprep.subr.bf16.mxu0 0
  %47 = vmatpush1.bf16.xpose.msra.mxu0 0
  %48 = vmatprep.subr.bf16.mxu0 0
  %49 = vmatpush1.bf16.xpose.msra.mxu0 0
  %50 = vmatprep.subr.bf16.mxu0 0
  %51 = vmatpush1.bf16.xpose.msra.mxu0 0
  %52 = vmatprep.subr.bf16.mxu0 0
  %53 = vmatpush1.bf16.xpose.msra.mxu0 0
  %54 = vmatprep.subr.bf16.mxu0 0
  %55 = vmatpush1.bf16.xpose.msra.mxu0 0
  %56 = vmatprep.subr.bf16.mxu0 0
  %57 = vmatpush1.bf16.xpose.msra.mxu0 0
  %58 = vmatprep.subr.bf16.mxu0 0
  %59 = vmatpush1.bf16.xpose.msra.mxu0 0
  %60 = vmatprep.subr.bf16.mxu0 0
  %61 = vmatpush1.bf16.xpose.msra.mxu0 0
  %62 = vmatprep.subr.bf16.mxu0 0
  %63 = vmatpush1.bf16.xpose.msra.mxu0 0
  %64 = vmatprep.subr.bf16.mxu0 0
  %65 = vmatpush1.bf16.xpose.msra.mxu0 0
  %66 = vmatprep.subr.bf16.mxu0 0
  %67 = vmatpush1.bf16.xpose.msra.mxu0 0
  %68 = vmatprep.subr.bf16.mxu0 0
  %69 = vmatpush1.bf16.xpose.msra.mxu0 0
  %70 = vmatprep.subr.bf16.mxu0 0
  %71 = vmatpush1.bf16.xpose.msra.mxu0 0
  %72 = vmatprep.subr.bf16.mxu0 0
  %73 = vmatpush1.bf16.xpose.msra.mxu0 0
  %74 = vmatprep.subr.bf16.mxu0 0
  %75 = vmatpush1.bf16.xpose.msra.mxu0 0
  %76 = vmatprep.mubr.bf16.mxu0 0
  %77 = vmatmul.mubr.bf16.gmra.mrb[0].mxu0 %v39
  %v78 = vpop.f32.mrb[0].mxu0
  %v79 = vadd.f32 0.0, %v78
  %v80 = vpop.f32.mrb[0].mxu0
  %v81 = vpop.f32.mrb[0].mxu0
  %v82 = vadd.f32 0.0, %v81
  %v83 = vpop.f32.mrb[0].mxu0
  %84 = vdwg.mxu0
  %v85 = vmul.f32 %v79, 5.0
  %v86 = vmul.f32 %v82, 5.0
  %p87 = scmp.eq.s32.totalorder 0, 0
  // Predicated region
  $region14: #{_lambda_.7} parent=0 // pred_check
    %p88 = pneg %p87
  $region15: #{_lambda_.7} parent=0 // pred_check_branch
    %90 = sbr.rel (%p88) target = $region17
  $region16: #{_lambda_.7} parent=0 // pred_region
    %v91 = vlaneseq
    %v92 = vshrl.u32 %v91, 7
    %v93 = vadd.s32 %v92, 8
    %v94 = vlaneseq
    %v95 = vand.u32 %v94, 127
    %v96 = vld [vmem:[#allocation4] sm:$0xff]
    %v97 = vld [vmem:[#allocation4 + $0x8] sm:$0xff]
    %vm98 = vcmp.eq.s32.totalorder %v92, %v95
    %vm99 = vcmp.eq.s32.totalorder %v93, %v95
    %v100 = vsel %vm98, %v85, 0.0
    %v101 = vsel %vm99, %v86, 0.0
    %vm102 = vcmask 130048
    %v103 = vsel %vm102, %v100, 0.0
    %104 = vadd.xlane.f32.xlu0 %v103
    %v105 = vpop.xlane.xlu0 %104
    %v106 = vsel %vm102, %v101, 0.0
    %107 = vadd.xlane.f32.xlu0 %v106
    %v108 = vpop.xlane.xlu0 %107
    %v109 = vadd.f32 %v96, %v105
    %v110 = vadd.f32 %v97, %v108
    %vm111 = vcmask 7168
    %112 = vst.msk [vmem:[#allocation4] sm:$0xff] %vm111, %v109
    %113 = vst.msk [vmem:[#allocation4 + $0x8] sm:$0xff] %vm111, %v110
  $region17: #{_lambda_.7} parent=0 // pred_fallthru
    _
  %p114 = scmp.lt.s32.totalorder 0, 0
  // Predicated region
  $region18: #{_lambda_.7} parent=0 // pred_check
    %p115 = pneg %p114
  $region19: #{_lambda_.7} parent=0 // pred_check_branch
    %117 = sbr.rel (%p115) target = $region21
  $region20: #{_lambda_.7} parent=0 // pred_region
    %v118 = vld [vmem:[#allocation2] sm:$0xff]
    %v119 = vld [vmem:[#allocation2 + $0x8] sm:$0xff]
    %vm120 = vcmask 130048
    %v121 = vsel %vm120, %v85, -inf
    %122 = vmax.xlane.f32.xlu0 %v121
    %v123 = vpop.xlane.xlu0 %122
    %v124 = vsel %vm120, %v86, -inf
    %125 = vmax.xlane.f32.xlu0 %v124
    %v126 = vpop.xlane.xlu0 %125
    %v127 = vmax.f32 %v118, %v123
    %v128 = vmax.f32 %v119, %v126
    %v129 = vsub.f32 %v118, %v127
    %v130 = vsub.f32 %v119, %v128
    %v131 = vmul.f32 %v129, 1.442695
    %v132 = vpow.pop %v131
    %v133 = vmul.f32 %v130, 1.442695
    %v134 = vpow.pop %v133
    %v135 = vld [vmem:[#allocation3] sm:$0xff]
    %v136 = vld [vmem:[#allocation3 + $0x8] sm:$0xff]
    %v137 = vmul.f32 %v132, %v135
    %v138 = vmul.f32 %v134, %v136
    %140 = vset.pattern.permute.xlu0 0
    %141 = vperm.xlu0 %140, %v127
    %v142 = vpop.permute.xlu0 %141
    %145 = vset.pattern.permute.xlu0 0
    %146 = vperm.xlu0 %145, %v128
    %v147 = vpop.permute.xlu0 %146
    %v149 = vsub.f32 %v85, %v142
    %v150 = vsub.f32 %v86, %v147
    %v151 = vmul.f32 %v149, 1.442695
    %v152 = vpow.pop %v151
    %v153 = vmul.f32 %v150, 1.442695
    %v154 = vpow.pop %v153
    %v155 = vsel %vm120, %v152, 0.0
    %156 = vadd.xlane.f32.xlu0 %v155
    %v157 = vpop.xlane.xlu0 %156
    %v158 = vsel %vm120, %v154, 0.0
    %159 = vadd.xlane.f32.xlu0 %v158
    %v160 = vpop.xlane.xlu0 %159
    %v161 = vadd.f32 %v137, %v157
    %v162 = vadd.f32 %v138, %v160
    %vm163 = vcmask 7168
    %164 = vst.msk [vmem:[#allocation3] sm:$0xff] %vm163, %v161
    %165 = vst.msk [vmem:[#allocation3 + $0x8] sm:$0xff] %vm163, %v162
    %166 = vst.msk [vmem:[#allocation2] sm:$0xff] %vm163, %v127
    %167 = vst.msk [vmem:[#allocation2 + $0x8] sm:$0xff] %vm163, %v128
  $region21: #{_lambda_.7} parent=0 // pred_fallthru
    _
  // Predicated region
  $region22: #{_lambda_.7} parent=0 // pred_check
    %p168 = pneg %p12
  $region23: #{_lambda_.7} parent=0 // pred_check_branch
    %170 = sbr.rel (%p168) target = $region25
  $region24: #{_lambda_.7} parent=0 // pred_region
    %v171 = vlaneseq
    %v172 = vand.u32 %v171, 127
    %vm173 = vcmp.lt.s32.totalorder %v172, 4
    %v174 = vsel %vm173, 1, 0
    %vm175 = vcmp.eq.s32.totalorder %v174, 1
    %v176 = vsel %vm175, %v85, -1e+30
    %v177 = vsel %vm175, %v86, -1e+30
    %v178 = vld [vmem:[#allocation2] sm:$0xff]
    %v179 = vld [vmem:[#allocation2 + $0x8] sm:$0xff]
    %vm180 = vcmask 130048
    %v181 = vsel %vm180, %v176, -inf
    %182 = vmax.xlane.f32.xlu0 %v181
    %v183 = vpop.xlane.xlu0 %182
    %v184 = vsel %vm180, %v177, -inf
    %185 = vmax.xlane.f32.xlu0 %v184
    %v186 = vpop.xlane.xlu0 %185
    %v187 = vmax.f32 %v178, %v183
    %v188 = vmax.f32 %v179, %v186
    %v189 = vsub.f32 %v178, %v187
    %v190 = vsub.f32 %v179, %v188
    %v191 = vmul.f32 %v189, 1.442695
    %v192 = vpow.pop %v191
    %v193 = vmul.f32 %v190, 1.442695
    %v194 = vpow.pop %v193
    %v195 = vld [vmem:[#allocation3] sm:$0xff]
    %v196 = vld [vmem:[#allocation3 + $0x8] sm:$0xff]
    %v197 = vmul.f32 %v192, %v195
    %v198 = vmul.f32 %v194, %v196
    %200 = vset.pattern.permute.xlu0 0
    %201 = vperm.xlu0 %200, %v187
    %v202 = vpop.permute.xlu0 %201
    %205 = vset.pattern.permute.xlu0 0
    %206 = vperm.xlu0 %205, %v188
    %v207 = vpop.permute.xlu0 %206
    %v209 = vsub.f32 %v176, %v202
    %v210 = vsub.f32 %v177, %v207
    %v211 = vmul.f32 %v209, 1.442695
    %v212 = vpow.pop %v211
    %v213 = vmul.f32 %v210, 1.442695
    %v214 = vpow.pop %v213
    %v215 = vsel %vm180, %v212, 0.0
    %216 = vadd.xlane.f32.xlu0 %v215
    %v217 = vpop.xlane.xlu0 %216
    %v218 = vsel %vm180, %v214, 0.0
    %219 = vadd.xlane.f32.xlu0 %v218
    %v220 = vpop.xlane.xlu0 %219
    %v221 = vadd.f32 %v197, %v217
    %v222 = vadd.f32 %v198, %v220
    %vm223 = vcmask 7168
    %224 = vst.msk [vmem:[#allocation3] sm:$0xff] %vm223, %v221
    %225 = vst.msk [vmem:[#allocation3 + $0x8] sm:$0xff] %vm223, %v222
    %226 = vst.msk [vmem:[#allocation2] sm:$0xff] %vm223, %v187
    %227 = vst.msk [vmem:[#allocation2 + $0x8] sm:$0xff] %vm223, %v188
    %s228 = smul.u32 0, 16
    %v229 = vlaneseq
    %v230 = vshrl.u32 %v229, 7
    %v231 = vadd.s32 %v230, 8
    %v232 = vstv %s228
    %v233 = vadd.s32 %v232, %v230
    %v234 = vadd.s32 %v232, %v231
    %vm235 = vcmp.lt.s32.totalorder %v233, 4
    %vm236 = vcmp.lt.s32.totalorder %v234, 4
    %v237 = vsel %vm235, 1, 0
    %v238 = vsel %vm236, 1, 0
    %v239 = vcvt.s32.f32 %v237
    %v240 = vcvt.s32.f32 %v238
    %v241 = vld [vmem:[#allocation2] sm:$0xff]
    %v242 = vld [vmem:[#allocation2 + $0x8] sm:$0xff]
    %v243 = vld [vmem:[#allocation3] sm:$0xff]
    %v244 = vld [vmem:[#allocation3 + $0x8] sm:$0xff]
    %v245 = vlog2.pop %v243
    %v246 = vmul.f32 %v245, 0.6931472
    %v247 = vlog2.pop %v244
    %v248 = vmul.f32 %v247, 0.6931472
    %v249 = vadd.f32 %v241, %v246
    %v250 = vadd.f32 %v242, %v248
    %v251 = vld [vmem:[#allocation4] sm:$0xff]
    %v252 = vld [vmem:[#allocation4 + $0x8] sm:$0xff]
    %v253 = vsub.f32 %v249, %v251
    %v254 = vsub.f32 %v250, %v252
    %v255 = vmul.f32 %v253, %v239
    %v256 = vmul.f32 %v254, %v240
    %257 = vst.msk [vmem:[%s2] sm:$0xff] %vm223, %v255
    %258 = vst.msk [vmem:[%s2 + $0x8] sm:$0xff] %vm223, %v256
  $region25: #{_lambda_.7} parent=0 // pred_fallthru
    _
  // Predicated region
  $region26: #{_lambda_.7} parent=0 // pred_check
    _
  $region27: #{_lambda_.7} parent=0 // pred_check_branch
    %260 = sbr.rel (0) target = $region29
  $region28: #{_lambda_.7} parent=0 // pred_region
    _
  $region29: #{_lambda_.7} parent=0 // pred_fallthru
    _
  // Predicated region
  $region30: #{_lambda_.7} parent=0 // pred_check
    _
  $region31: #{_lambda_.7} parent=0 // pred_check_branch
    %262 = sbr.rel (0) target = $region33
  $region32: #{_lambda_.7} parent=0 // pred_region
    _
  $region33: #{_lambda_.7} parent=0 // pred_fallthru
    _

// kernel: _lambda_.6
$region0: #{_lambda_.6}
  #allocation0 [shape = 'u32[]', space=smem, size = 0x4, offset = 0x4, fixed_abs, tag = 'smem constant byte address 0x4 - core index']
  #allocation1 [shape = 'u32[144,128]{1,0:T(1,128)}', space=vmem, size = 0x12000, scoped, tag = 'internal scratch']
  #allocation2 [shape = 'f32[32,1]{1,0:T(8,128)}', space=vmem, size = 0x4000, scoped, tag = 'scratch operand']
  #allocation3 [shape = 'f32[32,1]{1,0:T(8,128)}', space=vmem, size = 0x4000, scoped, tag = 'scratch operand']
  #allocation4 [shape = 'f32[32,1]{1,0:T(8,128)}', space=vmem, size = 0x4000, scoped, tag = 'scratch operand']
  %s0 = inlined_call_operand.vmem [shape: bf16[32,64], index: 0, kind: input, shape index: {}, may-alias: {0,1}]
  %s1 = inlined_call_operand.vmem [shape: bf16[32,64], index: 1, kind: input, shape index: {}, may-alias: {0,1}]
  %s2 = inlined_call_operand.vmem [shape: f32[32,1], index: 2, kind: output, shape index: {}]
  %s3 = sld [smem:[#allocation0]]
  $region34: #{_lambda_.6} parent=0
    _
  %s5 = ssub.s32 1, %s3
  %s6 = scalar_select 0, %s5, %s3
  // Predicated region
  $region2: #{_lambda_.6} parent=0 // pred_check
    _
  $region3: #{_lambda_.6} parent=0 // pred_check_branch
    %8 = sbr.rel (0) target = $region5
  $region4: #{_lambda_.6} parent=0 // pred_region
    _
  $region5: #{_lambda_.6} parent=0 // pred_fallthru
    _
  // Predicated region
  $region6: #{_lambda_.6} parent=0 // pred_check
    _
  $region7: #{_lambda_.6} parent=0 // pred_check_branch
    %10 = sbr.rel (0) target = $region9
  $region8: #{_lambda_.6} parent=0 // pred_region
    _
  $region9: #{_lambda_.6} parent=0 // pred_fallthru
    _
  %p12 = scmp.eq.s32.totalorder 0, 0
  // Predicated region
  $region10: #{_lambda_.6} parent=0 // pred_check
    %p13 = pneg %p12
  $region11: #{_lambda_.6} parent=0 // pred_check_branch
    %15 = sbr.rel (%p13) target = $region13
  $region12: #{_lambda_.6} parent=0 // pred_region
    %vm16 = vcmask 7168
    %17 = vst.msk [vmem:[#allocation2] sm:$0xff] %vm16, -1e+30
    %18 = vst.msk [vmem:[#allocation2 + $0x8] sm:$0xff] %vm16, -1e+30
    %19 = vst.msk [vmem:[#allocation2 + $0x10] sm:$0xff] %vm16, -1e+30
    %20 = vst.msk [vmem:[#allocation2 + $0x18] sm:$0xff] %vm16, -1e+30
    %21 = vst.msk [vmem:[#allocation3] sm:$0xff] %vm16, 0.0
    %22 = vst.msk [vmem:[#allocation3 + $0x8] sm:$0xff] %vm16, 0.0
    %23 = vst.msk [vmem:[#allocation3 + $0x10] sm:$0xff] %vm16, 0.0
    %24 = vst.msk [vmem:[#allocation3 + $0x18] sm:$0xff] %vm16, 0.0
    %25 = vst.msk [vmem:[#allocation4] sm:$0xff] %vm16, 0.0
    %26 = vst.msk [vmem:[#allocation4 + $0x8] sm:$0xff] %vm16, 0.0
    %27 = vst.msk [vmem:[#allocation4 + $0x10] sm:$0xff] %vm16, 0.0
    %28 = vst.msk [vmem:[#allocation4 + $0x18] sm:$0xff] %vm16, 0.0
  $region13: #{_lambda_.6} parent=0 // pred_fallthru
    _
  %v29 = vld [vmem:[%s0] sm:$0xf]
  %v30 = vld [vmem:[%s0 + $0x4] sm:$0xf]
  %v31 = vld [vmem:[%s0 + $0x8] sm:$0xf]
  %v32 = vld [vmem:[%s0 + $0xc] sm:$0xf]
  %v33 = vld [vmem:[%s1] sm:$0xf]
  %v34 = vld [vmem:[%s1 + $0x4] sm:$0xf]
  %v35 = vld [vmem:[%s1 + $0x8] sm:$0xf]
  %v36 = vld [vmem:[%s1 + $0xc] sm:$0xf]
  %v41 = vunpack.c.l.b16 %v29
  %v42 = vunpack.c.l.b16 %v30
  %v43 = vunpack.c.l.b16 %v31
  %v44 = vunpack.c.l.b16 %v32
  %v45 = vpack.c.b16 %v42, %v41
  %v46 = vpack.c.b16 %v44, %v43
  %v51 = vunpack.c.l.b16 %v33
  %v52 = vunpack.c.l.b16 %v34
  %v53 = vunpack.c.l.b16 %v35
  %v54 = vunpack.c.l.b16 %v36
  %v55 = vpack.c.b16 %v52, %v51
  %v56 = vpack.c.b16 %v54, %v53
  %vm57 = vcmask 523264
  %v59 = vsel %vm57, %v45, 0
  %v62 = vsel %vm57, %v46, 0
  %v65 = vsel %vm57, %v55, 0
  %v68 = vsel %vm57, %v56, 0
  %70 = vmatprep.subr.bf16.mxu0 0
  %71 = vmatpush1.bf16.xpose.msra.mxu0 %v65
  %72 = vmatprep.subr.bf16.mxu0 0
  %73 = vmatpush1.bf16.xpose.msra.mxu0 %v68
  %74 = vmatprep.subr.bf16.mxu0 0
  %75 = vmatpush1.bf16.xpose.msra.mxu0 0
  %76 = vmatprep.subr.bf16.mxu0 0
  %77 = vmatpush1.bf16.xpose.msra.mxu0 0
  %78 = vmatprep.subr.bf16.mxu0 0
  %79 = vmatpush1.bf16.xpose.msra.mxu0 0
  %80 = vmatprep.subr.bf16.mxu0 0
  %81 = vmatpush1.bf16.xpose.msra.mxu0 0
  %82 = vmatprep.subr.bf16.mxu0 0
  %83 = vmatpush1.bf16.xpose.msra.mxu0 0
  %84 = vmatprep.subr.bf16.mxu0 0
  %85 = vmatpush1.bf16.xpose.msra.mxu0 0
  %86 = vmatprep.subr.bf16.mxu0 0
  %87 = vmatpush1.bf16.xpose.msra.mxu0 0
  %88 = vmatprep.subr.bf16.mxu0 0
  %89 = vmatpush1.bf16.xpose.msra.mxu0 0
  %90 = vmatprep.subr.bf16.mxu0 0
  %91 = vmatpush1.bf16.xpose.msra.mxu0 0
  %92 = vmatprep.subr.bf16.mxu0 0
  %93 = vmatpush1.bf16.xpose.msra.mxu0 0
  %94 = vmatprep.subr.bf16.mxu0 0
  %95 = vmatpush1.bf16.xpose.msra.mxu0 0
  %96 = vmatprep.subr.bf16.mxu0 0
  %97 = vmatpush1.bf16.xpose.msra.mxu0 0
  %98 = vmatprep.subr.bf16.mxu0 0
  %99 = vmatpush1.bf16.xpose.msra.mxu0 0
  %100 = vmatprep.subr.bf16.mxu0 0
  %101 = vmatpush1.bf16.xpose.msra.mxu0 0
  %102 = vmatprep.mubr.bf16.mxu0 0
  %103 = vmatmul.mubr.bf16.gmra.mrb[0].mxu0 %v59
  %v104 = vpop.f32.mrb[0].mxu0
  %v105 = vadd.f32 0.0, %v104
  %v106 = vpop.f32.mrb[0].mxu0
  %v107 = vpop.f32.mrb[0].mxu0
  %v108 = vadd.f32 0.0, %v107
  %v109 = vpop.f32.mrb[0].mxu0
  %110 = vmatprep.mubr.bf16.mxu0 0
  %111 = vmatmul.mubr.bf16.gmra.mrb[0].mxu0 %v62
  %v112 = vpop.f32.mrb[0].mxu0
  %v113 = vadd.f32 0.0, %v112
  %v114 = vpop.f32.mrb[0].mxu0
  %v115 = vpop.f32.mrb[0].mxu0
  %v116 = vadd.f32 0.0, %v115
  %v117 = vpop.f32.mrb[0].mxu0
  %118 = vdwg.mxu0
  %v119 = vmul.f32 %v105, 5.0
  %v120 = vmul.f32 %v108, 5.0
  %v121 = vmul.f32 %v113, 5.0
  %v122 = vmul.f32 %v116, 5.0
  %p123 = scmp.eq.s32.totalorder 0, 0
  // Predicated region
  $region14: #{_lambda_.6} parent=0 // pred_check
    %p124 = pneg %p123
  $region15: #{_lambda_.6} parent=0 // pred_check_branch
    %126 = sbr.rel (%p124) target = $region17
  $region16: #{_lambda_.6} parent=0 // pred_region
    %v127 = vlaneseq
    %v128 = vshrl.u32 %v127, 7
    %v129 = vadd.s32 %v128, 8
    %v130 = vadd.s32 %v128, 16
    %v131 = vadd.s32 %v128, 24
    %v132 = vlaneseq
    %v133 = vand.u32 %v132, 127
    %v134 = vld [vmem:[#allocation4] sm:$0xff]
    %v135 = vld [vmem:[#allocation4 + $0x8] sm:$0xff]
    %v136 = vld [vmem:[#allocation4 + $0x10] sm:$0xff]
    %v137 = vld [vmem:[#allocation4 + $0x18] sm:$0xff]
    %vm138 = vcmp.eq.s32.totalorder %v128, %v133
    %vm139 = vcmp.eq.s32.totalorder %v129, %v133
    %vm140 = vcmp.eq.s32.totalorder %v130, %v133
    %vm141 = vcmp.eq.s32.totalorder %v131, %v133
    %v142 = vsel %vm138, %v119, 0.0
    %v143 = vsel %vm139, %v120, 0.0
    %v144 = vsel %vm140, %v121, 0.0
    %v145 = vsel %vm141, %v122, 0.0
    %vm146 = vcmask 261120
    %v147 = vsel %vm146, %v142, 0.0
    %148 = vadd.xlane.f32.xlu0 %v147
    %v149 = vpop.xlane.xlu0 %148
    %v150 = vsel %vm146, %v143, 0.0
    %151 = vadd.xlane.f32.xlu0 %v150
    %v152 = vpop.xlane.xlu0 %151
    %v153 = vsel %vm146, %v144, 0.0
    %154 = vadd.xlane.f32.xlu0 %v153
    %v155 = vpop.xlane.xlu0 %154
    %v156 = vsel %vm146, %v145, 0.0
    %157 = vadd.xlane.f32.xlu0 %v156
    %v158 = vpop.xlane.xlu0 %157
    %v159 = vadd.f32 %v134, %v149
    %v160 = vadd.f32 %v135, %v152
    %v161 = vadd.f32 %v136, %v155
    %v162 = vadd.f32 %v137, %v158
    %vm163 = vcmask 7168
    %164 = vst.msk [vmem:[#allocation4] sm:$0xff] %vm163, %v159
    %165 = vst.msk [vmem:[#allocation4 + $0x8] sm:$0xff] %vm163, %v160
    %166 = vst.msk [vmem:[#allocation4 + $0x10] sm:$0xff] %vm163, %v161
    %167 = vst.msk [vmem:[#allocation4 + $0x18] sm:$0xff] %vm163, %v162
  $region17: #{_lambda_.6} parent=0 // pred_fallthru
    _
  %p168 = scmp.lt.s32.totalorder 0, 0
  // Predicated region
  $region18: #{_lambda_.6} parent=0 // pred_check
    %p169 = pneg %p168
  $region19: #{_lambda_.6} parent=0 // pred_check_branch
    %171 = sbr.rel (%p169) target = $region21
  $region20: #{_lambda_.6} parent=0 // pred_region
    %v172 = vld [vmem:[#allocation2] sm:$0xff]
    %v173 = vld [vmem:[#allocation2 + $0x8] sm:$0xff]
    %v174 = vld [vmem:[#allocation2 + $0x10] sm:$0xff]
    %v175 = vld [vmem:[#allocation2 + $0x18] sm:$0xff]
    %vm176 = vcmask 261120
    %v177 = vsel %vm176, %v119, -inf
    %178 = vmax.xlane.f32.xlu0 %v177
    %v179 = vpop.xlane.xlu0 %178
    %v180 = vsel %vm176, %v120, -inf
    %181 = vmax.xlane.f32.xlu0 %v180
    %v182 = vpop.xlane.xlu0 %181
    %v183 = vsel %vm176, %v121, -inf
    %184 = vmax.xlane.f32.xlu0 %v183
    %v185 = vpop.xlane.xlu0 %184
    %v186 = vsel %vm176, %v122, -inf
    %187 = vmax.xlane.f32.xlu0 %v186
    %v188 = vpop.xlane.xlu0 %187
    %v189 = vmax.f32 %v172, %v179
    %v190 = vmax.f32 %v173, %v182
    %v191 = vmax.f32 %v174, %v185
    %v192 = vmax.f32 %v175, %v188
    %v193 = vsub.f32 %v172, %v189
    %v194 = vsub.f32 %v173, %v190
    %v195 = vsub.f32 %v174, %v191
    %v196 = vsub.f32 %v175, %v192
    %v197 = vmul.f32 %v193, 1.442695
    %v198 = vpow.pop %v197
    %v199 = vmul.f32 %v194, 1.442695
    %v200 = vpow.pop %v199
    %v201 = vmul.f32 %v195, 1.442695
    %v202 = vpow.pop %v201
    %v203 = vmul.f32 %v196, 1.442695
    %v204 = vpow.pop %v203
    %v205 = vld [vmem:[#allocation3] sm:$0xff]
    %v206 = vld [vmem:[#allocation3 + $0x8] sm:$0xff]
    %v207 = vld [vmem:[#allocation3 + $0x10] sm:$0xff]
    %v208 = vld [vmem:[#allocation3 + $0x18] sm:$0xff]
    %v209 = vmul.f32 %v198, %v205
    %v210 = vmul.f32 %v200, %v206
    %v211 = vmul.f32 %v202, %v207
    %v212 = vmul.f32 %v204, %v208
    %214 = vset.pattern.permute.xlu0 0
    %215 = vperm.xlu0 %214, %v189
    %v216 = vpop.permute.xlu0 %215
    %219 = vset.pattern.permute.xlu0 0
    %220 = vperm.xlu0 %219, %v190
    %v221 = vpop.permute.xlu0 %220
    %224 = vset.pattern.permute.xlu0 0
    %225 = vperm.xlu0 %224, %v191
    %v226 = vpop.permute.xlu0 %225
    %229 = vset.pattern.permute.xlu0 0
    %230 = vperm.xlu0 %229, %v192
    %v231 = vpop.permute.xlu0 %230
    %v233 = vsub.f32 %v119, %v216
    %v234 = vsub.f32 %v120, %v221
    %v235 = vsub.f32 %v121, %v226
    %v236 = vsub.f32 %v122, %v231
    %v237 = vmul.f32 %v233, 1.442695
    %v238 = vpow.pop %v237
    %v239 = vmul.f32 %v234, 1.442695
    %v240 = vpow.pop %v239
    %v241 = vmul.f32 %v235, 1.442695
    %v242 = vpow.pop %v241
    %v243 = vmul.f32 %v236, 1.442695
    %v244 = vpow.pop %v243
    %v245 = vsel %vm176, %v238, 0.0
    %246 = vadd.xlane.f32.xlu0 %v245
    %v247 = vpop.xlane.xlu0 %246
    %v248 = vsel %vm176, %v240, 0.0
    %249 = vadd.xlane.f32.xlu0 %v248
    %v250 = vpop.xlane.xlu0 %249
    %v251 = vsel %vm176, %v242, 0.0
    %252 = vadd.xlane.f32.xlu0 %v251
    %v253 = vpop.xlane.xlu0 %252
    %v254 = vsel %vm176, %v244, 0.0
    %255 = vadd.xlane.f32.xlu0 %v254
    %v256 = vpop.xlane.xlu0 %255
    %v257 = vadd.f32 %v209, %v247
    %v258 = vadd.f32 %v210, %v250
    %v259 = vadd.f32 %v211, %v253
    %v260 = vadd.f32 %v212, %v256
    %vm261 = vcmask 7168
    %262 = vst.msk [vmem:[#allocation3] sm:$0xff] %vm261, %v257
    %263 = vst.msk [vmem:[#allocation3 + $0x8] sm:$0xff] %vm261, %v258
    %264 = vst.msk [vmem:[#allocation3 + $0x10] sm:$0xff] %vm261, %v259
    %265 = vst.msk [vmem:[#allocation3 + $0x18] sm:$0xff] %vm261, %v260
    %266 = vst.msk [vmem:[#allocation2] sm:$0xff] %vm261, %v189
    %267 = vst.msk [vmem:[#allocation2 + $0x8] sm:$0xff] %vm261, %v190
    %268 = vst.msk [vmem:[#allocation2 + $0x10] sm:$0xff] %vm261, %v191
    %269 = vst.msk [vmem:[#allocation2 + $0x18] sm:$0xff] %vm261, %v192
  $region21: #{_lambda_.6} parent=0 // pred_fallthru
    _
  // Predicated region
  $region22: #{_lambda_.6} parent=0 // pred_check
    %p270 = pneg %p12
  $region23: #{_lambda_.6} parent=0 // pred_check_branch
    %272 = sbr.rel (%p270) target = $region25
  $region24: #{_lambda_.6} parent=0 // pred_region
    %v273 = vlaneseq
    %v274 = vand.u32 %v273, 127
    %vm275 = vcmp.lt.s32.totalorder %v274, 18
    %v276 = vsel %vm275, 1, 0
    %vm277 = vcmp.eq.s32.totalorder %v276, 1
    %v278 = vsel %vm277, %v119, -1e+30
    %v279 = vsel %vm277, %v120, -1e+30
    %v280 = vsel %vm277, %v121, -1e+30
    %v281 = vsel %vm277, %v122, -1e+30
    %v282 = vld [vmem:[#allocation2] sm:$0xff]
    %v283 = vld [vmem:[#allocation2 + $0x8] sm:$0xff]
    %v284 = vld [vmem:[#allocation2 + $0x10] sm:$0xff]
    %v285 = vld [vmem:[#allocation2 + $0x18] sm:$0xff]
    %vm286 = vcmask 261120
    %v287 = vsel %vm286, %v278, -inf
    %288 = vmax.xlane.f32.xlu0 %v287
    %v289 = vpop.xlane.xlu0 %288
    %v290 = vsel %vm286, %v279, -inf
    %291 = vmax.xlane.f32.xlu0 %v290
    %v292 = vpop.xlane.xlu0 %291
    %v293 = vsel %vm286, %v280, -inf
    %294 = vmax.xlane.f32.xlu0 %v293
    %v295 = vpop.xlane.xlu0 %294
    %v296 = vsel %vm286, %v281, -inf
    %297 = vmax.xlane.f32.xlu0 %v296
    %v298 = vpop.xlane.xlu0 %297
    %v299 = vmax.f32 %v282, %v289
    %v300 = vmax.f32 %v283, %v292
    %v301 = vmax.f32 %v284, %v295
    %v302 = vmax.f32 %v285, %v298
    %v303 = vsub.f32 %v282, %v299
    %v304 = vsub.f32 %v283, %v300
    %v305 = vsub.f32 %v284, %v301
    %v306 = vsub.f32 %v285, %v302
    %v307 = vmul.f32 %v303, 1.442695
    %v308 = vpow.pop %v307
    %v309 = vmul.f32 %v304, 1.442695
    %v310 = vpow.pop %v309
    %v311 = vmul.f32 %v305, 1.442695
    %v312 = vpow.pop %v311
    %v313 = vmul.f32 %v306, 1.442695
    %v314 = vpow.pop %v313
    %v315 = vld [vmem:[#allocation3] sm:$0xff]
    %v316 = vld [vmem:[#allocation3 + $0x8] sm:$0xff]
    %v317 = vld [vmem:[#allocation3 + $0x10] sm:$0xff]
    %v318 = vld [vmem:[#allocation3 + $0x18] sm:$0xff]
    %v319 = vmul.f32 %v308, %v315
    %v320 = vmul.f32 %v310, %v316
    %v321 = vmul.f32 %v312, %v317
    %v322 = vmul.f32 %v314, %v318
    %324 = vset.pattern.permute.xlu0 0
    %325 = vperm.xlu0 %324, %v299
    %v326 = vpop.permute.xlu0 %325
    %329 = vset.pattern.permute.xlu0 0
    %330 = vperm.xlu0 %329, %v300
    %v331 = vpop.permute.xlu0 %330
    %334 = vset.pattern.permute.xlu0 0
    %335 = vperm.xlu0 %334, %v301
    %v336 = vpop.permute.xlu0 %335
    %339 = vset.pattern.permute.xlu0 0
    %340 = vperm.xlu0 %339, %v302
    %v341 = vpop.permute.xlu0 %340
    %v343 = vsub.f32 %v278, %v326
    %v344 = vsub.f32 %v279, %v331
    %v345 = vsub.f32 %v280, %v336
    %v346 = vsub.f32 %v281, %v341
    %v347 = vmul.f32 %v343, 1.442695
    %v348 = vpow.pop %v347
    %v349 = vmul.f32 %v344, 1.442695
    %v350 = vpow.pop %v349
    %v351 = vmul.f32 %v345, 1.442695
    %v352 = vpow.pop %v351
    %v353 = vmul.f32 %v346, 1.442695
    %v354 = vpow.pop %v353
    %v355 = vsel %vm286, %v348, 0.0
    %356 = vadd.xlane.f32.xlu0 %v355
    %v357 = vpop.xlane.xlu0 %356
    %v358 = vsel %vm286, %v350, 0.0
    %359 = vadd.xlane.f32.xlu0 %v358
    %v360 = vpop.xlane.xlu0 %359
    %v361 = vsel %vm286, %v352, 0.0
    %362 = vadd.xlane.f32.xlu0 %v361
    %v363 = vpop.xlane.xlu0 %362
    %v364 = vsel %vm286, %v354, 0.0
    %365 = vadd.xlane.f32.xlu0 %v364
    %v366 = vpop.xlane.xlu0 %365
    %v367 = vadd.f32 %v319, %v357
    %v368 = vadd.f32 %v320, %v360
    %v369 = vadd.f32 %v321, %v363
    %v370 = vadd.f32 %v322, %v366
    %vm371 = vcmask 7168
    %372 = vst.msk [vmem:[#allocation3] sm:$0xff] %vm371, %v367
    %373 = vst.msk [vmem:[#allocation3 + $0x8] sm:$0xff] %vm371, %v368
    %374 = vst.msk [vmem:[#allocation3 + $0x10] sm:$0xff] %vm371, %v369
    %375 = vst.msk [vmem:[#allocation3 + $0x18] sm:$0xff] %vm371, %v370
    %376 = vst.msk [vmem:[#allocation2] sm:$0xff] %vm371, %v299
    %377 = vst.msk [vmem:[#allocation2 + $0x8] sm:$0xff] %vm371, %v300
    %378 = vst.msk [vmem:[#allocation2 + $0x10] sm:$0xff] %vm371, %v301
    %379 = vst.msk [vmem:[#allocation2 + $0x18] sm:$0xff] %vm371, %v302
    %s380 = smul.u32 0, 32
    %v381 = vlaneseq
    %v382 = vshrl.u32 %v381, 7
    %v383 = vadd.s32 %v382, 8
    %v384 = vadd.s32 %v382, 16
    %v385 = vadd.s32 %v382, 24
    %v386 = vstv %s380
    %v387 = vadd.s32 %v386, %v382
    %v388 = vadd.s32 %v386, %v383
    %v389 = vadd.s32 %v386, %v384
    %v390 = vadd.s32 %v386, %v385
    %vm391 = vcmp.lt.s32.totalorder %v387, 18
    %vm392 = vcmp.lt.s32.totalorder %v388, 18
    %vm393 = vcmp.lt.s32.totalorder %v389, 18
    %vm394 = vcmp.lt.s32.totalorder %v390, 18
    %v395 = vsel %vm391, 1, 0
    %v396 = vsel %vm392, 1, 0
    %v397 = vsel %vm393, 1, 0
    %v398 = vsel %vm394, 1, 0
    %v399 = vcvt.s32.f32 %v395
    %v400 = vcvt.s32.f32 %v396
    %v401 = vcvt.s32.f32 %v397
    %v402 = vcvt.s32.f32 %v398
    %v403 = vld [vmem:[#allocation2] sm:$0xff]
    %v404 = vld [vmem:[#allocation2 + $0x8] sm:$0xff]
    %v405 = vld [vmem:[#allocation2 + $0x10] sm:$0xff]
    %v406 = vld [vmem:[#allocation2 + $0x18] sm:$0xff]
    %v407 = vld [vmem:[#allocation3] sm:$0xff]
    %v408 = vld [vmem:[#allocation3 + $0x8] sm:$0xff]
    %v409 = vld [vmem:[#allocation3 + $0x10] sm:$0xff]
    %v410 = vld [vmem:[#allocation3 + $0x18] sm:$0xff]
    %v411 = vlog2.pop %v407
    %v412 = vmul.f32 %v411, 0.6931472
    %v413 = vlog2.pop %v408
    %v414 = vmul.f32 %v413, 0.6931472
    %v415 = vlog2.pop %v409
    %v416 = vmul.f32 %v415, 0.6931472
    %v417 = vlog2.pop %v410
    %v418 = vmul.f32 %v417, 0.6931472
    %v419 = vadd.f32 %v403, %v412
    %v420 = vadd.f32 %v404, %v414
    %v421 = vadd.f32 %v405, %v416
    %v422 = vadd.f32 %v406, %v418
    %v423 = vld [vmem:[#allocation4] sm:$0xff]
    %v424 = vld [vmem:[#allocation4 + $0x8] sm:$0xff]
    %v425 = vld [vmem:[#allocation4 + $0x10] sm:$0xff]
    %v426 = vld [vmem:[#allocation4 + $0x18] sm:$0xff]
    %v427 = vsub.f32 %v419, %v423
    %v428 = vsub.f32 %v420, %v424
    %v429 = vsub.f32 %v421, %v425
    %v430 = vsub.f32 %v422, %v426
    %v431 = vmul.f32 %v427, %v399
    %v432 = vmul.f32 %v428, %v400
    %v433 = vmul.f32 %v429, %v401
    %v434 = vmul.f32 %v430, %v402
    %435 = vst.msk [vmem:[%s2] sm:$0xff] %vm371, %v431
    %436 = vst.msk [vmem:[%s2 + $0x8] sm:$0xff] %vm371, %v432
    %437 = vst.msk [vmem:[%s2 + $0x10] sm:$0xff] %vm371, %v433
    %438 = vst.msk [vmem:[%s2 + $0x18] sm:$0xff] %vm371, %v434
  $region25: #{_lambda_.6} parent=0 // pred_fallthru
    _
  // Predicated region
  $region26: #{_lambda_.6} parent=0 // pred_check
    _
  $region27: #{_lambda_.6} parent=0 // pred_check_branch
    %440 = sbr.rel (0) target = $region29
  $region28: #{_lambda_.6} parent=0 // pred_region
    _
  $region29: #{_lambda_.6} parent=0 // pred_fallthru
    _
  // Predicated region
  $region30: #{_lambda_.6} parent=0 // pred_check
    _
  $region31: #{_lambda_.6} parent=0 // pred_check_branch
    %442 = sbr.rel (0) target = $region33
  $region32: #{_lambda_.6} parent=0 // pred_region
    _
  $region33: #{_lambda_.6} parent=0 // pred_fallthru
    _

// kernel: _lambda_.4
$region0: #{_lambda_.4}
  #allocation0 [shape = 'u32[]', space=smem, size = 0x4, offset = 0x4, fixed_abs, tag = 'smem constant byte address 0x4 - core index']
  #allocation1 [shape = 'u32[144,128]{1,0:T(1,128)}', space=vmem, size = 0x12000, scoped, tag = 'internal scratch']
  %s0 = inlined_call_operand.smem [shape: u32[38], index: -1, kind: input, shape index: {}]
  %s1 = sld [smem:[%s0]]
  %s2 = scalar_lea.smem %s0, 1
  %s3 = sld [smem:[%s2]]
  %s4 = scalar_lea.smem %s0, 2
  %s5 = sld [smem:[%s4]]
  %s6 = scalar_lea.smem %s0, 3
  %s7 = sld [smem:[%s6]]
  %s8 = scalar_lea.smem %s0, 4
  %s9 = sld [smem:[%s8]]
  %s10 = scalar_lea.smem %s0, 5
  %s11 = sld [smem:[%s10]]
  %s12 = scalar_lea.smem %s0, 6
  %s13 = sld [smem:[%s12]]
  %s14 = scalar_lea.smem %s0, 7
  %s15 = sld [smem:[%s14]]
  %s16 = scalar_lea.smem %s0, 8
  %s17 = sld [smem:[%s16]]
  %s18 = scalar_lea.smem %s0, 9
  %s19 = sld [smem:[%s18]]
  %s20 = scalar_lea.smem %s0, 10
  %s21 = sld [smem:[%s20]]
  %s22 = scalar_lea.smem %s0, 11
  %s23 = sld [smem:[%s22]]
  %s24 = scalar_lea.smem %s0, 12
  %s25 = sld [smem:[%s24]]
  %s26 = scalar_lea.smem %s0, 13
  %s27 = sld [smem:[%s26]]
  %s28 = scalar_lea.smem %s0, 14
  %s29 = sld [smem:[%s28]]
  %s30 = scalar_lea.smem %s0, 15
  %s31 = sld [smem:[%s30]]
  %s32 = scalar_lea.smem %s0, 16
  %s33 = sld [smem:[%s32]]
  %s34 = scalar_lea.smem %s0, 17
  %s35 = sld [smem:[%s34]]
  %s36 = scalar_lea.smem %s0, 18
  %s37 = sld [smem:[%s36]]
  %s38 = scalar_lea.smem %s0, 19
  %s39 = sld [smem:[%s38]]
  %s40 = scalar_lea.smem %s0, 20
  %s41 = sld [smem:[%s40]]
  %s42 = scalar_lea.smem %s0, 21
  %s43 = sld [smem:[%s42]]
  %s44 = scalar_lea.smem %s0, 22
  %s45 = sld [smem:[%s44]]
  %s46 = scalar_lea.smem %s0, 23
  %s47 = sld [smem:[%s46]]
  %s48 = scalar_lea.smem %s0, 24
  %s49 = sld [smem:[%s48]]
  %s50 = scalar_lea.smem %s0, 25
  %s51 = sld [smem:[%s50]]
  %s52 = scalar_lea.smem %s0, 26
  %s53 = sld [smem:[%s52]]
  %s54 = scalar_lea.smem %s0, 27
  %s55 = sld [smem:[%s54]]
  %s56 = scalar_lea.smem %s0, 28
  %s57 = sld [smem:[%s56]]
  %s58 = scalar_lea.smem %s0, 29
  %s59 = sld [smem:[%s58]]
  %s60 = scalar_lea.smem %s0, 30
  %s61 = sld [smem:[%s60]]
  %s62 = scalar_lea.smem %s0, 31
  %s63 = sld [smem:[%s62]]
  %s64 = scalar_lea.smem %s0, 32
  %s65 = sld [smem:[%s64]]
  %s66 = scalar_lea.smem %s0, 33
  %s67 = sld [smem:[%s66]]
  %s68 = scalar_lea.smem %s0, 34
  %s69 = sld [smem:[%s68]]
  %s70 = scalar_lea.smem %s0, 35
  %s71 = sld [smem:[%s70]]
  %s72 = scalar_lea.smem %s0, 36
  %s73 = sld [smem:[%s72]]
  %s74 = scalar_lea.smem %s0, 37
  %s75 = sld [smem:[%s74]]
  %s76 = sld [smem:[#allocation0]]
  $region306: #{_lambda_.4} parent=0
    _
  %s78 = ssub.s32 1, %s76
  %s79 = scalar_select 0, %s78, %s76
  $region1: #{_lambda_.4} parent=0
    #allocation2 [shape = 'u8[12288]{0}', space=vmem, size = 0x3000, scoped, tag = 'input window, operand 0, single buffered']
    #allocation3 [shape = 's32[1]{0}', space=sflag, size = 0x4, scoped, tag = 'scoped memory for _lambda_.4']
    #allocation4 [shape = 's32[1]{0}', space=sflag, size = 0x4, scoped, tag = 'scoped memory for _lambda_.4']
    #allocation5 [shape = 's32[1]{0}', space=sflag, size = 0x4, scoped, tag = 'scoped memory for _lambda_.4']
    #allocation6 [shape = 'u8[12288]{0}', space=vmem, size = 0x3000, scoped, tag = 'input window, operand 1, single buffered']
    #allocation7 [shape = 's32[1]{0}', space=sflag, size = 0x4, scoped, tag = 'scoped memory for _lambda_.4']
    #allocation8 [shape = 'u8[12288]{0}', space=vmem, size = 0x3000, scoped, tag = 'input window, operand 2, single buffered']
    #allocation9 [shape = 'u8[24576]{0}', space=vmem, size = 0x6000, scoped, tag = 'input window, operand 3, single buffered']
    #allocation10 [shape = 's32[1]{0}', space=sflag, size = 0x4, scoped, tag = 'scoped memory for _lambda_.4']
    #allocation11 [shape = 'u8[24576]{0}', space=vmem, size = 0x6000, scoped, tag = 'input window, operand 4, single buffered']
    #allocation12 [shape = 'u8[8192]{0}', space=vmem, size = 0x2000, scoped, tag = 'input window, operand 5, single buffered']
    #allocation13 [shape = 's32[1]{0}', space=sflag, size = 0x4, scoped, tag = 'scoped memory for _lambda_.4']
    #allocation14 [shape = 'u8[512]{0}', space=vmem, size = 0x400, scoped, tag = 'input window, operand 6, single buffered']
    #allocation15 [shape = 'u8[16384]{0}', space=vmem, size = 0x4000, scoped, tag = 'input window, operand 7, single buffered']
    #allocation16 [shape = 's32[1]{0}', space=sflag, size = 0x4, scoped, tag = 'scoped memory for _lambda_.4']
    #allocation17 [shape = 'u8[1024]{0}', space=vmem, size = 0x400, scoped, tag = 'input window, operand 8, single buffered']
    #allocation18 [shape = 'u8[65536]{0}', space=vmem, size = 0x10000, scoped, tag = 'input window, operand 9, single buffered']
    #allocation19 [shape = 's32[1]{0}', space=sflag, size = 0x4, scoped, tag = 'scoped memory for _lambda_.4']
    #allocation20 [shape = 'u8[512]{0}', space=vmem, size = 0x400, scoped, tag = 'input window, operand 10, single buffered']
    #allocation21 [shape = 'u8[12288]{0}', space=vmem, size = 0x3000, scoped, tag = 'input window, operand 11, single buffered']
    #allocation22 [shape = 's32[1]{0}', space=sflag, size = 0x4, scoped, tag = 'scoped memory for _lambda_.4']
    #allocation23 [shape = 'u8[512]{0}', space=vmem, size = 0x400, scoped, tag = 'input window, operand 12, single buffered']
    #allocation24 [shape = 'u8[24576]{0}', space=vmem, size = 0x6000, scoped, tag = 'input window, operand 13, single buffered']
    #allocation25 [shape = 's32[1]{0}', space=sflag, size = 0x4, scoped, tag = 'scoped memory for _lambda_.4']
    #allocation26 [shape = 'u8[1024]{0}', space=vmem, size = 0x400, scoped, tag = 'input window, operand 14, single buffered']
    #allocation27 [shape = 'u8[65536]{0}', space=vmem, size = 0x10000, scoped, tag = 'input window, operand 15, single buffered']
    #allocation28 [shape = 's32[1]{0}', space=sflag, size = 0x4, scoped, tag = 'scoped memory for _lambda_.4']
    #allocation29 [shape = 'u8[512]{0}', space=vmem, size = 0x400, scoped, tag = 'input window, operand 16, single buffered']
    #allocation30 [shape = 'u8[16384]{0}', space=vmem, size = 0x4000, scoped, tag = 'input window, operand 17, single buffered']
    #allocation31 [shape = 's32[1]{0}', space=sflag, size = 0x4, scoped, tag = 'scoped memory for _lambda_.4']
    #allocation32 [shape = 'u8[512]{0}', space=vmem, size = 0x400, scoped, tag = 'input window, operand 18, single buffered']
    #allocation33 [shape = 'u8[32768]{0}', space=vmem, size = 0x8000, scoped, tag = 'input window, operand 19, single buffered']
    #allocation34 [shape = 's32[1]{0}', space=sflag, size = 0x4, scoped, tag = 'scoped memory for _lambda_.4']
    #allocation35 [shape = 'u8[512]{0}', space=smem, size = 0x200, scoped, tag = 'input window, operand 20, single buffered']
    #allocation36 [shape = 'u8[8192]{0}', space=vmem, size = 0x2000, scoped, tag = 'input window, operand 21, single buffered']
    #allocation37 [shape = 'u8[512]{0}', space=vmem, size = 0x400, scoped, tag = 'input window, operand 22, single buffered']
    #allocation38 [shape = 's32[1]{0}', space=sflag, size = 0x4, scoped, tag = 'scoped memory for _lambda_.4']
    #allocation39 [shape = 'u8[16384]{0}', space=vmem, size = 0x4000, scoped, tag = 'input window, operand 23, single buffered']
    #allocation40 [shape = 'u8[1024]{0}', space=vmem, size = 0x400, scoped, tag = 'input window, operand 24, single buffered']
    #allocation41 [shape = 's32[1]{0}', space=sflag, size = 0x4, scoped, tag = 'scoped memory for _lambda_.4']
    #allocation42 [shape = 'u8[65536]{0}', space=vmem, size = 0x10000, scoped, tag = 'input window, operand 25, single buffered']
    #allocation43 [shape = 'u8[512]{0}', space=vmem, size = 0x400, scoped, tag = 'input window, operand 26, single buffered']
    #allocation44 [shape = 's32[1]{0}', space=sflag, size = 0x4, scoped, tag = 'scoped memory for _lambda_.4']
    #allocation45 [shape = 'u8[12288]{0}', space=vmem, size = 0x3000, scoped, tag = 'input window, operand 27, single buffered']
    #allocation46 [shape = 'u8[512]{0}', space=vmem, size = 0x400, scoped, tag = 'input window, operand 28, single buffered']
    #allocation47 [shape = 's32[1]{0}', space=sflag, size = 0x4, scoped, tag = 'scoped memory for _lambda_.4']
    #allocation48 [shape = 'u8[24576]{0}', space=vmem, size = 0x6000, scoped, tag = 'input window, operand 29, single buffered']
    #allocation49 [shape = 'u8[1024]{0}', space=vmem, size = 0x400, scoped, tag = 'input window, operand 30, single buffered']
    #allocation50 [shape = 's32[1]{0}', space=sflag, size = 0x4, scoped, tag = 'scoped memory for _lambda_.4']
    #allocation51 [shape = 'u8[65536]{0}', space=vmem, size = 0x10000, scoped, tag = 'input window, operand 31, single buffered']
    #allocation52 [shape = 'u8[512]{0}', space=vmem, size = 0x400, scoped, tag = 'input window, operand 32, single buffered']
    #allocation53 [shape = 's32[1]{0}', space=sflag, size = 0x4, scoped, tag = 'scoped memory for _lambda_.4']
    #allocation54 [shape = 'u8[16384]{0}', space=vmem, size = 0x4000, scoped, tag = 'input window, operand 33, single buffered']
    #allocation55 [shape = 'u8[512]{0}', space=vmem, size = 0x400, scoped, tag = 'input window, operand 34, single buffered']
    #allocation56 [shape = 's32[1]{0}', space=sflag, size = 0x4, scoped, tag = 'scoped memory for _lambda_.4']
    #allocation57 [shape = 'u8[32768]{0}', space=vmem, size = 0x8000, scoped, tag = 'input window, operand 35, single buffered']
    #allocation58 [shape = 'u8[512]{0}', space=smem, size = 0x200, scoped, tag = 'input window, operand 36, single buffered']
    #allocation59 [shape = 's32[1]{0}', space=sflag, size = 0x4, scoped, tag = 'scoped memory for _lambda_.4']
    #allocation60 [shape = 'u8[12288]{0}', space=vmem, size = 0x3000, scoped, tag = 'output window, operand 0, single buffered']
    %80 = vsyncpa [#allocation3], 0
    %81 = vsyncpa [#allocation7], 0
    %82 = vsyncpa [#allocation10], 0
    %83 = vsyncpa [#allocation13], 0
    %84 = vsyncpa [#allocation16], 0
    %85 = vsyncpa [#allocation19], 0
    %86 = vsyncpa [#allocation22], 0
    %87 = vsyncpa [#allocation25], 0
    %88 = vsyncpa [#allocation28], 0
    %89 = vsyncpa [#allocation31], 0
    %90 = vsyncpa [#allocation34], 0
    %91 = vsyncpa [#allocation5], 0
    %92 = vsyncpa [#allocation38], 0
    %93 = vsyncpa [#allocation41], 0
    %94 = vsyncpa [#allocation44], 0
    %95 = vsyncpa [#allocation47], 0
    %96 = vsyncpa [#allocation50], 0
    %97 = vsyncpa [#allocation53], 0
    %98 = vsyncpa [#allocation56], 0
    %99 = vsyncpa [#allocation59], 0
    %100 = vsyncpa [#allocation4], 0
    // Predicated region
    $region2: #{_lambda_.4} parent=1 // pred_check
      _
    $region3: #{_lambda_.4} parent=1 // pred_check_branch
      %102 = sbr.rel (0) target = $region5
    $region4: #{_lambda_.4} parent=1 // pred_region
      %s104 = ssub.s32 384, 384
      %105 = vsyncadd [#allocation3], %s104
      %s106 = sshll.u32 [#allocation2], 4
      %s107 = int_to_ptr.vmem [resolvable:$true] %s106
      %112 = dma.hbm_to_vmem [thread:$0]  %s1, 384, %s107, [#allocation3], 64, 64, 4
    $region5: #{_lambda_.4} parent=1 // pred_fallthru
      _
    // Predicated region
    $region6: #{_lambda_.4} parent=1 // pred_check
      _
    $region7: #{_lambda_.4} parent=1 // pred_check_branch
      %114 = sbr.rel (0) target = $region9
    $region8: #{_lambda_.4} parent=1 // pred_region
      %s116 = ssub.s32 384, 384
      %117 = vsyncadd [#allocation7], %s116
      %s118 = sshll.u32 [#allocation6], 4
      %s119 = int_to_ptr.vmem [resolvable:$true] %s118
      %124 = dma.hbm_to_vmem [thread:$0]  %s3, 384, %s119, [#allocation7], 64, 64, 4
    $region9: #{_lambda_.4} parent=1 // pred_fallthru
      _
    // Predicated region
    $region10: #{_lambda_.4} parent=1 // pred_check
      _
    $region11: #{_lambda_.4} parent=1 // pred_check_branch
      %126 = sbr.rel (0) target = $region13
    $region12: #{_lambda_.4} parent=1 // pred_region
      %s128 = ssub.s32 384, 384
      %129 = vsyncadd [#allocation7], %s128
      %s130 = sshll.u32 [#allocation8], 4
      %s131 = int_to_ptr.vmem [resolvable:$true] %s130
      %136 = dma.hbm_to_vmem [thread:$0]  %s5, 384, %s131, [#allocation7], 64, 64, 4
    $region13: #{_lambda_.4} parent=1 // pred_fallthru
      _
    // Predicated region
    $region14: #{_lambda_.4} parent=1 // pred_check
      _
    $region15: #{_lambda_.4} parent=1 // pred_check_branch
      %138 = sbr.rel (0) target = $region17
    $region16: #{_lambda_.4} parent=1 // pred_region
      %s140 = ssub.s32 768, 768
      %141 = vsyncadd [#allocation10], %s140
      %s142 = sshll.u32 [#allocation9], 4
      %s143 = int_to_ptr.vmem [resolvable:$true] %s142
      %148 = dma.hbm_to_vmem [thread:$0]  %s7, 768, %s143, [#allocation10], 128, 128, 8
    $region17: #{_lambda_.4} parent=1 // pred_fallthru
      _
    // Predicated region
    $region18: #{_lambda_.4} parent=1 // pred_check
      _
    $region19: #{_lambda_.4} parent=1 // pred_check_branch
      %150 = sbr.rel (0) target = $region21
    $region20: #{_lambda_.4} parent=1 // pred_region
      %s152 = ssub.s32 768, 768
      %153 = vsyncadd [#allocation10], %s152
      %s154 = sshll.u32 [#allocation11], 4
      %s155 = int_to_ptr.vmem [resolvable:$true] %s154
      %160 = dma.hbm_to_vmem [thread:$0]  %s9, 768, %s155, [#allocation10], 128, 128, 8
    $region21: #{_lambda_.4} parent=1 // pred_fallthru
      _
    // Predicated region
    $region22: #{_lambda_.4} parent=1 // pred_check
      _
    $region23: #{_lambda_.4} parent=1 // pred_check_branch
      %162 = sbr.rel (0) target = $region25
    $region24: #{_lambda_.4} parent=1 // pred_region
      %s164 = ssub.s32 256, 256
      %165 = vsyncadd [#allocation13], %s164
      %s166 = sshll.u32 [#allocation12], 4
      %s167 = int_to_ptr.vmem [resolvable:$true] %s166
      %172 = dma.hbm_to_vmem [thread:$0]  %s11, 256, %s167, [#allocation13], 64, 64, 4
    $region25: #{_lambda_.4} parent=1 // pred_fallthru
      _
    // Predicated region
    $region26: #{_lambda_.4} parent=1 // pred_check
      _
    $region27: #{_lambda_.4} parent=1 // pred_check_branch
      %174 = sbr.rel (0) target = $region29
    $region28: #{_lambda_.4} parent=1 // pred_region
      %s176 = ssub.s32 16, 16
      %177 = vsyncadd [#allocation13], %s176
      %s179 = sshll.u32 [#allocation14], 4
      %s180 = int_to_ptr.vmem [resolvable:$true] %s179
      %182 = dma.hbm_to_vmem [thread:$0]  %s13, 16, %s180, [#allocation13]
    $region29: #{_lambda_.4} parent=1 // pred_fallthru
      _
    // Predicated region
    $region30: #{_lambda_.4} parent=1 // pred_check
      _
    $region31: #{_lambda_.4} parent=1 // pred_check_branch
      %184 = sbr.rel (0) target = $region33
    $region32: #{_lambda_.4} parent=1 // pred_region
      %s186 = ssub.s32 512, 512
      %187 = vsyncadd [#allocation16], %s186
      %s188 = sshll.u32 [#allocation15], 4
      %s189 = int_to_ptr.vmem [resolvable:$true] %s188
      %194 = dma.hbm_to_vmem [thread:$0]  %s15, 512, %s189, [#allocation16], 128, 128, 8
    $region33: #{_lambda_.4} parent=1 // pred_fallthru
      _
    // Predicated region
    $region34: #{_lambda_.4} parent=1 // pred_check
      _
    $region35: #{_lambda_.4} parent=1 // pred_check_branch
      %196 = sbr.rel (0) target = $region37
    $region36: #{_lambda_.4} parent=1 // pred_region
      %s198 = ssub.s32 32, 32
      %199 = vsyncadd [#allocation16], %s198
      %s201 = sshll.u32 [#allocation17], 4
      %s202 = int_to_ptr.vmem [resolvable:$true] %s201
      %204 = dma.hbm_to_vmem [thread:$0]  %s17, 32, %s202, [#allocation16]
    $region37: #{_lambda_.4} parent=1 // pred_fallthru
      _
    // Predicated region
    $region38: #{_lambda_.4} parent=1 // pred_check
      _
    $region39: #{_lambda_.4} parent=1 // pred_check_branch
      %206 = sbr.rel (0) target = $region41
    $region40: #{_lambda_.4} parent=1 // pred_region
      %s208 = ssub.s32 2048, 2048
      %209 = vsyncadd [#allocation19], %s208
      %s210 = sshll.u32 [#allocation18], 4
      %s211 = int_to_ptr.vmem [resolvable:$true] %s210
      %216 = dma.hbm_to_vmem [thread:$0]  %s19, 2048, %s211, [#allocation19], 64, 64, 4
    $region41: #{_lambda_.4} parent=1 // pred_fallthru
      _
    // Predicated region
    $region42: #{_lambda_.4} parent=1 // pred_check
      _
    $region43: #{_lambda_.4} parent=1 // pred_check_branch
      %218 = sbr.rel (0) target = $region45
    $region44: #{_lambda_.4} parent=1 // pred_region
      %s220 = ssub.s32 16, 16
      %221 = vsyncadd [#allocation19], %s220
      %s223 = sshll.u32 [#allocation20], 4
      %s224 = int_to_ptr.vmem [resolvable:$true] %s223
      %226 = dma.hbm_to_vmem [thread:$0]  %s21, 16, %s224, [#allocation19]
    $region45: #{_lambda_.4} parent=1 // pred_fallthru
      _
    // Predicated region
    $region46: #{_lambda_.4} parent=1 // pred_check
      _
    $region47: #{_lambda_.4} parent=1 // pred_check_branch
      %228 = sbr.rel (0) target = $region49
    $region48: #{_lambda_.4} parent=1 // pred_region
      %s230 = ssub.s32 384, 384
      %231 = vsyncadd [#allocation22], %s230
      %s232 = sshll.u32 [#allocation21], 4
      %s233 = int_to_ptr.vmem [resolvable:$true] %s232
      %238 = dma.hbm_to_vmem [thread:$0]  %s23, 384, %s233, [#allocation22], 64, 64, 4
    $region49: #{_lambda_.4} parent=1 // pred_fallthru
      _
    // Predicated region
    $region50: #{_lambda_.4} parent=1 // pred_check
      _
    $region51: #{_lambda_.4} parent=1 // pred_check_branch
      %240 = sbr.rel (0) target = $region53
    $region52: #{_lambda_.4} parent=1 // pred_region
      %s242 = ssub.s32 16, 16
      %243 = vsyncadd [#allocation22], %s242
      %s245 = sshll.u32 [#allocation23], 4
      %s246 = int_to_ptr.vmem [resolvable:$true] %s245
      %248 = dma.hbm_to_vmem [thread:$0]  %s25, 16, %s246, [#allocation22]
    $region53: #{_lambda_.4} parent=1 // pred_fallthru
      _
    // Predicated region
    $region54: #{_lambda_.4} parent=1 // pred_check
      _
    $region55: #{_lambda_.4} parent=1 // pred_check_branch
      %250 = sbr.rel (0) target = $region57
    $region56: #{_lambda_.4} parent=1 // pred_region
      %s252 = ssub.s32 768, 768
      %253 = vsyncadd [#allocation25], %s252
      %s254 = sshll.u32 [#allocation24], 4
      %s255 = int_to_ptr.vmem [resolvable:$true] %s254
      %260 = dma.hbm_to_vmem [thread:$0]  %s27, 768, %s255, [#allocation25], 128, 128, 8
    $region57: #{_lambda_.4} parent=1 // pred_fallthru
      _
    // Predicated region
    $region58: #{_lambda_.4} parent=1 // pred_check
      _
    $region59: #{_lambda_.4} parent=1 // pred_check_branch
      %262 = sbr.rel (0) target = $region61
    $region60: #{_lambda_.4} parent=1 // pred_region
      %s264 = ssub.s32 32, 32
      %265 = vsyncadd [#allocation25], %s264
      %s267 = sshll.u32 [#allocation26], 4
      %s268 = int_to_ptr.vmem [resolvable:$true] %s267
      %270 = dma.hbm_to_vmem [thread:$0]  %s29, 32, %s268, [#allocation25]
    $region61: #{_lambda_.4} parent=1 // pred_fallthru
      _
    // Predicated region
    $region62: #{_lambda_.4} parent=1 // pred_check
      _
    $region63: #{_lambda_.4} parent=1 // pred_check_branch
      %272 = sbr.rel (0) target = $region65
    $region64: #{_lambda_.4} parent=1 // pred_region
      %s274 = ssub.s32 2048, 2048
      %275 = vsyncadd [#allocation28], %s274
      %s276 = sshll.u32 [#allocation27], 4
      %s277 = int_to_ptr.vmem [resolvable:$true] %s276
      %282 = dma.hbm_to_vmem [thread:$0]  %s31, 2048, %s277, [#allocation28], 64, 64, 4
    $region65: #{_lambda_.4} parent=1 // pred_fallthru
      _
    // Predicated region
    $region66: #{_lambda_.4} parent=1 // pred_check
      _
    $region67: #{_lambda_.4} parent=1 // pred_check_branch
      %284 = sbr.rel (0) target = $region69
    $region68: #{_lambda_.4} parent=1 // pred_region
      %s286 = ssub.s32 16, 16
      %287 = vsyncadd [#allocation28], %s286
      %s289 = sshll.u32 [#allocation29], 4
      %s290 = int_to_ptr.vmem [resolvable:$true] %s289
      %292 = dma.hbm_to_vmem [thread:$0]  %s33, 16, %s290, [#allocation28]
    $region69: #{_lambda_.4} parent=1 // pred_fallthru
      _
    // Predicated region
    $region70: #{_lambda_.4} parent=1 // pred_check
      _
    $region71: #{_lambda_.4} parent=1 // pred_check_branch
      %294 = sbr.rel (0) target = $region73
    $region72: #{_lambda_.4} parent=1 // pred_region
      %s296 = ssub.s32 512, 512
      %297 = vsyncadd [#allocation31], %s296
      %s298 = sshll.u32 [#allocation30], 4
      %s299 = int_to_ptr.vmem [resolvable:$true] %s298
      %304 = dma.hbm_to_vmem [thread:$0]  %s35, 512, %s299, [#allocation31], 64, 64, 4
    $region73: #{_lambda_.4} parent=1 // pred_fallthru
      _
    // Predicated region
    $region74: #{_lambda_.4} parent=1 // pred_check
      _
    $region75: #{_lambda_.4} parent=1 // pred_check_branch
      %306 = sbr.rel (0) target = $region77
    $region76: #{_lambda_.4} parent=1 // pred_region
      %s308 = ssub.s32 16, 16
      %309 = vsyncadd [#allocation31], %s308
      %s311 = sshll.u32 [#allocation32], 4
      %s312 = int_to_ptr.vmem [resolvable:$true] %s311
      %314 = dma.hbm_to_vmem [thread:$0]  %s37, 16, %s312, [#allocation31]
    $region77: #{_lambda_.4} parent=1 // pred_fallthru
      _
    // Predicated region
    $region78: #{_lambda_.4} parent=1 // pred_check
      _
    $region79: #{_lambda_.4} parent=1 // pred_check_branch
      %316 = sbr.rel (0) target = $region81
    $region80: #{_lambda_.4} parent=1 // pred_region
      %s318 = ssub.s32 1024, 1024
      %319 = vsyncadd [#allocation34], %s318
      %s320 = sshll.u32 [#allocation33], 4
      %s321 = int_to_ptr.vmem [resolvable:$true] %s320
      %326 = dma.hbm_to_vmem [thread:$0]  %s39, 1024, %s321, [#allocation34], 128, 128, 8
    $region81: #{_lambda_.4} parent=1 // pred_fallthru
      _
    // Predicated region
    $region82: #{_lambda_.4} parent=1 // pred_check
      _
    $region83: #{_lambda_.4} parent=1 // pred_check_branch
      %328 = sbr.rel (0) target = $region85
    $region84: #{_lambda_.4} parent=1 // pred_region
      %s330 = ssub.s32 16, 16
      %331 = vsyncadd [#allocation5], %s330
      %334 = dma.hbm_to_smem %s41, 16, [#allocation35], [#allocation5]
    $region85: #{_lambda_.4} parent=1 // pred_fallthru
      _
    // Predicated region
    $region86: #{_lambda_.4} parent=1 // pred_check
      _
    $region87: #{_lambda_.4} parent=1 // pred_check_branch
      %336 = sbr.rel (0) target = $region89
    $region88: #{_lambda_.4} parent=1 // pred_region
      %s338 = ssub.s32 256, 256
      %339 = vsyncadd [#allocation34], %s338
      %s340 = sshll.u32 [#allocation36], 4
      %s341 = int_to_ptr.vmem [resolvable:$true] %s340
      %346 = dma.hbm_to_vmem [thread:$0]  %s43, 256, %s341, [#allocation34], 64, 64, 4
    $region89: #{_lambda_.4} parent=1 // pred_fallthru
      _
    // Predicated region
    $region90: #{_lambda_.4} parent=1 // pred_check
      _
    $region91: #{_lambda_.4} parent=1 // pred_check_branch
      %348 = sbr.rel (0) target = $region93
    $region92: #{_lambda_.4} parent=1 // pred_region
      %s350 = ssub.s32 16, 16
      %351 = vsyncadd [#allocation38], %s350
      %s353 = sshll.u32 [#allocation37], 4
      %s354 = int_to_ptr.vmem [resolvable:$true] %s353
      %356 = dma.hbm_to_vmem [thread:$0]  %s45, 16, %s354, [#allocation38]
    $region93: #{_lambda_.4} parent=1 // pred_fallthru
      _
    // Predicated region
    $region94: #{_lambda_.4} parent=1 // pred_check
      _
    $region95: #{_lambda_.4} parent=1 // pred_check_branch
      %358 = sbr.rel (0) target = $region97
    $region96: #{_lambda_.4} parent=1 // pred_region
      %s360 = ssub.s32 512, 512
      %361 = vsyncadd [#allocation38], %s360
      %s362 = sshll.u32 [#allocation39], 4
      %s363 = int_to_ptr.vmem [resolvable:$true] %s362
      %368 = dma.hbm_to_vmem [thread:$0]  %s47, 512, %s363, [#allocation38], 128, 128, 8
    $region97: #{_lambda_.4} parent=1 // pred_fallthru
      _
    // Predicated region
    $region98: #{_lambda_.4} parent=1 // pred_check
      _
    $region99: #{_lambda_.4} parent=1 // pred_check_branch
      %370 = sbr.rel (0) target = $region101
    $region100: #{_lambda_.4} parent=1 // pred_region
      %s372 = ssub.s32 32, 32
      %373 = vsyncadd [#allocation41], %s372
      %s375 = sshll.u32 [#allocation40], 4
      %s376 = int_to_ptr.vmem [resolvable:$true] %s375
      %378 = dma.hbm_to_vmem [thread:$0]  %s49, 32, %s376, [#allocation41]
    $region101: #{_lambda_.4} parent=1 // pred_fallthru
      _
    // Predicated region
    $region102: #{_lambda_.4} parent=1 // pred_check
      _
    $region103: #{_lambda_.4} parent=1 // pred_check_branch
      %380 = sbr.rel (0) target = $region105
    $region104: #{_lambda_.4} parent=1 // pred_region
      %s382 = ssub.s32 2048, 2048
      %383 = vsyncadd [#allocation41], %s382
      %s384 = sshll.u32 [#allocation42], 4
      %s385 = int_to_ptr.vmem [resolvable:$true] %s384
      %390 = dma.hbm_to_vmem [thread:$0]  %s51, 2048, %s385, [#allocation41], 64, 64, 4
    $region105: #{_lambda_.4} parent=1 // pred_fallthru
      _
    // Predicated region
    $region106: #{_lambda_.4} parent=1 // pred_check
      _
    $region107: #{_lambda_.4} parent=1 // pred_check_branch
      %392 = sbr.rel (0) target = $region109
    $region108: #{_lambda_.4} parent=1 // pred_region
      %s394 = ssub.s32 16, 16
      %395 = vsyncadd [#allocation44], %s394
      %s397 = sshll.u32 [#allocation43], 4
      %s398 = int_to_ptr.vmem [resolvable:$true] %s397
      %400 = dma.hbm_to_vmem [thread:$0]  %s53, 16, %s398, [#allocation44]
    $region109: #{_lambda_.4} parent=1 // pred_fallthru
      _
    // Predicated region
    $region110: #{_lambda_.4} parent=1 // pred_check
      _
    $region111: #{_lambda_.4} parent=1 // pred_check_branch
      %402 = sbr.rel (0) target = $region113
    $region112: #{_lambda_.4} parent=1 // pred_region
      %s404 = ssub.s32 384, 384
      %405 = vsyncadd [#allocation44], %s404
      %s406 = sshll.u32 [#allocation45], 4
      %s407 = int_to_ptr.vmem [resolvable:$true] %s406
      %412 = dma.hbm_to_vmem [thread:$0]  %s55, 384, %s407, [#allocation44], 64, 64, 4
    $region113: #{_lambda_.4} parent=1 // pred_fallthru
      _
    // Predicated region
    $region114: #{_lambda_.4} parent=1 // pred_check
      _
    $region115: #{_lambda_.4} parent=1 // pred_check_branch
      %414 = sbr.rel (0) target = $region117
    $region116: #{_lambda_.4} parent=1 // pred_region
      %s416 = ssub.s32 16, 16
      %417 = vsyncadd [#allocation47], %s416
      %s419 = sshll.u32 [#allocation46], 4
      %s420 = int_to_ptr.vmem [resolvable:$true] %s419
      %422 = dma.hbm_to_vmem [thread:$0]  %s57, 16, %s420, [#allocation47]
    $region117: #{_lambda_.4} parent=1 // pred_fallthru
      _
    // Predicated region
    $region118: #{_lambda_.4} parent=1 // pred_check
      _
    $region119: #{_lambda_.4} parent=1 // pred_check_branch
      %424 = sbr.rel (0) target = $region121
    $region120: #{_lambda_.4} parent=1 // pred_region
      %s426 = ssub.s32 768, 768
      %427 = vsyncadd [#allocation47], %s426
      %s428 = sshll.u32 [#allocation48], 4
      %s429 = int_to_ptr.vmem [resolvable:$true] %s428
      %434 = dma.hbm_to_vmem [thread:$0]  %s59, 768, %s429, [#allocation47], 128, 128, 8
    $region121: #{_lambda_.4} parent=1 // pred_fallthru
      _
    // Predicated region
    $region122: #{_lambda_.4} parent=1 // pred_check
      _
    $region123: #{_lambda_.4} parent=1 // pred_check_branch
      %436 = sbr.rel (0) target = $region125
    $region124: #{_lambda_.4} parent=1 // pred_region
      %s438 = ssub.s32 32, 32
      %439 = vsyncadd [#allocation50], %s438
      %s441 = sshll.u32 [#allocation49], 4
      %s442 = int_to_ptr.vmem [resolvable:$true] %s441
      %444 = dma.hbm_to_vmem [thread:$0]  %s61, 32, %s442, [#allocation50]
    $region125: #{_lambda_.4} parent=1 // pred_fallthru
      _
    // Predicated region
    $region126: #{_lambda_.4} parent=1 // pred_check
      _
    $region127: #{_lambda_.4} parent=1 // pred_check_branch
      %446 = sbr.rel (0) target = $region129
    $region128: #{_lambda_.4} parent=1 // pred_region
      %s448 = ssub.s32 2048, 2048
      %449 = vsyncadd [#allocation50], %s448
      %s450 = sshll.u32 [#allocation51], 4
      %s451 = int_to_ptr.vmem [resolvable:$true] %s450
      %456 = dma.hbm_to_vmem [thread:$0]  %s63, 2048, %s451, [#allocation50], 64, 64, 4
    $region129: #{_lambda_.4} parent=1 // pred_fallthru
      _
    // Predicated region
    $region130: #{_lambda_.4} parent=1 // pred_check
      _
    $region131: #{_lambda_.4} parent=1 // pred_check_branch
      %458 = sbr.rel (0) target = $region133
    $region132: #{_lambda_.4} parent=1 // pred_region
      %s460 = ssub.s32 16, 16
      %461 = vsyncadd [#allocation53], %s460
      %s463 = sshll.u32 [#allocation52], 4
      %s464 = int_to_ptr.vmem [resolvable:$true] %s463
      %466 = dma.hbm_to_vmem [thread:$0]  %s65, 16, %s464, [#allocation53]
    $region133: #{_lambda_.4} parent=1 // pred_fallthru
      _
    // Predicated region
    $region134: #{_lambda_.4} parent=1 // pred_check
      _
    $region135: #{_lambda_.4} parent=1 // pred_check_branch
      %468 = sbr.rel (0) target = $region137
    $region136: #{_lambda_.4} parent=1 // pred_region
      %s470 = ssub.s32 512, 512
      %471 = vsyncadd [#allocation53], %s470
      %s472 = sshll.u32 [#allocation54], 4
      %s473 = int_to_ptr.vmem [resolvable:$true] %s472
      %478 = dma.hbm_to_vmem [thread:$0]  %s67, 512, %s473, [#allocation53], 64, 64, 4
    $region137: #{_lambda_.4} parent=1 // pred_fallthru
      _
    // Predicated region
    $region138: #{_lambda_.4} parent=1 // pred_check
      _
    $region139: #{_lambda_.4} parent=1 // pred_check_branch
      %480 = sbr.rel (0) target = $region141
    $region140: #{_lambda_.4} parent=1 // pred_region
      %s482 = ssub.s32 16, 16
      %483 = vsyncadd [#allocation56], %s482
      %s485 = sshll.u32 [#allocation55], 4
      %s486 = int_to_ptr.vmem [resolvable:$true] %s485
      %488 = dma.hbm_to_vmem [thread:$0]  %s69, 16, %s486, [#allocation56]
    $region141: #{_lambda_.4} parent=1 // pred_fallthru
      _
    // Predicated region
    $region142: #{_lambda_.4} parent=1 // pred_check
      _
    $region143: #{_lambda_.4} parent=1 // pred_check_branch
      %490 = sbr.rel (0) target = $region145
    $region144: #{_lambda_.4} parent=1 // pred_region
      %s492 = ssub.s32 1024, 1024
      %493 = vsyncadd [#allocation56], %s492
      %s494 = sshll.u32 [#allocation57], 4
      %s495 = int_to_ptr.vmem [resolvable:$true] %s494
      %500 = dma.hbm_to_vmem [thread:$0]  %s71, 1024, %s495, [#allocation56], 128, 128, 8
    $region145: #{_lambda_.4} parent=1 // pred_fallthru
      _
    // Predicated region
    $region146: #{_lambda_.4} parent=1 // pred_check
      _
    $region147: #{_lambda_.4} parent=1 // pred_check_branch
      %502 = sbr.rel (0) target = $region149
    $region148: #{_lambda_.4} parent=1 // pred_region
      %s504 = ssub.s32 16, 16
      %505 = vsyncadd [#allocation59], %s504
      %508 = dma.hbm_to_smem %s73, 16, [#allocation58], [#allocation59]
    $region149: #{_lambda_.4} parent=1 // pred_fallthru
      _
    // Predicated region
    $region150: #{_lambda_.4} parent=1 // pred_check
      _
    $region151: #{_lambda_.4} parent=1 // pred_check_branch
      %510 = sbr.rel (0) target = $region153
    $region152: #{_lambda_.4} parent=1 // pred_region
      %511 = dma.done [#allocation3], 384
    $region153: #{_lambda_.4} parent=1 // pred_fallthru
      _
    // Predicated region
    $region154: #{_lambda_.4} parent=1 // pred_check
      _
    $region155: #{_lambda_.4} parent=1 // pred_check_branch
      %513 = sbr.rel (0) target = $region157
    $region156: #{_lambda_.4} parent=1 // pred_region
      %514 = dma.done [#allocation7], 384
    $region157: #{_lambda_.4} parent=1 // pred_fallthru
      _
    // Predicated region
    $region158: #{_lambda_.4} parent=1 // pred_check
      _
    $region159: #{_lambda_.4} parent=1 // pred_check_branch
      %516 = sbr.rel (0) target = $region161
    $region160: #{_lambda_.4} parent=1 // pred_region
      %517 = dma.done [#allocation7], 384
    $region161: #{_lambda_.4} parent=1 // pred_fallthru
      _
    // Predicated region
    $region162: #{_lambda_.4} parent=1 // pred_check
      _
    $region163: #{_lambda_.4} parent=1 // pred_check_branch
      %519 = sbr.rel (0) target = $region165
    $region164: #{_lambda_.4} parent=1 // pred_region
      %520 = dma.done [#allocation10], 768
    $region165: #{_lambda_.4} parent=1 // pred_fallthru
      _
    // Predicated region
    $region166: #{_lambda_.4} parent=1 // pred_check
      _
    $region167: #{_lambda_.4} parent=1 // pred_check_branch
      %522 = sbr.rel (0) target = $region169
    $region168: #{_lambda_.4} parent=1 // pred_region
      %523 = dma.done [#allocation10], 768
    $region169: #{_lambda_.4} parent=1 // pred_fallthru
      _
    // Predicated region
    $region170: #{_lambda_.4} parent=1 // pred_check
      _
    $region171: #{_lambda_.4} parent=1 // pred_check_branch
      %525 = sbr.rel (0) target = $region173
    $region172: #{_lambda_.4} parent=1 // pred_region
      %526 = dma.done [#allocation13], 256
    $region173: #{_lambda_.4} parent=1 // pred_fallthru
      _
    // Predicated region
    $region174: #{_lambda_.4} parent=1 // pred_check
      _
    $region175: #{_lambda_.4} parent=1 // pred_check_branch
      %528 = sbr.rel (0) target = $region177
    $region176: #{_lambda_.4} parent=1 // pred_region
      %529 = dma.done [#allocation13], 16
    $region177: #{_lambda_.4} parent=1 // pred_fallthru
      _
    // Predicated region
    $region178: #{_lambda_.4} parent=1 // pred_check
      _
    $region179: #{_lambda_.4} parent=1 // pred_check_branch
      %531 = sbr.rel (0) target = $region181
    $region180: #{_lambda_.4} parent=1 // pred_region
      %532 = dma.done [#allocation16], 512
    $region181: #{_lambda_.4} parent=1 // pred_fallthru
      _
    // Predicated region
    $region182: #{_lambda_.4} parent=1 // pred_check
      _
    $region183: #{_lambda_.4} parent=1 // pred_check_branch
      %534 = sbr.rel (0) target = $region185
    $region184: #{_lambda_.4} parent=1 // pred_region
      %535 = dma.done [#allocation16], 32
    $region185: #{_lambda_.4} parent=1 // pred_fallthru
      _
    // Predicated region
    $region186: #{_lambda_.4} parent=1 // pred_check
      _
    $region187: #{_lambda_.4} parent=1 // pred_check_branch
      %537 = sbr.rel (0) target = $region189
    $region188: #{_lambda_.4} parent=1 // pred_region
      %538 = dma.done [#allocation19], 2048
    $region189: #{_lambda_.4} parent=1 // pred_fallthru
      _
    // Predicated region
    $region190: #{_lambda_.4} parent=1 // pred_check
      _
    $region191: #{_lambda_.4} parent=1 // pred_check_branch
      %540 = sbr.rel (0) target = $region193
    $region192: #{_lambda_.4} parent=1 // pred_region
      %541 = dma.done [#allocation19], 16
    $region193: #{_lambda_.4} parent=1 // pred_fallthru
      _
    // Predicated region
    $region194: #{_lambda_.4} parent=1 // pred_check
      _
    $region195: #{_lambda_.4} parent=1 // pred_check_branch
      %543 = sbr.rel (0) target = $region197
    $region196: #{_lambda_.4} parent=1 // pred_region
      %544 = dma.done [#allocation22], 384
    $region197: #{_lambda_.4} parent=1 // pred_fallthru
      _
    // Predicated region
    $region198: #{_lambda_.4} parent=1 // pred_check
      _
    $region199: #{_lambda_.4} parent=1 // pred_check_branch
      %546 = sbr.rel (0) target = $region201
    $region200: #{_lambda_.4} parent=1 // pred_region
      %547 = dma.done [#allocation22], 16
    $region201: #{_lambda_.4} parent=1 // pred_fallthru
      _
    // Predicated region
    $region202: #{_lambda_.4} parent=1 // pred_check
      _
    $region203: #{_lambda_.4} parent=1 // pred_check_branch
      %549 = sbr.rel (0) target = $region205
    $region204: #{_lambda_.4} parent=1 // pred_region
      %550 = dma.done [#allocation25], 768
    $region205: #{_lambda_.4} parent=1 // pred_fallthru
      _
    // Predicated region
    $region206: #{_lambda_.4} parent=1 // pred_check
      _
    $region207: #{_lambda_.4} parent=1 // pred_check_branch
      %552 = sbr.rel (0) target = $region209
    $region208: #{_lambda_.4} parent=1 // pred_region
      %553 = dma.done [#allocation25], 32
    $region209: #{_lambda_.4} parent=1 // pred_fallthru
      _
    // Predicated region
    $region210: #{_lambda_.4} parent=1 // pred_check
      _
    $region211: #{_lambda_.4} parent=1 // pred_check_branch
      %555 = sbr.rel (0) target = $region213
    $region212: #{_lambda_.4} parent=1 // pred_region
      %556 = dma.done [#allocation28], 2048
    $region213: #{_lambda_.4} parent=1 // pred_fallthru
      _
    // Predicated region
    $region214: #{_lambda_.4} parent=1 // pred_check
      _
    $region215: #{_lambda_.4} parent=1 // pred_check_branch
      %558 = sbr.rel (0) target = $region217
    $region216: #{_lambda_.4} parent=1 // pred_region
      %559 = dma.done [#allocation28], 16
    $region217: #{_lambda_.4} parent=1 // pred_fallthru
      _
    // Predicated region
    $region218: #{_lambda_.4} parent=1 // pred_check
      _
    $region219: #{_lambda_.4} parent=1 // pred_check_branch
      %561 = sbr.rel (0) target = $region221
    $region220: #{_lambda_.4} parent=1 // pred_region
      %562 = dma.done [#allocation31], 512
    $region221: #{_lambda_.4} parent=1 // pred_fallthru
      _
    // Predicated region
    $region222: #{_lambda_.4} parent=1 // pred_check
      _
    $region223: #{_lambda_.4} parent=1 // pred_check_branch
      %564 = sbr.rel (0) target = $region225
    $region224: #{_lambda_.4} parent=1 // pred_region
      %565 = dma.done [#allocation31], 16
    $region225: #{_lambda_.4} parent=1 // pred_fallthru
      _
    // Predicated region
    $region226: #{_lambda_.4} parent=1 // pred_check
      _
    $region227: #{_lambda_.4} parent=1 // pred_check_branch
      %567 = sbr.rel (0) target = $region229
    $region228: #{_lambda_.4} parent=1 // pred_region
      %568 = dma.done [#allocation34], 1024
    $region229: #{_lambda_.4} parent=1 // pred_fallthru
      _
    // Predicated region
    $region230: #{_lambda_.4} parent=1 // pred_check
      _
    $region231: #{_lambda_.4} parent=1 // pred_check_branch
      %570 = sbr.rel (0) target = $region233
    $region232: #{_lambda_.4} parent=1 // pred_region
      %571 = dma.done [#allocation5], 16
    $region233: #{_lambda_.4} parent=1 // pred_fallthru
      _
    // Predicated region
    $region234: #{_lambda_.4} parent=1 // pred_check
      _
    $region235: #{_lambda_.4} parent=1 // pred_check_branch
      %573 = sbr.rel (0) target = $region237
    $region236: #{_lambda_.4} parent=1 // pred_region
      %574 = dma.done [#allocation34], 256
    $region237: #{_lambda_.4} parent=1 // pred_fallthru
      _
    // Predicated region
    $region238: #{_lambda_.4} parent=1 // pred_check
      _
    $region239: #{_lambda_.4} parent=1 // pred_check_branch
      %576 = sbr.rel (0) target = $region241
    $region240: #{_lambda_.4} parent=1 // pred_region
      %577 = dma.done [#allocation38], 16
    $region241: #{_lambda_.4} parent=1 // pred_fallthru
      _
    // Predicated region
    $region242: #{_lambda_.4} parent=1 // pred_check
      _
    $region243: #{_lambda_.4} parent=1 // pred_check_branch
      %579 = sbr.rel (0) target = $region245
    $region244: #{_lambda_.4} parent=1 // pred_region
      %580 = dma.done [#allocation38], 512
    $region245: #{_lambda_.4} parent=1 // pred_fallthru
      _
    // Predicated region
    $region246: #{_lambda_.4} parent=1 // pred_check
      _
    $region247: #{_lambda_.4} parent=1 // pred_check_branch
      %582 = sbr.rel (0) target = $region249
    $region248: #{_lambda_.4} parent=1 // pred_region
      %583 = dma.done [#allocation41], 32
    $region249: #{_lambda_.4} parent=1 // pred_fallthru
      _
    // Predicated region
    $region250: #{_lambda_.4} parent=1 // pred_check
      _
    $region251: #{_lambda_.4} parent=1 // pred_check_branch
      %585 = sbr.rel (0) target = $region253
    $region252: #{_lambda_.4} parent=1 // pred_region
      %586 = dma.done [#allocation41], 2048
    $region253: #{_lambda_.4} parent=1 // pred_fallthru
      _
    // Predicated region
    $region254: #{_lambda_.4} parent=1 // pred_check
      _
    $region255: #{_lambda_.4} parent=1 // pred_check_branch
      %588 = sbr.rel (0) target = $region257
    $region256: #{_lambda_.4} parent=1 // pred_region
      %589 = dma.done [#allocation44], 16
    $region257: #{_lambda_.4} parent=1 // pred_fallthru
      _
    // Predicated region
    $region258: #{_lambda_.4} parent=1 // pred_check
      _
    $region259: #{_lambda_.4} parent=1 // pred_check_branch
      %591 = sbr.rel (0) target = $region261
    $region260: #{_lambda_.4} parent=1 // pred_region
      %592 = dma.done [#allocation44], 384
    $region261: #{_lambda_.4} parent=1 // pred_fallthru
      _
    // Predicated region
    $region262: #{_lambda_.4} parent=1 // pred_check
      _
    $region263: #{_lambda_.4} parent=1 // pred_check_branch
      %594 = sbr.rel (0) target = $region265
    $region264: #{_lambda_.4} parent=1 // pred_region
      %595 = dma.done [#allocation47], 16
    $region265: #{_lambda_.4} parent=1 // pred_fallthru
      _
    // Predicated region
    $region266: #{_lambda_.4} parent=1 // pred_check
      _
    $region267: #{_lambda_.4} parent=1 // pred_check_branch
      %597 = sbr.rel (0) target = $region269
    $region268: #{_lambda_.4} parent=1 // pred_region
      %598 = dma.done [#allocation47], 768
    $region269: #{_lambda_.4} parent=1 // pred_fallthru
      _
    // Predicated region
    $region270: #{_lambda_.4} parent=1 // pred_check
      _
    $region271: #{_lambda_.4} parent=1 // pred_check_branch
      %600 = sbr.rel (0) target = $region273
    $region272: #{_lambda_.4} parent=1 // pred_region
      %601 = dma.done [#allocation50], 32
    $region273: #{_lambda_.4} parent=1 // pred_fallthru
      _
    // Predicated region
    $region274: #{_lambda_.4} parent=1 // pred_check
      _
    $region275: #{_lambda_.4} parent=1 // pred_check_branch
      %603 = sbr.rel (0) target = $region277
    $region276: #{_lambda_.4} parent=1 // pred_region
      %604 = dma.done [#allocation50], 2048
    $region277: #{_lambda_.4} parent=1 // pred_fallthru
      _
    // Predicated region
    $region278: #{_lambda_.4} parent=1 // pred_check
      _
    $region279: #{_lambda_.4} parent=1 // pred_check_branch
      %606 = sbr.rel (0) target = $region281
    $region280: #{_lambda_.4} parent=1 // pred_region
      %607 = dma.done [#allocation53], 16
    $region281: #{_lambda_.4} parent=1 // pred_fallthru
      _
    // Predicated region
    $region282: #{_lambda_.4} parent=1 // pred_check
      _
    $region283: #{_lambda_.4} parent=1 // pred_check_branch
      %609 = sbr.rel (0) target = $region285
    $region284: #{_lambda_.4} parent=1 // pred_region
      %610 = dma.done [#allocation53], 512
    $region285: #{_lambda_.4} parent=1 // pred_fallthru
      _
    // Predicated region
    $region286: #{_lambda_.4} parent=1 // pred_check
      _
    $region287: #{_lambda_.4} parent=1 // pred_check_branch
      %612 = sbr.rel (0) target = $region289
    $region288: #{_lambda_.4} parent=1 // pred_region
      %613 = dma.done [#allocation56], 16
    $region289: #{_lambda_.4} parent=1 // pred_fallthru
      _
    // Predicated region
    $region290: #{_lambda_.4} parent=1 // pred_check
      _
    $region291: #{_lambda_.4} parent=1 // pred_check_branch
      %615 = sbr.rel (0) target = $region293
    $region292: #{_lambda_.4} parent=1 // pred_region
      %616 = dma.done [#allocation56], 1024
    $region293: #{_lambda_.4} parent=1 // pred_fallthru
      _
    // Predicated region
    $region294: #{_lambda_.4} parent=1 // pred_check
      _
    $region295: #{_lambda_.4} parent=1 // pred_check_branch
      %618 = sbr.rel (0) target = $region297
    $region296: #{_lambda_.4} parent=1 // pred_region
      %619 = dma.done [#allocation59], 16
    $region297: #{_lambda_.4} parent=1 // pred_fallthru
      _
    %620 = sfence
    %v622 = vld [vmem:[#allocation2] sm:$0xf]
    %v623 = vld [vmem:[#allocation2 + $0x4] sm:$0xf]
    %v624 = vld [vmem:[#allocation2 + $0x8] sm:$0xf]
    %v625 = vld [vmem:[#allocation2 + $0xc] sm:$0xf]
    %v626 = vld [vmem:[#allocation2 + $0x10] sm:$0xf]
    %v627 = vld [vmem:[#allocation2 + $0x14] sm:$0xf]
    %v628 = vld [vmem:[#allocation6] sm:$0xf]
    %v629 = vld [vmem:[#allocation6 + $0x4] sm:$0xf]
    %v630 = vld [vmem:[#allocation6 + $0x8] sm:$0xf]
    %v631 = vld [vmem:[#allocation6 + $0xc] sm:$0xf]
    %v632 = vld [vmem:[#allocation6 + $0x10] sm:$0xf]
    %v633 = vld [vmem:[#allocation6 + $0x14] sm:$0xf]
    %v634 = vld [vmem:[#allocation8] sm:$0xf]
    %v635 = vld [vmem:[#allocation8 + $0x4] sm:$0xf]
    %v636 = vld [vmem:[#allocation8 + $0x8] sm:$0xf]
    %v637 = vld [vmem:[#allocation8 + $0xc] sm:$0xf]
    %v638 = vld [vmem:[#allocation8 + $0x10] sm:$0xf]
    %v639 = vld [vmem:[#allocation8 + $0x14] sm:$0xf]
    %v640 = vld [vmem:[#allocation11] sm:$0xff]
    %v641 = vld [vmem:[#allocation11 + $0x8] sm:$0xff]
    %v642 = vld [vmem:[#allocation11 + $0x10] sm:$0xff]
    %v643 = vld [vmem:[#allocation11 + $0x18] sm:$0xff]
    %v644 = vld [vmem:[#allocation11 + $0x20] sm:$0xff]
    %v645 = vld [vmem:[#allocation11 + $0x28] sm:$0xff]
    %v646 = vld [vmem:[#allocation9] sm:$0xff]
    %v647 = vld [vmem:[#allocation9 + $0x8] sm:$0xff]
    %v648 = vld [vmem:[#allocation9 + $0x10] sm:$0xff]
    %v649 = vld [vmem:[#allocation9 + $0x18] sm:$0xff]
    %v650 = vld [vmem:[#allocation9 + $0x20] sm:$0xff]
    %v651 = vld [vmem:[#allocation9 + $0x28] sm:$0xff]
    %v652 = vld [vmem:[#allocation12] sm:$0xf]
    %v653 = vld [vmem:[#allocation12 + $0x4] sm:$0xf]
    %v654 = vld [vmem:[#allocation12 + $0x8] sm:$0xf]
    %v655 = vld [vmem:[#allocation12 + $0xc] sm:$0xf]
    %v656 = vld [vmem:[#allocation14] sm:$0x1]
    %v658 = vlaneseq
    %v659 = vshrl.u32 %v658, 7
    %v660 = vsub.s32 0, %v659
    %v661 = vrot.slane %v656, %v660
    %v669 = vunpack.c.l.b16 %v622
    %v670 = vunpack.c.l.b16 %v623
    %v671 = vunpack.c.l.b16 %v624
    %v672 = vunpack.c.l.b16 %v625
    %v673 = vunpack.c.l.b16 %v626
    %v674 = vunpack.c.l.b16 %v627
    %v675 = vpack.c.b16 %v670, %v669
    %v676 = vpack.c.b16 %v672, %v671
    %v677 = vpack.c.b16 %v674, %v673
    %v682 = vunpack.c.l.b16 %v652
    %v683 = vunpack.c.l.b16 %v653
    %v684 = vunpack.c.l.b16 %v654
    %v685 = vunpack.c.l.b16 %v655
    %v686 = vpack.c.b16 %v683, %v682
    %v687 = vpack.c.b16 %v685, %v684
    %vm690 = vcmask 261120
    %v692 = vsel %vm690, %v675, 0
    %v695 = vsel %vm690, %v676, 0
    %v698 = vsel %vm690, %v677, 0
    %700 = vmatprep.subr.bf16.mxu0 0
    %701 = vmatpush1.bf16.msra.mxu0 %v686
    %702 = vmatprep.subr.bf16.mxu0 0
    %703 = vmatpush1.bf16.msra.mxu0 %v687
    %704 = vmatprep.subr.bf16.mxu0 0
    %705 = vmatpush1.bf16.msra.mxu0 0
    %706 = vmatprep.subr.bf16.mxu0 0
    %707 = vmatpush1.bf16.msra.mxu0 0
    %708 = vmatprep.subr.bf16.mxu0 0
    %709 = vmatpush1.bf16.msra.mxu0 0
    %710 = vmatprep.subr.bf16.mxu0 0
    %711 = vmatpush1.bf16.msra.mxu0 0
    %712 = vmatprep.subr.bf16.mxu0 0
    %713 = vmatpush1.bf16.msra.mxu0 0
    %714 = vmatprep.subr.bf16.mxu0 0
    %715 = vmatpush1.bf16.msra.mxu0 0
    %716 = vmatprep.subr.bf16.mxu0 0
    %717 = vmatpush1.bf16.msra.mxu0 0
    %718 = vmatprep.subr.bf16.mxu0 0
    %719 = vmatpush1.bf16.msra.mxu0 0
    %720 = vmatprep.subr.bf16.mxu0 0
    %721 = vmatpush1.bf16.msra.mxu0 0
    %722 = vmatprep.subr.bf16.mxu0 0
    %723 = vmatpush1.bf16.msra.mxu0 0
    %724 = vmatprep.subr.bf16.mxu0 0
    %725 = vmatpush1.bf16.msra.mxu0 0
    %726 = vmatprep.subr.bf16.mxu0 0
    %727 = vmatpush1.bf16.msra.mxu0 0
    %728 = vmatprep.subr.bf16.mxu0 0
    %729 = vmatpush1.bf16.msra.mxu0 0
    %730 = vmatprep.subr.bf16.mxu0 0
    %731 = vmatpush1.bf16.msra.mxu0 0
    %732 = vmatprep.mubr.bf16.mxu0 0
    %733 = vmatmul.mubr.bf16.gmra.mrb[0].mxu0 %v692
    %v734 = vpop.f32.mrb[0].mxu0
    %v735 = vadd.f32 %v661, %v734
    %v736 = vpop.f32.mrb[0].mxu0
    %v737 = vpop.f32.mrb[0].mxu0
    %v738 = vadd.f32 %v661, %v737
    %v739 = vpop.f32.mrb[0].mxu0
    %740 = vmatprep.mubr.bf16.mxu0 0
    %741 = vmatmul.mubr.bf16.gmra.mrb[0].mxu0 %v695
    %v742 = vpop.f32.mrb[0].mxu0
    %v743 = vadd.f32 %v661, %v742
    %v744 = vpop.f32.mrb[0].mxu0
    %v745 = vpop.f32.mrb[0].mxu0
    %v746 = vadd.f32 %v661, %v745
    %v747 = vpop.f32.mrb[0].mxu0
    %748 = vmatprep.mubr.bf16.mxu0 0
    %749 = vmatmul.mubr.bf16.gmra.mrb[0].mxu0 %v698
    %v750 = vpop.f32.mrb[0].mxu0
    %v751 = vadd.f32 %v661, %v750
    %v752 = vpop.f32.mrb[0].mxu0
    %v753 = vpop.f32.mrb[0].mxu0
    %v754 = vadd.f32 %v661, %v753
    %v755 = vpop.f32.mrb[0].mxu0
    %756 = vdwg.mxu0
    %v757 = vmax.f32 %v735, 0.0
    %v758 = vmax.f32 %v738, 0.0
    %v759 = vmax.f32 %v743, 0.0
    %v760 = vmax.f32 %v746, 0.0
    %v761 = vmax.f32 %v751, 0.0
    %v762 = vmax.f32 %v754, 0.0
    %v763 = vpack.c.bf16 %v758, %v757
    %v764 = vpack.c.bf16 %v760, %v759
    %v765 = vpack.c.bf16 %v762, %v761
    %v766 = vld [vmem:[#allocation15] sm:$0xff]
    %v767 = vld [vmem:[#allocation15 + $0x8] sm:$0xff]
    %v768 = vld [vmem:[#allocation15 + $0x10] sm:$0xff]
    %v769 = vld [vmem:[#allocation15 + $0x18] sm:$0xff]
    %v770 = vld [vmem:[#allocation17] sm:$0x3]
    %v772 = vlaneseq
    %v773 = vshrl.u32 %v772, 7
    %v774 = vsub.s32 0, %v773
    %v775 = vrot.slane %v770, %v774
    %v776 = vlaneseq
    %v777 = vshrl.u32 %v776, 7
    %v778 = vsub.s32 1, %v777
    %v779 = vrot.slane %v770, %v778
    %v786 = vunpack.c.l.b16 %v766
    %v787 = vunpack.c.h.b16 %v766
    %v788 = vunpack.c.l.b16 %v767
    %v789 = vunpack.c.h.b16 %v767
    %v790 = vunpack.c.l.b16 %v768
    %v791 = vunpack.c.h.b16 %v768
    %v792 = vunpack.c.l.b16 %v769
    %v793 = vunpack.c.h.b16 %v769
    %v794 = vpack.c.b16 %v788, %v786
    %v795 = vpack.c.b16 %v789, %v787
    %v796 = vpack.c.b16 %v792, %v790
    %v797 = vpack.c.b16 %v793, %v791
    %v803 = vsel %vm690, %v763, 0
    %v806 = vsel %vm690, %v764, 0
    %v809 = vsel %vm690, %v765, 0
    %811 = vmatprep.subr.bf16.mxu0 %v795
    %812 = vmatpush1.bf16.msra.mxu0 %v794
    %813 = vmatprep.subr.bf16.mxu0 %v797
    %814 = vmatpush1.bf16.msra.mxu0 %v796
    %815 = vmatprep.subr.bf16.mxu0 0
    %816 = vmatpush1.bf16.msra.mxu0 0
    %817 = vmatprep.subr.bf16.mxu0 0
    %818 = vmatpush1.bf16.msra.mxu0 0
    %819 = vmatprep.subr.bf16.mxu0 0
    %820 = vmatpush1.bf16.msra.mxu0 0
    %821 = vmatprep.subr.bf16.mxu0 0
    %822 = vmatpush1.bf16.msra.mxu0 0
    %823 = vmatprep.subr.bf16.mxu0 0
    %824 = vmatpush1.bf16.msra.mxu0 0
    %825 = vmatprep.subr.bf16.mxu0 0
    %826 = vmatpush1.bf16.msra.mxu0 0
    %827 = vmatprep.subr.bf16.mxu0 0
    %828 = vmatpush1.bf16.msra.mxu0 0
    %829 = vmatprep.subr.bf16.mxu0 0
    %830 = vmatpush1.bf16.msra.mxu0 0
    %831 = vmatprep.subr.bf16.mxu0 0
    %832 = vmatpush1.bf16.msra.mxu0 0
    %833 = vmatprep.subr.bf16.mxu0 0
    %834 = vmatpush1.bf16.msra.mxu0 0
    %835 = vmatprep.subr.bf16.mxu0 0
    %836 = vmatpush1.bf16.msra.mxu0 0
    %837 = vmatprep.subr.bf16.mxu0 0
    %838 = vmatpush1.bf16.msra.mxu0 0
    %839 = vmatprep.subr.bf16.mxu0 0
    %840 = vmatpush1.bf16.msra.mxu0 0
    %841 = vmatprep.subr.bf16.mxu0 0
    %842 = vmatpush1.bf16.msra.mxu0 0
    %843 = vmatprep.mubr.bf16.mxu0 0
    %844 = vmatmul.mubr.bf16.gmra.mrb[0].mxu0 %v803
    %v845 = vpop.f32.mrb[0].mxu0
    %v846 = vadd.f32 %v775, %v845
    %v847 = vpop.f32.mrb[0].mxu0
    %v848 = vadd.f32 %v779, %v847
    %v849 = vpop.f32.mrb[0].mxu0
    %v850 = vadd.f32 %v775, %v849
    %v851 = vpop.f32.mrb[0].mxu0
    %v852 = vadd.f32 %v779, %v851
    %853 = vmatprep.mubr.bf16.mxu0 0
    %854 = vmatmul.mubr.bf16.gmra.mrb[0].mxu0 %v806
    %v855 = vpop.f32.mrb[0].mxu0
    %v856 = vadd.f32 %v775, %v855
    %v857 = vpop.f32.mrb[0].mxu0
    %v858 = vadd.f32 %v779, %v857
    %v859 = vpop.f32.mrb[0].mxu0
    %v860 = vadd.f32 %v775, %v859
    %v861 = vpop.f32.mrb[0].mxu0
    %v862 = vadd.f32 %v779, %v861
    %863 = vmatprep.mubr.bf16.mxu0 0
    %864 = vmatmul.mubr.bf16.gmra.mrb[0].mxu0 %v809
    %v865 = vpop.f32.mrb[0].mxu0
    %v866 = vadd.f32 %v775, %v865
    %v867 = vpop.f32.mrb[0].mxu0
    %v868 = vadd.f32 %v779, %v867
    %v869 = vpop.f32.mrb[0].mxu0
    %v870 = vadd.f32 %v775, %v869
    %v871 = vpop.f32.mrb[0].mxu0
    %v872 = vadd.f32 %v779, %v871
    %873 = vdwg.mxu0
    %v874 = vmax.f32 %v846, 0.0
    %v875 = vmax.f32 %v848, 0.0
    %v876 = vmax.f32 %v850, 0.0
    %v877 = vmax.f32 %v852, 0.0
    %v878 = vmax.f32 %v856, 0.0
    %v879 = vmax.f32 %v858, 0.0
    %v880 = vmax.f32 %v860, 0.0
    %v881 = vmax.f32 %v862, 0.0
    %v882 = vmax.f32 %v866, 0.0
    %v883 = vmax.f32 %v868, 0.0
    %v884 = vmax.f32 %v870, 0.0
    %v885 = vmax.f32 %v872, 0.0
    %v886 = vpack.c.bf16 %v876, %v874
    %v887 = vpack.c.bf16 %v877, %v875
    %v888 = vpack.c.bf16 %v880, %v878
    %v889 = vpack.c.bf16 %v881, %v879
    %v890 = vpack.c.bf16 %v884, %v882
    %v891 = vpack.c.bf16 %v885, %v883
    %v892 = vld [vmem:[#allocation18] sm:$0xf]
    %v893 = vld [vmem:[#allocation18 + $0x4] sm:$0xf]
    %v894 = vld [vmem:[#allocation18 + $0x8] sm:$0xf]
    %v895 = vld [vmem:[#allocation18 + $0xc] sm:$0xf]
    %v896 = vld [vmem:[#allocation18 + $0x10] sm:$0xf]
    %v897 = vld [vmem:[#allocation18 + $0x14] sm:$0xf]
    %v898 = vld [vmem:[#allocation18 + $0x18] sm:$0xf]
    %v899 = vld [vmem:[#allocation18 + $0x1c] sm:$0xf]
    %v900 = vld [vmem:[#allocation18 + $0x20] sm:$0xf]
    %v901 = vld [vmem:[#allocation18 + $0x24] sm:$0xf]
    %v902 = vld [vmem:[#allocation18 + $0x28] sm:$0xf]
    %v903 = vld [vmem:[#allocation18 + $0x2c] sm:$0xf]
    %v904 = vld [vmem:[#allocation18 + $0x30] sm:$0xf]
    %v905 = vld [vmem:[#allocation18 + $0x34] sm:$0xf]
    %v906 = vld [vmem:[#allocation18 + $0x38] sm:$0xf]
    %v907 = vld [vmem:[#allocation18 + $0x3c] sm:$0xf]
    %v908 = vld [vmem:[#allocation18 + $0x40] sm:$0xf]
    %v909 = vld [vmem:[#allocation18 + $0x44] sm:$0xf]
    %v910 = vld [vmem:[#allocation18 + $0x48] sm:$0xf]
    %v911 = vld [vmem:[#allocation18 + $0x4c] sm:$0xf]
    %v912 = vld [vmem:[#allocation18 + $0x50] sm:$0xf]
    %v913 = vld [vmem:[#allocation18 + $0x54] sm:$0xf]
    %v914 = vld [vmem:[#allocation18 + $0x58] sm:$0xf]
    %v915 = vld [vmem:[#allocation18 + $0x5c] sm:$0xf]
    %v916 = vld [vmem:[#allocation18 + $0x60] sm:$0xf]
    %v917 = vld [vmem:[#allocation18 + $0x64] sm:$0xf]
    %v918 = vld [vmem:[#allocation18 + $0x68] sm:$0xf]
    %v919 = vld [vmem:[#allocation18 + $0x6c] sm:$0xf]
    %v920 = vld [vmem:[#allocation18 + $0x70] sm:$0xf]
    %v921 = vld [vmem:[#allocation18 + $0x74] sm:$0xf]
    %v922 = vld [vmem:[#allocation18 + $0x78] sm:$0xf]
    %v923 = vld [vmem:[#allocation18 + $0x7c] sm:$0xf]
    %v924 = vld [vmem:[#allocation20] sm:$0x1]
    %v926 = vlaneseq
    %v927 = vshrl.u32 %v926, 7
    %v928 = vsub.s32 0, %v927
    %v929 = vrot.slane %v924, %v928
    %v963 = vunpack.c.l.b16 %v892
    %v964 = vunpack.c.l.b16 %v893
    %v965 = vunpack.c.l.b16 %v894
    %v966 = vunpack.c.l.b16 %v895
    %v967 = vunpack.c.l.b16 %v896
    %v968 = vunpack.c.l.b16 %v897
    %v969 = vunpack.c.l.b16 %v898
    %v970 = vunpack.c.l.b16 %v899
    %v971 = vunpack.c.l.b16 %v900
    %v972 = vunpack.c.l.b16 %v901
    %v973 = vunpack.c.l.b16 %v902
    %v974 = vunpack.c.l.b16 %v903
    %v975 = vunpack.c.l.b16 %v904
    %v976 = vunpack.c.l.b16 %v905
    %v977 = vunpack.c.l.b16 %v906
    %v978 = vunpack.c.l.b16 %v907
    %v979 = vunpack.c.l.b16 %v908
    %v980 = vunpack.c.l.b16 %v909
    %v981 = vunpack.c.l.b16 %v910
    %v982 = vunpack.c.l.b16 %v911
    %v983 = vunpack.c.l.b16 %v912
    %v984 = vunpack.c.l.b16 %v913
    %v985 = vunpack.c.l.b16 %v914
    %v986 = vunpack.c.l.b16 %v915
    %v987 = vunpack.c.l.b16 %v916
    %v988 = vunpack.c.l.b16 %v917
    %v989 = vunpack.c.l.b16 %v918
    %v990 = vunpack.c.l.b16 %v919
    %v991 = vunpack.c.l.b16 %v920
    %v992 = vunpack.c.l.b16 %v921
    %v993 = vunpack.c.l.b16 %v922
    %v994 = vunpack.c.l.b16 %v923
    %v995 = vpack.c.b16 %v964, %v963
    %v996 = vpack.c.b16 %v966, %v965
    %v997 = vpack.c.b16 %v968, %v967
    %v998 = vpack.c.b16 %v970, %v969
    %v999 = vpack.c.b16 %v972, %v971
    %v1000 = vpack.c.b16 %v974, %v973
    %v1001 = vpack.c.b16 %v976, %v975
    %v1002 = vpack.c.b16 %v978, %v977
    %v1003 = vpack.c.b16 %v980, %v979
    %v1004 = vpack.c.b16 %v982, %v981
    %v1005 = vpack.c.b16 %v984, %v983
    %v1006 = vpack.c.b16 %v986, %v985
    %v1007 = vpack.c.b16 %v988, %v987
    %v1008 = vpack.c.b16 %v990, %v989
    %v1009 = vpack.c.b16 %v992, %v991
    %v1010 = vpack.c.b16 %v994, %v993
    %1027 = vmatprep.subr.bf16.mxu0 0
    %1028 = vmatpush1.bf16.msra.mxu0 %v995
    %1029 = vmatprep.subr.bf16.mxu0 0
    %1030 = vmatpush1.bf16.msra.mxu0 %v996
    %1031 = vmatprep.subr.bf16.mxu0 0
    %1032 = vmatpush1.bf16.msra.mxu0 %v997
    %1033 = vmatprep.subr.bf16.mxu0 0
    %1034 = vmatpush1.bf16.msra.mxu0 %v998
    %1035 = vmatprep.subr.bf16.mxu0 0
    %1036 = vmatpush1.bf16.msra.mxu0 %v999
    %1037 = vmatprep.subr.bf16.mxu0 0
    %1038 = vmatpush1.bf16.msra.mxu0 %v1000
    %1039 = vmatprep.subr.bf16.mxu0 0
    %1040 = vmatpush1.bf16.msra.mxu0 %v1001
    %1041 = vmatprep.subr.bf16.mxu0 0
    %1042 = vmatpush1.bf16.msra.mxu0 %v1002
    %1043 = vmatprep.subr.bf16.mxu0 0
    %1044 = vmatpush1.bf16.msra.mxu0 %v1003
    %1045 = vmatprep.subr.bf16.mxu0 0
    %1046 = vmatpush1.bf16.msra.mxu0 %v1004
    %1047 = vmatprep.subr.bf16.mxu0 0
    %1048 = vmatpush1.bf16.msra.mxu0 %v1005
    %1049 = vmatprep.subr.bf16.mxu0 0
    %1050 = vmatpush1.bf16.msra.mxu0 %v1006
    %1051 = vmatprep.subr.bf16.mxu0 0
    %1052 = vmatpush1.bf16.msra.mxu0 %v1007
    %1053 = vmatprep.subr.bf16.mxu0 0
    %1054 = vmatpush1.bf16.msra.mxu0 %v1008
    %1055 = vmatprep.subr.bf16.mxu0 0
    %1056 = vmatpush1.bf16.msra.mxu0 %v1009
    %1057 = vmatprep.subr.bf16.mxu0 0
    %1058 = vmatpush1.bf16.msra.mxu0 %v1010
    %1059 = vmatprep.mubr.bf16.mxu0 %v887
    %1060 = vmatmul.mubr.bf16.gmra.mrb[0].mxu0 %v886
    %v1061 = vpop.f32.mrb[0].mxu0
    %v1062 = vadd.f32 %v929, %v1061
    %v1063 = vpop.f32.mrb[0].mxu0
    %v1064 = vpop.f32.mrb[0].mxu0
    %v1065 = vadd.f32 %v929, %v1064
    %v1066 = vpop.f32.mrb[0].mxu0
    %1067 = vmatprep.mubr.bf16.mxu0 %v889
    %1068 = vmatmul.mubr.bf16.gmra.mrb[0].mxu0 %v888
    %v1069 = vpop.f32.mrb[0].mxu0
    %v1070 = vadd.f32 %v929, %v1069
    %v1071 = vpop.f32.mrb[0].mxu0
    %v1072 = vpop.f32.mrb[0].mxu0
    %v1073 = vadd.f32 %v929, %v1072
    %v1074 = vpop.f32.mrb[0].mxu0
    %1075 = vmatprep.mubr.bf16.mxu0 %v891
    %1076 = vmatmul.mubr.bf16.gmra.mrb[0].mxu0 %v890
    %v1077 = vpop.f32.mrb[0].mxu0
    %v1078 = vadd.f32 %v929, %v1077
    %v1079 = vpop.f32.mrb[0].mxu0
    %v1080 = vpop.f32.mrb[0].mxu0
    %v1081 = vadd.f32 %v929, %v1080
    %v1082 = vpop.f32.mrb[0].mxu0
    %1083 = vdwg.mxu0
    %v1084 = vld [vmem:[#allocation21] sm:$0xf]
    %v1085 = vld [vmem:[#allocation21 + $0x4] sm:$0xf]
    %v1086 = vld [vmem:[#allocation21 + $0x8] sm:$0xf]
    %v1087 = vld [vmem:[#allocation21 + $0xc] sm:$0xf]
    %v1088 = vld [vmem:[#allocation21 + $0x10] sm:$0xf]
    %v1089 = vld [vmem:[#allocation21 + $0x14] sm:$0xf]
    %v1090 = vld [vmem:[#allocation23] sm:$0x1]
    %v1092 = vlaneseq
    %v1093 = vshrl.u32 %v1092, 7
    %v1094 = vsub.s32 0, %v1093
    %v1095 = vrot.slane %v1090, %v1094
    %v1103 = vunpack.c.l.b16 %v628
    %v1104 = vunpack.c.l.b16 %v629
    %v1105 = vunpack.c.l.b16 %v630
    %v1106 = vunpack.c.l.b16 %v631
    %v1107 = vunpack.c.l.b16 %v632
    %v1108 = vunpack.c.l.b16 %v633
    %v1109 = vpack.c.b16 %v1104, %v1103
    %v1110 = vpack.c.b16 %v1106, %v1105
    %v1111 = vpack.c.b16 %v1108, %v1107
    %v1118 = vunpack.c.l.b16 %v1084
    %v1119 = vunpack.c.l.b16 %v1085
    %v1120 = vunpack.c.l.b16 %v1086
    %v1121 = vunpack.c.l.b16 %v1087
    %v1122 = vunpack.c.l.b16 %v1088
    %v1123 = vunpack.c.l.b16 %v1089
    %v1124 = vpack.c.b16 %v1119, %v1118
    %v1125 = vpack.c.b16 %v1121, %v1120
    %v1126 = vpack.c.b16 %v1123, %v1122
    %vm1130 = vcmask 392192
    %v1132 = vsel %vm1130, %v1109, 0
    %v1135 = vsel %vm1130, %v1110, 0
    %v1138 = vsel %vm1130, %v1111, 0
    %1140 = vmatprep.subr.bf16.mxu0 0
    %1141 = vmatpush1.bf16.msra.mxu0 %v1124
    %1142 = vmatprep.subr.bf16.mxu0 0
    %1143 = vmatpush1.bf16.msra.mxu0 %v1125
    %1144 = vmatprep.subr.bf16.mxu0 0
    %1145 = vmatpush1.bf16.msra.mxu0 %v1126
    %1146 = vmatprep.subr.bf16.mxu0 0
    %1147 = vmatpush1.bf16.msra.mxu0 0
    %1148 = vmatprep.subr.bf16.mxu0 0
    %1149 = vmatpush1.bf16.msra.mxu0 0
    %1150 = vmatprep.subr.bf16.mxu0 0
    %1151 = vmatpush1.bf16.msra.mxu0 0
    %1152 = vmatprep.subr.bf16.mxu0 0
    %1153 = vmatpush1.bf16.msra.mxu0 0
    %1154 = vmatprep.subr.bf16.mxu0 0
    %1155 = vmatpush1.bf16.msra.mxu0 0
    %1156 = vmatprep.subr.bf16.mxu0 0
    %1157 = vmatpush1.bf16.msra.mxu0 0
    %1158 = vmatprep.subr.bf16.mxu0 0
    %1159 = vmatpush1.bf16.msra.mxu0 0
    %1160 = vmatprep.subr.bf16.mxu0 0
    %1161 = vmatpush1.bf16.msra.mxu0 0
    %1162 = vmatprep.subr.bf16.mxu0 0
    %1163 = vmatpush1.bf16.msra.mxu0 0
    %1164 = vmatprep.subr.bf16.mxu0 0
    %1165 = vmatpush1.bf16.msra.mxu0 0
    %1166 = vmatprep.subr.bf16.mxu0 0
    %1167 = vmatpush1.bf16.msra.mxu0 0
    %1168 = vmatprep.subr.bf16.mxu0 0
    %1169 = vmatpush1.bf16.msra.mxu0 0
    %1170 = vmatprep.subr.bf16.mxu0 0
    %1171 = vmatpush1.bf16.msra.mxu0 0
    %1172 = vmatprep.mubr.bf16.mxu0 0
    %1173 = vmatmul.mubr.bf16.gmra.mrb[0].mxu0 %v1132
    %v1174 = vpop.f32.mrb[0].mxu0
    %v1175 = vadd.f32 %v1095, %v1174
    %v1176 = vpop.f32.mrb[0].mxu0
    %v1177 = vpop.f32.mrb[0].mxu0
    %v1178 = vadd.f32 %v1095, %v1177
    %v1179 = vpop.f32.mrb[0].mxu0
    %1180 = vmatprep.mubr.bf16.mxu0 0
    %1181 = vmatmul.mubr.bf16.gmra.mrb[0].mxu0 %v1135
    %v1182 = vpop.f32.mrb[0].mxu0
    %v1183 = vadd.f32 %v1095, %v1182
    %v1184 = vpop.f32.mrb[0].mxu0
    %v1185 = vpop.f32.mrb[0].mxu0
    %v1186 = vadd.f32 %v1095, %v1185
    %v1187 = vpop.f32.mrb[0].mxu0
    %1188 = vmatprep.mubr.bf16.mxu0 0
    %1189 = vmatmul.mubr.bf16.gmra.mrb[0].mxu0 %v1138
    %v1190 = vpop.f32.mrb[0].mxu0
    %v1191 = vadd.f32 %v1095, %v1190
    %v1192 = vpop.f32.mrb[0].mxu0
    %v1193 = vpop.f32.mrb[0].mxu0
    %v1194 = vadd.f32 %v1095, %v1193
    %v1195 = vpop.f32.mrb[0].mxu0
    %1196 = vdwg.mxu0
    %v1197 = vmax.f32 %v1175, 0.0
    %v1198 = vmax.f32 %v1178, 0.0
    %v1199 = vmax.f32 %v1183, 0.0
    %v1200 = vmax.f32 %v1186, 0.0
    %v1201 = vmax.f32 %v1191, 0.0
    %v1202 = vmax.f32 %v1194, 0.0
    %v1203 = vpack.c.bf16 %v1198, %v1197
    %v1204 = vpack.c.bf16 %v1200, %v1199
    %v1205 = vpack.c.bf16 %v1202, %v1201
    %v1206 = vld [vmem:[#allocation24] sm:$0xff]
    %v1207 = vld [vmem:[#allocation24 + $0x8] sm:$0xff]
    %v1208 = vld [vmem:[#allocation24 + $0x10] sm:$0xff]
    %v1209 = vld [vmem:[#allocation24 + $0x18] sm:$0xff]
    %v1210 = vld [vmem:[#allocation24 + $0x20] sm:$0xff]
    %v1211 = vld [vmem:[#allocation24 + $0x28] sm:$0xff]
    %v1212 = vld [vmem:[#allocation26] sm:$0x3]
    %v1214 = vlaneseq
    %v1215 = vshrl.u32 %v1214, 7
    %v1216 = vsub.s32 0, %v1215
    %v1217 = vrot.slane %v1212, %v1216
    %v1218 = vlaneseq
    %v1219 = vshrl.u32 %v1218, 7
    %v1220 = vsub.s32 1, %v1219
    %v1221 = vrot.slane %v1212, %v1220
    %v1230 = vunpack.c.l.b16 %v1206
    %v1231 = vunpack.c.h.b16 %v1206
    %v1232 = vunpack.c.l.b16 %v1207
    %v1233 = vunpack.c.h.b16 %v1207
    %v1234 = vunpack.c.l.b16 %v1208
    %v1235 = vunpack.c.h.b16 %v1208
    %v1236 = vunpack.c.l.b16 %v1209
    %v1237 = vunpack.c.h.b16 %v1209
    %v1238 = vunpack.c.l.b16 %v1210
    %v1239 = vunpack.c.h.b16 %v1210
    %v1240 = vunpack.c.l.b16 %v1211
    %v1241 = vunpack.c.h.b16 %v1211
    %v1242 = vpack.c.b16 %v1232, %v1230
    %v1243 = vpack.c.b16 %v1233, %v1231
    %v1244 = vpack.c.b16 %v1236, %v1234
    %v1245 = vpack.c.b16 %v1237, %v1235
    %v1246 = vpack.c.b16 %v1240, %v1238
    %v1247 = vpack.c.b16 %v1241, %v1239
    %v1255 = vsel %vm1130, %v1203, 0
    %v1258 = vsel %vm1130, %v1204, 0
    %v1261 = vsel %vm1130, %v1205, 0
    %1263 = vmatprep.subr.bf16.mxu0 %v1243
    %1264 = vmatpush1.bf16.msra.mxu0 %v1242
    %1265 = vmatprep.subr.bf16.mxu0 %v1245
    %1266 = vmatpush1.bf16.msra.mxu0 %v1244
    %1267 = vmatprep.subr.bf16.mxu0 %v1247
    %1268 = vmatpush1.bf16.msra.mxu0 %v1246
    %1269 = vmatprep.subr.bf16.mxu0 0
    %1270 = vmatpush1.bf16.msra.mxu0 0
    %1271 = vmatprep.subr.bf16.mxu0 0
    %1272 = vmatpush1.bf16.msra.mxu0 0
    %1273 = vmatprep.subr.bf16.mxu0 0
    %1274 = vmatpush1.bf16.msra.mxu0 0
    %1275 = vmatprep.subr.bf16.mxu0 0
    %1276 = vmatpush1.bf16.msra.mxu0 0
    %1277 = vmatprep.subr.bf16.mxu0 0
    %1278 = vmatpush1.bf16.msra.mxu0 0
    %1279 = vmatprep.subr.bf16.mxu0 0
    %1280 = vmatpush1.bf16.msra.mxu0 0
    %1281 = vmatprep.subr.bf16.mxu0 0
    %1282 = vmatpush1.bf16.msra.mxu0 0
    %1283 = vmatprep.subr.bf16.mxu0 0
    %1284 = vmatpush1.bf16.msra.mxu0 0
    %1285 = vmatprep.subr.bf16.mxu0 0
    %1286 = vmatpush1.bf16.msra.mxu0 0
    %1287 = vmatprep.subr.bf16.mxu0 0
    %1288 = vmatpush1.bf16.msra.mxu0 0
    %1289 = vmatprep.subr.bf16.mxu0 0
    %1290 = vmatpush1.bf16.msra.mxu0 0
    %1291 = vmatprep.subr.bf16.mxu0 0
    %1292 = vmatpush1.bf16.msra.mxu0 0
    %1293 = vmatprep.subr.bf16.mxu0 0
    %1294 = vmatpush1.bf16.msra.mxu0 0
    %1295 = vmatprep.mubr.bf16.mxu0 0
    %1296 = vmatmul.mubr.bf16.gmra.mrb[0].mxu0 %v1255
    %v1297 = vpop.f32.mrb[0].mxu0
    %v1298 = vadd.f32 %v1217, %v1297
    %v1299 = vpop.f32.mrb[0].mxu0
    %v1300 = vadd.f32 %v1221, %v1299
    %v1301 = vpop.f32.mrb[0].mxu0
    %v1302 = vadd.f32 %v1217, %v1301
    %v1303 = vpop.f32.mrb[0].mxu0
    %v1304 = vadd.f32 %v1221, %v1303
    %1305 = vmatprep.mubr.bf16.mxu0 0
    %1306 = vmatmul.mubr.bf16.gmra.mrb[0].mxu0 %v1258
    %v1307 = vpop.f32.mrb[0].mxu0
    %v1308 = vadd.f32 %v1217, %v1307
    %v1309 = vpop.f32.mrb[0].mxu0
    %v1310 = vadd.f32 %v1221, %v1309
    %v1311 = vpop.f32.mrb[0].mxu0
    %v1312 = vadd.f32 %v1217, %v1311
    %v1313 = vpop.f32.mrb[0].mxu0
    %v1314 = vadd.f32 %v1221, %v1313
    %1315 = vmatprep.mubr.bf16.mxu0 0
    %1316 = vmatmul.mubr.bf16.gmra.mrb[0].mxu0 %v1261
    %v1317 = vpop.f32.mrb[0].mxu0
    %v1318 = vadd.f32 %v1217, %v1317
    %v1319 = vpop.f32.mrb[0].mxu0
    %v1320 = vadd.f32 %v1221, %v1319
    %v1321 = vpop.f32.mrb[0].mxu0
    %v1322 = vadd.f32 %v1217, %v1321
    %v1323 = vpop.f32.mrb[0].mxu0
    %v1324 = vadd.f32 %v1221, %v1323
    %1325 = vdwg.mxu0
    %v1326 = vmax.f32 %v1298, 0.0
    %v1327 = vmax.f32 %v1300, 0.0
    %v1328 = vmax.f32 %v1302, 0.0
    %v1329 = vmax.f32 %v1304, 0.0
    %v1330 = vmax.f32 %v1308, 0.0
    %v1331 = vmax.f32 %v1310, 0.0
    %v1332 = vmax.f32 %v1312, 0.0
    %v1333 = vmax.f32 %v1314, 0.0
    %v1334 = vmax.f32 %v1318, 0.0
    %v1335 = vmax.f32 %v1320, 0.0
    %v1336 = vmax.f32 %v1322, 0.0
    %v1337 = vmax.f32 %v1324, 0.0
    %v1338 = vpack.c.bf16 %v1328, %v1326
    %v1339 = vpack.c.bf16 %v1329, %v1327
    %v1340 = vpack.c.bf16 %v1332, %v1330
    %v1341 = vpack.c.bf16 %v1333, %v1331
    %v1342 = vpack.c.bf16 %v1336, %v1334
    %v1343 = vpack.c.bf16 %v1337, %v1335
    %v1344 = vld [vmem:[#allocation27] sm:$0xf]
    %v1345 = vld [vmem:[#allocation27 + $0x4] sm:$0xf]
    %v1346 = vld [vmem:[#allocation27 + $0x8] sm:$0xf]
    %v1347 = vld [vmem:[#allocation27 + $0xc] sm:$0xf]
    %v1348 = vld [vmem:[#allocation27 + $0x10] sm:$0xf]
    %v1349 = vld [vmem:[#allocation27 + $0x14] sm:$0xf]
    %v1350 = vld [vmem:[#allocation27 + $0x18] sm:$0xf]
    %v1351 = vld [vmem:[#allocation27 + $0x1c] sm:$0xf]
    %v1352 = vld [vmem:[#allocation27 + $0x20] sm:$0xf]
    %v1353 = vld [vmem:[#allocation27 + $0x24] sm:$0xf]
    %v1354 = vld [vmem:[#allocation27 + $0x28] sm:$0xf]
    %v1355 = vld [vmem:[#allocation27 + $0x2c] sm:$0xf]
    %v1356 = vld [vmem:[#allocation27 + $0x30] sm:$0xf]
    %v1357 = vld [vmem:[#allocation27 + $0x34] sm:$0xf]
    %v1358 = vld [vmem:[#allocation27 + $0x38] sm:$0xf]
    %v1359 = vld [vmem:[#allocation27 + $0x3c] sm:$0xf]
    %v1360 = vld [vmem:[#allocation27 + $0x40] sm:$0xf]
    %v1361 = vld [vmem:[#allocation27 + $0x44] sm:$0xf]
    %v1362 = vld [vmem:[#allocation27 + $0x48] sm:$0xf]
    %v1363 = vld [vmem:[#allocation27 + $0x4c] sm:$0xf]
    %v1364 = vld [vmem:[#allocation27 + $0x50] sm:$0xf]
    %v1365 = vld [vmem:[#allocation27 + $0x54] sm:$0xf]
    %v1366 = vld [vmem:[#allocation27 + $0x58] sm:$0xf]
    %v1367 = vld [vmem:[#allocation27 + $0x5c] sm:$0xf]
    %v1368 = vld [vmem:[#allocation27 + $0x60] sm:$0xf]
    %v1369 = vld [vmem:[#allocation27 + $0x64] sm:$0xf]
    %v1370 = vld [vmem:[#allocation27 + $0x68] sm:$0xf]
    %v1371 = vld [vmem:[#allocation27 + $0x6c] sm:$0xf]
    %v1372 = vld [vmem:[#allocation27 + $0x70] sm:$0xf]
    %v1373 = vld [vmem:[#allocation27 + $0x74] sm:$0xf]
    %v1374 = vld [vmem:[#allocation27 + $0x78] sm:$0xf]
    %v1375 = vld [vmem:[#allocation27 + $0x7c] sm:$0xf]
    %v1376 = vld [vmem:[#allocation29] sm:$0x1]
    %v1378 = vlaneseq
    %v1379 = vshrl.u32 %v1378, 7
    %v1380 = vsub.s32 0, %v1379
    %v1381 = vrot.slane %v1376, %v1380
    %v1415 = vunpack.c.l.b16 %v1344
    %v1416 = vunpack.c.l.b16 %v1345
    %v1417 = vunpack.c.l.b16 %v1346
    %v1418 = vunpack.c.l.b16 %v1347
    %v1419 = vunpack.c.l.b16 %v1348
    %v1420 = vunpack.c.l.b16 %v1349
    %v1421 = vunpack.c.l.b16 %v1350
    %v1422 = vunpack.c.l.b16 %v1351
    %v1423 = vunpack.c.l.b16 %v1352
    %v1424 = vunpack.c.l.b16 %v1353
    %v1425 = vunpack.c.l.b16 %v1354
    %v1426 = vunpack.c.l.b16 %v1355
    %v1427 = vunpack.c.l.b16 %v1356
    %v1428 = vunpack.c.l.b16 %v1357
    %v1429 = vunpack.c.l.b16 %v1358
    %v1430 = vunpack.c.l.b16 %v1359
    %v1431 = vunpack.c.l.b16 %v1360
    %v1432 = vunpack.c.l.b16 %v1361
    %v1433 = vunpack.c.l.b16 %v1362
    %v1434 = vunpack.c.l.b16 %v1363
    %v1435 = vunpack.c.l.b16 %v1364
    %v1436 = vunpack.c.l.b16 %v1365
    %v1437 = vunpack.c.l.b16 %v1366
    %v1438 = vunpack.c.l.b16 %v1367
    %v1439 = vunpack.c.l.b16 %v1368
    %v1440 = vunpack.c.l.b16 %v1369
    %v1441 = vunpack.c.l.b16 %v1370
    %v1442 = vunpack.c.l.b16 %v1371
    %v1443 = vunpack.c.l.b16 %v1372
    %v1444 = vunpack.c.l.b16 %v1373
    %v1445 = vunpack.c.l.b16 %v1374
    %v1446 = vunpack.c.l.b16 %v1375
    %v1447 = vpack.c.b16 %v1416, %v1415
    %v1448 = vpack.c.b16 %v1418, %v1417
    %v1449 = vpack.c.b16 %v1420, %v1419
    %v1450 = vpack.c.b16 %v1422, %v1421
    %v1451 = vpack.c.b16 %v1424, %v1423
    %v1452 = vpack.c.b16 %v1426, %v1425
    %v1453 = vpack.c.b16 %v1428, %v1427
    %v1454 = vpack.c.b16 %v1430, %v1429
    %v1455 = vpack.c.b16 %v1432, %v1431
    %v1456 = vpack.c.b16 %v1434, %v1433
    %v1457 = vpack.c.b16 %v1436, %v1435
    %v1458 = vpack.c.b16 %v1438, %v1437
    %v1459 = vpack.c.b16 %v1440, %v1439
    %v1460 = vpack.c.b16 %v1442, %v1441
    %v1461 = vpack.c.b16 %v1444, %v1443
    %v1462 = vpack.c.b16 %v1446, %v1445
    %1479 = vmatprep.subr.bf16.mxu0 0
    %1480 = vmatpush1.bf16.msra.mxu0 %v1447
    %1481 = vmatprep.subr.bf16.mxu0 0
    %1482 = vmatpush1.bf16.msra.mxu0 %v1448
    %1483 = vmatprep.subr.bf16.mxu0 0
    %1484 = vmatpush1.bf16.msra.mxu0 %v1449
    %1485 = vmatprep.subr.bf16.mxu0 0
    %1486 = vmatpush1.bf16.msra.mxu0 %v1450
    %1487 = vmatprep.subr.bf16.mxu0 0
    %1488 = vmatpush1.bf16.msra.mxu0 %v1451
    %1489 = vmatprep.subr.bf16.mxu0 0
    %1490 = vmatpush1.bf16.msra.mxu0 %v1452
    %1491 = vmatprep.subr.bf16.mxu0 0
    %1492 = vmatpush1.bf16.msra.mxu0 %v1453
    %1493 = vmatprep.subr.bf16.mxu0 0
    %1494 = vmatpush1.bf16.msra.mxu0 %v1454
    %1495 = vmatprep.subr.bf16.mxu0 0
    %1496 = vmatpush1.bf16.msra.mxu0 %v1455
    %1497 = vmatprep.subr.bf16.mxu0 0
    %1498 = vmatpush1.bf16.msra.mxu0 %v1456
    %1499 = vmatprep.subr.bf16.mxu0 0
    %1500 = vmatpush1.bf16.msra.mxu0 %v1457
    %1501 = vmatprep.subr.bf16.mxu0 0
    %1502 = vmatpush1.bf16.msra.mxu0 %v1458
    %1503 = vmatprep.subr.bf16.mxu0 0
    %1504 = vmatpush1.bf16.msra.mxu0 %v1459
    %1505 = vmatprep.subr.bf16.mxu0 0
    %1506 = vmatpush1.bf16.msra.mxu0 %v1460
    %1507 = vmatprep.subr.bf16.mxu0 0
    %1508 = vmatpush1.bf16.msra.mxu0 %v1461
    %1509 = vmatprep.subr.bf16.mxu0 0
    %1510 = vmatpush1.bf16.msra.mxu0 %v1462
    %1511 = vmatprep.mubr.bf16.mxu0 %v1339
    %1512 = vmatmul.mubr.bf16.gmra.mrb[0].mxu0 %v1338
    %v1513 = vpop.f32.mrb[0].mxu0
    %v1514 = vadd.f32 %v1381, %v1513
    %v1515 = vpop.f32.mrb[0].mxu0
    %v1516 = vpop.f32.mrb[0].mxu0
    %v1517 = vadd.f32 %v1381, %v1516
    %v1518 = vpop.f32.mrb[0].mxu0
    %1519 = vmatprep.mubr.bf16.mxu0 %v1341
    %1520 = vmatmul.mubr.bf16.gmra.mrb[0].mxu0 %v1340
    %v1521 = vpop.f32.mrb[0].mxu0
    %v1522 = vadd.f32 %v1381, %v1521
    %v1523 = vpop.f32.mrb[0].mxu0
    %v1524 = vpop.f32.mrb[0].mxu0
    %v1525 = vadd.f32 %v1381, %v1524
    %v1526 = vpop.f32.mrb[0].mxu0
    %1527 = vmatprep.mubr.bf16.mxu0 %v1343
    %1528 = vmatmul.mubr.bf16.gmra.mrb[0].mxu0 %v1342
    %v1529 = vpop.f32.mrb[0].mxu0
    %v1530 = vadd.f32 %v1381, %v1529
    %v1531 = vpop.f32.mrb[0].mxu0
    %v1532 = vpop.f32.mrb[0].mxu0
    %v1533 = vadd.f32 %v1381, %v1532
    %v1534 = vpop.f32.mrb[0].mxu0
    %1535 = vdwg.mxu0
    %s1536 = sld [smem:[#allocation35]]
    %v1537 = vmul.f32 %v1062, %v1062
    %v1538 = vmul.f32 %v1065, %v1065
    %v1539 = vmul.f32 %v1070, %v1070
    %v1540 = vmul.f32 %v1073, %v1073
    %v1541 = vmul.f32 %v1078, %v1078
    %v1542 = vmul.f32 %v1081, %v1081
    %vm1543 = vcmask 523264
    %v1544 = vsel %vm1543, %v1537, 0.0
    %1545 = vadd.xlane.f32.xlu0 %v1544
    %v1546 = vpop.xlane.xlu0 %1545
    %v1547 = vsel %vm1543, %v1538, 0.0
    %1548 = vadd.xlane.f32.xlu0 %v1547
    %v1549 = vpop.xlane.xlu0 %1548
    %v1550 = vsel %vm1543, %v1539, 0.0
    %1551 = vadd.xlane.f32.xlu0 %v1550
    %v1552 = vpop.xlane.xlu0 %1551
    %v1553 = vsel %vm1543, %v1540, 0.0
    %1554 = vadd.xlane.f32.xlu0 %v1553
    %v1555 = vpop.xlane.xlu0 %1554
    %v1556 = vsel %vm1543, %v1541, 0.0
    %1557 = vadd.xlane.f32.xlu0 %v1556
    %v1558 = vpop.xlane.xlu0 %1557
    %v1559 = vsel %vm1543, %v1542, 0.0
    %1560 = vadd.xlane.f32.xlu0 %v1559
    %v1561 = vpop.xlane.xlu0 %1560
    %v1562 = vmax.f32 %v1546, 1e-24
    %v1563 = vmax.f32 %v1549, 1e-24
    %v1564 = vmax.f32 %v1552, 1e-24
    %v1565 = vmax.f32 %v1555, 1e-24
    %v1566 = vmax.f32 %v1558, 1e-24
    %v1567 = vmax.f32 %v1561, 1e-24
    %v1568 = vrsqrt.pop %v1562
    %v1569 = vrsqrt.pop %v1563
    %v1570 = vrsqrt.pop %v1564
    %v1571 = vrsqrt.pop %v1565
    %v1572 = vrsqrt.pop %v1566
    %v1573 = vrsqrt.pop %v1567
    %v1574 = vmul.f32 %v1062, %v1568
    %v1575 = vmul.f32 %v1065, %v1569
    %v1576 = vmul.f32 %v1070, %v1570
    %v1577 = vmul.f32 %v1073, %v1571
    %v1578 = vmul.f32 %v1078, %v1572
    %v1579 = vmul.f32 %v1081, %v1573
    %v1580 = vstv %s1536
    %v1581 = vmul.f32 %v1580, %v1574
    %v1582 = vmul.f32 %v1580, %v1575
    %v1583 = vmul.f32 %v1580, %v1576
    %v1584 = vmul.f32 %v1580, %v1577
    %v1585 = vmul.f32 %v1580, %v1578
    %v1586 = vmul.f32 %v1580, %v1579
    %s1587 = sld [smem:[#allocation35 + $0x1]]
    %v1588 = vmul.f32 %v1514, %v1514
    %v1589 = vmul.f32 %v1517, %v1517
    %v1590 = vmul.f32 %v1522, %v1522
    %v1591 = vmul.f32 %v1525, %v1525
    %v1592 = vmul.f32 %v1530, %v1530
    %v1593 = vmul.f32 %v1533, %v1533
    %v1594 = vsel %vm1543, %v1588, 0.0
    %1595 = vadd.xlane.f32.xlu0 %v1594
    %v1596 = vpop.xlane.xlu0 %1595
    %v1597 = vsel %vm1543, %v1589, 0.0
    %1598 = vadd.xlane.f32.xlu0 %v1597
    %v1599 = vpop.xlane.xlu0 %1598
    %v1600 = vsel %vm1543, %v1590, 0.0
    %1601 = vadd.xlane.f32.xlu0 %v1600
    %v1602 = vpop.xlane.xlu0 %1601
    %v1603 = vsel %vm1543, %v1591, 0.0
    %1604 = vadd.xlane.f32.xlu0 %v1603
    %v1605 = vpop.xlane.xlu0 %1604
    %v1606 = vsel %vm1543, %v1592, 0.0
    %1607 = vadd.xlane.f32.xlu0 %v1606
    %v1608 = vpop.xlane.xlu0 %1607
    %v1609 = vsel %vm1543, %v1593, 0.0
    %1610 = vadd.xlane.f32.xlu0 %v1609
    %v1611 = vpop.xlane.xlu0 %1610
    %v1612 = vmax.f32 %v1596, 1e-24
    %v1613 = vmax.f32 %v1599, 1e-24
    %v1614 = vmax.f32 %v1602, 1e-24
    %v1615 = vmax.f32 %v1605, 1e-24
    %v1616 = vmax.f32 %v1608, 1e-24
    %v1617 = vmax.f32 %v1611, 1e-24
    %v1618 = vrsqrt.pop %v1612
    %v1619 = vrsqrt.pop %v1613
    %v1620 = vrsqrt.pop %v1614
    %v1621 = vrsqrt.pop %v1615
    %v1622 = vrsqrt.pop %v1616
    %v1623 = vrsqrt.pop %v1617
    %v1624 = vmul.f32 %v1514, %v1618
    %v1625 = vmul.f32 %v1517, %v1619
    %v1626 = vmul.f32 %v1522, %v1620
    %v1627 = vmul.f32 %v1525, %v1621
    %v1628 = vmul.f32 %v1530, %v1622
    %v1629 = vmul.f32 %v1533, %v1623
    %v1630 = vstv %s1587
    %v1631 = vmul.f32 %v1630, %v1624
    %v1632 = vmul.f32 %v1630, %v1625
    %v1633 = vmul.f32 %v1630, %v1626
    %v1634 = vmul.f32 %v1630, %v1627
    %v1635 = vmul.f32 %v1630, %v1628
    %v1636 = vmul.f32 %v1630, %v1629
    %v1637 = vadd.f32 %v1581, %v1631
    %v1638 = vadd.f32 %v1582, %v1632
    %v1639 = vadd.f32 %v1583, %v1633
    %v1640 = vadd.f32 %v1584, %v1634
    %v1641 = vadd.f32 %v1585, %v1635
    %v1642 = vadd.f32 %v1586, %v1636
    %v1643 = vld [vmem:[#allocation30] sm:$0xf]
    %v1644 = vld [vmem:[#allocation30 + $0x4] sm:$0xf]
    %v1645 = vld [vmem:[#allocation30 + $0x8] sm:$0xf]
    %v1646 = vld [vmem:[#allocation30 + $0xc] sm:$0xf]
    %v1647 = vld [vmem:[#allocation30 + $0x10] sm:$0xf]
    %v1648 = vld [vmem:[#allocation30 + $0x14] sm:$0xf]
    %v1649 = vld [vmem:[#allocation30 + $0x18] sm:$0xf]
    %v1650 = vld [vmem:[#allocation30 + $0x1c] sm:$0xf]
    %v1651 = vld [vmem:[#allocation32] sm:$0x1]
    %v1653 = vlaneseq
    %v1654 = vshrl.u32 %v1653, 7
    %v1655 = vsub.s32 0, %v1654
    %v1656 = vrot.slane %v1651, %v1655
    %v1664 = vunpack.c.l.b16 %v634
    %v1665 = vunpack.c.l.b16 %v635
    %v1666 = vunpack.c.l.b16 %v636
    %v1667 = vunpack.c.l.b16 %v637
    %v1668 = vunpack.c.l.b16 %v638
    %v1669 = vunpack.c.l.b16 %v639
    %v1670 = vpack.c.b16 %v1665, %v1664
    %v1671 = vpack.c.b16 %v1667, %v1666
    %v1672 = vpack.c.b16 %v1669, %v1668
    %v1681 = vunpack.c.l.b16 %v1643
    %v1682 = vunpack.c.l.b16 %v1644
    %v1683 = vunpack.c.l.b16 %v1645
    %v1684 = vunpack.c.l.b16 %v1646
    %v1685 = vunpack.c.l.b16 %v1647
    %v1686 = vunpack.c.l.b16 %v1648
    %v1687 = vunpack.c.l.b16 %v1649
    %v1688 = vunpack.c.l.b16 %v1650
    %v1689 = vpack.c.b16 %v1682, %v1681
    %v1690 = vpack.c.b16 %v1684, %v1683
    %v1691 = vpack.c.b16 %v1686, %v1685
    %v1692 = vpack.c.b16 %v1688, %v1687
    %v1698 = vsel %vm1543, %v1670, 0
    %v1701 = vsel %vm1543, %v1671, 0
    %v1704 = vsel %vm1543, %v1672, 0
    %1706 = vmatprep.subr.bf16.mxu0 0
    %1707 = vmatpush1.bf16.msra.mxu0 %v1689
    %1708 = vmatprep.subr.bf16.mxu0 0
    %1709 = vmatpush1.bf16.msra.mxu0 %v1690
    %1710 = vmatprep.subr.bf16.mxu0 0
    %1711 = vmatpush1.bf16.msra.mxu0 %v1691
    %1712 = vmatprep.subr.bf16.mxu0 0
    %1713 = vmatpush1.bf16.msra.mxu0 %v1692
    %1714 = vmatprep.subr.bf16.mxu0 0
    %1715 = vmatpush1.bf16.msra.mxu0 0
    %1716 = vmatprep.subr.bf16.mxu0 0
    %1717 = vmatpush1.bf16.msra.mxu0 0
    %1718 = vmatprep.subr.bf16.mxu0 0
    %1719 = vmatpush1.bf16.msra.mxu0 0
    %1720 = vmatprep.subr.bf16.mxu0 0
    %1721 = vmatpush1.bf16.msra.mxu0 0
    %1722 = vmatprep.subr.bf16.mxu0 0
    %1723 = vmatpush1.bf16.msra.mxu0 0
    %1724 = vmatprep.subr.bf16.mxu0 0
    %1725 = vmatpush1.bf16.msra.mxu0 0
    %1726 = vmatprep.subr.bf16.mxu0 0
    %1727 = vmatpush1.bf16.msra.mxu0 0
    %1728 = vmatprep.subr.bf16.mxu0 0
    %1729 = vmatpush1.bf16.msra.mxu0 0
    %1730 = vmatprep.subr.bf16.mxu0 0
    %1731 = vmatpush1.bf16.msra.mxu0 0
    %1732 = vmatprep.subr.bf16.mxu0 0
    %1733 = vmatpush1.bf16.msra.mxu0 0
    %1734 = vmatprep.subr.bf16.mxu0 0
    %1735 = vmatpush1.bf16.msra.mxu0 0
    %1736 = vmatprep.subr.bf16.mxu0 0
    %1737 = vmatpush1.bf16.msra.mxu0 0
    %1738 = vmatprep.mubr.bf16.mxu0 0
    %1739 = vmatmul.mubr.bf16.gmra.mrb[0].mxu0 %v1698
    %v1740 = vpop.f32.mrb[0].mxu0
    %v1741 = vadd.f32 %v1656, %v1740
    %v1742 = vpop.f32.mrb[0].mxu0
    %v1743 = vpop.f32.mrb[0].mxu0
    %v1744 = vadd.f32 %v1656, %v1743
    %v1745 = vpop.f32.mrb[0].mxu0
    %1746 = vmatprep.mubr.bf16.mxu0 0
    %1747 = vmatmul.mubr.bf16.gmra.mrb[0].mxu0 %v1701
    %v1748 = vpop.f32.mrb[0].mxu0
    %v1749 = vadd.f32 %v1656, %v1748
    %v1750 = vpop.f32.mrb[0].mxu0
    %v1751 = vpop.f32.mrb[0].mxu0
    %v1752 = vadd.f32 %v1656, %v1751
    %v1753 = vpop.f32.mrb[0].mxu0
    %1754 = vmatprep.mubr.bf16.mxu0 0
    %1755 = vmatmul.mubr.bf16.gmra.mrb[0].mxu0 %v1704
    %v1756 = vpop.f32.mrb[0].mxu0
    %v1757 = vadd.f32 %v1656, %v1756
    %v1758 = vpop.f32.mrb[0].mxu0
    %v1759 = vpop.f32.mrb[0].mxu0
    %v1760 = vadd.f32 %v1656, %v1759
    %v1761 = vpop.f32.mrb[0].mxu0
    %1762 = vdwg.mxu0
    %1764 = vset.pattern.permute.xlu0 0
    %1765 = vperm.xlu0 %1764, %v640
    %v1766 = vpop.permute.xlu0 %1765
    %1769 = vset.pattern.permute.xlu0 0
    %1770 = vperm.xlu0 %1769, %v641
    %v1771 = vpop.permute.xlu0 %1770
    %1774 = vset.pattern.permute.xlu0 0
    %1775 = vperm.xlu0 %1774, %v642
    %v1776 = vpop.permute.xlu0 %1775
    %1779 = vset.pattern.permute.xlu0 0
    %1780 = vperm.xlu0 %1779, %v643
    %v1781 = vpop.permute.xlu0 %1780
    %1784 = vset.pattern.permute.xlu0 0
    %1785 = vperm.xlu0 %1784, %v644
    %v1786 = vpop.permute.xlu0 %1785
    %1789 = vset.pattern.permute.xlu0 0
    %1790 = vperm.xlu0 %1789, %v645
    %v1791 = vpop.permute.xlu0 %1790
    %v1793 = vmul.f32 %v1766, %v1637
    %v1794 = vmul.f32 %v1771, %v1638
    %v1795 = vmul.f32 %v1776, %v1639
    %v1796 = vmul.f32 %v1781, %v1640
    %v1797 = vmul.f32 %v1786, %v1641
    %v1798 = vmul.f32 %v1791, %v1642
    %v1799 = vsub.f32 1.0, %v640
    %v1800 = vsub.f32 1.0, %v641
    %v1801 = vsub.f32 1.0, %v642
    %v1802 = vsub.f32 1.0, %v643
    %v1803 = vsub.f32 1.0, %v644
    %v1804 = vsub.f32 1.0, %v645
    %1806 = vset.pattern.permute.xlu0 0
    %1807 = vperm.xlu0 %1806, %v1799
    %v1808 = vpop.permute.xlu0 %1807
    %1811 = vset.pattern.permute.xlu0 0
    %1812 = vperm.xlu0 %1811, %v1800
    %v1813 = vpop.permute.xlu0 %1812
    %1816 = vset.pattern.permute.xlu0 0
    %1817 = vperm.xlu0 %1816, %v1801
    %v1818 = vpop.permute.xlu0 %1817
    %1821 = vset.pattern.permute.xlu0 0
    %1822 = vperm.xlu0 %1821, %v1802
    %v1823 = vpop.permute.xlu0 %1822
    %1826 = vset.pattern.permute.xlu0 0
    %1827 = vperm.xlu0 %1826, %v1803
    %v1828 = vpop.permute.xlu0 %1827
    %1831 = vset.pattern.permute.xlu0 0
    %1832 = vperm.xlu0 %1831, %v1804
    %v1833 = vpop.permute.xlu0 %1832
    %v1835 = vmul.f32 %v1808, %v1741
    %v1836 = vmul.f32 %v1813, %v1744
    %v1837 = vmul.f32 %v1818, %v1749
    %v1838 = vmul.f32 %v1823, %v1752
    %v1839 = vmul.f32 %v1828, %v1757
    %v1840 = vmul.f32 %v1833, %v1760
    %v1841 = vadd.f32 %v1793, %v1835
    %v1842 = vadd.f32 %v1794, %v1836
    %v1843 = vadd.f32 %v1795, %v1837
    %v1844 = vadd.f32 %v1796, %v1838
    %v1845 = vadd.f32 %v1797, %v1839
    %v1846 = vadd.f32 %v1798, %v1840
    %v1847 = vmul.f32 %v1637, %v1637
    %v1848 = vmul.f32 %v1638, %v1638
    %v1849 = vmul.f32 %v1639, %v1639
    %v1850 = vmul.f32 %v1640, %v1640
    %v1851 = vmul.f32 %v1641, %v1641
    %v1852 = vmul.f32 %v1642, %v1642
    %v1853 = vsel %vm1543, %v1847, 0.0
    %1854 = vadd.xlane.f32.xlu0 %v1853
    %v1855 = vpop.xlane.xlu0 %1854
    %v1856 = vsel %vm1543, %v1848, 0.0
    %1857 = vadd.xlane.f32.xlu0 %v1856
    %v1858 = vpop.xlane.xlu0 %1857
    %v1859 = vsel %vm1543, %v1849, 0.0
    %1860 = vadd.xlane.f32.xlu0 %v1859
    %v1861 = vpop.xlane.xlu0 %1860
    %v1862 = vsel %vm1543, %v1850, 0.0
    %1863 = vadd.xlane.f32.xlu0 %v1862
    %v1864 = vpop.xlane.xlu0 %1863
    %v1865 = vsel %vm1543, %v1851, 0.0
    %1866 = vadd.xlane.f32.xlu0 %v1865
    %v1867 = vpop.xlane.xlu0 %1866
    %v1868 = vsel %vm1543, %v1852, 0.0
    %1869 = vadd.xlane.f32.xlu0 %v1868
    %v1870 = vpop.xlane.xlu0 %1869
    %v1871 = vmax.f32 %v1855, 1e-24
    %v1872 = vmax.f32 %v1858, 1e-24
    %v1873 = vmax.f32 %v1861, 1e-24
    %v1874 = vmax.f32 %v1864, 1e-24
    %v1875 = vmax.f32 %v1867, 1e-24
    %v1876 = vmax.f32 %v1870, 1e-24
    %v1877 = vrsqrt.pop %v1871
    %v1878 = vrsqrt.pop %v1872
    %v1879 = vrsqrt.pop %v1873
    %v1880 = vrsqrt.pop %v1874
    %v1881 = vrsqrt.pop %v1875
    %v1882 = vrsqrt.pop %v1876
    %v1883 = vmul.f32 %v1637, %v1877
    %v1884 = vmul.f32 %v1638, %v1878
    %v1885 = vmul.f32 %v1639, %v1879
    %v1886 = vmul.f32 %v1640, %v1880
    %v1887 = vmul.f32 %v1641, %v1881
    %v1888 = vmul.f32 %v1642, %v1882
    %v1889 = vsel %vm1543, %v1883, 0.0
    %1890 = vadd.xlane.f32.xlu0 %v1889
    %v1891 = vpop.xlane.xlu0 %1890
    %v1892 = vsel %vm1543, %v1884, 0.0
    %1893 = vadd.xlane.f32.xlu0 %v1892
    %v1894 = vpop.xlane.xlu0 %1893
    %v1895 = vsel %vm1543, %v1885, 0.0
    %1896 = vadd.xlane.f32.xlu0 %v1895
    %v1897 = vpop.xlane.xlu0 %1896
    %v1898 = vsel %vm1543, %v1886, 0.0
    %1899 = vadd.xlane.f32.xlu0 %v1898
    %v1900 = vpop.xlane.xlu0 %1899
    %v1901 = vsel %vm1543, %v1887, 0.0
    %1902 = vadd.xlane.f32.xlu0 %v1901
    %v1903 = vpop.xlane.xlu0 %1902
    %v1904 = vsel %vm1543, %v1888, 0.0
    %1905 = vadd.xlane.f32.xlu0 %v1904
    %v1906 = vpop.xlane.xlu0 %1905
    %v1907 = vrcp.pop 64.0
    %v1908 = vmul.f32 %v1891, %v1907
    %v1909 = vmul.f32 %v1894, %v1907
    %v1910 = vmul.f32 %v1897, %v1907
    %v1911 = vmul.f32 %v1900, %v1907
    %v1912 = vmul.f32 %v1903, %v1907
    %v1913 = vmul.f32 %v1906, %v1907
    %v1914 = vsub.f32 %v1883, %v1908
    %v1915 = vsub.f32 %v1884, %v1909
    %v1916 = vsub.f32 %v1885, %v1910
    %v1917 = vsub.f32 %v1886, %v1911
    %v1918 = vsub.f32 %v1887, %v1912
    %v1919 = vsub.f32 %v1888, %v1913
    %v1920 = vmul.f32 %v1914, %v1914
    %v1921 = vmul.f32 %v1915, %v1915
    %v1922 = vmul.f32 %v1916, %v1916
    %v1923 = vmul.f32 %v1917, %v1917
    %v1924 = vmul.f32 %v1918, %v1918
    %v1925 = vmul.f32 %v1919, %v1919
    %v1926 = vsel %vm1543, %v1920, 0.0
    %1927 = vadd.xlane.f32.xlu0 %v1926
    %v1928 = vpop.xlane.xlu0 %1927
    %v1929 = vsel %vm1543, %v1921, 0.0
    %1930 = vadd.xlane.f32.xlu0 %v1929
    %v1931 = vpop.xlane.xlu0 %1930
    %v1932 = vsel %vm1543, %v1922, 0.0
    %1933 = vadd.xlane.f32.xlu0 %v1932
    %v1934 = vpop.xlane.xlu0 %1933
    %v1935 = vsel %vm1543, %v1923, 0.0
    %1936 = vadd.xlane.f32.xlu0 %v1935
    %v1937 = vpop.xlane.xlu0 %1936
    %v1938 = vsel %vm1543, %v1924, 0.0
    %1939 = vadd.xlane.f32.xlu0 %v1938
    %v1940 = vpop.xlane.xlu0 %1939
    %v1941 = vsel %vm1543, %v1925, 0.0
    %1942 = vadd.xlane.f32.xlu0 %v1941
    %v1943 = vpop.xlane.xlu0 %1942
    %v1944 = vmul.f32 %v1928, %v1907
    %v1945 = vmul.f32 %v1931, %v1907
    %v1946 = vmul.f32 %v1934, %v1907
    %v1947 = vmul.f32 %v1937, %v1907
    %v1948 = vmul.f32 %v1940, %v1907
    %v1949 = vmul.f32 %v1943, %v1907
    %v1950 = vadd.f32 %v1944, 1e-05
    %v1951 = vadd.f32 %v1945, 1e-05
    %v1952 = vadd.f32 %v1946, 1e-05
    %v1953 = vadd.f32 %v1947, 1e-05
    %v1954 = vadd.f32 %v1948, 1e-05
    %v1955 = vadd.f32 %v1949, 1e-05
    %v1956 = vrsqrt.pop %v1950
    %v1957 = vrsqrt.pop %v1951
    %v1958 = vrsqrt.pop %v1952
    %v1959 = vrsqrt.pop %v1953
    %v1960 = vrsqrt.pop %v1954
    %v1961 = vrsqrt.pop %v1955
    %v1962 = vmul.f32 %v1914, %v1956
    %v1963 = vmul.f32 %v1915, %v1957
    %v1964 = vmul.f32 %v1916, %v1958
    %v1965 = vmul.f32 %v1917, %v1959
    %v1966 = vmul.f32 %v1918, %v1960
    %v1967 = vmul.f32 %v1919, %v1961
    %v1968 = vmul.f32 %v646, %v646
    %v1969 = vmul.f32 %v647, %v647
    %v1970 = vmul.f32 %v648, %v648
    %v1971 = vmul.f32 %v649, %v649
    %v1972 = vmul.f32 %v650, %v650
    %v1973 = vmul.f32 %v651, %v651
    %v1974 = vsel %vm1543, %v1968, 0.0
    %1975 = vadd.xlane.f32.xlu0 %v1974
    %v1976 = vpop.xlane.xlu0 %1975
    %v1977 = vsel %vm1543, %v1969, 0.0
    %1978 = vadd.xlane.f32.xlu0 %v1977
    %v1979 = vpop.xlane.xlu0 %1978
    %v1980 = vsel %vm1543, %v1970, 0.0
    %1981 = vadd.xlane.f32.xlu0 %v1980
    %v1982 = vpop.xlane.xlu0 %1981
    %v1983 = vsel %vm1543, %v1971, 0.0
    %1984 = vadd.xlane.f32.xlu0 %v1983
    %v1985 = vpop.xlane.xlu0 %1984
    %v1986 = vsel %vm1543, %v1972, 0.0
    %1987 = vadd.xlane.f32.xlu0 %v1986
    %v1988 = vpop.xlane.xlu0 %1987
    %v1989 = vsel %vm1543, %v1973, 0.0
    %1990 = vadd.xlane.f32.xlu0 %v1989
    %v1991 = vpop.xlane.xlu0 %1990
    %v1992 = vmax.f32 %v1976, 1e-24
    %v1993 = vmax.f32 %v1979, 1e-24
    %v1994 = vmax.f32 %v1982, 1e-24
    %v1995 = vmax.f32 %v1985, 1e-24
    %v1996 = vmax.f32 %v1988, 1e-24
    %v1997 = vmax.f32 %v1991, 1e-24
    %v1998 = vrsqrt.pop %v1992
    %v1999 = vrsqrt.pop %v1993
    %v2000 = vrsqrt.pop %v1994
    %v2001 = vrsqrt.pop %v1995
    %v2002 = vrsqrt.pop %v1996
    %v2003 = vrsqrt.pop %v1997
    %v2004 = vmul.f32 %v646, %v1998
    %v2005 = vmul.f32 %v647, %v1999
    %v2006 = vmul.f32 %v648, %v2000
    %v2007 = vmul.f32 %v649, %v2001
    %v2008 = vmul.f32 %v650, %v2002
    %v2009 = vmul.f32 %v651, %v2003
    %v2010 = vsel %vm1543, %v2004, 0.0
    %2011 = vadd.xlane.f32.xlu0 %v2010
    %v2012 = vpop.xlane.xlu0 %2011
    %v2013 = vsel %vm1543, %v2005, 0.0
    %2014 = vadd.xlane.f32.xlu0 %v2013
    %v2015 = vpop.xlane.xlu0 %2014
    %v2016 = vsel %vm1543, %v2006, 0.0
    %2017 = vadd.xlane.f32.xlu0 %v2016
    %v2018 = vpop.xlane.xlu0 %2017
    %v2019 = vsel %vm1543, %v2007, 0.0
    %2020 = vadd.xlane.f32.xlu0 %v2019
    %v2021 = vpop.xlane.xlu0 %2020
    %v2022 = vsel %vm1543, %v2008, 0.0
    %2023 = vadd.xlane.f32.xlu0 %v2022
    %v2024 = vpop.xlane.xlu0 %2023
    %v2025 = vsel %vm1543, %v2009, 0.0
    %2026 = vadd.xlane.f32.xlu0 %v2025
    %v2027 = vpop.xlane.xlu0 %2026
    %v2028 = vmul.f32 %v2012, %v1907
    %v2029 = vmul.f32 %v2015, %v1907
    %v2030 = vmul.f32 %v2018, %v1907
    %v2031 = vmul.f32 %v2021, %v1907
    %v2032 = vmul.f32 %v2024, %v1907
    %v2033 = vmul.f32 %v2027, %v1907
    %v2034 = vsub.f32 %v2004, %v2028
    %v2035 = vsub.f32 %v2005, %v2029
    %v2036 = vsub.f32 %v2006, %v2030
    %v2037 = vsub.f32 %v2007, %v2031
    %v2038 = vsub.f32 %v2008, %v2032
    %v2039 = vsub.f32 %v2009, %v2033
    %v2040 = vmul.f32 %v2034, %v2034
    %v2041 = vmul.f32 %v2035, %v2035
    %v2042 = vmul.f32 %v2036, %v2036
    %v2043 = vmul.f32 %v2037, %v2037
    %v2044 = vmul.f32 %v2038, %v2038
    %v2045 = vmul.f32 %v2039, %v2039
    %v2046 = vsel %vm1543, %v2040, 0.0
    %2047 = vadd.xlane.f32.xlu0 %v2046
    %v2048 = vpop.xlane.xlu0 %2047
    %v2049 = vsel %vm1543, %v2041, 0.0
    %2050 = vadd.xlane.f32.xlu0 %v2049
    %v2051 = vpop.xlane.xlu0 %2050
    %v2052 = vsel %vm1543, %v2042, 0.0
    %2053 = vadd.xlane.f32.xlu0 %v2052
    %v2054 = vpop.xlane.xlu0 %2053
    %v2055 = vsel %vm1543, %v2043, 0.0
    %2056 = vadd.xlane.f32.xlu0 %v2055
    %v2057 = vpop.xlane.xlu0 %2056
    %v2058 = vsel %vm1543, %v2044, 0.0
    %2059 = vadd.xlane.f32.xlu0 %v2058
    %v2060 = vpop.xlane.xlu0 %2059
    %v2061 = vsel %vm1543, %v2045, 0.0
    %2062 = vadd.xlane.f32.xlu0 %v2061
    %v2063 = vpop.xlane.xlu0 %2062
    %v2064 = vmul.f32 %v2048, %v1907
    %v2065 = vmul.f32 %v2051, %v1907
    %v2066 = vmul.f32 %v2054, %v1907
    %v2067 = vmul.f32 %v2057, %v1907
    %v2068 = vmul.f32 %v2060, %v1907
    %v2069 = vmul.f32 %v2063, %v1907
    %v2070 = vadd.f32 %v2064, 1e-05
    %v2071 = vadd.f32 %v2065, 1e-05
    %v2072 = vadd.f32 %v2066, 1e-05
    %v2073 = vadd.f32 %v2067, 1e-05
    %v2074 = vadd.f32 %v2068, 1e-05
    %v2075 = vadd.f32 %v2069, 1e-05
    %v2076 = vrsqrt.pop %v2070
    %v2077 = vrsqrt.pop %v2071
    %v2078 = vrsqrt.pop %v2072
    %v2079 = vrsqrt.pop %v2073
    %v2080 = vrsqrt.pop %v2074
    %v2081 = vrsqrt.pop %v2075
    %v2082 = vmul.f32 %v2034, %v2076
    %v2083 = vmul.f32 %v2035, %v2077
    %v2084 = vmul.f32 %v2036, %v2078
    %v2085 = vmul.f32 %v2037, %v2079
    %v2086 = vmul.f32 %v2038, %v2080
    %v2087 = vmul.f32 %v2039, %v2081
    %v2088 = vmul.f32 %v1841, %v1841
    %v2089 = vmul.f32 %v1842, %v1842
    %v2090 = vmul.f32 %v1843, %v1843
    %v2091 = vmul.f32 %v1844, %v1844
    %v2092 = vmul.f32 %v1845, %v1845
    %v2093 = vmul.f32 %v1846, %v1846
    %v2094 = vsel %vm1543, %v2088, 0.0
    %2095 = vadd.xlane.f32.xlu0 %v2094
    %v2096 = vpop.xlane.xlu0 %2095
    %v2097 = vsel %vm1543, %v2089, 0.0
    %2098 = vadd.xlane.f32.xlu0 %v2097
    %v2099 = vpop.xlane.xlu0 %2098
    %v2100 = vsel %vm1543, %v2090, 0.0
    %2101 = vadd.xlane.f32.xlu0 %v2100
    %v2102 = vpop.xlane.xlu0 %2101
    %v2103 = vsel %vm1543, %v2091, 0.0
    %2104 = vadd.xlane.f32.xlu0 %v2103
    %v2105 = vpop.xlane.xlu0 %2104
    %v2106 = vsel %vm1543, %v2092, 0.0
    %2107 = vadd.xlane.f32.xlu0 %v2106
    %v2108 = vpop.xlane.xlu0 %2107
    %v2109 = vsel %vm1543, %v2093, 0.0
    %2110 = vadd.xlane.f32.xlu0 %v2109
    %v2111 = vpop.xlane.xlu0 %2110
    %v2112 = vmax.f32 %v2096, 1e-24
    %v2113 = vmax.f32 %v2099, 1e-24
    %v2114 = vmax.f32 %v2102, 1e-24
    %v2115 = vmax.f32 %v2105, 1e-24
    %v2116 = vmax.f32 %v2108, 1e-24
    %v2117 = vmax.f32 %v2111, 1e-24
    %v2118 = vrsqrt.pop %v2112
    %v2119 = vrsqrt.pop %v2113
    %v2120 = vrsqrt.pop %v2114
    %v2121 = vrsqrt.pop %v2115
    %v2122 = vrsqrt.pop %v2116
    %v2123 = vrsqrt.pop %v2117
    %v2124 = vmul.f32 %v1841, %v2118
    %v2125 = vmul.f32 %v1842, %v2119
    %v2126 = vmul.f32 %v1843, %v2120
    %v2127 = vmul.f32 %v1844, %v2121
    %v2128 = vmul.f32 %v1845, %v2122
    %v2129 = vmul.f32 %v1846, %v2123
    %v2130 = vsel %vm1543, %v2124, 0.0
    %2131 = vadd.xlane.f32.xlu0 %v2130
    %v2132 = vpop.xlane.xlu0 %2131
    %v2133 = vsel %vm1543, %v2125, 0.0
    %2134 = vadd.xlane.f32.xlu0 %v2133
    %v2135 = vpop.xlane.xlu0 %2134
    %v2136 = vsel %vm1543, %v2126, 0.0
    %2137 = vadd.xlane.f32.xlu0 %v2136
    %v2138 = vpop.xlane.xlu0 %2137
    %v2139 = vsel %vm1543, %v2127, 0.0
    %2140 = vadd.xlane.f32.xlu0 %v2139
    %v2141 = vpop.xlane.xlu0 %2140
    %v2142 = vsel %vm1543, %v2128, 0.0
    %2143 = vadd.xlane.f32.xlu0 %v2142
    %v2144 = vpop.xlane.xlu0 %2143
    %v2145 = vsel %vm1543, %v2129, 0.0
    %2146 = vadd.xlane.f32.xlu0 %v2145
    %v2147 = vpop.xlane.xlu0 %2146
    %v2148 = vmul.f32 %v2132, %v1907
    %v2149 = vmul.f32 %v2135, %v1907
    %v2150 = vmul.f32 %v2138, %v1907
    %v2151 = vmul.f32 %v2141, %v1907
    %v2152 = vmul.f32 %v2144, %v1907
    %v2153 = vmul.f32 %v2147, %v1907
    %v2154 = vsub.f32 %v2124, %v2148
    %v2155 = vsub.f32 %v2125, %v2149
    %v2156 = vsub.f32 %v2126, %v2150
    %v2157 = vsub.f32 %v2127, %v2151
    %v2158 = vsub.f32 %v2128, %v2152
    %v2159 = vsub.f32 %v2129, %v2153
    %v2160 = vmul.f32 %v2154, %v2154
    %v2161 = vmul.f32 %v2155, %v2155
    %v2162 = vmul.f32 %v2156, %v2156
    %v2163 = vmul.f32 %v2157, %v2157
    %v2164 = vmul.f32 %v2158, %v2158
    %v2165 = vmul.f32 %v2159, %v2159
    %v2166 = vsel %vm1543, %v2160, 0.0
    %2167 = vadd.xlane.f32.xlu0 %v2166
    %v2168 = vpop.xlane.xlu0 %2167
    %v2169 = vsel %vm1543, %v2161, 0.0
    %2170 = vadd.xlane.f32.xlu0 %v2169
    %v2171 = vpop.xlane.xlu0 %2170
    %v2172 = vsel %vm1543, %v2162, 0.0
    %2173 = vadd.xlane.f32.xlu0 %v2172
    %v2174 = vpop.xlane.xlu0 %2173
    %v2175 = vsel %vm1543, %v2163, 0.0
    %2176 = vadd.xlane.f32.xlu0 %v2175
    %v2177 = vpop.xlane.xlu0 %2176
    %v2178 = vsel %vm1543, %v2164, 0.0
    %2179 = vadd.xlane.f32.xlu0 %v2178
    %v2180 = vpop.xlane.xlu0 %2179
    %v2181 = vsel %vm1543, %v2165, 0.0
    %2182 = vadd.xlane.f32.xlu0 %v2181
    %v2183 = vpop.xlane.xlu0 %2182
    %v2184 = vmul.f32 %v2168, %v1907
    %v2185 = vmul.f32 %v2171, %v1907
    %v2186 = vmul.f32 %v2174, %v1907
    %v2187 = vmul.f32 %v2177, %v1907
    %v2188 = vmul.f32 %v2180, %v1907
    %v2189 = vmul.f32 %v2183, %v1907
    %v2190 = vadd.f32 %v2184, 1e-05
    %v2191 = vadd.f32 %v2185, 1e-05
    %v2192 = vadd.f32 %v2186, 1e-05
    %v2193 = vadd.f32 %v2187, 1e-05
    %v2194 = vadd.f32 %v2188, 1e-05
    %v2195 = vadd.f32 %v2189, 1e-05
    %v2196 = vrsqrt.pop %v2190
    %v2197 = vrsqrt.pop %v2191
    %v2198 = vrsqrt.pop %v2192
    %v2199 = vrsqrt.pop %v2193
    %v2200 = vrsqrt.pop %v2194
    %v2201 = vrsqrt.pop %v2195
    %v2202 = vmul.f32 %v2154, %v2196
    %v2203 = vmul.f32 %v2155, %v2197
    %v2204 = vmul.f32 %v2156, %v2198
    %v2205 = vmul.f32 %v2157, %v2199
    %v2206 = vmul.f32 %v2158, %v2200
    %v2207 = vmul.f32 %v2159, %v2201
    %v2208 = vpack.c.bf16 %v1963, %v1962
    %v2209 = vpack.c.bf16 %v1965, %v1964
    %v2210 = vpack.c.bf16 %v1967, %v1966
    %v2211 = vld [vmem:[#allocation33] sm:$0xff]
    %v2212 = vld [vmem:[#allocation33 + $0x8] sm:$0xff]
    %v2213 = vld [vmem:[#allocation33 + $0x10] sm:$0xff]
    %v2214 = vld [vmem:[#allocation33 + $0x18] sm:$0xff]
    %v2215 = vld [vmem:[#allocation33 + $0x20] sm:$0xff]
    %v2216 = vld [vmem:[#allocation33 + $0x28] sm:$0xff]
    %v2217 = vld [vmem:[#allocation33 + $0x30] sm:$0xff]
    %v2218 = vld [vmem:[#allocation33 + $0x38] sm:$0xff]
    %v2227 = vunpack.c.l.b16 %v2211
    %v2228 = vunpack.c.h.b16 %v2211
    %v2229 = vunpack.c.l.b16 %v2212
    %v2230 = vunpack.c.h.b16 %v2212
    %v2231 = vunpack.c.l.b16 %v2213
    %v2232 = vunpack.c.h.b16 %v2213
    %v2233 = vunpack.c.l.b16 %v2214
    %v2234 = vunpack.c.h.b16 %v2214
    %v2235 = vunpack.c.l.b16 %v2215
    %v2236 = vunpack.c.h.b16 %v2215
    %v2237 = vunpack.c.l.b16 %v2216
    %v2238 = vunpack.c.h.b16 %v2216
    %v2239 = vunpack.c.l.b16 %v2217
    %v2240 = vunpack.c.h.b16 %v2217
    %v2241 = vunpack.c.l.b16 %v2218
    %v2242 = vunpack.c.h.b16 %v2218
    %v2243 = vpack.c.b16 %v2229, %v2227
    %v2244 = vpack.c.b16 %v2230, %v2228
    %v2245 = vpack.c.b16 %v2233, %v2231
    %v2246 = vpack.c.b16 %v2234, %v2232
    %v2247 = vpack.c.b16 %v2237, %v2235
    %v2248 = vpack.c.b16 %v2238, %v2236
    %v2249 = vpack.c.b16 %v2241, %v2239
    %v2250 = vpack.c.b16 %v2242, %v2240
    %v2260 = vsel %vm1543, %v2208, 0
    %v2263 = vsel %vm1543, %v2209, 0
    %v2266 = vsel %vm1543, %v2210, 0
    %2268 = vmatprep.subr.bf16.mxu0 %v2244
    %2269 = vmatpush1.bf16.msra.mxu0 %v2243
    %2270 = vmatprep.subr.bf16.mxu0 %v2246
    %2271 = vmatpush1.bf16.msra.mxu0 %v2245
    %2272 = vmatprep.subr.bf16.mxu0 %v2248
    %2273 = vmatpush1.bf16.msra.mxu0 %v2247
    %2274 = vmatprep.subr.bf16.mxu0 %v2250
    %2275 = vmatpush1.bf16.msra.mxu0 %v2249
    %2276 = vmatprep.subr.bf16.mxu0 0
    %2277 = vmatpush1.bf16.msra.mxu0 0
    %2278 = vmatprep.subr.bf16.mxu0 0
    %2279 = vmatpush1.bf16.msra.mxu0 0
    %2280 = vmatprep.subr.bf16.mxu0 0
    %2281 = vmatpush1.bf16.msra.mxu0 0
    %2282 = vmatprep.subr.bf16.mxu0 0
    %2283 = vmatpush1.bf16.msra.mxu0 0
    %2284 = vmatprep.subr.bf16.mxu0 0
    %2285 = vmatpush1.bf16.msra.mxu0 0
    %2286 = vmatprep.subr.bf16.mxu0 0
    %2287 = vmatpush1.bf16.msra.mxu0 0
    %2288 = vmatprep.subr.bf16.mxu0 0
    %2289 = vmatpush1.bf16.msra.mxu0 0
    %2290 = vmatprep.subr.bf16.mxu0 0
    %2291 = vmatpush1.bf16.msra.mxu0 0
    %2292 = vmatprep.subr.bf16.mxu0 0
    %2293 = vmatpush1.bf16.msra.mxu0 0
    %2294 = vmatprep.subr.bf16.mxu0 0
    %2295 = vmatpush1.bf16.msra.mxu0 0
    %2296 = vmatprep.subr.bf16.mxu0 0
    %2297 = vmatpush1.bf16.msra.mxu0 0
    %2298 = vmatprep.subr.bf16.mxu0 0
    %2299 = vmatpush1.bf16.msra.mxu0 0
    %2300 = vmatprep.mubr.bf16.mxu0 0
    %2301 = vmatmul.mubr.bf16.gmra.mrb[0].mxu0 %v2260
    %v2302 = vpop.f32.mrb[0].mxu0
    %v2303 = vadd.f32 0.0, %v2302
    %v2304 = vpop.f32.mrb[0].mxu0
    %v2305 = vadd.f32 0.0, %v2304
    %v2306 = vpop.f32.mrb[0].mxu0
    %v2307 = vadd.f32 0.0, %v2306
    %v2308 = vpop.f32.mrb[0].mxu0
    %v2309 = vadd.f32 0.0, %v2308
    %2310 = vmatprep.mubr.bf16.mxu0 0
    %2311 = vmatmul.mubr.bf16.gmra.mrb[0].mxu0 %v2263
    %v2312 = vpop.f32.mrb[0].mxu0
    %v2313 = vadd.f32 0.0, %v2312
    %v2314 = vpop.f32.mrb[0].mxu0
    %v2315 = vadd.f32 0.0, %v2314
    %v2316 = vpop.f32.mrb[0].mxu0
    %v2317 = vadd.f32 0.0, %v2316
    %v2318 = vpop.f32.mrb[0].mxu0
    %v2319 = vadd.f32 0.0, %v2318
    %2320 = vmatprep.mubr.bf16.mxu0 0
    %2321 = vmatmul.mubr.bf16.gmra.mrb[0].mxu0 %v2266
    %v2322 = vpop.f32.mrb[0].mxu0
    %v2323 = vadd.f32 0.0, %v2322
    %v2324 = vpop.f32.mrb[0].mxu0
    %v2325 = vadd.f32 0.0, %v2324
    %v2326 = vpop.f32.mrb[0].mxu0
    %v2327 = vadd.f32 0.0, %v2326
    %v2328 = vpop.f32.mrb[0].mxu0
    %v2329 = vadd.f32 0.0, %v2328
    %2330 = vdwg.mxu0
    %v2331 = vpack.c.bf16 %v2083, %v2082
    %v2332 = vpack.c.bf16 %v2085, %v2084
    %v2333 = vpack.c.bf16 %v2087, %v2086
    %v2335 = vsel %vm1543, %v2331, 0
    %v2338 = vsel %vm1543, %v2332, 0
    %v2341 = vsel %vm1543, %v2333, 0
    %2343 = vmatprep.subr.bf16.mxu0 %v2244
    %2344 = vmatpush1.bf16.msra.mxu0 %v2243
    %2345 = vmatprep.subr.bf16.mxu0 %v2246
    %2346 = vmatpush1.bf16.msra.mxu0 %v2245
    %2347 = vmatprep.subr.bf16.mxu0 %v2248
    %2348 = vmatpush1.bf16.msra.mxu0 %v2247
    %2349 = vmatprep.subr.bf16.mxu0 %v2250
    %2350 = vmatpush1.bf16.msra.mxu0 %v2249
    %2351 = vmatprep.subr.bf16.mxu0 0
    %2352 = vmatpush1.bf16.msra.mxu0 0
    %2353 = vmatprep.subr.bf16.mxu0 0
    %2354 = vmatpush1.bf16.msra.mxu0 0
    %2355 = vmatprep.subr.bf16.mxu0 0
    %2356 = vmatpush1.bf16.msra.mxu0 0
    %2357 = vmatprep.subr.bf16.mxu0 0
    %2358 = vmatpush1.bf16.msra.mxu0 0
    %2359 = vmatprep.subr.bf16.mxu0 0
    %2360 = vmatpush1.bf16.msra.mxu0 0
    %2361 = vmatprep.subr.bf16.mxu0 0
    %2362 = vmatpush1.bf16.msra.mxu0 0
    %2363 = vmatprep.subr.bf16.mxu0 0
    %2364 = vmatpush1.bf16.msra.mxu0 0
    %2365 = vmatprep.subr.bf16.mxu0 0
    %2366 = vmatpush1.bf16.msra.mxu0 0
    %2367 = vmatprep.subr.bf16.mxu0 0
    %2368 = vmatpush1.bf16.msra.mxu0 0
    %2369 = vmatprep.subr.bf16.mxu0 0
    %2370 = vmatpush1.bf16.msra.mxu0 0
    %2371 = vmatprep.subr.bf16.mxu0 0
    %2372 = vmatpush1.bf16.msra.mxu0 0
    %2373 = vmatprep.subr.bf16.mxu0 0
    %2374 = vmatpush1.bf16.msra.mxu0 0
    %2375 = vmatprep.mubr.bf16.mxu0 0
    %2376 = vmatmul.mubr.bf16.gmra.mrb[0].mxu0 %v2335
    %v2377 = vpop.f32.mrb[0].mxu0
    %v2378 = vadd.f32 0.0, %v2377
    %v2379 = vpop.f32.mrb[0].mxu0
    %v2380 = vadd.f32 0.0, %v2379
    %v2381 = vpop.f32.mrb[0].mxu0
    %v2382 = vadd.f32 0.0, %v2381
    %v2383 = vpop.f32.mrb[0].mxu0
    %v2384 = vadd.f32 0.0, %v2383
    %2385 = vmatprep.mubr.bf16.mxu0 0
    %2386 = vmatmul.mubr.bf16.gmra.mrb[0].mxu0 %v2338
    %v2387 = vpop.f32.mrb[0].mxu0
    %v2388 = vadd.f32 0.0, %v2387
    %v2389 = vpop.f32.mrb[0].mxu0
    %v2390 = vadd.f32 0.0, %v2389
    %v2391 = vpop.f32.mrb[0].mxu0
    %v2392 = vadd.f32 0.0, %v2391
    %v2393 = vpop.f32.mrb[0].mxu0
    %v2394 = vadd.f32 0.0, %v2393
    %2395 = vmatprep.mubr.bf16.mxu0 0
    %2396 = vmatmul.mubr.bf16.gmra.mrb[0].mxu0 %v2341
    %v2397 = vpop.f32.mrb[0].mxu0
    %v2398 = vadd.f32 0.0, %v2397
    %v2399 = vpop.f32.mrb[0].mxu0
    %v2400 = vadd.f32 0.0, %v2399
    %v2401 = vpop.f32.mrb[0].mxu0
    %v2402 = vadd.f32 0.0, %v2401
    %v2403 = vpop.f32.mrb[0].mxu0
    %v2404 = vadd.f32 0.0, %v2403
    %2405 = vdwg.mxu0
    %v2406 = vpack.c.bf16 %v2203, %v2202
    %v2407 = vpack.c.bf16 %v2205, %v2204
    %v2408 = vpack.c.bf16 %v2207, %v2206
    %v2410 = vsel %vm1543, %v2406, 0
    %v2413 = vsel %vm1543, %v2407, 0
    %v2416 = vsel %vm1543, %v2408, 0
    %2418 = vmatprep.subr.bf16.mxu0 %v2244
    %2419 = vmatpush1.bf16.msra.mxu0 %v2243
    %2420 = vmatprep.subr.bf16.mxu0 %v2246
    %2421 = vmatpush1.bf16.msra.mxu0 %v2245
    %2422 = vmatprep.subr.bf16.mxu0 %v2248
    %2423 = vmatpush1.bf16.msra.mxu0 %v2247
    %2424 = vmatprep.subr.bf16.mxu0 %v2250
    %2425 = vmatpush1.bf16.msra.mxu0 %v2249
    %2426 = vmatprep.subr.bf16.mxu0 0
    %2427 = vmatpush1.bf16.msra.mxu0 0
    %2428 = vmatprep.subr.bf16.mxu0 0
    %2429 = vmatpush1.bf16.msra.mxu0 0
    %2430 = vmatprep.subr.bf16.mxu0 0
    %2431 = vmatpush1.bf16.msra.mxu0 0
    %2432 = vmatprep.subr.bf16.mxu0 0
    %2433 = vmatpush1.bf16.msra.mxu0 0
    %2434 = vmatprep.subr.bf16.mxu0 0
    %2435 = vmatpush1.bf16.msra.mxu0 0
    %2436 = vmatprep.subr.bf16.mxu0 0
    %2437 = vmatpush1.bf16.msra.mxu0 0
    %2438 = vmatprep.subr.bf16.mxu0 0
    %2439 = vmatpush1.bf16.msra.mxu0 0
    %2440 = vmatprep.subr.bf16.mxu0 0
    %2441 = vmatpush1.bf16.msra.mxu0 0
    %2442 = vmatprep.subr.bf16.mxu0 0
    %2443 = vmatpush1.bf16.msra.mxu0 0
    %2444 = vmatprep.subr.bf16.mxu0 0
    %2445 = vmatpush1.bf16.msra.mxu0 0
    %2446 = vmatprep.subr.bf16.mxu0 0
    %2447 = vmatpush1.bf16.msra.mxu0 0
    %2448 = vmatprep.subr.bf16.mxu0 0
    %2449 = vmatpush1.bf16.msra.mxu0 0
    %2450 = vmatprep.mubr.bf16.mxu0 0
    %2451 = vmatmul.mubr.bf16.gmra.mrb[0].mxu0 %v2410
    %v2452 = vpop.f32.mrb[0].mxu0
    %v2453 = vadd.f32 0.0, %v2452
    %v2454 = vpop.f32.mrb[0].mxu0
    %v2455 = vadd.f32 0.0, %v2454
    %v2456 = vpop.f32.mrb[0].mxu0
    %v2457 = vadd.f32 0.0, %v2456
    %v2458 = vpop.f32.mrb[0].mxu0
    %v2459 = vadd.f32 0.0, %v2458
    %2460 = vmatprep.mubr.bf16.mxu0 0
    %2461 = vmatmul.mubr.bf16.gmra.mrb[0].mxu0 %v2413
    %v2462 = vpop.f32.mrb[0].mxu0
    %v2463 = vadd.f32 0.0, %v2462
    %v2464 = vpop.f32.mrb[0].mxu0
    %v2465 = vadd.f32 0.0, %v2464
    %v2466 = vpop.f32.mrb[0].mxu0
    %v2467 = vadd.f32 0.0, %v2466
    %v2468 = vpop.f32.mrb[0].mxu0
    %v2469 = vadd.f32 0.0, %v2468
    %2470 = vmatprep.mubr.bf16.mxu0 0
    %2471 = vmatmul.mubr.bf16.gmra.mrb[0].mxu0 %v2416
    %v2472 = vpop.f32.mrb[0].mxu0
    %v2473 = vadd.f32 0.0, %v2472
    %v2474 = vpop.f32.mrb[0].mxu0
    %v2475 = vadd.f32 0.0, %v2474
    %v2476 = vpop.f32.mrb[0].mxu0
    %v2477 = vadd.f32 0.0, %v2476
    %v2478 = vpop.f32.mrb[0].mxu0
    %v2479 = vadd.f32 0.0, %v2478
    %2480 = vdwg.mxu0
    %2487 = vrot.lane.b32.xlu0 %v2303, 64
    %v2488 = vpop.permute.xlu0 %2487
    %2489 = vrot.lane.b32.xlu0 %v2307, 64
    %v2490 = vpop.permute.xlu0 %2489
    %2491 = vrot.lane.b32.xlu0 %v2313, 64
    %v2492 = vpop.permute.xlu0 %2491
    %2493 = vrot.lane.b32.xlu0 %v2317, 64
    %v2494 = vpop.permute.xlu0 %2493
    %2495 = vrot.lane.b32.xlu0 %v2323, 64
    %v2496 = vpop.permute.xlu0 %2495
    %2497 = vrot.lane.b32.xlu0 %v2327, 64
    %v2498 = vpop.permute.xlu0 %2497
    %v2505 = vmul.f32 %v2303, %v2488
    %v2506 = vmul.f32 %v2307, %v2490
    %v2507 = vmul.f32 %v2313, %v2492
    %v2508 = vmul.f32 %v2317, %v2494
    %v2509 = vmul.f32 %v2323, %v2496
    %v2510 = vmul.f32 %v2327, %v2498
    %v2511 = vsel %vm1543, %v2505, 0.0
    %2512 = vadd.xlane.f32.xlu0 %v2511
    %v2513 = vpop.xlane.xlu0 %2512
    %v2514 = vsel %vm1543, %v2506, 0.0
    %2515 = vadd.xlane.f32.xlu0 %v2514
    %v2516 = vpop.xlane.xlu0 %2515
    %v2517 = vsel %vm1543, %v2507, 0.0
    %2518 = vadd.xlane.f32.xlu0 %v2517
    %v2519 = vpop.xlane.xlu0 %2518
    %v2520 = vsel %vm1543, %v2508, 0.0
    %2521 = vadd.xlane.f32.xlu0 %v2520
    %v2522 = vpop.xlane.xlu0 %2521
    %v2523 = vsel %vm1543, %v2509, 0.0
    %2524 = vadd.xlane.f32.xlu0 %v2523
    %v2525 = vpop.xlane.xlu0 %2524
    %v2526 = vsel %vm1543, %v2510, 0.0
    %2527 = vadd.xlane.f32.xlu0 %v2526
    %v2528 = vpop.xlane.xlu0 %2527
    %v2529 = vmul.f32 %v2513, 0.125
    %v2530 = vmul.f32 %v2516, 0.125
    %v2531 = vmul.f32 %v2519, 0.125
    %v2532 = vmul.f32 %v2522, 0.125
    %v2533 = vmul.f32 %v2525, 0.125
    %v2534 = vmul.f32 %v2528, 0.125
    %2541 = vrot.lane.b32.xlu0 %v2378, 64
    %v2542 = vpop.permute.xlu0 %2541
    %2543 = vrot.lane.b32.xlu0 %v2382, 64
    %v2544 = vpop.permute.xlu0 %2543
    %2545 = vrot.lane.b32.xlu0 %v2388, 64
    %v2546 = vpop.permute.xlu0 %2545
    %2547 = vrot.lane.b32.xlu0 %v2392, 64
    %v2548 = vpop.permute.xlu0 %2547
    %2549 = vrot.lane.b32.xlu0 %v2398, 64
    %v2550 = vpop.permute.xlu0 %2549
    %2551 = vrot.lane.b32.xlu0 %v2402, 64
    %v2552 = vpop.permute.xlu0 %2551
    %v2559 = vmul.f32 %v2303, %v2542
    %v2560 = vmul.f32 %v2307, %v2544
    %v2561 = vmul.f32 %v2313, %v2546
    %v2562 = vmul.f32 %v2317, %v2548
    %v2563 = vmul.f32 %v2323, %v2550
    %v2564 = vmul.f32 %v2327, %v2552
    %v2565 = vsel %vm1543, %v2559, 0.0
    %2566 = vadd.xlane.f32.xlu0 %v2565
    %v2567 = vpop.xlane.xlu0 %2566
    %v2568 = vsel %vm1543, %v2560, 0.0
    %2569 = vadd.xlane.f32.xlu0 %v2568
    %v2570 = vpop.xlane.xlu0 %2569
    %v2571 = vsel %vm1543, %v2561, 0.0
    %2572 = vadd.xlane.f32.xlu0 %v2571
    %v2573 = vpop.xlane.xlu0 %2572
    %v2574 = vsel %vm1543, %v2562, 0.0
    %2575 = vadd.xlane.f32.xlu0 %v2574
    %v2576 = vpop.xlane.xlu0 %2575
    %v2577 = vsel %vm1543, %v2563, 0.0
    %2578 = vadd.xlane.f32.xlu0 %v2577
    %v2579 = vpop.xlane.xlu0 %2578
    %v2580 = vsel %vm1543, %v2564, 0.0
    %2581 = vadd.xlane.f32.xlu0 %v2580
    %v2582 = vpop.xlane.xlu0 %2581
    %v2583 = vmul.f32 %v2567, 0.125
    %v2584 = vmul.f32 %v2570, 0.125
    %v2585 = vmul.f32 %v2573, 0.125
    %v2586 = vmul.f32 %v2576, 0.125
    %v2587 = vmul.f32 %v2579, 0.125
    %v2588 = vmul.f32 %v2582, 0.125
    %2595 = vrot.lane.b32.xlu0 %v2453, 64
    %v2596 = vpop.permute.xlu0 %2595
    %2597 = vrot.lane.b32.xlu0 %v2457, 64
    %v2598 = vpop.permute.xlu0 %2597
    %2599 = vrot.lane.b32.xlu0 %v2463, 64
    %v2600 = vpop.permute.xlu0 %2599
    %2601 = vrot.lane.b32.xlu0 %v2467, 64
    %v2602 = vpop.permute.xlu0 %2601
    %2603 = vrot.lane.b32.xlu0 %v2473, 64
    %v2604 = vpop.permute.xlu0 %2603
    %2605 = vrot.lane.b32.xlu0 %v2477, 64
    %v2606 = vpop.permute.xlu0 %2605
    %v2613 = vmul.f32 %v2303, %v2596
    %v2614 = vmul.f32 %v2307, %v2598
    %v2615 = vmul.f32 %v2313, %v2600
    %v2616 = vmul.f32 %v2317, %v2602
    %v2617 = vmul.f32 %v2323, %v2604
    %v2618 = vmul.f32 %v2327, %v2606
    %v2619 = vsel %vm1543, %v2613, 0.0
    %2620 = vadd.xlane.f32.xlu0 %v2619
    %v2621 = vpop.xlane.xlu0 %2620
    %v2622 = vsel %vm1543, %v2614, 0.0
    %2623 = vadd.xlane.f32.xlu0 %v2622
    %v2624 = vpop.xlane.xlu0 %2623
    %v2625 = vsel %vm1543, %v2615, 0.0
    %2626 = vadd.xlane.f32.xlu0 %v2625
    %v2627 = vpop.xlane.xlu0 %2626
    %v2628 = vsel %vm1543, %v2616, 0.0
    %2629 = vadd.xlane.f32.xlu0 %v2628
    %v2630 = vpop.xlane.xlu0 %2629
    %v2631 = vsel %vm1543, %v2617, 0.0
    %2632 = vadd.xlane.f32.xlu0 %v2631
    %v2633 = vpop.xlane.xlu0 %2632
    %v2634 = vsel %vm1543, %v2618, 0.0
    %2635 = vadd.xlane.f32.xlu0 %v2634
    %v2636 = vpop.xlane.xlu0 %2635
    %v2637 = vmul.f32 %v2621, 0.125
    %v2638 = vmul.f32 %v2624, 0.125
    %v2639 = vmul.f32 %v2627, 0.125
    %v2640 = vmul.f32 %v2630, 0.125
    %v2641 = vmul.f32 %v2633, 0.125
    %v2642 = vmul.f32 %v2636, 0.125
    %v2643 = vmax.f32 %v2529, %v2583
    %v2644 = vmax.f32 %v2530, %v2584
    %v2645 = vmax.f32 %v2531, %v2585
    %v2646 = vmax.f32 %v2532, %v2586
    %v2647 = vmax.f32 %v2533, %v2587
    %v2648 = vmax.f32 %v2534, %v2588
    %v2649 = vmax.f32 %v2643, %v2637
    %v2650 = vmax.f32 %v2644, %v2638
    %v2651 = vmax.f32 %v2645, %v2639
    %v2652 = vmax.f32 %v2646, %v2640
    %v2653 = vmax.f32 %v2647, %v2641
    %v2654 = vmax.f32 %v2648, %v2642
    %v2655 = vsub.f32 %v2529, %v2649
    %v2656 = vsub.f32 %v2530, %v2650
    %v2657 = vsub.f32 %v2531, %v2651
    %v2658 = vsub.f32 %v2532, %v2652
    %v2659 = vsub.f32 %v2533, %v2653
    %v2660 = vsub.f32 %v2534, %v2654
    %v2661 = vmul.f32 %v2655, 1.442695
    %v2662 = vpow.pop %v2661
    %v2663 = vmul.f32 %v2656, 1.442695
    %v2664 = vpow.pop %v2663
    %v2665 = vmul.f32 %v2657, 1.442695
    %v2666 = vpow.pop %v2665
    %v2667 = vmul.f32 %v2658, 1.442695
    %v2668 = vpow.pop %v2667
    %v2669 = vmul.f32 %v2659, 1.442695
    %v2670 = vpow.pop %v2669
    %v2671 = vmul.f32 %v2660, 1.442695
    %v2672 = vpow.pop %v2671
    %v2673 = vsub.f32 %v2583, %v2649
    %v2674 = vsub.f32 %v2584, %v2650
    %v2675 = vsub.f32 %v2585, %v2651
    %v2676 = vsub.f32 %v2586, %v2652
    %v2677 = vsub.f32 %v2587, %v2653
    %v2678 = vsub.f32 %v2588, %v2654
    %v2679 = vmul.f32 %v2673, 1.442695
    %v2680 = vpow.pop %v2679
    %v2681 = vmul.f32 %v2674, 1.442695
    %v2682 = vpow.pop %v2681
    %v2683 = vmul.f32 %v2675, 1.442695
    %v2684 = vpow.pop %v2683
    %v2685 = vmul.f32 %v2676, 1.442695
    %v2686 = vpow.pop %v2685
    %v2687 = vmul.f32 %v2677, 1.442695
    %v2688 = vpow.pop %v2687
    %v2689 = vmul.f32 %v2678, 1.442695
    %v2690 = vpow.pop %v2689
    %v2691 = vsub.f32 %v2637, %v2649
    %v2692 = vsub.f32 %v2638, %v2650
    %v2693 = vsub.f32 %v2639, %v2651
    %v2694 = vsub.f32 %v2640, %v2652
    %v2695 = vsub.f32 %v2641, %v2653
    %v2696 = vsub.f32 %v2642, %v2654
    %v2697 = vmul.f32 %v2691, 1.442695
    %v2698 = vpow.pop %v2697
    %v2699 = vmul.f32 %v2692, 1.442695
    %v2700 = vpow.pop %v2699
    %v2701 = vmul.f32 %v2693, 1.442695
    %v2702 = vpow.pop %v2701
    %v2703 = vmul.f32 %v2694, 1.442695
    %v2704 = vpow.pop %v2703
    %v2705 = vmul.f32 %v2695, 1.442695
    %v2706 = vpow.pop %v2705
    %v2707 = vmul.f32 %v2696, 1.442695
    %v2708 = vpow.pop %v2707
    %v2709 = vadd.f32 %v2662, %v2680
    %v2710 = vadd.f32 %v2664, %v2682
    %v2711 = vadd.f32 %v2666, %v2684
    %v2712 = vadd.f32 %v2668, %v2686
    %v2713 = vadd.f32 %v2670, %v2688
    %v2714 = vadd.f32 %v2672, %v2690
    %v2715 = vadd.f32 %v2709, %v2698
    %v2716 = vadd.f32 %v2710, %v2700
    %v2717 = vadd.f32 %v2711, %v2702
    %v2718 = vadd.f32 %v2712, %v2704
    %v2719 = vadd.f32 %v2713, %v2706
    %v2720 = vadd.f32 %v2714, %v2708
    %v2721 = vmul.f32 %v2662, %v2305
    %v2722 = vmul.f32 %v2664, %v2309
    %v2723 = vmul.f32 %v2666, %v2315
    %v2724 = vmul.f32 %v2668, %v2319
    %v2725 = vmul.f32 %v2670, %v2325
    %v2726 = vmul.f32 %v2672, %v2329
    %v2727 = vmul.f32 %v2680, %v2380
    %v2728 = vmul.f32 %v2682, %v2384
    %v2729 = vmul.f32 %v2684, %v2390
    %v2730 = vmul.f32 %v2686, %v2394
    %v2731 = vmul.f32 %v2688, %v2400
    %v2732 = vmul.f32 %v2690, %v2404
    %v2733 = vadd.f32 %v2721, %v2727
    %v2734 = vadd.f32 %v2722, %v2728
    %v2735 = vadd.f32 %v2723, %v2729
    %v2736 = vadd.f32 %v2724, %v2730
    %v2737 = vadd.f32 %v2725, %v2731
    %v2738 = vadd.f32 %v2726, %v2732
    %v2739 = vmul.f32 %v2698, %v2455
    %v2740 = vmul.f32 %v2700, %v2459
    %v2741 = vmul.f32 %v2702, %v2465
    %v2742 = vmul.f32 %v2704, %v2469
    %v2743 = vmul.f32 %v2706, %v2475
    %v2744 = vmul.f32 %v2708, %v2479
    %v2745 = vadd.f32 %v2733, %v2739
    %v2746 = vadd.f32 %v2734, %v2740
    %v2747 = vadd.f32 %v2735, %v2741
    %v2748 = vadd.f32 %v2736, %v2742
    %v2749 = vadd.f32 %v2737, %v2743
    %v2750 = vadd.f32 %v2738, %v2744
    %v2751 = vrcp.pop %v2715
    %v2752 = vmul.f32 %v2745, %v2751
    %v2753 = vrcp.pop %v2716
    %v2754 = vmul.f32 %v2746, %v2753
    %v2755 = vrcp.pop %v2717
    %v2756 = vmul.f32 %v2747, %v2755
    %v2757 = vrcp.pop %v2718
    %v2758 = vmul.f32 %v2748, %v2757
    %v2759 = vrcp.pop %v2719
    %v2760 = vmul.f32 %v2749, %v2759
    %v2761 = vrcp.pop %v2720
    %v2762 = vmul.f32 %v2750, %v2761
    %v2763 = vadd.f32 %v2752, 0.0
    %v2764 = vadd.f32 %v2754, 0.0
    %v2765 = vadd.f32 %v2756, 0.0
    %v2766 = vadd.f32 %v2758, 0.0
    %v2767 = vadd.f32 %v2760, 0.0
    %v2768 = vadd.f32 %v2762, 0.0
    %v2769 = vmul.f32 %v2378, %v2488
    %v2770 = vmul.f32 %v2382, %v2490
    %v2771 = vmul.f32 %v2388, %v2492
    %v2772 = vmul.f32 %v2392, %v2494
    %v2773 = vmul.f32 %v2398, %v2496
    %v2774 = vmul.f32 %v2402, %v2498
    %v2775 = vsel %vm1543, %v2769, 0.0
    %2776 = vadd.xlane.f32.xlu0 %v2775
    %v2777 = vpop.xlane.xlu0 %2776
    %v2778 = vsel %vm1543, %v2770, 0.0
    %2779 = vadd.xlane.f32.xlu0 %v2778
    %v2780 = vpop.xlane.xlu0 %2779
    %v2781 = vsel %vm1543, %v2771, 0.0
    %2782 = vadd.xlane.f32.xlu0 %v2781
    %v2783 = vpop.xlane.xlu0 %2782
    %v2784 = vsel %vm1543, %v2772, 0.0
    %2785 = vadd.xlane.f32.xlu0 %v2784
    %v2786 = vpop.xlane.xlu0 %2785
    %v2787 = vsel %vm1543, %v2773, 0.0
    %2788 = vadd.xlane.f32.xlu0 %v2787
    %v2789 = vpop.xlane.xlu0 %2788
    %v2790 = vsel %vm1543, %v2774, 0.0
    %2791 = vadd.xlane.f32.xlu0 %v2790
    %v2792 = vpop.xlane.xlu0 %2791
    %v2793 = vmul.f32 %v2777, 0.125
    %v2794 = vmul.f32 %v2780, 0.125
    %v2795 = vmul.f32 %v2783, 0.125
    %v2796 = vmul.f32 %v2786, 0.125
    %v2797 = vmul.f32 %v2789, 0.125
    %v2798 = vmul.f32 %v2792, 0.125
    %v2799 = vmul.f32 %v2378, %v2542
    %v2800 = vmul.f32 %v2382, %v2544
    %v2801 = vmul.f32 %v2388, %v2546
    %v2802 = vmul.f32 %v2392, %v2548
    %v2803 = vmul.f32 %v2398, %v2550
    %v2804 = vmul.f32 %v2402, %v2552
    %v2805 = vsel %vm1543, %v2799, 0.0
    %2806 = vadd.xlane.f32.xlu0 %v2805
    %v2807 = vpop.xlane.xlu0 %2806
    %v2808 = vsel %vm1543, %v2800, 0.0
    %2809 = vadd.xlane.f32.xlu0 %v2808
    %v2810 = vpop.xlane.xlu0 %2809
    %v2811 = vsel %vm1543, %v2801, 0.0
    %2812 = vadd.xlane.f32.xlu0 %v2811
    %v2813 = vpop.xlane.xlu0 %2812
    %v2814 = vsel %vm1543, %v2802, 0.0
    %2815 = vadd.xlane.f32.xlu0 %v2814
    %v2816 = vpop.xlane.xlu0 %2815
    %v2817 = vsel %vm1543, %v2803, 0.0
    %2818 = vadd.xlane.f32.xlu0 %v2817
    %v2819 = vpop.xlane.xlu0 %2818
    %v2820 = vsel %vm1543, %v2804, 0.0
    %2821 = vadd.xlane.f32.xlu0 %v2820
    %v2822 = vpop.xlane.xlu0 %2821
    %v2823 = vmul.f32 %v2807, 0.125
    %v2824 = vmul.f32 %v2810, 0.125
    %v2825 = vmul.f32 %v2813, 0.125
    %v2826 = vmul.f32 %v2816, 0.125
    %v2827 = vmul.f32 %v2819, 0.125
    %v2828 = vmul.f32 %v2822, 0.125
    %v2829 = vmul.f32 %v2378, %v2596
    %v2830 = vmul.f32 %v2382, %v2598
    %v2831 = vmul.f32 %v2388, %v2600
    %v2832 = vmul.f32 %v2392, %v2602
    %v2833 = vmul.f32 %v2398, %v2604
    %v2834 = vmul.f32 %v2402, %v2606
    %v2835 = vsel %vm1543, %v2829, 0.0
    %2836 = vadd.xlane.f32.xlu0 %v2835
    %v2837 = vpop.xlane.xlu0 %2836
    %v2838 = vsel %vm1543, %v2830, 0.0
    %2839 = vadd.xlane.f32.xlu0 %v2838
    %v2840 = vpop.xlane.xlu0 %2839
    %v2841 = vsel %vm1543, %v2831, 0.0
    %2842 = vadd.xlane.f32.xlu0 %v2841
    %v2843 = vpop.xlane.xlu0 %2842
    %v2844 = vsel %vm1543, %v2832, 0.0
    %2845 = vadd.xlane.f32.xlu0 %v2844
    %v2846 = vpop.xlane.xlu0 %2845
    %v2847 = vsel %vm1543, %v2833, 0.0
    %2848 = vadd.xlane.f32.xlu0 %v2847
    %v2849 = vpop.xlane.xlu0 %2848
    %v2850 = vsel %vm1543, %v2834, 0.0
    %2851 = vadd.xlane.f32.xlu0 %v2850
    %v2852 = vpop.xlane.xlu0 %2851
    %v2853 = vmul.f32 %v2837, 0.125
    %v2854 = vmul.f32 %v2840, 0.125
    %v2855 = vmul.f32 %v2843, 0.125
    %v2856 = vmul.f32 %v2846, 0.125
    %v2857 = vmul.f32 %v2849, 0.125
    %v2858 = vmul.f32 %v2852, 0.125
    %v2859 = vmax.f32 %v2793, %v2823
    %v2860 = vmax.f32 %v2794, %v2824
    %v2861 = vmax.f32 %v2795, %v2825
    %v2862 = vmax.f32 %v2796, %v2826
    %v2863 = vmax.f32 %v2797, %v2827
    %v2864 = vmax.f32 %v2798, %v2828
    %v2865 = vmax.f32 %v2859, %v2853
    %v2866 = vmax.f32 %v2860, %v2854
    %v2867 = vmax.f32 %v2861, %v2855
    %v2868 = vmax.f32 %v2862, %v2856
    %v2869 = vmax.f32 %v2863, %v2857
    %v2870 = vmax.f32 %v2864, %v2858
    %v2871 = vsub.f32 %v2793, %v2865
    %v2872 = vsub.f32 %v2794, %v2866
    %v2873 = vsub.f32 %v2795, %v2867
    %v2874 = vsub.f32 %v2796, %v2868
    %v2875 = vsub.f32 %v2797, %v2869
    %v2876 = vsub.f32 %v2798, %v2870
    %v2877 = vmul.f32 %v2871, 1.442695
    %v2878 = vpow.pop %v2877
    %v2879 = vmul.f32 %v2872, 1.442695
    %v2880 = vpow.pop %v2879
    %v2881 = vmul.f32 %v2873, 1.442695
    %v2882 = vpow.pop %v2881
    %v2883 = vmul.f32 %v2874, 1.442695
    %v2884 = vpow.pop %v2883
    %v2885 = vmul.f32 %v2875, 1.442695
    %v2886 = vpow.pop %v2885
    %v2887 = vmul.f32 %v2876, 1.442695
    %v2888 = vpow.pop %v2887
    %v2889 = vsub.f32 %v2823, %v2865
    %v2890 = vsub.f32 %v2824, %v2866
    %v2891 = vsub.f32 %v2825, %v2867
    %v2892 = vsub.f32 %v2826, %v2868
    %v2893 = vsub.f32 %v2827, %v2869
    %v2894 = vsub.f32 %v2828, %v2870
    %v2895 = vmul.f32 %v2889, 1.442695
    %v2896 = vpow.pop %v2895
    %v2897 = vmul.f32 %v2890, 1.442695
    %v2898 = vpow.pop %v2897
    %v2899 = vmul.f32 %v2891, 1.442695
    %v2900 = vpow.pop %v2899
    %v2901 = vmul.f32 %v2892, 1.442695
    %v2902 = vpow.pop %v2901
    %v2903 = vmul.f32 %v2893, 1.442695
    %v2904 = vpow.pop %v2903
    %v2905 = vmul.f32 %v2894, 1.442695
    %v2906 = vpow.pop %v2905
    %v2907 = vsub.f32 %v2853, %v2865
    %v2908 = vsub.f32 %v2854, %v2866
    %v2909 = vsub.f32 %v2855, %v2867
    %v2910 = vsub.f32 %v2856, %v2868
    %v2911 = vsub.f32 %v2857, %v2869
    %v2912 = vsub.f32 %v2858, %v2870
    %v2913 = vmul.f32 %v2907, 1.442695
    %v2914 = vpow.pop %v2913
    %v2915 = vmul.f32 %v2908, 1.442695
    %v2916 = vpow.pop %v2915
    %v2917 = vmul.f32 %v2909, 1.442695
    %v2918 = vpow.pop %v2917
    %v2919 = vmul.f32 %v2910, 1.442695
    %v2920 = vpow.pop %v2919
    %v2921 = vmul.f32 %v2911, 1.442695
    %v2922 = vpow.pop %v2921
    %v2923 = vmul.f32 %v2912, 1.442695
    %v2924 = vpow.pop %v2923
    %v2925 = vadd.f32 %v2878, %v2896
    %v2926 = vadd.f32 %v2880, %v2898
    %v2927 = vadd.f32 %v2882, %v2900
    %v2928 = vadd.f32 %v2884, %v2902
    %v2929 = vadd.f32 %v2886, %v2904
    %v2930 = vadd.f32 %v2888, %v2906
    %v2931 = vadd.f32 %v2925, %v2914
    %v2932 = vadd.f32 %v2926, %v2916
    %v2933 = vadd.f32 %v2927, %v2918
    %v2934 = vadd.f32 %v2928, %v2920
    %v2935 = vadd.f32 %v2929, %v2922
    %v2936 = vadd.f32 %v2930, %v2924
    %v2937 = vmul.f32 %v2878, %v2305
    %v2938 = vmul.f32 %v2880, %v2309
    %v2939 = vmul.f32 %v2882, %v2315
    %v2940 = vmul.f32 %v2884, %v2319
    %v2941 = vmul.f32 %v2886, %v2325
    %v2942 = vmul.f32 %v2888, %v2329
    %v2943 = vmul.f32 %v2896, %v2380
    %v2944 = vmul.f32 %v2898, %v2384
    %v2945 = vmul.f32 %v2900, %v2390
    %v2946 = vmul.f32 %v2902, %v2394
    %v2947 = vmul.f32 %v2904, %v2400
    %v2948 = vmul.f32 %v2906, %v2404
    %v2949 = vadd.f32 %v2937, %v2943
    %v2950 = vadd.f32 %v2938, %v2944
    %v2951 = vadd.f32 %v2939, %v2945
    %v2952 = vadd.f32 %v2940, %v2946
    %v2953 = vadd.f32 %v2941, %v2947
    %v2954 = vadd.f32 %v2942, %v2948
    %v2955 = vmul.f32 %v2914, %v2455
    %v2956 = vmul.f32 %v2916, %v2459
    %v2957 = vmul.f32 %v2918, %v2465
    %v2958 = vmul.f32 %v2920, %v2469
    %v2959 = vmul.f32 %v2922, %v2475
    %v2960 = vmul.f32 %v2924, %v2479
    %v2961 = vadd.f32 %v2949, %v2955
    %v2962 = vadd.f32 %v2950, %v2956
    %v2963 = vadd.f32 %v2951, %v2957
    %v2964 = vadd.f32 %v2952, %v2958
    %v2965 = vadd.f32 %v2953, %v2959
    %v2966 = vadd.f32 %v2954, %v2960
    %v2967 = vrcp.pop %v2931
    %v2968 = vmul.f32 %v2961, %v2967
    %v2969 = vrcp.pop %v2932
    %v2970 = vmul.f32 %v2962, %v2969
    %v2971 = vrcp.pop %v2933
    %v2972 = vmul.f32 %v2963, %v2971
    %v2973 = vrcp.pop %v2934
    %v2974 = vmul.f32 %v2964, %v2973
    %v2975 = vrcp.pop %v2935
    %v2976 = vmul.f32 %v2965, %v2975
    %v2977 = vrcp.pop %v2936
    %v2978 = vmul.f32 %v2966, %v2977
    %v2979 = vadd.f32 %v2763, %v2968
    %v2980 = vadd.f32 %v2764, %v2970
    %v2981 = vadd.f32 %v2765, %v2972
    %v2982 = vadd.f32 %v2766, %v2974
    %v2983 = vadd.f32 %v2767, %v2976
    %v2984 = vadd.f32 %v2768, %v2978
    %v2985 = vmul.f32 %v2453, %v2488
    %v2986 = vmul.f32 %v2457, %v2490
    %v2987 = vmul.f32 %v2463, %v2492
    %v2988 = vmul.f32 %v2467, %v2494
    %v2989 = vmul.f32 %v2473, %v2496
    %v2990 = vmul.f32 %v2477, %v2498
    %v2991 = vsel %vm1543, %v2985, 0.0
    %2992 = vadd.xlane.f32.xlu0 %v2991
    %v2993 = vpop.xlane.xlu0 %2992
    %v2994 = vsel %vm1543, %v2986, 0.0
    %2995 = vadd.xlane.f32.xlu0 %v2994
    %v2996 = vpop.xlane.xlu0 %2995
    %v2997 = vsel %vm1543, %v2987, 0.0
    %2998 = vadd.xlane.f32.xlu0 %v2997
    %v2999 = vpop.xlane.xlu0 %2998
    %v3000 = vsel %vm1543, %v2988, 0.0
    %3001 = vadd.xlane.f32.xlu0 %v3000
    %v3002 = vpop.xlane.xlu0 %3001
    %v3003 = vsel %vm1543, %v2989, 0.0
    %3004 = vadd.xlane.f32.xlu0 %v3003
    %v3005 = vpop.xlane.xlu0 %3004
    %v3006 = vsel %vm1543, %v2990, 0.0
    %3007 = vadd.xlane.f32.xlu0 %v3006
    %v3008 = vpop.xlane.xlu0 %3007
    %v3009 = vmul.f32 %v2993, 0.125
    %v3010 = vmul.f32 %v2996, 0.125
    %v3011 = vmul.f32 %v2999, 0.125
    %v3012 = vmul.f32 %v3002, 0.125
    %v3013 = vmul.f32 %v3005, 0.125
    %v3014 = vmul.f32 %v3008, 0.125
    %v3015 = vmul.f32 %v2453, %v2542
    %v3016 = vmul.f32 %v2457, %v2544
    %v3017 = vmul.f32 %v2463, %v2546
    %v3018 = vmul.f32 %v2467, %v2548
    %v3019 = vmul.f32 %v2473, %v2550
    %v3020 = vmul.f32 %v2477, %v2552
    %v3021 = vsel %vm1543, %v3015, 0.0
    %3022 = vadd.xlane.f32.xlu0 %v3021
    %v3023 = vpop.xlane.xlu0 %3022
    %v3024 = vsel %vm1543, %v3016, 0.0
    %3025 = vadd.xlane.f32.xlu0 %v3024
    %v3026 = vpop.xlane.xlu0 %3025
    %v3027 = vsel %vm1543, %v3017, 0.0
    %3028 = vadd.xlane.f32.xlu0 %v3027
    %v3029 = vpop.xlane.xlu0 %3028
    %v3030 = vsel %vm1543, %v3018, 0.0
    %3031 = vadd.xlane.f32.xlu0 %v3030
    %v3032 = vpop.xlane.xlu0 %3031
    %v3033 = vsel %vm1543, %v3019, 0.0
    %3034 = vadd.xlane.f32.xlu0 %v3033
    %v3035 = vpop.xlane.xlu0 %3034
    %v3036 = vsel %vm1543, %v3020, 0.0
    %3037 = vadd.xlane.f32.xlu0 %v3036
    %v3038 = vpop.xlane.xlu0 %3037
    %v3039 = vmul.f32 %v3023, 0.125
    %v3040 = vmul.f32 %v3026, 0.125
    %v3041 = vmul.f32 %v3029, 0.125
    %v3042 = vmul.f32 %v3032, 0.125
    %v3043 = vmul.f32 %v3035, 0.125
    %v3044 = vmul.f32 %v3038, 0.125
    %v3045 = vmul.f32 %v2453, %v2596
    %v3046 = vmul.f32 %v2457, %v2598
    %v3047 = vmul.f32 %v2463, %v2600
    %v3048 = vmul.f32 %v2467, %v2602
    %v3049 = vmul.f32 %v2473, %v2604
    %v3050 = vmul.f32 %v2477, %v2606
    %v3051 = vsel %vm1543, %v3045, 0.0
    %3052 = vadd.xlane.f32.xlu0 %v3051
    %v3053 = vpop.xlane.xlu0 %3052
    %v3054 = vsel %vm1543, %v3046, 0.0
    %3055 = vadd.xlane.f32.xlu0 %v3054
    %v3056 = vpop.xlane.xlu0 %3055
    %v3057 = vsel %vm1543, %v3047, 0.0
    %3058 = vadd.xlane.f32.xlu0 %v3057
    %v3059 = vpop.xlane.xlu0 %3058
    %v3060 = vsel %vm1543, %v3048, 0.0
    %3061 = vadd.xlane.f32.xlu0 %v3060
    %v3062 = vpop.xlane.xlu0 %3061
    %v3063 = vsel %vm1543, %v3049, 0.0
    %3064 = vadd.xlane.f32.xlu0 %v3063
    %v3065 = vpop.xlane.xlu0 %3064
    %v3066 = vsel %vm1543, %v3050, 0.0
    %3067 = vadd.xlane.f32.xlu0 %v3066
    %v3068 = vpop.xlane.xlu0 %3067
    %v3069 = vmul.f32 %v3053, 0.125
    %v3070 = vmul.f32 %v3056, 0.125
    %v3071 = vmul.f32 %v3059, 0.125
    %v3072 = vmul.f32 %v3062, 0.125
    %v3073 = vmul.f32 %v3065, 0.125
    %v3074 = vmul.f32 %v3068, 0.125
    %v3075 = vmax.f32 %v3009, %v3039
    %v3076 = vmax.f32 %v3010, %v3040
    %v3077 = vmax.f32 %v3011, %v3041
    %v3078 = vmax.f32 %v3012, %v3042
    %v3079 = vmax.f32 %v3013, %v3043
    %v3080 = vmax.f32 %v3014, %v3044
    %v3081 = vmax.f32 %v3075, %v3069
    %v3082 = vmax.f32 %v3076, %v3070
    %v3083 = vmax.f32 %v3077, %v3071
    %v3084 = vmax.f32 %v3078, %v3072
    %v3085 = vmax.f32 %v3079, %v3073
    %v3086 = vmax.f32 %v3080, %v3074
    %v3087 = vsub.f32 %v3009, %v3081
    %v3088 = vsub.f32 %v3010, %v3082
    %v3089 = vsub.f32 %v3011, %v3083
    %v3090 = vsub.f32 %v3012, %v3084
    %v3091 = vsub.f32 %v3013, %v3085
    %v3092 = vsub.f32 %v3014, %v3086
    %v3093 = vmul.f32 %v3087, 1.442695
    %v3094 = vpow.pop %v3093
    %v3095 = vmul.f32 %v3088, 1.442695
    %v3096 = vpow.pop %v3095
    %v3097 = vmul.f32 %v3089, 1.442695
    %v3098 = vpow.pop %v3097
    %v3099 = vmul.f32 %v3090, 1.442695
    %v3100 = vpow.pop %v3099
    %v3101 = vmul.f32 %v3091, 1.442695
    %v3102 = vpow.pop %v3101
    %v3103 = vmul.f32 %v3092, 1.442695
    %v3104 = vpow.pop %v3103
    %v3105 = vsub.f32 %v3039, %v3081
    %v3106 = vsub.f32 %v3040, %v3082
    %v3107 = vsub.f32 %v3041, %v3083
    %v3108 = vsub.f32 %v3042, %v3084
    %v3109 = vsub.f32 %v3043, %v3085
    %v3110 = vsub.f32 %v3044, %v3086
    %v3111 = vmul.f32 %v3105, 1.442695
    %v3112 = vpow.pop %v3111
    %v3113 = vmul.f32 %v3106, 1.442695
    %v3114 = vpow.pop %v3113
    %v3115 = vmul.f32 %v3107, 1.442695
    %v3116 = vpow.pop %v3115
    %v3117 = vmul.f32 %v3108, 1.442695
    %v3118 = vpow.pop %v3117
    %v3119 = vmul.f32 %v3109, 1.442695
    %v3120 = vpow.pop %v3119
    %v3121 = vmul.f32 %v3110, 1.442695
    %v3122 = vpow.pop %v3121
    %v3123 = vsub.f32 %v3069, %v3081
    %v3124 = vsub.f32 %v3070, %v3082
    %v3125 = vsub.f32 %v3071, %v3083
    %v3126 = vsub.f32 %v3072, %v3084
    %v3127 = vsub.f32 %v3073, %v3085
    %v3128 = vsub.f32 %v3074, %v3086
    %v3129 = vmul.f32 %v3123, 1.442695
    %v3130 = vpow.pop %v3129
    %v3131 = vmul.f32 %v3124, 1.442695
    %v3132 = vpow.pop %v3131
    %v3133 = vmul.f32 %v3125, 1.442695
    %v3134 = vpow.pop %v3133
    %v3135 = vmul.f32 %v3126, 1.442695
    %v3136 = vpow.pop %v3135
    %v3137 = vmul.f32 %v3127, 1.442695
    %v3138 = vpow.pop %v3137
    %v3139 = vmul.f32 %v3128, 1.442695
    %v3140 = vpow.pop %v3139
    %v3141 = vadd.f32 %v3094, %v3112
    %v3142 = vadd.f32 %v3096, %v3114
    %v3143 = vadd.f32 %v3098, %v3116
    %v3144 = vadd.f32 %v3100, %v3118
    %v3145 = vadd.f32 %v3102, %v3120
    %v3146 = vadd.f32 %v3104, %v3122
    %v3147 = vadd.f32 %v3141, %v3130
    %v3148 = vadd.f32 %v3142, %v3132
    %v3149 = vadd.f32 %v3143, %v3134
    %v3150 = vadd.f32 %v3144, %v3136
    %v3151 = vadd.f32 %v3145, %v3138
    %v3152 = vadd.f32 %v3146, %v3140
    %v3153 = vmul.f32 %v3094, %v2305
    %v3154 = vmul.f32 %v3096, %v2309
    %v3155 = vmul.f32 %v3098, %v2315
    %v3156 = vmul.f32 %v3100, %v2319
    %v3157 = vmul.f32 %v3102, %v2325
    %v3158 = vmul.f32 %v3104, %v2329
    %v3159 = vmul.f32 %v3112, %v2380
    %v3160 = vmul.f32 %v3114, %v2384
    %v3161 = vmul.f32 %v3116, %v2390
    %v3162 = vmul.f32 %v3118, %v2394
    %v3163 = vmul.f32 %v3120, %v2400
    %v3164 = vmul.f32 %v3122, %v2404
    %v3165 = vadd.f32 %v3153, %v3159
    %v3166 = vadd.f32 %v3154, %v3160
    %v3167 = vadd.f32 %v3155, %v3161
    %v3168 = vadd.f32 %v3156, %v3162
    %v3169 = vadd.f32 %v3157, %v3163
    %v3170 = vadd.f32 %v3158, %v3164
    %v3171 = vmul.f32 %v3130, %v2455
    %v3172 = vmul.f32 %v3132, %v2459
    %v3173 = vmul.f32 %v3134, %v2465
    %v3174 = vmul.f32 %v3136, %v2469
    %v3175 = vmul.f32 %v3138, %v2475
    %v3176 = vmul.f32 %v3140, %v2479
    %v3177 = vadd.f32 %v3165, %v3171
    %v3178 = vadd.f32 %v3166, %v3172
    %v3179 = vadd.f32 %v3167, %v3173
    %v3180 = vadd.f32 %v3168, %v3174
    %v3181 = vadd.f32 %v3169, %v3175
    %v3182 = vadd.f32 %v3170, %v3176
    %v3183 = vrcp.pop %v3147
    %v3184 = vmul.f32 %v3177, %v3183
    %v3185 = vrcp.pop %v3148
    %v3186 = vmul.f32 %v3178, %v3185
    %v3187 = vrcp.pop %v3149
    %v3188 = vmul.f32 %v3179, %v3187
    %v3189 = vrcp.pop %v3150
    %v3190 = vmul.f32 %v3180, %v3189
    %v3191 = vrcp.pop %v3151
    %v3192 = vmul.f32 %v3181, %v3191
    %v3193 = vrcp.pop %v3152
    %v3194 = vmul.f32 %v3182, %v3193
    %v3195 = vadd.f32 %v2979, %v3184
    %v3196 = vadd.f32 %v2980, %v3186
    %v3197 = vadd.f32 %v2981, %v3188
    %v3198 = vadd.f32 %v2982, %v3190
    %v3199 = vadd.f32 %v2983, %v3192
    %v3200 = vadd.f32 %v2984, %v3194
    %v3201 = vmul.f32 %v3195, 0.33333334
    %v3202 = vmul.f32 %v3196, 0.33333334
    %v3203 = vmul.f32 %v3197, 0.33333334
    %v3204 = vmul.f32 %v3198, 0.33333334
    %v3205 = vmul.f32 %v3199, 0.33333334
    %v3206 = vmul.f32 %v3200, 0.33333334
    %v3207 = vld [vmem:[#allocation36] sm:$0xf]
    %v3208 = vld [vmem:[#allocation36 + $0x4] sm:$0xf]
    %v3209 = vld [vmem:[#allocation36 + $0x8] sm:$0xf]
    %v3210 = vld [vmem:[#allocation36 + $0xc] sm:$0xf]
    %v3211 = vld [vmem:[#allocation37] sm:$0x1]
    %v3213 = vlaneseq
    %v3214 = vshrl.u32 %v3213, 7
    %v3215 = vsub.s32 0, %v3214
    %v3216 = vrot.slane %v3211, %v3215
    %v3222 = vunpack.c.l.b16 %v3207
    %v3223 = vunpack.c.l.b16 %v3208
    %v3224 = vunpack.c.l.b16 %v3209
    %v3225 = vunpack.c.l.b16 %v3210
    %v3226 = vpack.c.b16 %v3223, %v3222
    %v3227 = vpack.c.b16 %v3225, %v3224
    %3230 = vmatprep.subr.bf16.mxu0 0
    %3231 = vmatpush1.bf16.msra.mxu0 %v3226
    %3232 = vmatprep.subr.bf16.mxu0 0
    %3233 = vmatpush1.bf16.msra.mxu0 %v3227
    %3234 = vmatprep.subr.bf16.mxu0 0
    %3235 = vmatpush1.bf16.msra.mxu0 0
    %3236 = vmatprep.subr.bf16.mxu0 0
    %3237 = vmatpush1.bf16.msra.mxu0 0
    %3238 = vmatprep.subr.bf16.mxu0 0
    %3239 = vmatpush1.bf16.msra.mxu0 0
    %3240 = vmatprep.subr.bf16.mxu0 0
    %3241 = vmatpush1.bf16.msra.mxu0 0
    %3242 = vmatprep.subr.bf16.mxu0 0
    %3243 = vmatpush1.bf16.msra.mxu0 0
    %3244 = vmatprep.subr.bf16.mxu0 0
    %3245 = vmatpush1.bf16.msra.mxu0 0
    %3246 = vmatprep.subr.bf16.mxu0 0
    %3247 = vmatpush1.bf16.msra.mxu0 0
    %3248 = vmatprep.subr.bf16.mxu0 0
    %3249 = vmatpush1.bf16.msra.mxu0 0
    %3250 = vmatprep.subr.bf16.mxu0 0
    %3251 = vmatpush1.bf16.msra.mxu0 0
    %3252 = vmatprep.subr.bf16.mxu0 0
    %3253 = vmatpush1.bf16.msra.mxu0 0
    %3254 = vmatprep.subr.bf16.mxu0 0
    %3255 = vmatpush1.bf16.msra.mxu0 0
    %3256 = vmatprep.subr.bf16.mxu0 0
    %3257 = vmatpush1.bf16.msra.mxu0 0
    %3258 = vmatprep.subr.bf16.mxu0 0
    %3259 = vmatpush1.bf16.msra.mxu0 0
    %3260 = vmatprep.subr.bf16.mxu0 0
    %3261 = vmatpush1.bf16.msra.mxu0 0
    %3262 = vmatprep.mubr.bf16.mxu0 0
    %3263 = vmatmul.mubr.bf16.gmra.mrb[0].mxu0 %v692
    %v3264 = vpop.f32.mrb[0].mxu0
    %v3265 = vadd.f32 %v3216, %v3264
    %v3266 = vpop.f32.mrb[0].mxu0
    %v3267 = vpop.f32.mrb[0].mxu0
    %v3268 = vadd.f32 %v3216, %v3267
    %v3269 = vpop.f32.mrb[0].mxu0
    %3270 = vmatprep.mubr.bf16.mxu0 0
    %3271 = vmatmul.mubr.bf16.gmra.mrb[0].mxu0 %v695
    %v3272 = vpop.f32.mrb[0].mxu0
    %v3273 = vadd.f32 %v3216, %v3272
    %v3274 = vpop.f32.mrb[0].mxu0
    %v3275 = vpop.f32.mrb[0].mxu0
    %v3276 = vadd.f32 %v3216, %v3275
    %v3277 = vpop.f32.mrb[0].mxu0
    %3278 = vmatprep.mubr.bf16.mxu0 0
    %3279 = vmatmul.mubr.bf16.gmra.mrb[0].mxu0 %v698
    %v3280 = vpop.f32.mrb[0].mxu0
    %v3281 = vadd.f32 %v3216, %v3280
    %v3282 = vpop.f32.mrb[0].mxu0
    %v3283 = vpop.f32.mrb[0].mxu0
    %v3284 = vadd.f32 %v3216, %v3283
    %v3285 = vpop.f32.mrb[0].mxu0
    %3286 = vdwg.mxu0
    %v3287 = vmax.f32 %v3265, 0.0
    %v3288 = vmax.f32 %v3268, 0.0
    %v3289 = vmax.f32 %v3273, 0.0
    %v3290 = vmax.f32 %v3276, 0.0
    %v3291 = vmax.f32 %v3281, 0.0
    %v3292 = vmax.f32 %v3284, 0.0
    %v3293 = vpack.c.bf16 %v3288, %v3287
    %v3294 = vpack.c.bf16 %v3290, %v3289
    %v3295 = vpack.c.bf16 %v3292, %v3291
    %v3296 = vld [vmem:[#allocation39] sm:$0xff]
    %v3297 = vld [vmem:[#allocation39 + $0x8] sm:$0xff]
    %v3298 = vld [vmem:[#allocation39 + $0x10] sm:$0xff]
    %v3299 = vld [vmem:[#allocation39 + $0x18] sm:$0xff]
    %v3300 = vld [vmem:[#allocation40] sm:$0x3]
    %v3302 = vlaneseq
    %v3303 = vshrl.u32 %v3302, 7
    %v3304 = vsub.s32 0, %v3303
    %v3305 = vrot.slane %v3300, %v3304
    %v3306 = vlaneseq
    %v3307 = vshrl.u32 %v3306, 7
    %v3308 = vsub.s32 1, %v3307
    %v3309 = vrot.slane %v3300, %v3308
    %v3316 = vunpack.c.l.b16 %v3296
    %v3317 = vunpack.c.h.b16 %v3296
    %v3318 = vunpack.c.l.b16 %v3297
    %v3319 = vunpack.c.h.b16 %v3297
    %v3320 = vunpack.c.l.b16 %v3298
    %v3321 = vunpack.c.h.b16 %v3298
    %v3322 = vunpack.c.l.b16 %v3299
    %v3323 = vunpack.c.h.b16 %v3299
    %v3324 = vpack.c.b16 %v3318, %v3316
    %v3325 = vpack.c.b16 %v3319, %v3317
    %v3326 = vpack.c.b16 %v3322, %v3320
    %v3327 = vpack.c.b16 %v3323, %v3321
    %v3333 = vsel %vm690, %v3293, 0
    %v3336 = vsel %vm690, %v3294, 0
    %v3339 = vsel %vm690, %v3295, 0
    %3341 = vmatprep.subr.bf16.mxu0 %v3325
    %3342 = vmatpush1.bf16.msra.mxu0 %v3324
    %3343 = vmatprep.subr.bf16.mxu0 %v3327
    %3344 = vmatpush1.bf16.msra.mxu0 %v3326
    %3345 = vmatprep.subr.bf16.mxu0 0
    %3346 = vmatpush1.bf16.msra.mxu0 0
    %3347 = vmatprep.subr.bf16.mxu0 0
    %3348 = vmatpush1.bf16.msra.mxu0 0
    %3349 = vmatprep.subr.bf16.mxu0 0
    %3350 = vmatpush1.bf16.msra.mxu0 0
    %3351 = vmatprep.subr.bf16.mxu0 0
    %3352 = vmatpush1.bf16.msra.mxu0 0
    %3353 = vmatprep.subr.bf16.mxu0 0
    %3354 = vmatpush1.bf16.msra.mxu0 0
    %3355 = vmatprep.subr.bf16.mxu0 0
    %3356 = vmatpush1.bf16.msra.mxu0 0
    %3357 = vmatprep.subr.bf16.mxu0 0
    %3358 = vmatpush1.bf16.msra.mxu0 0
    %3359 = vmatprep.subr.bf16.mxu0 0
    %3360 = vmatpush1.bf16.msra.mxu0 0
    %3361 = vmatprep.subr.bf16.mxu0 0
    %3362 = vmatpush1.bf16.msra.mxu0 0
    %3363 = vmatprep.subr.bf16.mxu0 0
    %3364 = vmatpush1.bf16.msra.mxu0 0
    %3365 = vmatprep.subr.bf16.mxu0 0
    %3366 = vmatpush1.bf16.msra.mxu0 0
    %3367 = vmatprep.subr.bf16.mxu0 0
    %3368 = vmatpush1.bf16.msra.mxu0 0
    %3369 = vmatprep.subr.bf16.mxu0 0
    %3370 = vmatpush1.bf16.msra.mxu0 0
    %3371 = vmatprep.subr.bf16.mxu0 0
    %3372 = vmatpush1.bf16.msra.mxu0 0
    %3373 = vmatprep.mubr.bf16.mxu0 0
    %3374 = vmatmul.mubr.bf16.gmra.mrb[0].mxu0 %v3333
    %v3375 = vpop.f32.mrb[0].mxu0
    %v3376 = vadd.f32 %v3305, %v3375
    %v3377 = vpop.f32.mrb[0].mxu0
    %v3378 = vadd.f32 %v3309, %v3377
    %v3379 = vpop.f32.mrb[0].mxu0
    %v3380 = vadd.f32 %v3305, %v3379
    %v3381 = vpop.f32.mrb[0].mxu0
    %v3382 = vadd.f32 %v3309, %v3381
    %3383 = vmatprep.mubr.bf16.mxu0 0
    %3384 = vmatmul.mubr.bf16.gmra.mrb[0].mxu0 %v3336
    %v3385 = vpop.f32.mrb[0].mxu0
    %v3386 = vadd.f32 %v3305, %v3385
    %v3387 = vpop.f32.mrb[0].mxu0
    %v3388 = vadd.f32 %v3309, %v3387
    %v3389 = vpop.f32.mrb[0].mxu0
    %v3390 = vadd.f32 %v3305, %v3389
    %v3391 = vpop.f32.mrb[0].mxu0
    %v3392 = vadd.f32 %v3309, %v3391
    %3393 = vmatprep.mubr.bf16.mxu0 0
    %3394 = vmatmul.mubr.bf16.gmra.mrb[0].mxu0 %v3339
    %v3395 = vpop.f32.mrb[0].mxu0
    %v3396 = vadd.f32 %v3305, %v3395
    %v3397 = vpop.f32.mrb[0].mxu0
    %v3398 = vadd.f32 %v3309, %v3397
    %v3399 = vpop.f32.mrb[0].mxu0
    %v3400 = vadd.f32 %v3305, %v3399
    %v3401 = vpop.f32.mrb[0].mxu0
    %v3402 = vadd.f32 %v3309, %v3401
    %3403 = vdwg.mxu0
    %v3404 = vmax.f32 %v3376, 0.0
    %v3405 = vmax.f32 %v3378, 0.0
    %v3406 = vmax.f32 %v3380, 0.0
    %v3407 = vmax.f32 %v3382, 0.0
    %v3408 = vmax.f32 %v3386, 0.0
    %v3409 = vmax.f32 %v3388, 0.0
    %v3410 = vmax.f32 %v3390, 0.0
    %v3411 = vmax.f32 %v3392, 0.0
    %v3412 = vmax.f32 %v3396, 0.0
    %v3413 = vmax.f32 %v3398, 0.0
    %v3414 = vmax.f32 %v3400, 0.0
    %v3415 = vmax.f32 %v3402, 0.0
    %v3416 = vpack.c.bf16 %v3406, %v3404
    %v3417 = vpack.c.bf16 %v3407, %v3405
    %v3418 = vpack.c.bf16 %v3410, %v3408
    %v3419 = vpack.c.bf16 %v3411, %v3409
    %v3420 = vpack.c.bf16 %v3414, %v3412
    %v3421 = vpack.c.bf16 %v3415, %v3413
    %v3422 = vld [vmem:[#allocation42] sm:$0xf]
    %v3423 = vld [vmem:[#allocation42 + $0x4] sm:$0xf]
    %v3424 = vld [vmem:[#allocation42 + $0x8] sm:$0xf]
    %v3425 = vld [vmem:[#allocation42 + $0xc] sm:$0xf]
    %v3426 = vld [vmem:[#allocation42 + $0x10] sm:$0xf]
    %v3427 = vld [vmem:[#allocation42 + $0x14] sm:$0xf]
    %v3428 = vld [vmem:[#allocation42 + $0x18] sm:$0xf]
    %v3429 = vld [vmem:[#allocation42 + $0x1c] sm:$0xf]
    %v3430 = vld [vmem:[#allocation42 + $0x20] sm:$0xf]
    %v3431 = vld [vmem:[#allocation42 + $0x24] sm:$0xf]
    %v3432 = vld [vmem:[#allocation42 + $0x28] sm:$0xf]
    %v3433 = vld [vmem:[#allocation42 + $0x2c] sm:$0xf]
    %v3434 = vld [vmem:[#allocation42 + $0x30] sm:$0xf]
    %v3435 = vld [vmem:[#allocation42 + $0x34] sm:$0xf]
    %v3436 = vld [vmem:[#allocation42 + $0x38] sm:$0xf]
    %v3437 = vld [vmem:[#allocation42 + $0x3c] sm:$0xf]
    %v3438 = vld [vmem:[#allocation42 + $0x40] sm:$0xf]
    %v3439 = vld [vmem:[#allocation42 + $0x44] sm:$0xf]
    %v3440 = vld [vmem:[#allocation42 + $0x48] sm:$0xf]
    %v3441 = vld [vmem:[#allocation42 + $0x4c] sm:$0xf]
    %v3442 = vld [vmem:[#allocation42 + $0x50] sm:$0xf]
    %v3443 = vld [vmem:[#allocation42 + $0x54] sm:$0xf]
    %v3444 = vld [vmem:[#allocation42 + $0x58] sm:$0xf]
    %v3445 = vld [vmem:[#allocation42 + $0x5c] sm:$0xf]
    %v3446 = vld [vmem:[#allocation42 + $0x60] sm:$0xf]
    %v3447 = vld [vmem:[#allocation42 + $0x64] sm:$0xf]
    %v3448 = vld [vmem:[#allocation42 + $0x68] sm:$0xf]
    %v3449 = vld [vmem:[#allocation42 + $0x6c] sm:$0xf]
    %v3450 = vld [vmem:[#allocation42 + $0x70] sm:$0xf]
    %v3451 = vld [vmem:[#allocation42 + $0x74] sm:$0xf]
    %v3452 = vld [vmem:[#allocation42 + $0x78] sm:$0xf]
    %v3453 = vld [vmem:[#allocation42 + $0x7c] sm:$0xf]
    %v3454 = vld [vmem:[#allocation43] sm:$0x1]
    %v3456 = vlaneseq
    %v3457 = vshrl.u32 %v3456, 7
    %v3458 = vsub.s32 0, %v3457
    %v3459 = vrot.slane %v3454, %v3458
    %v3493 = vunpack.c.l.b16 %v3422
    %v3494 = vunpack.c.l.b16 %v3423
    %v3495 = vunpack.c.l.b16 %v3424
    %v3496 = vunpack.c.l.b16 %v3425
    %v3497 = vunpack.c.l.b16 %v3426
    %v3498 = vunpack.c.l.b16 %v3427
    %v3499 = vunpack.c.l.b16 %v3428
    %v3500 = vunpack.c.l.b16 %v3429
    %v3501 = vunpack.c.l.b16 %v3430
    %v3502 = vunpack.c.l.b16 %v3431
    %v3503 = vunpack.c.l.b16 %v3432
    %v3504 = vunpack.c.l.b16 %v3433
    %v3505 = vunpack.c.l.b16 %v3434
    %v3506 = vunpack.c.l.b16 %v3435
    %v3507 = vunpack.c.l.b16 %v3436
    %v3508 = vunpack.c.l.b16 %v3437
    %v3509 = vunpack.c.l.b16 %v3438
    %v3510 = vunpack.c.l.b16 %v3439
    %v3511 = vunpack.c.l.b16 %v3440
    %v3512 = vunpack.c.l.b16 %v3441
    %v3513 = vunpack.c.l.b16 %v3442
    %v3514 = vunpack.c.l.b16 %v3443
    %v3515 = vunpack.c.l.b16 %v3444
    %v3516 = vunpack.c.l.b16 %v3445
    %v3517 = vunpack.c.l.b16 %v3446
    %v3518 = vunpack.c.l.b16 %v3447
    %v3519 = vunpack.c.l.b16 %v3448
    %v3520 = vunpack.c.l.b16 %v3449
    %v3521 = vunpack.c.l.b16 %v3450
    %v3522 = vunpack.c.l.b16 %v3451
    %v3523 = vunpack.c.l.b16 %v3452
    %v3524 = vunpack.c.l.b16 %v3453
    %v3525 = vpack.c.b16 %v3494, %v3493
    %v3526 = vpack.c.b16 %v3496, %v3495
    %v3527 = vpack.c.b16 %v3498, %v3497
    %v3528 = vpack.c.b16 %v3500, %v3499
    %v3529 = vpack.c.b16 %v3502, %v3501
    %v3530 = vpack.c.b16 %v3504, %v3503
    %v3531 = vpack.c.b16 %v3506, %v3505
    %v3532 = vpack.c.b16 %v3508, %v3507
    %v3533 = vpack.c.b16 %v3510, %v3509
    %v3534 = vpack.c.b16 %v3512, %v3511
    %v3535 = vpack.c.b16 %v3514, %v3513
    %v3536 = vpack.c.b16 %v3516, %v3515
    %v3537 = vpack.c.b16 %v3518, %v3517
    %v3538 = vpack.c.b16 %v3520, %v3519
    %v3539 = vpack.c.b16 %v3522, %v3521
    %v3540 = vpack.c.b16 %v3524, %v3523
    %3557 = vmatprep.subr.bf16.mxu0 0
    %3558 = vmatpush1.bf16.msra.mxu0 %v3525
    %3559 = vmatprep.subr.bf16.mxu0 0
    %3560 = vmatpush1.bf16.msra.mxu0 %v3526
    %3561 = vmatprep.subr.bf16.mxu0 0
    %3562 = vmatpush1.bf16.msra.mxu0 %v3527
    %3563 = vmatprep.subr.bf16.mxu0 0
    %3564 = vmatpush1.bf16.msra.mxu0 %v3528
    %3565 = vmatprep.subr.bf16.mxu0 0
    %3566 = vmatpush1.bf16.msra.mxu0 %v3529
    %3567 = vmatprep.subr.bf16.mxu0 0
    %3568 = vmatpush1.bf16.msra.mxu0 %v3530
    %3569 = vmatprep.subr.bf16.mxu0 0
    %3570 = vmatpush1.bf16.msra.mxu0 %v3531
    %3571 = vmatprep.subr.bf16.mxu0 0
    %3572 = vmatpush1.bf16.msra.mxu0 %v3532
    %3573 = vmatprep.subr.bf16.mxu0 0
    %3574 = vmatpush1.bf16.msra.mxu0 %v3533
    %3575 = vmatprep.subr.bf16.mxu0 0
    %3576 = vmatpush1.bf16.msra.mxu0 %v3534
    %3577 = vmatprep.subr.bf16.mxu0 0
    %3578 = vmatpush1.bf16.msra.mxu0 %v3535
    %3579 = vmatprep.subr.bf16.mxu0 0
    %3580 = vmatpush1.bf16.msra.mxu0 %v3536
    %3581 = vmatprep.subr.bf16.mxu0 0
    %3582 = vmatpush1.bf16.msra.mxu0 %v3537
    %3583 = vmatprep.subr.bf16.mxu0 0
    %3584 = vmatpush1.bf16.msra.mxu0 %v3538
    %3585 = vmatprep.subr.bf16.mxu0 0
    %3586 = vmatpush1.bf16.msra.mxu0 %v3539
    %3587 = vmatprep.subr.bf16.mxu0 0
    %3588 = vmatpush1.bf16.msra.mxu0 %v3540
    %3589 = vmatprep.mubr.bf16.mxu0 %v3417
    %3590 = vmatmul.mubr.bf16.gmra.mrb[0].mxu0 %v3416
    %v3591 = vpop.f32.mrb[0].mxu0
    %v3592 = vadd.f32 %v3459, %v3591
    %v3593 = vpop.f32.mrb[0].mxu0
    %v3594 = vpop.f32.mrb[0].mxu0
    %v3595 = vadd.f32 %v3459, %v3594
    %v3596 = vpop.f32.mrb[0].mxu0
    %3597 = vmatprep.mubr.bf16.mxu0 %v3419
    %3598 = vmatmul.mubr.bf16.gmra.mrb[0].mxu0 %v3418
    %v3599 = vpop.f32.mrb[0].mxu0
    %v3600 = vadd.f32 %v3459, %v3599
    %v3601 = vpop.f32.mrb[0].mxu0
    %v3602 = vpop.f32.mrb[0].mxu0
    %v3603 = vadd.f32 %v3459, %v3602
    %v3604 = vpop.f32.mrb[0].mxu0
    %3605 = vmatprep.mubr.bf16.mxu0 %v3421
    %3606 = vmatmul.mubr.bf16.gmra.mrb[0].mxu0 %v3420
    %v3607 = vpop.f32.mrb[0].mxu0
    %v3608 = vadd.f32 %v3459, %v3607
    %v3609 = vpop.f32.mrb[0].mxu0
    %v3610 = vpop.f32.mrb[0].mxu0
    %v3611 = vadd.f32 %v3459, %v3610
    %v3612 = vpop.f32.mrb[0].mxu0
    %3613 = vdwg.mxu0
    %v3614 = vld [vmem:[#allocation45] sm:$0xf]
    %v3615 = vld [vmem:[#allocation45 + $0x4] sm:$0xf]
    %v3616 = vld [vmem:[#allocation45 + $0x8] sm:$0xf]
    %v3617 = vld [vmem:[#allocation45 + $0xc] sm:$0xf]
    %v3618 = vld [vmem:[#allocation45 + $0x10] sm:$0xf]
    %v3619 = vld [vmem:[#allocation45 + $0x14] sm:$0xf]
    %v3620 = vld [vmem:[#allocation46] sm:$0x1]
    %v3622 = vlaneseq
    %v3623 = vshrl.u32 %v3622, 7
    %v3624 = vsub.s32 0, %v3623
    %v3625 = vrot.slane %v3620, %v3624
    %v3633 = vunpack.c.l.b16 %v3614
    %v3634 = vunpack.c.l.b16 %v3615
    %v3635 = vunpack.c.l.b16 %v3616
    %v3636 = vunpack.c.l.b16 %v3617
    %v3637 = vunpack.c.l.b16 %v3618
    %v3638 = vunpack.c.l.b16 %v3619
    %v3639 = vpack.c.b16 %v3634, %v3633
    %v3640 = vpack.c.b16 %v3636, %v3635
    %v3641 = vpack.c.b16 %v3638, %v3637
    %3645 = vmatprep.subr.bf16.mxu0 0
    %3646 = vmatpush1.bf16.msra.mxu0 %v3639
    %3647 = vmatprep.subr.bf16.mxu0 0
    %3648 = vmatpush1.bf16.msra.mxu0 %v3640
    %3649 = vmatprep.subr.bf16.mxu0 0
    %3650 = vmatpush1.bf16.msra.mxu0 %v3641
    %3651 = vmatprep.subr.bf16.mxu0 0
    %3652 = vmatpush1.bf16.msra.mxu0 0
    %3653 = vmatprep.subr.bf16.mxu0 0
    %3654 = vmatpush1.bf16.msra.mxu0 0
    %3655 = vmatprep.subr.bf16.mxu0 0
    %3656 = vmatpush1.bf16.msra.mxu0 0
    %3657 = vmatprep.subr.bf16.mxu0 0
    %3658 = vmatpush1.bf16.msra.mxu0 0
    %3659 = vmatprep.subr.bf16.mxu0 0
    %3660 = vmatpush1.bf16.msra.mxu0 0
    %3661 = vmatprep.subr.bf16.mxu0 0
    %3662 = vmatpush1.bf16.msra.mxu0 0
    %3663 = vmatprep.subr.bf16.mxu0 0
    %3664 = vmatpush1.bf16.msra.mxu0 0
    %3665 = vmatprep.subr.bf16.mxu0 0
    %3666 = vmatpush1.bf16.msra.mxu0 0
    %3667 = vmatprep.subr.bf16.mxu0 0
    %3668 = vmatpush1.bf16.msra.mxu0 0
    %3669 = vmatprep.subr.bf16.mxu0 0
    %3670 = vmatpush1.bf16.msra.mxu0 0
    %3671 = vmatprep.subr.bf16.mxu0 0
    %3672 = vmatpush1.bf16.msra.mxu0 0
    %3673 = vmatprep.subr.bf16.mxu0 0
    %3674 = vmatpush1.bf16.msra.mxu0 0
    %3675 = vmatprep.subr.bf16.mxu0 0
    %3676 = vmatpush1.bf16.msra.mxu0 0
    %3677 = vmatprep.mubr.bf16.mxu0 0
    %3678 = vmatmul.mubr.bf16.gmra.mrb[0].mxu0 %v1132
    %v3679 = vpop.f32.mrb[0].mxu0
    %v3680 = vadd.f32 %v3625, %v3679
    %v3681 = vpop.f32.mrb[0].mxu0
    %v3682 = vpop.f32.mrb[0].mxu0
    %v3683 = vadd.f32 %v3625, %v3682
    %v3684 = vpop.f32.mrb[0].mxu0
    %3685 = vmatprep.mubr.bf16.mxu0 0
    %3686 = vmatmul.mubr.bf16.gmra.mrb[0].mxu0 %v1135
    %v3687 = vpop.f32.mrb[0].mxu0
    %v3688 = vadd.f32 %v3625, %v3687
    %v3689 = vpop.f32.mrb[0].mxu0
    %v3690 = vpop.f32.mrb[0].mxu0
    %v3691 = vadd.f32 %v3625, %v3690
    %v3692 = vpop.f32.mrb[0].mxu0
    %3693 = vmatprep.mubr.bf16.mxu0 0
    %3694 = vmatmul.mubr.bf16.gmra.mrb[0].mxu0 %v1138
    %v3695 = vpop.f32.mrb[0].mxu0
    %v3696 = vadd.f32 %v3625, %v3695
    %v3697 = vpop.f32.mrb[0].mxu0
    %v3698 = vpop.f32.mrb[0].mxu0
    %v3699 = vadd.f32 %v3625, %v3698
    %v3700 = vpop.f32.mrb[0].mxu0
    %3701 = vdwg.mxu0
    %v3702 = vmax.f32 %v3680, 0.0
    %v3703 = vmax.f32 %v3683, 0.0
    %v3704 = vmax.f32 %v3688, 0.0
    %v3705 = vmax.f32 %v3691, 0.0
    %v3706 = vmax.f32 %v3696, 0.0
    %v3707 = vmax.f32 %v3699, 0.0
    %v3708 = vpack.c.bf16 %v3703, %v3702
    %v3709 = vpack.c.bf16 %v3705, %v3704
    %v3710 = vpack.c.bf16 %v3707, %v3706
    %v3711 = vld [vmem:[#allocation48] sm:$0xff]
    %v3712 = vld [vmem:[#allocation48 + $0x8] sm:$0xff]
    %v3713 = vld [vmem:[#allocation48 + $0x10] sm:$0xff]
    %v3714 = vld [vmem:[#allocation48 + $0x18] sm:$0xff]
    %v3715 = vld [vmem:[#allocation48 + $0x20] sm:$0xff]
    %v3716 = vld [vmem:[#allocation48 + $0x28] sm:$0xff]
    %v3717 = vld [vmem:[#allocation49] sm:$0x3]
    %v3719 = vlaneseq
    %v3720 = vshrl.u32 %v3719, 7
    %v3721 = vsub.s32 0, %v3720
    %v3722 = vrot.slane %v3717, %v3721
    %v3723 = vlaneseq
    %v3724 = vshrl.u32 %v3723, 7
    %v3725 = vsub.s32 1, %v3724
    %v3726 = vrot.slane %v3717, %v3725
    %v3735 = vunpack.c.l.b16 %v3711
    %v3736 = vunpack.c.h.b16 %v3711
    %v3737 = vunpack.c.l.b16 %v3712
    %v3738 = vunpack.c.h.b16 %v3712
    %v3739 = vunpack.c.l.b16 %v3713
    %v3740 = vunpack.c.h.b16 %v3713
    %v3741 = vunpack.c.l.b16 %v3714
    %v3742 = vunpack.c.h.b16 %v3714
    %v3743 = vunpack.c.l.b16 %v3715
    %v3744 = vunpack.c.h.b16 %v3715
    %v3745 = vunpack.c.l.b16 %v3716
    %v3746 = vunpack.c.h.b16 %v3716
    %v3747 = vpack.c.b16 %v3737, %v3735
    %v3748 = vpack.c.b16 %v3738, %v3736
    %v3749 = vpack.c.b16 %v3741, %v3739
    %v3750 = vpack.c.b16 %v3742, %v3740
    %v3751 = vpack.c.b16 %v3745, %v3743
    %v3752 = vpack.c.b16 %v3746, %v3744
    %v3760 = vsel %vm1130, %v3708, 0
    %v3763 = vsel %vm1130, %v3709, 0
    %v3766 = vsel %vm1130, %v3710, 0
    %3768 = vmatprep.subr.bf16.mxu0 %v3748
    %3769 = vmatpush1.bf16.msra.mxu0 %v3747
    %3770 = vmatprep.subr.bf16.mxu0 %v3750
    %3771 = vmatpush1.bf16.msra.mxu0 %v3749
    %3772 = vmatprep.subr.bf16.mxu0 %v3752
    %3773 = vmatpush1.bf16.msra.mxu0 %v3751
    %3774 = vmatprep.subr.bf16.mxu0 0
    %3775 = vmatpush1.bf16.msra.mxu0 0
    %3776 = vmatprep.subr.bf16.mxu0 0
    %3777 = vmatpush1.bf16.msra.mxu0 0
    %3778 = vmatprep.subr.bf16.mxu0 0
    %3779 = vmatpush1.bf16.msra.mxu0 0
    %3780 = vmatprep.subr.bf16.mxu0 0
    %3781 = vmatpush1.bf16.msra.mxu0 0
    %3782 = vmatprep.subr.bf16.mxu0 0
    %3783 = vmatpush1.bf16.msra.mxu0 0
    %3784 = vmatprep.subr.bf16.mxu0 0
    %3785 = vmatpush1.bf16.msra.mxu0 0
    %3786 = vmatprep.subr.bf16.mxu0 0
    %3787 = vmatpush1.bf16.msra.mxu0 0
    %3788 = vmatprep.subr.bf16.mxu0 0
    %3789 = vmatpush1.bf16.msra.mxu0 0
    %3790 = vmatprep.subr.bf16.mxu0 0
    %3791 = vmatpush1.bf16.msra.mxu0 0
    %3792 = vmatprep.subr.bf16.mxu0 0
    %3793 = vmatpush1.bf16.msra.mxu0 0
    %3794 = vmatprep.subr.bf16.mxu0 0
    %3795 = vmatpush1.bf16.msra.mxu0 0
    %3796 = vmatprep.subr.bf16.mxu0 0
    %3797 = vmatpush1.bf16.msra.mxu0 0
    %3798 = vmatprep.subr.bf16.mxu0 0
    %3799 = vmatpush1.bf16.msra.mxu0 0
    %3800 = vmatprep.mubr.bf16.mxu0 0
    %3801 = vmatmul.mubr.bf16.gmra.mrb[0].mxu0 %v3760
    %v3802 = vpop.f32.mrb[0].mxu0
    %v3803 = vadd.f32 %v3722, %v3802
    %v3804 = vpop.f32.mrb[0].mxu0
    %v3805 = vadd.f32 %v3726, %v3804
    %v3806 = vpop.f32.mrb[0].mxu0
    %v3807 = vadd.f32 %v3722, %v3806
    %v3808 = vpop.f32.mrb[0].mxu0
    %v3809 = vadd.f32 %v3726, %v3808
    %3810 = vmatprep.mubr.bf16.mxu0 0
    %3811 = vmatmul.mubr.bf16.gmra.mrb[0].mxu0 %v3763
    %v3812 = vpop.f32.mrb[0].mxu0
    %v3813 = vadd.f32 %v3722, %v3812
    %v3814 = vpop.f32.mrb[0].mxu0
    %v3815 = vadd.f32 %v3726, %v3814
    %v3816 = vpop.f32.mrb[0].mxu0
    %v3817 = vadd.f32 %v3722, %v3816
    %v3818 = vpop.f32.mrb[0].mxu0
    %v3819 = vadd.f32 %v3726, %v3818
    %3820 = vmatprep.mubr.bf16.mxu0 0
    %3821 = vmatmul.mubr.bf16.gmra.mrb[0].mxu0 %v3766
    %v3822 = vpop.f32.mrb[0].mxu0
    %v3823 = vadd.f32 %v3722, %v3822
    %v3824 = vpop.f32.mrb[0].mxu0
    %v3825 = vadd.f32 %v3726, %v3824
    %v3826 = vpop.f32.mrb[0].mxu0
    %v3827 = vadd.f32 %v3722, %v3826
    %v3828 = vpop.f32.mrb[0].mxu0
    %v3829 = vadd.f32 %v3726, %v3828
    %3830 = vdwg.mxu0
    %v3831 = vmax.f32 %v3803, 0.0
    %v3832 = vmax.f32 %v3805, 0.0
    %v3833 = vmax.f32 %v3807, 0.0
    %v3834 = vmax.f32 %v3809, 0.0
    %v3835 = vmax.f32 %v3813, 0.0
    %v3836 = vmax.f32 %v3815, 0.0
    %v3837 = vmax.f32 %v3817, 0.0
    %v3838 = vmax.f32 %v3819, 0.0
    %v3839 = vmax.f32 %v3823, 0.0
    %v3840 = vmax.f32 %v3825, 0.0
    %v3841 = vmax.f32 %v3827, 0.0
    %v3842 = vmax.f32 %v3829, 0.0
    %v3843 = vpack.c.bf16 %v3833, %v3831
    %v3844 = vpack.c.bf16 %v3834, %v3832
    %v3845 = vpack.c.bf16 %v3837, %v3835
    %v3846 = vpack.c.bf16 %v3838, %v3836
    %v3847 = vpack.c.bf16 %v3841, %v3839
    %v3848 = vpack.c.bf16 %v3842, %v3840
    %v3849 = vld [vmem:[#allocation51] sm:$0xf]
    %v3850 = vld [vmem:[#allocation51 + $0x4] sm:$0xf]
    %v3851 = vld [vmem:[#allocation51 + $0x8] sm:$0xf]
    %v3852 = vld [vmem:[#allocation51 + $0xc] sm:$0xf]
    %v3853 = vld [vmem:[#allocation51 + $0x10] sm:$0xf]
    %v3854 = vld [vmem:[#allocation51 + $0x14] sm:$0xf]
    %v3855 = vld [vmem:[#allocation51 + $0x18] sm:$0xf]
    %v3856 = vld [vmem:[#allocation51 + $0x1c] sm:$0xf]
    %v3857 = vld [vmem:[#allocation51 + $0x20] sm:$0xf]
    %v3858 = vld [vmem:[#allocation51 + $0x24] sm:$0xf]
    %v3859 = vld [vmem:[#allocation51 + $0x28] sm:$0xf]
    %v3860 = vld [vmem:[#allocation51 + $0x2c] sm:$0xf]
    %v3861 = vld [vmem:[#allocation51 + $0x30] sm:$0xf]
    %v3862 = vld [vmem:[#allocation51 + $0x34] sm:$0xf]
    %v3863 = vld [vmem:[#allocation51 + $0x38] sm:$0xf]
    %v3864 = vld [vmem:[#allocation51 + $0x3c] sm:$0xf]
    %v3865 = vld [vmem:[#allocation51 + $0x40] sm:$0xf]
    %v3866 = vld [vmem:[#allocation51 + $0x44] sm:$0xf]
    %v3867 = vld [vmem:[#allocation51 + $0x48] sm:$0xf]
    %v3868 = vld [vmem:[#allocation51 + $0x4c] sm:$0xf]
    %v3869 = vld [vmem:[#allocation51 + $0x50] sm:$0xf]
    %v3870 = vld [vmem:[#allocation51 + $0x54] sm:$0xf]
    %v3871 = vld [vmem:[#allocation51 + $0x58] sm:$0xf]
    %v3872 = vld [vmem:[#allocation51 + $0x5c] sm:$0xf]
    %v3873 = vld [vmem:[#allocation51 + $0x60] sm:$0xf]
    %v3874 = vld [vmem:[#allocation51 + $0x64] sm:$0xf]
    %v3875 = vld [vmem:[#allocation51 + $0x68] sm:$0xf]
    %v3876 = vld [vmem:[#allocation51 + $0x6c] sm:$0xf]
    %v3877 = vld [vmem:[#allocation51 + $0x70] sm:$0xf]
    %v3878 = vld [vmem:[#allocation51 + $0x74] sm:$0xf]
    %v3879 = vld [vmem:[#allocation51 + $0x78] sm:$0xf]
    %v3880 = vld [vmem:[#allocation51 + $0x7c] sm:$0xf]
    %v3881 = vld [vmem:[#allocation52] sm:$0x1]
    %v3883 = vlaneseq
    %v3884 = vshrl.u32 %v3883, 7
    %v3885 = vsub.s32 0, %v3884
    %v3886 = vrot.slane %v3881, %v3885
    %v3920 = vunpack.c.l.b16 %v3849
    %v3921 = vunpack.c.l.b16 %v3850
    %v3922 = vunpack.c.l.b16 %v3851
    %v3923 = vunpack.c.l.b16 %v3852
    %v3924 = vunpack.c.l.b16 %v3853
    %v3925 = vunpack.c.l.b16 %v3854
    %v3926 = vunpack.c.l.b16 %v3855
    %v3927 = vunpack.c.l.b16 %v3856
    %v3928 = vunpack.c.l.b16 %v3857
    %v3929 = vunpack.c.l.b16 %v3858
    %v3930 = vunpack.c.l.b16 %v3859
    %v3931 = vunpack.c.l.b16 %v3860
    %v3932 = vunpack.c.l.b16 %v3861
    %v3933 = vunpack.c.l.b16 %v3862
    %v3934 = vunpack.c.l.b16 %v3863
    %v3935 = vunpack.c.l.b16 %v3864
    %v3936 = vunpack.c.l.b16 %v3865
    %v3937 = vunpack.c.l.b16 %v3866
    %v3938 = vunpack.c.l.b16 %v3867
    %v3939 = vunpack.c.l.b16 %v3868
    %v3940 = vunpack.c.l.b16 %v3869
    %v3941 = vunpack.c.l.b16 %v3870
    %v3942 = vunpack.c.l.b16 %v3871
    %v3943 = vunpack.c.l.b16 %v3872
    %v3944 = vunpack.c.l.b16 %v3873
    %v3945 = vunpack.c.l.b16 %v3874
    %v3946 = vunpack.c.l.b16 %v3875
    %v3947 = vunpack.c.l.b16 %v3876
    %v3948 = vunpack.c.l.b16 %v3877
    %v3949 = vunpack.c.l.b16 %v3878
    %v3950 = vunpack.c.l.b16 %v3879
    %v3951 = vunpack.c.l.b16 %v3880
    %v3952 = vpack.c.b16 %v3921, %v3920
    %v3953 = vpack.c.b16 %v3923, %v3922
    %v3954 = vpack.c.b16 %v3925, %v3924
    %v3955 = vpack.c.b16 %v3927, %v3926
    %v3956 = vpack.c.b16 %v3929, %v3928
    %v3957 = vpack.c.b16 %v3931, %v3930
    %v3958 = vpack.c.b16 %v3933, %v3932
    %v3959 = vpack.c.b16 %v3935, %v3934
    %v3960 = vpack.c.b16 %v3937, %v3936
    %v3961 = vpack.c.b16 %v3939, %v3938
    %v3962 = vpack.c.b16 %v3941, %v3940
    %v3963 = vpack.c.b16 %v3943, %v3942
    %v3964 = vpack.c.b16 %v3945, %v3944
    %v3965 = vpack.c.b16 %v3947, %v3946
    %v3966 = vpack.c.b16 %v3949, %v3948
    %v3967 = vpack.c.b16 %v3951, %v3950
    %3984 = vmatprep.subr.bf16.mxu0 0
    %3985 = vmatpush1.bf16.msra.mxu0 %v3952
    %3986 = vmatprep.subr.bf16.mxu0 0
    %3987 = vmatpush1.bf16.msra.mxu0 %v3953
    %3988 = vmatprep.subr.bf16.mxu0 0
    %3989 = vmatpush1.bf16.msra.mxu0 %v3954
    %3990 = vmatprep.subr.bf16.mxu0 0
    %3991 = vmatpush1.bf16.msra.mxu0 %v3955
    %3992 = vmatprep.subr.bf16.mxu0 0
    %3993 = vmatpush1.bf16.msra.mxu0 %v3956
    %3994 = vmatprep.subr.bf16.mxu0 0
    %3995 = vmatpush1.bf16.msra.mxu0 %v3957
    %3996 = vmatprep.subr.bf16.mxu0 0
    %3997 = vmatpush1.bf16.msra.mxu0 %v3958
    %3998 = vmatprep.subr.bf16.mxu0 0
    %3999 = vmatpush1.bf16.msra.mxu0 %v3959
    %4000 = vmatprep.subr.bf16.mxu0 0
    %4001 = vmatpush1.bf16.msra.mxu0 %v3960
    %4002 = vmatprep.subr.bf16.mxu0 0
    %4003 = vmatpush1.bf16.msra.mxu0 %v3961
    %4004 = vmatprep.subr.bf16.mxu0 0
    %4005 = vmatpush1.bf16.msra.mxu0 %v3962
    %4006 = vmatprep.subr.bf16.mxu0 0
    %4007 = vmatpush1.bf16.msra.mxu0 %v3963
    %4008 = vmatprep.subr.bf16.mxu0 0
    %4009 = vmatpush1.bf16.msra.mxu0 %v3964
    %4010 = vmatprep.subr.bf16.mxu0 0
    %4011 = vmatpush1.bf16.msra.mxu0 %v3965
    %4012 = vmatprep.subr.bf16.mxu0 0
    %4013 = vmatpush1.bf16.msra.mxu0 %v3966
    %4014 = vmatprep.subr.bf16.mxu0 0
    %4015 = vmatpush1.bf16.msra.mxu0 %v3967
    %4016 = vmatprep.mubr.bf16.mxu0 %v3844
    %4017 = vmatmul.mubr.bf16.gmra.mrb[0].mxu0 %v3843
    %v4018 = vpop.f32.mrb[0].mxu0
    %v4019 = vadd.f32 %v3886, %v4018
    %v4020 = vpop.f32.mrb[0].mxu0
    %v4021 = vpop.f32.mrb[0].mxu0
    %v4022 = vadd.f32 %v3886, %v4021
    %v4023 = vpop.f32.mrb[0].mxu0
    %4024 = vmatprep.mubr.bf16.mxu0 %v3846
    %4025 = vmatmul.mubr.bf16.gmra.mrb[0].mxu0 %v3845
    %v4026 = vpop.f32.mrb[0].mxu0
    %v4027 = vadd.f32 %v3886, %v4026
    %v4028 = vpop.f32.mrb[0].mxu0
    %v4029 = vpop.f32.mrb[0].mxu0
    %v4030 = vadd.f32 %v3886, %v4029
    %v4031 = vpop.f32.mrb[0].mxu0
    %4032 = vmatprep.mubr.bf16.mxu0 %v3848
    %4033 = vmatmul.mubr.bf16.gmra.mrb[0].mxu0 %v3847
    %v4034 = vpop.f32.mrb[0].mxu0
    %v4035 = vadd.f32 %v3886, %v4034
    %v4036 = vpop.f32.mrb[0].mxu0
    %v4037 = vpop.f32.mrb[0].mxu0
    %v4038 = vadd.f32 %v3886, %v4037
    %v4039 = vpop.f32.mrb[0].mxu0
    %4040 = vdwg.mxu0
    %s4041 = sld [smem:[#allocation58]]
    %v4042 = vmul.f32 %v3592, %v3592
    %v4043 = vmul.f32 %v3595, %v3595
    %v4044 = vmul.f32 %v3600, %v3600
    %v4045 = vmul.f32 %v3603, %v3603
    %v4046 = vmul.f32 %v3608, %v3608
    %v4047 = vmul.f32 %v3611, %v3611
    %v4048 = vsel %vm1543, %v4042, 0.0
    %4049 = vadd.xlane.f32.xlu0 %v4048
    %v4050 = vpop.xlane.xlu0 %4049
    %v4051 = vsel %vm1543, %v4043, 0.0
    %4052 = vadd.xlane.f32.xlu0 %v4051
    %v4053 = vpop.xlane.xlu0 %4052
    %v4054 = vsel %vm1543, %v4044, 0.0
    %4055 = vadd.xlane.f32.xlu0 %v4054
    %v4056 = vpop.xlane.xlu0 %4055
    %v4057 = vsel %vm1543, %v4045, 0.0
    %4058 = vadd.xlane.f32.xlu0 %v4057
    %v4059 = vpop.xlane.xlu0 %4058
    %v4060 = vsel %vm1543, %v4046, 0.0
    %4061 = vadd.xlane.f32.xlu0 %v4060
    %v4062 = vpop.xlane.xlu0 %4061
    %v4063 = vsel %vm1543, %v4047, 0.0
    %4064 = vadd.xlane.f32.xlu0 %v4063
    %v4065 = vpop.xlane.xlu0 %4064
    %v4066 = vmax.f32 %v4050, 1e-24
    %v4067 = vmax.f32 %v4053, 1e-24
    %v4068 = vmax.f32 %v4056, 1e-24
    %v4069 = vmax.f32 %v4059, 1e-24
    %v4070 = vmax.f32 %v4062, 1e-24
    %v4071 = vmax.f32 %v4065, 1e-24
    %v4072 = vrsqrt.pop %v4066
    %v4073 = vrsqrt.pop %v4067
    %v4074 = vrsqrt.pop %v4068
    %v4075 = vrsqrt.pop %v4069
    %v4076 = vrsqrt.pop %v4070
    %v4077 = vrsqrt.pop %v4071
    %v4078 = vmul.f32 %v3592, %v4072
    %v4079 = vmul.f32 %v3595, %v4073
    %v4080 = vmul.f32 %v3600, %v4074
    %v4081 = vmul.f32 %v3603, %v4075
    %v4082 = vmul.f32 %v3608, %v4076
    %v4083 = vmul.f32 %v3611, %v4077
    %v4084 = vstv %s4041
    %v4085 = vmul.f32 %v4084, %v4078
    %v4086 = vmul.f32 %v4084, %v4079
    %v4087 = vmul.f32 %v4084, %v4080
    %v4088 = vmul.f32 %v4084, %v4081
    %v4089 = vmul.f32 %v4084, %v4082
    %v4090 = vmul.f32 %v4084, %v4083
    %s4091 = sld [smem:[#allocation58 + $0x1]]
    %v4092 = vmul.f32 %v4019, %v4019
    %v4093 = vmul.f32 %v4022, %v4022
    %v4094 = vmul.f32 %v4027, %v4027
    %v4095 = vmul.f32 %v4030, %v4030
    %v4096 = vmul.f32 %v4035, %v4035
    %v4097 = vmul.f32 %v4038, %v4038
    %v4098 = vsel %vm1543, %v4092, 0.0
    %4099 = vadd.xlane.f32.xlu0 %v4098
    %v4100 = vpop.xlane.xlu0 %4099
    %v4101 = vsel %vm1543, %v4093, 0.0
    %4102 = vadd.xlane.f32.xlu0 %v4101
    %v4103 = vpop.xlane.xlu0 %4102
    %v4104 = vsel %vm1543, %v4094, 0.0
    %4105 = vadd.xlane.f32.xlu0 %v4104
    %v4106 = vpop.xlane.xlu0 %4105
    %v4107 = vsel %vm1543, %v4095, 0.0
    %4108 = vadd.xlane.f32.xlu0 %v4107
    %v4109 = vpop.xlane.xlu0 %4108
    %v4110 = vsel %vm1543, %v4096, 0.0
    %4111 = vadd.xlane.f32.xlu0 %v4110
    %v4112 = vpop.xlane.xlu0 %4111
    %v4113 = vsel %vm1543, %v4097, 0.0
    %4114 = vadd.xlane.f32.xlu0 %v4113
    %v4115 = vpop.xlane.xlu0 %4114
    %v4116 = vmax.f32 %v4100, 1e-24
    %v4117 = vmax.f32 %v4103, 1e-24
    %v4118 = vmax.f32 %v4106, 1e-24
    %v4119 = vmax.f32 %v4109, 1e-24
    %v4120 = vmax.f32 %v4112, 1e-24
    %v4121 = vmax.f32 %v4115, 1e-24
    %v4122 = vrsqrt.pop %v4116
    %v4123 = vrsqrt.pop %v4117
    %v4124 = vrsqrt.pop %v4118
    %v4125 = vrsqrt.pop %v4119
    %v4126 = vrsqrt.pop %v4120
    %v4127 = vrsqrt.pop %v4121
    %v4128 = vmul.f32 %v4019, %v4122
    %v4129 = vmul.f32 %v4022, %v4123
    %v4130 = vmul.f32 %v4027, %v4124
    %v4131 = vmul.f32 %v4030, %v4125
    %v4132 = vmul.f32 %v4035, %v4126
    %v4133 = vmul.f32 %v4038, %v4127
    %v4134 = vstv %s4091
    %v4135 = vmul.f32 %v4134, %v4128
    %v4136 = vmul.f32 %v4134, %v4129
    %v4137 = vmul.f32 %v4134, %v4130
    %v4138 = vmul.f32 %v4134, %v4131
    %v4139 = vmul.f32 %v4134, %v4132
    %v4140 = vmul.f32 %v4134, %v4133
    %v4141 = vadd.f32 %v4085, %v4135
    %v4142 = vadd.f32 %v4086, %v4136
    %v4143 = vadd.f32 %v4087, %v4137
    %v4144 = vadd.f32 %v4088, %v4138
    %v4145 = vadd.f32 %v4089, %v4139
    %v4146 = vadd.f32 %v4090, %v4140
    %v4147 = vld [vmem:[#allocation54] sm:$0xf]
    %v4148 = vld [vmem:[#allocation54 + $0x4] sm:$0xf]
    %v4149 = vld [vmem:[#allocation54 + $0x8] sm:$0xf]
    %v4150 = vld [vmem:[#allocation54 + $0xc] sm:$0xf]
    %v4151 = vld [vmem:[#allocation54 + $0x10] sm:$0xf]
    %v4152 = vld [vmem:[#allocation54 + $0x14] sm:$0xf]
    %v4153 = vld [vmem:[#allocation54 + $0x18] sm:$0xf]
    %v4154 = vld [vmem:[#allocation54 + $0x1c] sm:$0xf]
    %v4155 = vld [vmem:[#allocation55] sm:$0x1]
    %v4157 = vlaneseq
    %v4158 = vshrl.u32 %v4157, 7
    %v4159 = vsub.s32 0, %v4158
    %v4160 = vrot.slane %v4155, %v4159
    %v4170 = vunpack.c.l.b16 %v4147
    %v4171 = vunpack.c.l.b16 %v4148
    %v4172 = vunpack.c.l.b16 %v4149
    %v4173 = vunpack.c.l.b16 %v4150
    %v4174 = vunpack.c.l.b16 %v4151
    %v4175 = vunpack.c.l.b16 %v4152
    %v4176 = vunpack.c.l.b16 %v4153
    %v4177 = vunpack.c.l.b16 %v4154
    %v4178 = vpack.c.b16 %v4171, %v4170
    %v4179 = vpack.c.b16 %v4173, %v4172
    %v4180 = vpack.c.b16 %v4175, %v4174
    %v4181 = vpack.c.b16 %v4177, %v4176
    %4186 = vmatprep.subr.bf16.mxu0 0
    %4187 = vmatpush1.bf16.msra.mxu0 %v4178
    %4188 = vmatprep.subr.bf16.mxu0 0
    %4189 = vmatpush1.bf16.msra.mxu0 %v4179
    %4190 = vmatprep.subr.bf16.mxu0 0
    %4191 = vmatpush1.bf16.msra.mxu0 %v4180
    %4192 = vmatprep.subr.bf16.mxu0 0
    %4193 = vmatpush1.bf16.msra.mxu0 %v4181
    %4194 = vmatprep.subr.bf16.mxu0 0
    %4195 = vmatpush1.bf16.msra.mxu0 0
    %4196 = vmatprep.subr.bf16.mxu0 0
    %4197 = vmatpush1.bf16.msra.mxu0 0
    %4198 = vmatprep.subr.bf16.mxu0 0
    %4199 = vmatpush1.bf16.msra.mxu0 0
    %4200 = vmatprep.subr.bf16.mxu0 0
    %4201 = vmatpush1.bf16.msra.mxu0 0
    %4202 = vmatprep.subr.bf16.mxu0 0
    %4203 = vmatpush1.bf16.msra.mxu0 0
    %4204 = vmatprep.subr.bf16.mxu0 0
    %4205 = vmatpush1.bf16.msra.mxu0 0
    %4206 = vmatprep.subr.bf16.mxu0 0
    %4207 = vmatpush1.bf16.msra.mxu0 0
    %4208 = vmatprep.subr.bf16.mxu0 0
    %4209 = vmatpush1.bf16.msra.mxu0 0
    %4210 = vmatprep.subr.bf16.mxu0 0
    %4211 = vmatpush1.bf16.msra.mxu0 0
    %4212 = vmatprep.subr.bf16.mxu0 0
    %4213 = vmatpush1.bf16.msra.mxu0 0
    %4214 = vmatprep.subr.bf16.mxu0 0
    %4215 = vmatpush1.bf16.msra.mxu0 0
    %4216 = vmatprep.subr.bf16.mxu0 0
    %4217 = vmatpush1.bf16.msra.mxu0 0
    %4218 = vmatprep.mubr.bf16.mxu0 0
    %4219 = vmatmul.mubr.bf16.gmra.mrb[0].mxu0 %v1698
    %v4220 = vpop.f32.mrb[0].mxu0
    %v4221 = vadd.f32 %v4160, %v4220
    %v4222 = vpop.f32.mrb[0].mxu0
    %v4223 = vpop.f32.mrb[0].mxu0
    %v4224 = vadd.f32 %v4160, %v4223
    %v4225 = vpop.f32.mrb[0].mxu0
    %4226 = vmatprep.mubr.bf16.mxu0 0
    %4227 = vmatmul.mubr.bf16.gmra.mrb[0].mxu0 %v1701
    %v4228 = vpop.f32.mrb[0].mxu0
    %v4229 = vadd.f32 %v4160, %v4228
    %v4230 = vpop.f32.mrb[0].mxu0
    %v4231 = vpop.f32.mrb[0].mxu0
    %v4232 = vadd.f32 %v4160, %v4231
    %v4233 = vpop.f32.mrb[0].mxu0
    %4234 = vmatprep.mubr.bf16.mxu0 0
    %4235 = vmatmul.mubr.bf16.gmra.mrb[0].mxu0 %v1704
    %v4236 = vpop.f32.mrb[0].mxu0
    %v4237 = vadd.f32 %v4160, %v4236
    %v4238 = vpop.f32.mrb[0].mxu0
    %v4239 = vpop.f32.mrb[0].mxu0
    %v4240 = vadd.f32 %v4160, %v4239
    %v4241 = vpop.f32.mrb[0].mxu0
    %4242 = vdwg.mxu0
    %v4243 = vmul.f32 %v1766, %v4141
    %v4244 = vmul.f32 %v1771, %v4142
    %v4245 = vmul.f32 %v1776, %v4143
    %v4246 = vmul.f32 %v1781, %v4144
    %v4247 = vmul.f32 %v1786, %v4145
    %v4248 = vmul.f32 %v1791, %v4146
    %v4249 = vmul.f32 %v1808, %v4221
    %v4250 = vmul.f32 %v1813, %v4224
    %v4251 = vmul.f32 %v1818, %v4229
    %v4252 = vmul.f32 %v1823, %v4232
    %v4253 = vmul.f32 %v1828, %v4237
    %v4254 = vmul.f32 %v1833, %v4240
    %v4255 = vadd.f32 %v4243, %v4249
    %v4256 = vadd.f32 %v4244, %v4250
    %v4257 = vadd.f32 %v4245, %v4251
    %v4258 = vadd.f32 %v4246, %v4252
    %v4259 = vadd.f32 %v4247, %v4253
    %v4260 = vadd.f32 %v4248, %v4254
    %v4261 = vmul.f32 %v4141, %v4141
    %v4262 = vmul.f32 %v4142, %v4142
    %v4263 = vmul.f32 %v4143, %v4143
    %v4264 = vmul.f32 %v4144, %v4144
    %v4265 = vmul.f32 %v4145, %v4145
    %v4266 = vmul.f32 %v4146, %v4146
    %v4267 = vsel %vm1543, %v4261, 0.0
    %4268 = vadd.xlane.f32.xlu0 %v4267
    %v4269 = vpop.xlane.xlu0 %4268
    %v4270 = vsel %vm1543, %v4262, 0.0
    %4271 = vadd.xlane.f32.xlu0 %v4270
    %v4272 = vpop.xlane.xlu0 %4271
    %v4273 = vsel %vm1543, %v4263, 0.0
    %4274 = vadd.xlane.f32.xlu0 %v4273
    %v4275 = vpop.xlane.xlu0 %4274
    %v4276 = vsel %vm1543, %v4264, 0.0
    %4277 = vadd.xlane.f32.xlu0 %v4276
    %v4278 = vpop.xlane.xlu0 %4277
    %v4279 = vsel %vm1543, %v4265, 0.0
    %4280 = vadd.xlane.f32.xlu0 %v4279
    %v4281 = vpop.xlane.xlu0 %4280
    %v4282 = vsel %vm1543, %v4266, 0.0
    %4283 = vadd.xlane.f32.xlu0 %v4282
    %v4284 = vpop.xlane.xlu0 %4283
    %v4285 = vmax.f32 %v4269, 1e-24
    %v4286 = vmax.f32 %v4272, 1e-24
    %v4287 = vmax.f32 %v4275, 1e-24
    %v4288 = vmax.f32 %v4278, 1e-24
    %v4289 = vmax.f32 %v4281, 1e-24
    %v4290 = vmax.f32 %v4284, 1e-24
    %v4291 = vrsqrt.pop %v4285
    %v4292 = vrsqrt.pop %v4286
    %v4293 = vrsqrt.pop %v4287
    %v4294 = vrsqrt.pop %v4288
    %v4295 = vrsqrt.pop %v4289
    %v4296 = vrsqrt.pop %v4290
    %v4297 = vmul.f32 %v4141, %v4291
    %v4298 = vmul.f32 %v4142, %v4292
    %v4299 = vmul.f32 %v4143, %v4293
    %v4300 = vmul.f32 %v4144, %v4294
    %v4301 = vmul.f32 %v4145, %v4295
    %v4302 = vmul.f32 %v4146, %v4296
    %v4303 = vsel %vm1543, %v4297, 0.0
    %4304 = vadd.xlane.f32.xlu0 %v4303
    %v4305 = vpop.xlane.xlu0 %4304
    %v4306 = vsel %vm1543, %v4298, 0.0
    %4307 = vadd.xlane.f32.xlu0 %v4306
    %v4308 = vpop.xlane.xlu0 %4307
    %v4309 = vsel %vm1543, %v4299, 0.0
    %4310 = vadd.xlane.f32.xlu0 %v4309
    %v4311 = vpop.xlane.xlu0 %4310
    %v4312 = vsel %vm1543, %v4300, 0.0
    %4313 = vadd.xlane.f32.xlu0 %v4312
    %v4314 = vpop.xlane.xlu0 %4313
    %v4315 = vsel %vm1543, %v4301, 0.0
    %4316 = vadd.xlane.f32.xlu0 %v4315
    %v4317 = vpop.xlane.xlu0 %4316
    %v4318 = vsel %vm1543, %v4302, 0.0
    %4319 = vadd.xlane.f32.xlu0 %v4318
    %v4320 = vpop.xlane.xlu0 %4319
    %v4321 = vmul.f32 %v4305, %v1907
    %v4322 = vmul.f32 %v4308, %v1907
    %v4323 = vmul.f32 %v4311, %v1907
    %v4324 = vmul.f32 %v4314, %v1907
    %v4325 = vmul.f32 %v4317, %v1907
    %v4326 = vmul.f32 %v4320, %v1907
    %v4327 = vsub.f32 %v4297, %v4321
    %v4328 = vsub.f32 %v4298, %v4322
    %v4329 = vsub.f32 %v4299, %v4323
    %v4330 = vsub.f32 %v4300, %v4324
    %v4331 = vsub.f32 %v4301, %v4325
    %v4332 = vsub.f32 %v4302, %v4326
    %v4333 = vmul.f32 %v4327, %v4327
    %v4334 = vmul.f32 %v4328, %v4328
    %v4335 = vmul.f32 %v4329, %v4329
    %v4336 = vmul.f32 %v4330, %v4330
    %v4337 = vmul.f32 %v4331, %v4331
    %v4338 = vmul.f32 %v4332, %v4332
    %v4339 = vsel %vm1543, %v4333, 0.0
    %4340 = vadd.xlane.f32.xlu0 %v4339
    %v4341 = vpop.xlane.xlu0 %4340
    %v4342 = vsel %vm1543, %v4334, 0.0
    %4343 = vadd.xlane.f32.xlu0 %v4342
    %v4344 = vpop.xlane.xlu0 %4343
    %v4345 = vsel %vm1543, %v4335, 0.0
    %4346 = vadd.xlane.f32.xlu0 %v4345
    %v4347 = vpop.xlane.xlu0 %4346
    %v4348 = vsel %vm1543, %v4336, 0.0
    %4349 = vadd.xlane.f32.xlu0 %v4348
    %v4350 = vpop.xlane.xlu0 %4349
    %v4351 = vsel %vm1543, %v4337, 0.0
    %4352 = vadd.xlane.f32.xlu0 %v4351
    %v4353 = vpop.xlane.xlu0 %4352
    %v4354 = vsel %vm1543, %v4338, 0.0
    %4355 = vadd.xlane.f32.xlu0 %v4354
    %v4356 = vpop.xlane.xlu0 %4355
    %v4357 = vmul.f32 %v4341, %v1907
    %v4358 = vmul.f32 %v4344, %v1907
    %v4359 = vmul.f32 %v4347, %v1907
    %v4360 = vmul.f32 %v4350, %v1907
    %v4361 = vmul.f32 %v4353, %v1907
    %v4362 = vmul.f32 %v4356, %v1907
    %v4363 = vadd.f32 %v4357, 1e-05
    %v4364 = vadd.f32 %v4358, 1e-05
    %v4365 = vadd.f32 %v4359, 1e-05
    %v4366 = vadd.f32 %v4360, 1e-05
    %v4367 = vadd.f32 %v4361, 1e-05
    %v4368 = vadd.f32 %v4362, 1e-05
    %v4369 = vrsqrt.pop %v4363
    %v4370 = vrsqrt.pop %v4364
    %v4371 = vrsqrt.pop %v4365
    %v4372 = vrsqrt.pop %v4366
    %v4373 = vrsqrt.pop %v4367
    %v4374 = vrsqrt.pop %v4368
    %v4375 = vmul.f32 %v4327, %v4369
    %v4376 = vmul.f32 %v4328, %v4370
    %v4377 = vmul.f32 %v4329, %v4371
    %v4378 = vmul.f32 %v4330, %v4372
    %v4379 = vmul.f32 %v4331, %v4373
    %v4380 = vmul.f32 %v4332, %v4374
    %4387 = vrot.lane.b32.xlu0 %v1968, 64
    %v4388 = vpop.permute.xlu0 %4387
    %4389 = vrot.lane.b32.xlu0 %v1969, 64
    %v4390 = vpop.permute.xlu0 %4389
    %4391 = vrot.lane.b32.xlu0 %v1970, 64
    %v4392 = vpop.permute.xlu0 %4391
    %4393 = vrot.lane.b32.xlu0 %v1971, 64
    %v4394 = vpop.permute.xlu0 %4393
    %4395 = vrot.lane.b32.xlu0 %v1972, 64
    %v4396 = vpop.permute.xlu0 %4395
    %4397 = vrot.lane.b32.xlu0 %v1973, 64
    %v4398 = vpop.permute.xlu0 %4397
    %v4405 = vsel %vm1543, %v4388, 0.0
    %4406 = vadd.xlane.f32.xlu0 %v4405
    %v4407 = vpop.xlane.xlu0 %4406
    %v4408 = vsel %vm1543, %v4390, 0.0
    %4409 = vadd.xlane.f32.xlu0 %v4408
    %v4410 = vpop.xlane.xlu0 %4409
    %v4411 = vsel %vm1543, %v4392, 0.0
    %4412 = vadd.xlane.f32.xlu0 %v4411
    %v4413 = vpop.xlane.xlu0 %4412
    %v4414 = vsel %vm1543, %v4394, 0.0
    %4415 = vadd.xlane.f32.xlu0 %v4414
    %v4416 = vpop.xlane.xlu0 %4415
    %v4417 = vsel %vm1543, %v4396, 0.0
    %4418 = vadd.xlane.f32.xlu0 %v4417
    %v4419 = vpop.xlane.xlu0 %4418
    %v4420 = vsel %vm1543, %v4398, 0.0
    %4421 = vadd.xlane.f32.xlu0 %v4420
    %v4422 = vpop.xlane.xlu0 %4421
    %v4423 = vmax.f32 %v4407, 1e-24
    %v4424 = vmax.f32 %v4410, 1e-24
    %v4425 = vmax.f32 %v4413, 1e-24
    %v4426 = vmax.f32 %v4416, 1e-24
    %v4427 = vmax.f32 %v4419, 1e-24
    %v4428 = vmax.f32 %v4422, 1e-24
    %v4429 = vrsqrt.pop %v4423
    %v4430 = vrsqrt.pop %v4424
    %v4431 = vrsqrt.pop %v4425
    %v4432 = vrsqrt.pop %v4426
    %v4433 = vrsqrt.pop %v4427
    %v4434 = vrsqrt.pop %v4428
    %v4435 = vmul.f32 %v646, %v4429
    %v4436 = vmul.f32 %v647, %v4430
    %v4437 = vmul.f32 %v648, %v4431
    %v4438 = vmul.f32 %v649, %v4432
    %v4439 = vmul.f32 %v650, %v4433
    %v4440 = vmul.f32 %v651, %v4434
    %4447 = vrot.lane.b32.xlu0 %v4435, 64
    %v4448 = vpop.permute.xlu0 %4447
    %4449 = vrot.lane.b32.xlu0 %v4436, 64
    %v4450 = vpop.permute.xlu0 %4449
    %4451 = vrot.lane.b32.xlu0 %v4437, 64
    %v4452 = vpop.permute.xlu0 %4451
    %4453 = vrot.lane.b32.xlu0 %v4438, 64
    %v4454 = vpop.permute.xlu0 %4453
    %4455 = vrot.lane.b32.xlu0 %v4439, 64
    %v4456 = vpop.permute.xlu0 %4455
    %4457 = vrot.lane.b32.xlu0 %v4440, 64
    %v4458 = vpop.permute.xlu0 %4457
    %v4465 = vsel %vm1543, %v4448, 0.0
    %4466 = vadd.xlane.f32.xlu0 %v4465
    %v4467 = vpop.xlane.xlu0 %4466
    %v4468 = vsel %vm1543, %v4450, 0.0
    %4469 = vadd.xlane.f32.xlu0 %v4468
    %v4470 = vpop.xlane.xlu0 %4469
    %v4471 = vsel %vm1543, %v4452, 0.0
    %4472 = vadd.xlane.f32.xlu0 %v4471
    %v4473 = vpop.xlane.xlu0 %4472
    %v4474 = vsel %vm1543, %v4454, 0.0
    %4475 = vadd.xlane.f32.xlu0 %v4474
    %v4476 = vpop.xlane.xlu0 %4475
    %v4477 = vsel %vm1543, %v4456, 0.0
    %4478 = vadd.xlane.f32.xlu0 %v4477
    %v4479 = vpop.xlane.xlu0 %4478
    %v4480 = vsel %vm1543, %v4458, 0.0
    %4481 = vadd.xlane.f32.xlu0 %v4480
    %v4482 = vpop.xlane.xlu0 %4481
    %v4483 = vmul.f32 %v4467, %v1907
    %v4484 = vmul.f32 %v4470, %v1907
    %v4485 = vmul.f32 %v4473, %v1907
    %v4486 = vmul.f32 %v4476, %v1907
    %v4487 = vmul.f32 %v4479, %v1907
    %v4488 = vmul.f32 %v4482, %v1907
    %v4489 = vsub.f32 %v4435, %v4483
    %v4490 = vsub.f32 %v4436, %v4484
    %v4491 = vsub.f32 %v4437, %v4485
    %v4492 = vsub.f32 %v4438, %v4486
    %v4493 = vsub.f32 %v4439, %v4487
    %v4494 = vsub.f32 %v4440, %v4488
    %v4495 = vmul.f32 %v4489, %v4489
    %v4496 = vmul.f32 %v4490, %v4490
    %v4497 = vmul.f32 %v4491, %v4491
    %v4498 = vmul.f32 %v4492, %v4492
    %v4499 = vmul.f32 %v4493, %v4493
    %v4500 = vmul.f32 %v4494, %v4494
    %4507 = vrot.lane.b32.xlu0 %v4495, 64
    %v4508 = vpop.permute.xlu0 %4507
    %4509 = vrot.lane.b32.xlu0 %v4496, 64
    %v4510 = vpop.permute.xlu0 %4509
    %4511 = vrot.lane.b32.xlu0 %v4497, 64
    %v4512 = vpop.permute.xlu0 %4511
    %4513 = vrot.lane.b32.xlu0 %v4498, 64
    %v4514 = vpop.permute.xlu0 %4513
    %4515 = vrot.lane.b32.xlu0 %v4499, 64
    %v4516 = vpop.permute.xlu0 %4515
    %4517 = vrot.lane.b32.xlu0 %v4500, 64
    %v4518 = vpop.permute.xlu0 %4517
    %v4525 = vsel %vm1543, %v4508, 0.0
    %4526 = vadd.xlane.f32.xlu0 %v4525
    %v4527 = vpop.xlane.xlu0 %4526
    %v4528 = vsel %vm1543, %v4510, 0.0
    %4529 = vadd.xlane.f32.xlu0 %v4528
    %v4530 = vpop.xlane.xlu0 %4529
    %v4531 = vsel %vm1543, %v4512, 0.0
    %4532 = vadd.xlane.f32.xlu0 %v4531
    %v4533 = vpop.xlane.xlu0 %4532
    %v4534 = vsel %vm1543, %v4514, 0.0
    %4535 = vadd.xlane.f32.xlu0 %v4534
    %v4536 = vpop.xlane.xlu0 %4535
    %v4537 = vsel %vm1543, %v4516, 0.0
    %4538 = vadd.xlane.f32.xlu0 %v4537
    %v4539 = vpop.xlane.xlu0 %4538
    %v4540 = vsel %vm1543, %v4518, 0.0
    %4541 = vadd.xlane.f32.xlu0 %v4540
    %v4542 = vpop.xlane.xlu0 %4541
    %v4543 = vmul.f32 %v4527, %v1907
    %v4544 = vmul.f32 %v4530, %v1907
    %v4545 = vmul.f32 %v4533, %v1907
    %v4546 = vmul.f32 %v4536, %v1907
    %v4547 = vmul.f32 %v4539, %v1907
    %v4548 = vmul.f32 %v4542, %v1907
    %v4549 = vadd.f32 %v4543, 1e-05
    %v4550 = vadd.f32 %v4544, 1e-05
    %v4551 = vadd.f32 %v4545, 1e-05
    %v4552 = vadd.f32 %v4546, 1e-05
    %v4553 = vadd.f32 %v4547, 1e-05
    %v4554 = vadd.f32 %v4548, 1e-05
    %v4555 = vrsqrt.pop %v4549
    %v4556 = vrsqrt.pop %v4550
    %v4557 = vrsqrt.pop %v4551
    %v4558 = vrsqrt.pop %v4552
    %v4559 = vrsqrt.pop %v4553
    %v4560 = vrsqrt.pop %v4554
    %v4561 = vmul.f32 %v4489, %v4555
    %v4562 = vmul.f32 %v4490, %v4556
    %v4563 = vmul.f32 %v4491, %v4557
    %v4564 = vmul.f32 %v4492, %v4558
    %v4565 = vmul.f32 %v4493, %v4559
    %v4566 = vmul.f32 %v4494, %v4560
    %v4567 = vmul.f32 %v4255, %v4255
    %v4568 = vmul.f32 %v4256, %v4256
    %v4569 = vmul.f32 %v4257, %v4257
    %v4570 = vmul.f32 %v4258, %v4258
    %v4571 = vmul.f32 %v4259, %v4259
    %v4572 = vmul.f32 %v4260, %v4260
    %v4573 = vsel %vm1543, %v4567, 0.0
    %4574 = vadd.xlane.f32.xlu0 %v4573
    %v4575 = vpop.xlane.xlu0 %4574
    %v4576 = vsel %vm1543, %v4568, 0.0
    %4577 = vadd.xlane.f32.xlu0 %v4576
    %v4578 = vpop.xlane.xlu0 %4577
    %v4579 = vsel %vm1543, %v4569, 0.0
    %4580 = vadd.xlane.f32.xlu0 %v4579
    %v4581 = vpop.xlane.xlu0 %4580
    %v4582 = vsel %vm1543, %v4570, 0.0
    %4583 = vadd.xlane.f32.xlu0 %v4582
    %v4584 = vpop.xlane.xlu0 %4583
    %v4585 = vsel %vm1543, %v4571, 0.0
    %4586 = vadd.xlane.f32.xlu0 %v4585
    %v4587 = vpop.xlane.xlu0 %4586
    %v4588 = vsel %vm1543, %v4572, 0.0
    %4589 = vadd.xlane.f32.xlu0 %v4588
    %v4590 = vpop.xlane.xlu0 %4589
    %v4591 = vmax.f32 %v4575, 1e-24
    %v4592 = vmax.f32 %v4578, 1e-24
    %v4593 = vmax.f32 %v4581, 1e-24
    %v4594 = vmax.f32 %v4584, 1e-24
    %v4595 = vmax.f32 %v4587, 1e-24
    %v4596 = vmax.f32 %v4590, 1e-24
    %v4597 = vrsqrt.pop %v4591
    %v4598 = vrsqrt.pop %v4592
    %v4599 = vrsqrt.pop %v4593
    %v4600 = vrsqrt.pop %v4594
    %v4601 = vrsqrt.pop %v4595
    %v4602 = vrsqrt.pop %v4596
    %v4603 = vmul.f32 %v4255, %v4597
    %v4604 = vmul.f32 %v4256, %v4598
    %v4605 = vmul.f32 %v4257, %v4599
    %v4606 = vmul.f32 %v4258, %v4600
    %v4607 = vmul.f32 %v4259, %v4601
    %v4608 = vmul.f32 %v4260, %v4602
    %v4609 = vsel %vm1543, %v4603, 0.0
    %4610 = vadd.xlane.f32.xlu0 %v4609
    %v4611 = vpop.xlane.xlu0 %4610
    %v4612 = vsel %vm1543, %v4604, 0.0
    %4613 = vadd.xlane.f32.xlu0 %v4612
    %v4614 = vpop.xlane.xlu0 %4613
    %v4615 = vsel %vm1543, %v4605, 0.0
    %4616 = vadd.xlane.f32.xlu0 %v4615
    %v4617 = vpop.xlane.xlu0 %4616
    %v4618 = vsel %vm1543, %v4606, 0.0
    %4619 = vadd.xlane.f32.xlu0 %v4618
    %v4620 = vpop.xlane.xlu0 %4619
    %v4621 = vsel %vm1543, %v4607, 0.0
    %4622 = vadd.xlane.f32.xlu0 %v4621
    %v4623 = vpop.xlane.xlu0 %4622
    %v4624 = vsel %vm1543, %v4608, 0.0
    %4625 = vadd.xlane.f32.xlu0 %v4624
    %v4626 = vpop.xlane.xlu0 %4625
    %v4627 = vmul.f32 %v4611, %v1907
    %v4628 = vmul.f32 %v4614, %v1907
    %v4629 = vmul.f32 %v4617, %v1907
    %v4630 = vmul.f32 %v4620, %v1907
    %v4631 = vmul.f32 %v4623, %v1907
    %v4632 = vmul.f32 %v4626, %v1907
    %v4633 = vsub.f32 %v4603, %v4627
    %v4634 = vsub.f32 %v4604, %v4628
    %v4635 = vsub.f32 %v4605, %v4629
    %v4636 = vsub.f32 %v4606, %v4630
    %v4637 = vsub.f32 %v4607, %v4631
    %v4638 = vsub.f32 %v4608, %v4632
    %v4639 = vmul.f32 %v4633, %v4633
    %v4640 = vmul.f32 %v4634, %v4634
    %v4641 = vmul.f32 %v4635, %v4635
    %v4642 = vmul.f32 %v4636, %v4636
    %v4643 = vmul.f32 %v4637, %v4637
    %v4644 = vmul.f32 %v4638, %v4638
    %v4645 = vsel %vm1543, %v4639, 0.0
    %4646 = vadd.xlane.f32.xlu0 %v4645
    %v4647 = vpop.xlane.xlu0 %4646
    %v4648 = vsel %vm1543, %v4640, 0.0
    %4649 = vadd.xlane.f32.xlu0 %v4648
    %v4650 = vpop.xlane.xlu0 %4649
    %v4651 = vsel %vm1543, %v4641, 0.0
    %4652 = vadd.xlane.f32.xlu0 %v4651
    %v4653 = vpop.xlane.xlu0 %4652
    %v4654 = vsel %vm1543, %v4642, 0.0
    %4655 = vadd.xlane.f32.xlu0 %v4654
    %v4656 = vpop.xlane.xlu0 %4655
    %v4657 = vsel %vm1543, %v4643, 0.0
    %4658 = vadd.xlane.f32.xlu0 %v4657
    %v4659 = vpop.xlane.xlu0 %4658
    %v4660 = vsel %vm1543, %v4644, 0.0
    %4661 = vadd.xlane.f32.xlu0 %v4660
    %v4662 = vpop.xlane.xlu0 %4661
    %v4663 = vmul.f32 %v4647, %v1907
    %v4664 = vmul.f32 %v4650, %v1907
    %v4665 = vmul.f32 %v4653, %v1907
    %v4666 = vmul.f32 %v4656, %v1907
    %v4667 = vmul.f32 %v4659, %v1907
    %v4668 = vmul.f32 %v4662, %v1907
    %v4669 = vadd.f32 %v4663, 1e-05
    %v4670 = vadd.f32 %v4664, 1e-05
    %v4671 = vadd.f32 %v4665, 1e-05
    %v4672 = vadd.f32 %v4666, 1e-05
    %v4673 = vadd.f32 %v4667, 1e-05
    %v4674 = vadd.f32 %v4668, 1e-05
    %v4675 = vrsqrt.pop %v4669
    %v4676 = vrsqrt.pop %v4670
    %v4677 = vrsqrt.pop %v4671
    %v4678 = vrsqrt.pop %v4672
    %v4679 = vrsqrt.pop %v4673
    %v4680 = vrsqrt.pop %v4674
    %v4681 = vmul.f32 %v4633, %v4675
    %v4682 = vmul.f32 %v4634, %v4676
    %v4683 = vmul.f32 %v4635, %v4677
    %v4684 = vmul.f32 %v4636, %v4678
    %v4685 = vmul.f32 %v4637, %v4679
    %v4686 = vmul.f32 %v4638, %v4680
    %v4687 = vpack.c.bf16 %v4376, %v4375
    %v4688 = vpack.c.bf16 %v4378, %v4377
    %v4689 = vpack.c.bf16 %v4380, %v4379
    %v4690 = vld [vmem:[#allocation57] sm:$0xff]
    %v4691 = vld [vmem:[#allocation57 + $0x8] sm:$0xff]
    %v4692 = vld [vmem:[#allocation57 + $0x10] sm:$0xff]
    %v4693 = vld [vmem:[#allocation57 + $0x18] sm:$0xff]
    %v4694 = vld [vmem:[#allocation57 + $0x20] sm:$0xff]
    %v4695 = vld [vmem:[#allocation57 + $0x28] sm:$0xff]
    %v4696 = vld [vmem:[#allocation57 + $0x30] sm:$0xff]
    %v4697 = vld [vmem:[#allocation57 + $0x38] sm:$0xff]
    %v4706 = vunpack.c.l.b16 %v4690
    %v4707 = vunpack.c.h.b16 %v4690
    %v4708 = vunpack.c.l.b16 %v4691
    %v4709 = vunpack.c.h.b16 %v4691
    %v4710 = vunpack.c.l.b16 %v4692
    %v4711 = vunpack.c.h.b16 %v4692
    %v4712 = vunpack.c.l.b16 %v4693
    %v4713 = vunpack.c.h.b16 %v4693
    %v4714 = vunpack.c.l.b16 %v4694
    %v4715 = vunpack.c.h.b16 %v4694
    %v4716 = vunpack.c.l.b16 %v4695
    %v4717 = vunpack.c.h.b16 %v4695
    %v4718 = vunpack.c.l.b16 %v4696
    %v4719 = vunpack.c.h.b16 %v4696
    %v4720 = vunpack.c.l.b16 %v4697
    %v4721 = vunpack.c.h.b16 %v4697
    %v4722 = vpack.c.b16 %v4708, %v4706
    %v4723 = vpack.c.b16 %v4709, %v4707
    %v4724 = vpack.c.b16 %v4712, %v4710
    %v4725 = vpack.c.b16 %v4713, %v4711
    %v4726 = vpack.c.b16 %v4716, %v4714
    %v4727 = vpack.c.b16 %v4717, %v4715
    %v4728 = vpack.c.b16 %v4720, %v4718
    %v4729 = vpack.c.b16 %v4721, %v4719
    %v4739 = vsel %vm1543, %v4687, 0
    %v4742 = vsel %vm1543, %v4688, 0
    %v4745 = vsel %vm1543, %v4689, 0
    %4747 = vmatprep.subr.bf16.mxu0 %v4723
    %4748 = vmatpush1.bf16.msra.mxu0 %v4722
    %4749 = vmatprep.subr.bf16.mxu0 %v4725
    %4750 = vmatpush1.bf16.msra.mxu0 %v4724
    %4751 = vmatprep.subr.bf16.mxu0 %v4727
    %4752 = vmatpush1.bf16.msra.mxu0 %v4726
    %4753 = vmatprep.subr.bf16.mxu0 %v4729
    %4754 = vmatpush1.bf16.msra.mxu0 %v4728
    %4755 = vmatprep.subr.bf16.mxu0 0
    %4756 = vmatpush1.bf16.msra.mxu0 0
    %4757 = vmatprep.subr.bf16.mxu0 0
    %4758 = vmatpush1.bf16.msra.mxu0 0
    %4759 = vmatprep.subr.bf16.mxu0 0
    %4760 = vmatpush1.bf16.msra.mxu0 0
    %4761 = vmatprep.subr.bf16.mxu0 0
    %4762 = vmatpush1.bf16.msra.mxu0 0
    %4763 = vmatprep.subr.bf16.mxu0 0
    %4764 = vmatpush1.bf16.msra.mxu0 0
    %4765 = vmatprep.subr.bf16.mxu0 0
    %4766 = vmatpush1.bf16.msra.mxu0 0
    %4767 = vmatprep.subr.bf16.mxu0 0
    %4768 = vmatpush1.bf16.msra.mxu0 0
    %4769 = vmatprep.subr.bf16.mxu0 0
    %4770 = vmatpush1.bf16.msra.mxu0 0
    %4771 = vmatprep.subr.bf16.mxu0 0
    %4772 = vmatpush1.bf16.msra.mxu0 0
    %4773 = vmatprep.subr.bf16.mxu0 0
    %4774 = vmatpush1.bf16.msra.mxu0 0
    %4775 = vmatprep.subr.bf16.mxu0 0
    %4776 = vmatpush1.bf16.msra.mxu0 0
    %4777 = vmatprep.subr.bf16.mxu0 0
    %4778 = vmatpush1.bf16.msra.mxu0 0
    %4779 = vmatprep.mubr.bf16.mxu0 0
    %4780 = vmatmul.mubr.bf16.gmra.mrb[0].mxu0 %v4739
    %v4781 = vpop.f32.mrb[0].mxu0
    %v4782 = vadd.f32 0.0, %v4781
    %v4783 = vpop.f32.mrb[0].mxu0
    %v4784 = vadd.f32 0.0, %v4783
    %v4785 = vpop.f32.mrb[0].mxu0
    %v4786 = vadd.f32 0.0, %v4785
    %v4787 = vpop.f32.mrb[0].mxu0
    %v4788 = vadd.f32 0.0, %v4787
    %4789 = vmatprep.mubr.bf16.mxu0 0
    %4790 = vmatmul.mubr.bf16.gmra.mrb[0].mxu0 %v4742
    %v4791 = vpop.f32.mrb[0].mxu0
    %v4792 = vadd.f32 0.0, %v4791
    %v4793 = vpop.f32.mrb[0].mxu0
    %v4794 = vadd.f32 0.0, %v4793
    %v4795 = vpop.f32.mrb[0].mxu0
    %v4796 = vadd.f32 0.0, %v4795
    %v4797 = vpop.f32.mrb[0].mxu0
    %v4798 = vadd.f32 0.0, %v4797
    %4799 = vmatprep.mubr.bf16.mxu0 0
    %4800 = vmatmul.mubr.bf16.gmra.mrb[0].mxu0 %v4745
    %v4801 = vpop.f32.mrb[0].mxu0
    %v4802 = vadd.f32 0.0, %v4801
    %v4803 = vpop.f32.mrb[0].mxu0
    %v4804 = vadd.f32 0.0, %v4803
    %v4805 = vpop.f32.mrb[0].mxu0
    %v4806 = vadd.f32 0.0, %v4805
    %v4807 = vpop.f32.mrb[0].mxu0
    %v4808 = vadd.f32 0.0, %v4807
    %4809 = vdwg.mxu0
    %v4810 = vpack.c.bf16 %v4562, %v4561
    %v4811 = vpack.c.bf16 %v4564, %v4563
    %v4812 = vpack.c.bf16 %v4566, %v4565
    %4816 = vrot.lane.b32.xlu0 %v4810, 64
    %v4817 = vpop.permute.xlu0 %4816
    %4818 = vrot.lane.b32.xlu0 %v4811, 64
    %v4819 = vpop.permute.xlu0 %4818
    %4820 = vrot.lane.b32.xlu0 %v4812, 64
    %v4821 = vpop.permute.xlu0 %4820
    %v4823 = vsel %vm1543, %v4817, 0
    %v4826 = vsel %vm1543, %v4819, 0
    %v4829 = vsel %vm1543, %v4821, 0
    %4831 = vmatprep.subr.bf16.mxu0 %v4723
    %4832 = vmatpush1.bf16.msra.mxu0 %v4722
    %4833 = vmatprep.subr.bf16.mxu0 %v4725
    %4834 = vmatpush1.bf16.msra.mxu0 %v4724
    %4835 = vmatprep.subr.bf16.mxu0 %v4727
    %4836 = vmatpush1.bf16.msra.mxu0 %v4726
    %4837 = vmatprep.subr.bf16.mxu0 %v4729
    %4838 = vmatpush1.bf16.msra.mxu0 %v4728
    %4839 = vmatprep.subr.bf16.mxu0 0
    %4840 = vmatpush1.bf16.msra.mxu0 0
    %4841 = vmatprep.subr.bf16.mxu0 0
    %4842 = vmatpush1.bf16.msra.mxu0 0
    %4843 = vmatprep.subr.bf16.mxu0 0
    %4844 = vmatpush1.bf16.msra.mxu0 0
    %4845 = vmatprep.subr.bf16.mxu0 0
    %4846 = vmatpush1.bf16.msra.mxu0 0
    %4847 = vmatprep.subr.bf16.mxu0 0
    %4848 = vmatpush1.bf16.msra.mxu0 0
    %4849 = vmatprep.subr.bf16.mxu0 0
    %4850 = vmatpush1.bf16.msra.mxu0 0
    %4851 = vmatprep.subr.bf16.mxu0 0
    %4852 = vmatpush1.bf16.msra.mxu0 0
    %4853 = vmatprep.subr.bf16.mxu0 0
    %4854 = vmatpush1.bf16.msra.mxu0 0
    %4855 = vmatprep.subr.bf16.mxu0 0
    %4856 = vmatpush1.bf16.msra.mxu0 0
    %4857 = vmatprep.subr.bf16.mxu0 0
    %4858 = vmatpush1.bf16.msra.mxu0 0
    %4859 = vmatprep.subr.bf16.mxu0 0
    %4860 = vmatpush1.bf16.msra.mxu0 0
    %4861 = vmatprep.subr.bf16.mxu0 0
    %4862 = vmatpush1.bf16.msra.mxu0 0
    %4863 = vmatprep.mubr.bf16.mxu0 0
    %4864 = vmatmul.mubr.bf16.gmra.mrb[0].mxu0 %v4823
    %v4865 = vpop.f32.mrb[0].mxu0
    %v4866 = vadd.f32 0.0, %v4865
    %v4867 = vpop.f32.mrb[0].mxu0
    %v4868 = vadd.f32 0.0, %v4867
    %v4869 = vpop.f32.mrb[0].mxu0
    %v4870 = vadd.f32 0.0, %v4869
    %v4871 = vpop.f32.mrb[0].mxu0
    %v4872 = vadd.f32 0.0, %v4871
    %4873 = vmatprep.mubr.bf16.mxu0 0
    %4874 = vmatmul.mubr.bf16.gmra.mrb[0].mxu0 %v4826
    %v4875 = vpop.f32.mrb[0].mxu0
    %v4876 = vadd.f32 0.0, %v4875
    %v4877 = vpop.f32.mrb[0].mxu0
    %v4878 = vadd.f32 0.0, %v4877
    %v4879 = vpop.f32.mrb[0].mxu0
    %v4880 = vadd.f32 0.0, %v4879
    %v4881 = vpop.f32.mrb[0].mxu0
    %v4882 = vadd.f32 0.0, %v4881
    %4883 = vmatprep.mubr.bf16.mxu0 0
    %4884 = vmatmul.mubr.bf16.gmra.mrb[0].mxu0 %v4829
    %v4885 = vpop.f32.mrb[0].mxu0
    %v4886 = vadd.f32 0.0, %v4885
    %v4887 = vpop.f32.mrb[0].mxu0
    %v4888 = vadd.f32 0.0, %v4887
    %v4889 = vpop.f32.mrb[0].mxu0
    %v4890 = vadd.f32 0.0, %v4889
    %v4891 = vpop.f32.mrb[0].mxu0
    %v4892 = vadd.f32 0.0, %v4891
    %4893 = vdwg.mxu0
    %v4894 = vpack.c.bf16 %v4682, %v4681
    %v4895 = vpack.c.bf16 %v4684, %v4683
    %v4896 = vpack.c.bf16 %v4686, %v4685
    %v4898 = vsel %vm1543, %v4894, 0
    %v4901 = vsel %vm1543, %v4895, 0
    %v4904 = vsel %vm1543, %v4896, 0
    %4906 = vmatprep.subr.bf16.mxu0 %v4723
    %4907 = vmatpush1.bf16.msra.mxu0 %v4722
    %4908 = vmatprep.subr.bf16.mxu0 %v4725
    %4909 = vmatpush1.bf16.msra.mxu0 %v4724
    %4910 = vmatprep.subr.bf16.mxu0 %v4727
    %4911 = vmatpush1.bf16.msra.mxu0 %v4726
    %4912 = vmatprep.subr.bf16.mxu0 %v4729
    %4913 = vmatpush1.bf16.msra.mxu0 %v4728
    %4914 = vmatprep.subr.bf16.mxu0 0
    %4915 = vmatpush1.bf16.msra.mxu0 0
    %4916 = vmatprep.subr.bf16.mxu0 0
    %4917 = vmatpush1.bf16.msra.mxu0 0
    %4918 = vmatprep.subr.bf16.mxu0 0
    %4919 = vmatpush1.bf16.msra.mxu0 0
    %4920 = vmatprep.subr.bf16.mxu0 0
    %4921 = vmatpush1.bf16.msra.mxu0 0
    %4922 = vmatprep.subr.bf16.mxu0 0
    %4923 = vmatpush1.bf16.msra.mxu0 0
    %4924 = vmatprep.subr.bf16.mxu0 0
    %4925 = vmatpush1.bf16.msra.mxu0 0
    %4926 = vmatprep.subr.bf16.mxu0 0
    %4927 = vmatpush1.bf16.msra.mxu0 0
    %4928 = vmatprep.subr.bf16.mxu0 0
    %4929 = vmatpush1.bf16.msra.mxu0 0
    %4930 = vmatprep.subr.bf16.mxu0 0
    %4931 = vmatpush1.bf16.msra.mxu0 0
    %4932 = vmatprep.subr.bf16.mxu0 0
    %4933 = vmatpush1.bf16.msra.mxu0 0
    %4934 = vmatprep.subr.bf16.mxu0 0
    %4935 = vmatpush1.bf16.msra.mxu0 0
    %4936 = vmatprep.subr.bf16.mxu0 0
    %4937 = vmatpush1.bf16.msra.mxu0 0
    %4938 = vmatprep.mubr.bf16.mxu0 0
    %4939 = vmatmul.mubr.bf16.gmra.mrb[0].mxu0 %v4898
    %v4940 = vpop.f32.mrb[0].mxu0
    %v4941 = vadd.f32 0.0, %v4940
    %v4942 = vpop.f32.mrb[0].mxu0
    %v4943 = vadd.f32 0.0, %v4942
    %v4944 = vpop.f32.mrb[0].mxu0
    %v4945 = vadd.f32 0.0, %v4944
    %v4946 = vpop.f32.mrb[0].mxu0
    %v4947 = vadd.f32 0.0, %v4946
    %4948 = vmatprep.mubr.bf16.mxu0 0
    %4949 = vmatmul.mubr.bf16.gmra.mrb[0].mxu0 %v4901
    %v4950 = vpop.f32.mrb[0].mxu0
    %v4951 = vadd.f32 0.0, %v4950
    %v4952 = vpop.f32.mrb[0].mxu0
    %v4953 = vadd.f32 0.0, %v4952
    %v4954 = vpop.f32.mrb[0].mxu0
    %v4955 = vadd.f32 0.0, %v4954
    %v4956 = vpop.f32.mrb[0].mxu0
    %v4957 = vadd.f32 0.0, %v4956
    %4958 = vmatprep.mubr.bf16.mxu0 0
    %4959 = vmatmul.mubr.bf16.gmra.mrb[0].mxu0 %v4904
    %v4960 = vpop.f32.mrb[0].mxu0
    %v4961 = vadd.f32 0.0, %v4960
    %v4962 = vpop.f32.mrb[0].mxu0
    %v4963 = vadd.f32 0.0, %v4962
    %v4964 = vpop.f32.mrb[0].mxu0
    %v4965 = vadd.f32 0.0, %v4964
    %v4966 = vpop.f32.mrb[0].mxu0
    %v4967 = vadd.f32 0.0, %v4966
    %4968 = vdwg.mxu0
    %4975 = vrot.lane.b32.xlu0 %v4782, 64
    %v4976 = vpop.permute.xlu0 %4975
    %4977 = vrot.lane.b32.xlu0 %v4786, 64
    %v4978 = vpop.permute.xlu0 %4977
    %4979 = vrot.lane.b32.xlu0 %v4792, 64
    %v4980 = vpop.permute.xlu0 %4979
    %4981 = vrot.lane.b32.xlu0 %v4796, 64
    %v4982 = vpop.permute.xlu0 %4981
    %4983 = vrot.lane.b32.xlu0 %v4802, 64
    %v4984 = vpop.permute.xlu0 %4983
    %4985 = vrot.lane.b32.xlu0 %v4806, 64
    %v4986 = vpop.permute.xlu0 %4985
    %v4993 = vmul.f32 %v4782, %v4976
    %v4994 = vmul.f32 %v4786, %v4978
    %v4995 = vmul.f32 %v4792, %v4980
    %v4996 = vmul.f32 %v4796, %v4982
    %v4997 = vmul.f32 %v4802, %v4984
    %v4998 = vmul.f32 %v4806, %v4986
    %v4999 = vsel %vm1543, %v4993, 0.0
    %5000 = vadd.xlane.f32.xlu0 %v4999
    %v5001 = vpop.xlane.xlu0 %5000
    %v5002 = vsel %vm1543, %v4994, 0.0
    %5003 = vadd.xlane.f32.xlu0 %v5002
    %v5004 = vpop.xlane.xlu0 %5003
    %v5005 = vsel %vm1543, %v4995, 0.0
    %5006 = vadd.xlane.f32.xlu0 %v5005
    %v5007 = vpop.xlane.xlu0 %5006
    %v5008 = vsel %vm1543, %v4996, 0.0
    %5009 = vadd.xlane.f32.xlu0 %v5008
    %v5010 = vpop.xlane.xlu0 %5009
    %v5011 = vsel %vm1543, %v4997, 0.0
    %5012 = vadd.xlane.f32.xlu0 %v5011
    %v5013 = vpop.xlane.xlu0 %5012
    %v5014 = vsel %vm1543, %v4998, 0.0
    %5015 = vadd.xlane.f32.xlu0 %v5014
    %v5016 = vpop.xlane.xlu0 %5015
    %v5017 = vmul.f32 %v5001, 0.125
    %v5018 = vmul.f32 %v5004, 0.125
    %v5019 = vmul.f32 %v5007, 0.125
    %v5020 = vmul.f32 %v5010, 0.125
    %v5021 = vmul.f32 %v5013, 0.125
    %v5022 = vmul.f32 %v5016, 0.125
    %5029 = vrot.lane.b32.xlu0 %v4866, 64
    %v5030 = vpop.permute.xlu0 %5029
    %5031 = vrot.lane.b32.xlu0 %v4870, 64
    %v5032 = vpop.permute.xlu0 %5031
    %5033 = vrot.lane.b32.xlu0 %v4876, 64
    %v5034 = vpop.permute.xlu0 %5033
    %5035 = vrot.lane.b32.xlu0 %v4880, 64
    %v5036 = vpop.permute.xlu0 %5035
    %5037 = vrot.lane.b32.xlu0 %v4886, 64
    %v5038 = vpop.permute.xlu0 %5037
    %5039 = vrot.lane.b32.xlu0 %v4890, 64
    %v5040 = vpop.permute.xlu0 %5039
    %v5047 = vmul.f32 %v4782, %v5030
    %v5048 = vmul.f32 %v4786, %v5032
    %v5049 = vmul.f32 %v4792, %v5034
    %v5050 = vmul.f32 %v4796, %v5036
    %v5051 = vmul.f32 %v4802, %v5038
    %v5052 = vmul.f32 %v4806, %v5040
    %v5053 = vsel %vm1543, %v5047, 0.0
    %5054 = vadd.xlane.f32.xlu0 %v5053
    %v5055 = vpop.xlane.xlu0 %5054
    %v5056 = vsel %vm1543, %v5048, 0.0
    %5057 = vadd.xlane.f32.xlu0 %v5056
    %v5058 = vpop.xlane.xlu0 %5057
    %v5059 = vsel %vm1543, %v5049, 0.0
    %5060 = vadd.xlane.f32.xlu0 %v5059
    %v5061 = vpop.xlane.xlu0 %5060
    %v5062 = vsel %vm1543, %v5050, 0.0
    %5063 = vadd.xlane.f32.xlu0 %v5062
    %v5064 = vpop.xlane.xlu0 %5063
    %v5065 = vsel %vm1543, %v5051, 0.0
    %5066 = vadd.xlane.f32.xlu0 %v5065
    %v5067 = vpop.xlane.xlu0 %5066
    %v5068 = vsel %vm1543, %v5052, 0.0
    %5069 = vadd.xlane.f32.xlu0 %v5068
    %v5070 = vpop.xlane.xlu0 %5069
    %v5071 = vmul.f32 %v5055, 0.125
    %v5072 = vmul.f32 %v5058, 0.125
    %v5073 = vmul.f32 %v5061, 0.125
    %v5074 = vmul.f32 %v5064, 0.125
    %v5075 = vmul.f32 %v5067, 0.125
    %v5076 = vmul.f32 %v5070, 0.125
    %5083 = vrot.lane.b32.xlu0 %v4941, 64
    %v5084 = vpop.permute.xlu0 %5083
    %5085 = vrot.lane.b32.xlu0 %v4945, 64
    %v5086 = vpop.permute.xlu0 %5085
    %5087 = vrot.lane.b32.xlu0 %v4951, 64
    %v5088 = vpop.permute.xlu0 %5087
    %5089 = vrot.lane.b32.xlu0 %v4955, 64
    %v5090 = vpop.permute.xlu0 %5089
    %5091 = vrot.lane.b32.xlu0 %v4961, 64
    %v5092 = vpop.permute.xlu0 %5091
    %5093 = vrot.lane.b32.xlu0 %v4965, 64
    %v5094 = vpop.permute.xlu0 %5093
    %v5101 = vmul.f32 %v4782, %v5084
    %v5102 = vmul.f32 %v4786, %v5086
    %v5103 = vmul.f32 %v4792, %v5088
    %v5104 = vmul.f32 %v4796, %v5090
    %v5105 = vmul.f32 %v4802, %v5092
    %v5106 = vmul.f32 %v4806, %v5094
    %v5107 = vsel %vm1543, %v5101, 0.0
    %5108 = vadd.xlane.f32.xlu0 %v5107
    %v5109 = vpop.xlane.xlu0 %5108
    %v5110 = vsel %vm1543, %v5102, 0.0
    %5111 = vadd.xlane.f32.xlu0 %v5110
    %v5112 = vpop.xlane.xlu0 %5111
    %v5113 = vsel %vm1543, %v5103, 0.0
    %5114 = vadd.xlane.f32.xlu0 %v5113
    %v5115 = vpop.xlane.xlu0 %5114
    %v5116 = vsel %vm1543, %v5104, 0.0
    %5117 = vadd.xlane.f32.xlu0 %v5116
    %v5118 = vpop.xlane.xlu0 %5117
    %v5119 = vsel %vm1543, %v5105, 0.0
    %5120 = vadd.xlane.f32.xlu0 %v5119
    %v5121 = vpop.xlane.xlu0 %5120
    %v5122 = vsel %vm1543, %v5106, 0.0
    %5123 = vadd.xlane.f32.xlu0 %v5122
    %v5124 = vpop.xlane.xlu0 %5123
    %v5125 = vmul.f32 %v5109, 0.125
    %v5126 = vmul.f32 %v5112, 0.125
    %v5127 = vmul.f32 %v5115, 0.125
    %v5128 = vmul.f32 %v5118, 0.125
    %v5129 = vmul.f32 %v5121, 0.125
    %v5130 = vmul.f32 %v5124, 0.125
    %v5131 = vmax.f32 %v5017, %v5071
    %v5132 = vmax.f32 %v5018, %v5072
    %v5133 = vmax.f32 %v5019, %v5073
    %v5134 = vmax.f32 %v5020, %v5074
    %v5135 = vmax.f32 %v5021, %v5075
    %v5136 = vmax.f32 %v5022, %v5076
    %v5137 = vmax.f32 %v5131, %v5125
    %v5138 = vmax.f32 %v5132, %v5126
    %v5139 = vmax.f32 %v5133, %v5127
    %v5140 = vmax.f32 %v5134, %v5128
    %v5141 = vmax.f32 %v5135, %v5129
    %v5142 = vmax.f32 %v5136, %v5130
    %v5143 = vsub.f32 %v5017, %v5137
    %v5144 = vsub.f32 %v5018, %v5138
    %v5145 = vsub.f32 %v5019, %v5139
    %v5146 = vsub.f32 %v5020, %v5140
    %v5147 = vsub.f32 %v5021, %v5141
    %v5148 = vsub.f32 %v5022, %v5142
    %v5149 = vmul.f32 %v5143, 1.442695
    %v5150 = vpow.pop %v5149
    %v5151 = vmul.f32 %v5144, 1.442695
    %v5152 = vpow.pop %v5151
    %v5153 = vmul.f32 %v5145, 1.442695
    %v5154 = vpow.pop %v5153
    %v5155 = vmul.f32 %v5146, 1.442695
    %v5156 = vpow.pop %v5155
    %v5157 = vmul.f32 %v5147, 1.442695
    %v5158 = vpow.pop %v5157
    %v5159 = vmul.f32 %v5148, 1.442695
    %v5160 = vpow.pop %v5159
    %v5161 = vsub.f32 %v5071, %v5137
    %v5162 = vsub.f32 %v5072, %v5138
    %v5163 = vsub.f32 %v5073, %v5139
    %v5164 = vsub.f32 %v5074, %v5140
    %v5165 = vsub.f32 %v5075, %v5141
    %v5166 = vsub.f32 %v5076, %v5142
    %v5167 = vmul.f32 %v5161, 1.442695
    %v5168 = vpow.pop %v5167
    %v5169 = vmul.f32 %v5162, 1.442695
    %v5170 = vpow.pop %v5169
    %v5171 = vmul.f32 %v5163, 1.442695
    %v5172 = vpow.pop %v5171
    %v5173 = vmul.f32 %v5164, 1.442695
    %v5174 = vpow.pop %v5173
    %v5175 = vmul.f32 %v5165, 1.442695
    %v5176 = vpow.pop %v5175
    %v5177 = vmul.f32 %v5166, 1.442695
    %v5178 = vpow.pop %v5177
    %v5179 = vsub.f32 %v5125, %v5137
    %v5180 = vsub.f32 %v5126, %v5138
    %v5181 = vsub.f32 %v5127, %v5139
    %v5182 = vsub.f32 %v5128, %v5140
    %v5183 = vsub.f32 %v5129, %v5141
    %v5184 = vsub.f32 %v5130, %v5142
    %v5185 = vmul.f32 %v5179, 1.442695
    %v5186 = vpow.pop %v5185
    %v5187 = vmul.f32 %v5180, 1.442695
    %v5188 = vpow.pop %v5187
    %v5189 = vmul.f32 %v5181, 1.442695
    %v5190 = vpow.pop %v5189
    %v5191 = vmul.f32 %v5182, 1.442695
    %v5192 = vpow.pop %v5191
    %v5193 = vmul.f32 %v5183, 1.442695
    %v5194 = vpow.pop %v5193
    %v5195 = vmul.f32 %v5184, 1.442695
    %v5196 = vpow.pop %v5195
    %v5197 = vadd.f32 %v5150, %v5168
    %v5198 = vadd.f32 %v5152, %v5170
    %v5199 = vadd.f32 %v5154, %v5172
    %v5200 = vadd.f32 %v5156, %v5174
    %v5201 = vadd.f32 %v5158, %v5176
    %v5202 = vadd.f32 %v5160, %v5178
    %v5203 = vadd.f32 %v5197, %v5186
    %v5204 = vadd.f32 %v5198, %v5188
    %v5205 = vadd.f32 %v5199, %v5190
    %v5206 = vadd.f32 %v5200, %v5192
    %v5207 = vadd.f32 %v5201, %v5194
    %v5208 = vadd.f32 %v5202, %v5196
    %v5209 = vmul.f32 %v5150, %v4784
    %v5210 = vmul.f32 %v5152, %v4788
    %v5211 = vmul.f32 %v5154, %v4794
    %v5212 = vmul.f32 %v5156, %v4798
    %v5213 = vmul.f32 %v5158, %v4804
    %v5214 = vmul.f32 %v5160, %v4808
    %v5215 = vmul.f32 %v5168, %v4868
    %v5216 = vmul.f32 %v5170, %v4872
    %v5217 = vmul.f32 %v5172, %v4878
    %v5218 = vmul.f32 %v5174, %v4882
    %v5219 = vmul.f32 %v5176, %v4888
    %v5220 = vmul.f32 %v5178, %v4892
    %v5221 = vadd.f32 %v5209, %v5215
    %v5222 = vadd.f32 %v5210, %v5216
    %v5223 = vadd.f32 %v5211, %v5217
    %v5224 = vadd.f32 %v5212, %v5218
    %v5225 = vadd.f32 %v5213, %v5219
    %v5226 = vadd.f32 %v5214, %v5220
    %v5227 = vmul.f32 %v5186, %v4943
    %v5228 = vmul.f32 %v5188, %v4947
    %v5229 = vmul.f32 %v5190, %v4953
    %v5230 = vmul.f32 %v5192, %v4957
    %v5231 = vmul.f32 %v5194, %v4963
    %v5232 = vmul.f32 %v5196, %v4967
    %v5233 = vadd.f32 %v5221, %v5227
    %v5234 = vadd.f32 %v5222, %v5228
    %v5235 = vadd.f32 %v5223, %v5229
    %v5236 = vadd.f32 %v5224, %v5230
    %v5237 = vadd.f32 %v5225, %v5231
    %v5238 = vadd.f32 %v5226, %v5232
    %v5239 = vrcp.pop %v5203
    %v5240 = vmul.f32 %v5233, %v5239
    %v5241 = vrcp.pop %v5204
    %v5242 = vmul.f32 %v5234, %v5241
    %v5243 = vrcp.pop %v5205
    %v5244 = vmul.f32 %v5235, %v5243
    %v5245 = vrcp.pop %v5206
    %v5246 = vmul.f32 %v5236, %v5245
    %v5247 = vrcp.pop %v5207
    %v5248 = vmul.f32 %v5237, %v5247
    %v5249 = vrcp.pop %v5208
    %v5250 = vmul.f32 %v5238, %v5249
    %v5251 = vadd.f32 %v5240, 0.0
    %v5252 = vadd.f32 %v5242, 0.0
    %v5253 = vadd.f32 %v5244, 0.0
    %v5254 = vadd.f32 %v5246, 0.0
    %v5255 = vadd.f32 %v5248, 0.0
    %v5256 = vadd.f32 %v5250, 0.0
    %v5257 = vmul.f32 %v4866, %v4976
    %v5258 = vmul.f32 %v4870, %v4978
    %v5259 = vmul.f32 %v4876, %v4980
    %v5260 = vmul.f32 %v4880, %v4982
    %v5261 = vmul.f32 %v4886, %v4984
    %v5262 = vmul.f32 %v4890, %v4986
    %v5263 = vsel %vm1543, %v5257, 0.0
    %5264 = vadd.xlane.f32.xlu0 %v5263
    %v5265 = vpop.xlane.xlu0 %5264
    %v5266 = vsel %vm1543, %v5258, 0.0
    %5267 = vadd.xlane.f32.xlu0 %v5266
    %v5268 = vpop.xlane.xlu0 %5267
    %v5269 = vsel %vm1543, %v5259, 0.0
    %5270 = vadd.xlane.f32.xlu0 %v5269
    %v5271 = vpop.xlane.xlu0 %5270
    %v5272 = vsel %vm1543, %v5260, 0.0
    %5273 = vadd.xlane.f32.xlu0 %v5272
    %v5274 = vpop.xlane.xlu0 %5273
    %v5275 = vsel %vm1543, %v5261, 0.0
    %5276 = vadd.xlane.f32.xlu0 %v5275
    %v5277 = vpop.xlane.xlu0 %5276
    %v5278 = vsel %vm1543, %v5262, 0.0
    %5279 = vadd.xlane.f32.xlu0 %v5278
    %v5280 = vpop.xlane.xlu0 %5279
    %v5281 = vmul.f32 %v5265, 0.125
    %v5282 = vmul.f32 %v5268, 0.125
    %v5283 = vmul.f32 %v5271, 0.125
    %v5284 = vmul.f32 %v5274, 0.125
    %v5285 = vmul.f32 %v5277, 0.125
    %v5286 = vmul.f32 %v5280, 0.125
    %v5287 = vmul.f32 %v4866, %v5030
    %v5288 = vmul.f32 %v4870, %v5032
    %v5289 = vmul.f32 %v4876, %v5034
    %v5290 = vmul.f32 %v4880, %v5036
    %v5291 = vmul.f32 %v4886, %v5038
    %v5292 = vmul.f32 %v4890, %v5040
    %v5293 = vsel %vm1543, %v5287, 0.0
    %5294 = vadd.xlane.f32.xlu0 %v5293
    %v5295 = vpop.xlane.xlu0 %5294
    %v5296 = vsel %vm1543, %v5288, 0.0
    %5297 = vadd.xlane.f32.xlu0 %v5296
    %v5298 = vpop.xlane.xlu0 %5297
    %v5299 = vsel %vm1543, %v5289, 0.0
    %5300 = vadd.xlane.f32.xlu0 %v5299
    %v5301 = vpop.xlane.xlu0 %5300
    %v5302 = vsel %vm1543, %v5290, 0.0
    %5303 = vadd.xlane.f32.xlu0 %v5302
    %v5304 = vpop.xlane.xlu0 %5303
    %v5305 = vsel %vm1543, %v5291, 0.0
    %5306 = vadd.xlane.f32.xlu0 %v5305
    %v5307 = vpop.xlane.xlu0 %5306
    %v5308 = vsel %vm1543, %v5292, 0.0
    %5309 = vadd.xlane.f32.xlu0 %v5308
    %v5310 = vpop.xlane.xlu0 %5309
    %v5311 = vmul.f32 %v5295, 0.125
    %v5312 = vmul.f32 %v5298, 0.125
    %v5313 = vmul.f32 %v5301, 0.125
    %v5314 = vmul.f32 %v5304, 0.125
    %v5315 = vmul.f32 %v5307, 0.125
    %v5316 = vmul.f32 %v5310, 0.125
    %v5317 = vmul.f32 %v4866, %v5084
    %v5318 = vmul.f32 %v4870, %v5086
    %v5319 = vmul.f32 %v4876, %v5088
    %v5320 = vmul.f32 %v4880, %v5090
    %v5321 = vmul.f32 %v4886, %v5092
    %v5322 = vmul.f32 %v4890, %v5094
    %v5323 = vsel %vm1543, %v5317, 0.0
    %5324 = vadd.xlane.f32.xlu0 %v5323
    %v5325 = vpop.xlane.xlu0 %5324
    %v5326 = vsel %vm1543, %v5318, 0.0
    %5327 = vadd.xlane.f32.xlu0 %v5326
    %v5328 = vpop.xlane.xlu0 %5327
    %v5329 = vsel %vm1543, %v5319, 0.0
    %5330 = vadd.xlane.f32.xlu0 %v5329
    %v5331 = vpop.xlane.xlu0 %5330
    %v5332 = vsel %vm1543, %v5320, 0.0
    %5333 = vadd.xlane.f32.xlu0 %v5332
    %v5334 = vpop.xlane.xlu0 %5333
    %v5335 = vsel %vm1543, %v5321, 0.0
    %5336 = vadd.xlane.f32.xlu0 %v5335
    %v5337 = vpop.xlane.xlu0 %5336
    %v5338 = vsel %vm1543, %v5322, 0.0
    %5339 = vadd.xlane.f32.xlu0 %v5338
    %v5340 = vpop.xlane.xlu0 %5339
    %v5341 = vmul.f32 %v5325, 0.125
    %v5342 = vmul.f32 %v5328, 0.125
    %v5343 = vmul.f32 %v5331, 0.125
    %v5344 = vmul.f32 %v5334, 0.125
    %v5345 = vmul.f32 %v5337, 0.125
    %v5346 = vmul.f32 %v5340, 0.125
    %v5347 = vmax.f32 %v5281, %v5311
    %v5348 = vmax.f32 %v5282, %v5312
    %v5349 = vmax.f32 %v5283, %v5313
    %v5350 = vmax.f32 %v5284, %v5314
    %v5351 = vmax.f32 %v5285, %v5315
    %v5352 = vmax.f32 %v5286, %v5316
    %v5353 = vmax.f32 %v5347, %v5341
    %v5354 = vmax.f32 %v5348, %v5342
    %v5355 = vmax.f32 %v5349, %v5343
    %v5356 = vmax.f32 %v5350, %v5344
    %v5357 = vmax.f32 %v5351, %v5345
    %v5358 = vmax.f32 %v5352, %v5346
    %v5359 = vsub.f32 %v5281, %v5353
    %v5360 = vsub.f32 %v5282, %v5354
    %v5361 = vsub.f32 %v5283, %v5355
    %v5362 = vsub.f32 %v5284, %v5356
    %v5363 = vsub.f32 %v5285, %v5357
    %v5364 = vsub.f32 %v5286, %v5358
    %v5365 = vmul.f32 %v5359, 1.442695
    %v5366 = vpow.pop %v5365
    %v5367 = vmul.f32 %v5360, 1.442695
    %v5368 = vpow.pop %v5367
    %v5369 = vmul.f32 %v5361, 1.442695
    %v5370 = vpow.pop %v5369
    %v5371 = vmul.f32 %v5362, 1.442695
    %v5372 = vpow.pop %v5371
    %v5373 = vmul.f32 %v5363, 1.442695
    %v5374 = vpow.pop %v5373
    %v5375 = vmul.f32 %v5364, 1.442695
    %v5376 = vpow.pop %v5375
    %v5377 = vsub.f32 %v5311, %v5353
    %v5378 = vsub.f32 %v5312, %v5354
    %v5379 = vsub.f32 %v5313, %v5355
    %v5380 = vsub.f32 %v5314, %v5356
    %v5381 = vsub.f32 %v5315, %v5357
    %v5382 = vsub.f32 %v5316, %v5358
    %v5383 = vmul.f32 %v5377, 1.442695
    %v5384 = vpow.pop %v5383
    %v5385 = vmul.f32 %v5378, 1.442695
    %v5386 = vpow.pop %v5385
    %v5387 = vmul.f32 %v5379, 1.442695
    %v5388 = vpow.pop %v5387
    %v5389 = vmul.f32 %v5380, 1.442695
    %v5390 = vpow.pop %v5389
    %v5391 = vmul.f32 %v5381, 1.442695
    %v5392 = vpow.pop %v5391
    %v5393 = vmul.f32 %v5382, 1.442695
    %v5394 = vpow.pop %v5393
    %v5395 = vsub.f32 %v5341, %v5353
    %v5396 = vsub.f32 %v5342, %v5354
    %v5397 = vsub.f32 %v5343, %v5355
    %v5398 = vsub.f32 %v5344, %v5356
    %v5399 = vsub.f32 %v5345, %v5357
    %v5400 = vsub.f32 %v5346, %v5358
    %v5401 = vmul.f32 %v5395, 1.442695
    %v5402 = vpow.pop %v5401
    %v5403 = vmul.f32 %v5396, 1.442695
    %v5404 = vpow.pop %v5403
    %v5405 = vmul.f32 %v5397, 1.442695
    %v5406 = vpow.pop %v5405
    %v5407 = vmul.f32 %v5398, 1.442695
    %v5408 = vpow.pop %v5407
    %v5409 = vmul.f32 %v5399, 1.442695
    %v5410 = vpow.pop %v5409
    %v5411 = vmul.f32 %v5400, 1.442695
    %v5412 = vpow.pop %v5411
    %v5413 = vadd.f32 %v5366, %v5384
    %v5414 = vadd.f32 %v5368, %v5386
    %v5415 = vadd.f32 %v5370, %v5388
    %v5416 = vadd.f32 %v5372, %v5390
    %v5417 = vadd.f32 %v5374, %v5392
    %v5418 = vadd.f32 %v5376, %v5394
    %v5419 = vadd.f32 %v5413, %v5402
    %v5420 = vadd.f32 %v5414, %v5404
    %v5421 = vadd.f32 %v5415, %v5406
    %v5422 = vadd.f32 %v5416, %v5408
    %v5423 = vadd.f32 %v5417, %v5410
    %v5424 = vadd.f32 %v5418, %v5412
    %v5425 = vmul.f32 %v5366, %v4784
    %v5426 = vmul.f32 %v5368, %v4788
    %v5427 = vmul.f32 %v5370, %v4794
    %v5428 = vmul.f32 %v5372, %v4798
    %v5429 = vmul.f32 %v5374, %v4804
    %v5430 = vmul.f32 %v5376, %v4808
    %v5431 = vmul.f32 %v5384, %v4868
    %v5432 = vmul.f32 %v5386, %v4872
    %v5433 = vmul.f32 %v5388, %v4878
    %v5434 = vmul.f32 %v5390, %v4882
    %v5435 = vmul.f32 %v5392, %v4888
    %v5436 = vmul.f32 %v5394, %v4892
    %v5437 = vadd.f32 %v5425, %v5431
    %v5438 = vadd.f32 %v5426, %v5432
    %v5439 = vadd.f32 %v5427, %v5433
    %v5440 = vadd.f32 %v5428, %v5434
    %v5441 = vadd.f32 %v5429, %v5435
    %v5442 = vadd.f32 %v5430, %v5436
    %v5443 = vmul.f32 %v5402, %v4943
    %v5444 = vmul.f32 %v5404, %v4947
    %v5445 = vmul.f32 %v5406, %v4953
    %v5446 = vmul.f32 %v5408, %v4957
    %v5447 = vmul.f32 %v5410, %v4963
    %v5448 = vmul.f32 %v5412, %v4967
    %v5449 = vadd.f32 %v5437, %v5443
    %v5450 = vadd.f32 %v5438, %v5444
    %v5451 = vadd.f32 %v5439, %v5445
    %v5452 = vadd.f32 %v5440, %v5446
    %v5453 = vadd.f32 %v5441, %v5447
    %v5454 = vadd.f32 %v5442, %v5448
    %v5455 = vrcp.pop %v5419
    %v5456 = vmul.f32 %v5449, %v5455
    %v5457 = vrcp.pop %v5420
    %v5458 = vmul.f32 %v5450, %v5457
    %v5459 = vrcp.pop %v5421
    %v5460 = vmul.f32 %v5451, %v5459
    %v5461 = vrcp.pop %v5422
    %v5462 = vmul.f32 %v5452, %v5461
    %v5463 = vrcp.pop %v5423
    %v5464 = vmul.f32 %v5453, %v5463
    %v5465 = vrcp.pop %v5424
    %v5466 = vmul.f32 %v5454, %v5465
    %v5467 = vadd.f32 %v5251, %v5456
    %v5468 = vadd.f32 %v5252, %v5458
    %v5469 = vadd.f32 %v5253, %v5460
    %v5470 = vadd.f32 %v5254, %v5462
    %v5471 = vadd.f32 %v5255, %v5464
    %v5472 = vadd.f32 %v5256, %v5466
    %v5473 = vmul.f32 %v4941, %v4976
    %v5474 = vmul.f32 %v4945, %v4978
    %v5475 = vmul.f32 %v4951, %v4980
    %v5476 = vmul.f32 %v4955, %v4982
    %v5477 = vmul.f32 %v4961, %v4984
    %v5478 = vmul.f32 %v4965, %v4986
    %v5479 = vsel %vm1543, %v5473, 0.0
    %5480 = vadd.xlane.f32.xlu0 %v5479
    %v5481 = vpop.xlane.xlu0 %5480
    %v5482 = vsel %vm1543, %v5474, 0.0
    %5483 = vadd.xlane.f32.xlu0 %v5482
    %v5484 = vpop.xlane.xlu0 %5483
    %v5485 = vsel %vm1543, %v5475, 0.0
    %5486 = vadd.xlane.f32.xlu0 %v5485
    %v5487 = vpop.xlane.xlu0 %5486
    %v5488 = vsel %vm1543, %v5476, 0.0
    %5489 = vadd.xlane.f32.xlu0 %v5488
    %v5490 = vpop.xlane.xlu0 %5489
    %v5491 = vsel %vm1543, %v5477, 0.0
    %5492 = vadd.xlane.f32.xlu0 %v5491
    %v5493 = vpop.xlane.xlu0 %5492
    %v5494 = vsel %vm1543, %v5478, 0.0
    %5495 = vadd.xlane.f32.xlu0 %v5494
    %v5496 = vpop.xlane.xlu0 %5495
    %v5497 = vmul.f32 %v5481, 0.125
    %v5498 = vmul.f32 %v5484, 0.125
    %v5499 = vmul.f32 %v5487, 0.125
    %v5500 = vmul.f32 %v5490, 0.125
    %v5501 = vmul.f32 %v5493, 0.125
    %v5502 = vmul.f32 %v5496, 0.125
    %v5503 = vmul.f32 %v4941, %v5030
    %v5504 = vmul.f32 %v4945, %v5032
    %v5505 = vmul.f32 %v4951, %v5034
    %v5506 = vmul.f32 %v4955, %v5036
    %v5507 = vmul.f32 %v4961, %v5038
    %v5508 = vmul.f32 %v4965, %v5040
    %v5509 = vsel %vm1543, %v5503, 0.0
    %5510 = vadd.xlane.f32.xlu0 %v5509
    %v5511 = vpop.xlane.xlu0 %5510
    %v5512 = vsel %vm1543, %v5504, 0.0
    %5513 = vadd.xlane.f32.xlu0 %v5512
    %v5514 = vpop.xlane.xlu0 %5513
    %v5515 = vsel %vm1543, %v5505, 0.0
    %5516 = vadd.xlane.f32.xlu0 %v5515
    %v5517 = vpop.xlane.xlu0 %5516
    %v5518 = vsel %vm1543, %v5506, 0.0
    %5519 = vadd.xlane.f32.xlu0 %v5518
    %v5520 = vpop.xlane.xlu0 %5519
    %v5521 = vsel %vm1543, %v5507, 0.0
    %5522 = vadd.xlane.f32.xlu0 %v5521
    %v5523 = vpop.xlane.xlu0 %5522
    %v5524 = vsel %vm1543, %v5508, 0.0
    %5525 = vadd.xlane.f32.xlu0 %v5524
    %v5526 = vpop.xlane.xlu0 %5525
    %v5527 = vmul.f32 %v5511, 0.125
    %v5528 = vmul.f32 %v5514, 0.125
    %v5529 = vmul.f32 %v5517, 0.125
    %v5530 = vmul.f32 %v5520, 0.125
    %v5531 = vmul.f32 %v5523, 0.125
    %v5532 = vmul.f32 %v5526, 0.125
    %v5533 = vmul.f32 %v4941, %v5084
    %v5534 = vmul.f32 %v4945, %v5086
    %v5535 = vmul.f32 %v4951, %v5088
    %v5536 = vmul.f32 %v4955, %v5090
    %v5537 = vmul.f32 %v4961, %v5092
    %v5538 = vmul.f32 %v4965, %v5094
    %v5539 = vsel %vm1543, %v5533, 0.0
    %5540 = vadd.xlane.f32.xlu0 %v5539
    %v5541 = vpop.xlane.xlu0 %5540
    %v5542 = vsel %vm1543, %v5534, 0.0
    %5543 = vadd.xlane.f32.xlu0 %v5542
    %v5544 = vpop.xlane.xlu0 %5543
    %v5545 = vsel %vm1543, %v5535, 0.0
    %5546 = vadd.xlane.f32.xlu0 %v5545
    %v5547 = vpop.xlane.xlu0 %5546
    %v5548 = vsel %vm1543, %v5536, 0.0
    %5549 = vadd.xlane.f32.xlu0 %v5548
    %v5550 = vpop.xlane.xlu0 %5549
    %v5551 = vsel %vm1543, %v5537, 0.0
    %5552 = vadd.xlane.f32.xlu0 %v5551
    %v5553 = vpop.xlane.xlu0 %5552
    %v5554 = vsel %vm1543, %v5538, 0.0
    %5555 = vadd.xlane.f32.xlu0 %v5554
    %v5556 = vpop.xlane.xlu0 %5555
    %v5557 = vmul.f32 %v5541, 0.125
    %v5558 = vmul.f32 %v5544, 0.125
    %v5559 = vmul.f32 %v5547, 0.125
    %v5560 = vmul.f32 %v5550, 0.125
    %v5561 = vmul.f32 %v5553, 0.125
    %v5562 = vmul.f32 %v5556, 0.125
    %v5563 = vmax.f32 %v5497, %v5527
    %v5564 = vmax.f32 %v5498, %v5528
    %v5565 = vmax.f32 %v5499, %v5529
    %v5566 = vmax.f32 %v5500, %v5530
    %v5567 = vmax.f32 %v5501, %v5531
    %v5568 = vmax.f32 %v5502, %v5532
    %v5569 = vmax.f32 %v5563, %v5557
    %v5570 = vmax.f32 %v5564, %v5558
    %v5571 = vmax.f32 %v5565, %v5559
    %v5572 = vmax.f32 %v5566, %v5560
    %v5573 = vmax.f32 %v5567, %v5561
    %v5574 = vmax.f32 %v5568, %v5562
    %v5575 = vsub.f32 %v5497, %v5569
    %v5576 = vsub.f32 %v5498, %v5570
    %v5577 = vsub.f32 %v5499, %v5571
    %v5578 = vsub.f32 %v5500, %v5572
    %v5579 = vsub.f32 %v5501, %v5573
    %v5580 = vsub.f32 %v5502, %v5574
    %v5581 = vmul.f32 %v5575, 1.442695
    %v5582 = vpow.pop %v5581
    %v5583 = vmul.f32 %v5576, 1.442695
    %v5584 = vpow.pop %v5583
    %v5585 = vmul.f32 %v5577, 1.442695
    %v5586 = vpow.pop %v5585
    %v5587 = vmul.f32 %v5578, 1.442695
    %v5588 = vpow.pop %v5587
    %v5589 = vmul.f32 %v5579, 1.442695
    %v5590 = vpow.pop %v5589
    %v5591 = vmul.f32 %v5580, 1.442695
    %v5592 = vpow.pop %v5591
    %v5593 = vsub.f32 %v5527, %v5569
    %v5594 = vsub.f32 %v5528, %v5570
    %v5595 = vsub.f32 %v5529, %v5571
    %v5596 = vsub.f32 %v5530, %v5572
    %v5597 = vsub.f32 %v5531, %v5573
    %v5598 = vsub.f32 %v5532, %v5574
    %v5599 = vmul.f32 %v5593, 1.442695
    %v5600 = vpow.pop %v5599
    %v5601 = vmul.f32 %v5594, 1.442695
    %v5602 = vpow.pop %v5601
    %v5603 = vmul.f32 %v5595, 1.442695
    %v5604 = vpow.pop %v5603
    %v5605 = vmul.f32 %v5596, 1.442695
    %v5606 = vpow.pop %v5605
    %v5607 = vmul.f32 %v5597, 1.442695
    %v5608 = vpow.pop %v5607
    %v5609 = vmul.f32 %v5598, 1.442695
    %v5610 = vpow.pop %v5609
    %v5611 = vsub.f32 %v5557, %v5569
    %v5612 = vsub.f32 %v5558, %v5570
    %v5613 = vsub.f32 %v5559, %v5571
    %v5614 = vsub.f32 %v5560, %v5572
    %v5615 = vsub.f32 %v5561, %v5573
    %v5616 = vsub.f32 %v5562, %v5574
    %v5617 = vmul.f32 %v5611, 1.442695
    %v5618 = vpow.pop %v5617
    %v5619 = vmul.f32 %v5612, 1.442695
    %v5620 = vpow.pop %v5619
    %v5621 = vmul.f32 %v5613, 1.442695
    %v5622 = vpow.pop %v5621
    %v5623 = vmul.f32 %v5614, 1.442695
    %v5624 = vpow.pop %v5623
    %v5625 = vmul.f32 %v5615, 1.442695
    %v5626 = vpow.pop %v5625
    %v5627 = vmul.f32 %v5616, 1.442695
    %v5628 = vpow.pop %v5627
    %v5629 = vadd.f32 %v5582, %v5600
    %v5630 = vadd.f32 %v5584, %v5602
    %v5631 = vadd.f32 %v5586, %v5604
    %v5632 = vadd.f32 %v5588, %v5606
    %v5633 = vadd.f32 %v5590, %v5608
    %v5634 = vadd.f32 %v5592, %v5610
    %v5635 = vadd.f32 %v5629, %v5618
    %v5636 = vadd.f32 %v5630, %v5620
    %v5637 = vadd.f32 %v5631, %v5622
    %v5638 = vadd.f32 %v5632, %v5624
    %v5639 = vadd.f32 %v5633, %v5626
    %v5640 = vadd.f32 %v5634, %v5628
    %v5641 = vmul.f32 %v5582, %v4784
    %v5642 = vmul.f32 %v5584, %v4788
    %v5643 = vmul.f32 %v5586, %v4794
    %v5644 = vmul.f32 %v5588, %v4798
    %v5645 = vmul.f32 %v5590, %v4804
    %v5646 = vmul.f32 %v5592, %v4808
    %v5647 = vmul.f32 %v5600, %v4868
    %v5648 = vmul.f32 %v5602, %v4872
    %v5649 = vmul.f32 %v5604, %v4878
    %v5650 = vmul.f32 %v5606, %v4882
    %v5651 = vmul.f32 %v5608, %v4888
    %v5652 = vmul.f32 %v5610, %v4892
    %v5653 = vadd.f32 %v5641, %v5647
    %v5654 = vadd.f32 %v5642, %v5648
    %v5655 = vadd.f32 %v5643, %v5649
    %v5656 = vadd.f32 %v5644, %v5650
    %v5657 = vadd.f32 %v5645, %v5651
    %v5658 = vadd.f32 %v5646, %v5652
    %v5659 = vmul.f32 %v5618, %v4943
    %v5660 = vmul.f32 %v5620, %v4947
    %v5661 = vmul.f32 %v5622, %v4953
    %v5662 = vmul.f32 %v5624, %v4957
    %v5663 = vmul.f32 %v5626, %v4963
    %v5664 = vmul.f32 %v5628, %v4967
    %v5665 = vadd.f32 %v5653, %v5659
    %v5666 = vadd.f32 %v5654, %v5660
    %v5667 = vadd.f32 %v5655, %v5661
    %v5668 = vadd.f32 %v5656, %v5662
    %v5669 = vadd.f32 %v5657, %v5663
    %v5670 = vadd.f32 %v5658, %v5664
    %v5671 = vrcp.pop %v5635
    %v5672 = vmul.f32 %v5665, %v5671
    %v5673 = vrcp.pop %v5636
    %v5674 = vmul.f32 %v5666, %v5673
    %v5675 = vrcp.pop %v5637
    %v5676 = vmul.f32 %v5667, %v5675
    %v5677 = vrcp.pop %v5638
    %v5678 = vmul.f32 %v5668, %v5677
    %v5679 = vrcp.pop %v5639
    %v5680 = vmul.f32 %v5669, %v5679
    %v5681 = vrcp.pop %v5640
    %v5682 = vmul.f32 %v5670, %v5681
    %v5683 = vadd.f32 %v5467, %v5672
    %v5684 = vadd.f32 %v5468, %v5674
    %v5685 = vadd.f32 %v5469, %v5676
    %v5686 = vadd.f32 %v5470, %v5678
    %v5687 = vadd.f32 %v5471, %v5680
    %v5688 = vadd.f32 %v5472, %v5682
    %v5689 = vmul.f32 %v5683, 0.33333334
    %v5690 = vmul.f32 %v5684, 0.33333334
    %v5691 = vmul.f32 %v5685, 0.33333334
    %v5692 = vmul.f32 %v5686, 0.33333334
    %v5693 = vmul.f32 %v5687, 0.33333334
    %v5694 = vmul.f32 %v5688, 0.33333334
    %5701 = vrot.lane.b32.xlu0 %v5689, 64
    %v5702 = vpop.permute.xlu0 %5701
    %5703 = vrot.lane.b32.xlu0 %v5690, 64
    %v5704 = vpop.permute.xlu0 %5703
    %5705 = vrot.lane.b32.xlu0 %v5691, 64
    %v5706 = vpop.permute.xlu0 %5705
    %5707 = vrot.lane.b32.xlu0 %v5692, 64
    %v5708 = vpop.permute.xlu0 %5707
    %5709 = vrot.lane.b32.xlu0 %v5693, 64
    %v5710 = vpop.permute.xlu0 %5709
    %5711 = vrot.lane.b32.xlu0 %v5694, 64
    %v5712 = vpop.permute.xlu0 %5711
    %v5719 = vsel %vm1543, %v3201, %v5702
    %v5720 = vsel %vm1543, %v3202, %v5704
    %v5721 = vsel %vm1543, %v3203, %v5706
    %v5722 = vsel %vm1543, %v3204, %v5708
    %v5723 = vsel %vm1543, %v3205, %v5710
    %v5724 = vsel %vm1543, %v3206, %v5712
    %v5725 = vpack.c.bf16 %v5720, %v5719
    %v5726 = vpack.c.bf16 %v5722, %v5721
    %v5727 = vpack.c.bf16 %v5724, %v5723
    %v5731 = vunpack.c.l.b16 %v5725
    %v5732 = vunpack.c.h.b16 %v5725
    %v5733 = vunpack.c.l.b16 %v5726
    %v5734 = vunpack.c.h.b16 %v5726
    %v5735 = vunpack.c.l.b16 %v5727
    %v5736 = vunpack.c.h.b16 %v5727
    %v5737 = vpack.c.b16 %v5731, %v5731
    %v5738 = vpack.c.b16 %v5732, %v5732
    %v5739 = vpack.c.b16 %v5733, %v5733
    %v5740 = vpack.c.b16 %v5734, %v5734
    %v5741 = vpack.c.b16 %v5735, %v5735
    %v5742 = vpack.c.b16 %v5736, %v5736
    %5749 = vst [vmem:[#allocation60] sm:$0xf] %v5737
    %5750 = vst [vmem:[#allocation60 + $0x4] sm:$0xf] %v5738
    %5751 = vst [vmem:[#allocation60 + $0x8] sm:$0xf] %v5739
    %5752 = vst [vmem:[#allocation60 + $0xc] sm:$0xf] %v5740
    %5753 = vst [vmem:[#allocation60 + $0x10] sm:$0xf] %v5741
    %5754 = vst [vmem:[#allocation60 + $0x14] sm:$0xf] %v5742
    // Predicated region
    $region298: #{_lambda_.4} parent=1 // pred_check
      _
    $region299: #{_lambda_.4} parent=1 // pred_check_branch
      %5756 = sbr.rel (0) target = $region301
    $region300: #{_lambda_.4} parent=1 // pred_region
      %s5758 = ssub.s32 384, 384
      %5759 = vsyncadd [#allocation4], %s5758
      %s5760 = sshll.u32 [#allocation60], 4
      %s5761 = int_to_ptr.vmem [resolvable:$true] %s5760
      %5766 = dma.vmem_to_hbm [thread:$0]  %s5761, 384, %s75, [#allocation4], 64, 64, 4
    $region301: #{_lambda_.4} parent=1 // pred_fallthru
      _
    // Predicated region
    $region302: #{_lambda_.4} parent=1 // pred_check
      _
    $region303: #{_lambda_.4} parent=1 // pred_check_branch
      %5768 = sbr.rel (0) target = $region305
    $region304: #{_lambda_.4} parent=1 // pred_region
      %5769 = dma.done [#allocation4], 384
    $region305: #{_lambda_.4} parent=1 // pred_fallthru
      _
    %5770 = vsyncpa [#allocation3], 1
    %5771 = vsyncpa [#allocation7], 1
    %5772 = vsyncpa [#allocation10], 1
    %5773 = vsyncpa [#allocation13], 1
    %5774 = vsyncpa [#allocation16], 1
    %5775 = vsyncpa [#allocation19], 1
    %5776 = vsyncpa [#allocation22], 1
    %5777 = vsyncpa [#allocation25], 1
    %5778 = vsyncpa [#allocation28], 1
    %5779 = vsyncpa [#allocation31], 1
    %5780 = vsyncpa [#allocation34], 1
    %5781 = vsyncpa [#allocation38], 1
    %5782 = vsyncpa [#allocation41], 1
    %5783 = vsyncpa [#allocation44], 1
    %5784 = vsyncpa [#allocation47], 1
    %5785 = vsyncpa [#allocation50], 1
    %5786 = vsyncpa [#allocation53], 1
    %5787 = vsyncpa [#allocation56], 1
    %5788 = vsyncpa [#allocation4], 1
    %5789 = vsyncpa [#allocation5], 1
    %5790 = vsyncpa [#allocation59], 1

</llo_original>
